<compile_context>
chip_gen: v6e
topology: v6e:2x2x1
jax: 0.10.0
libtpu: 0.0.40
codegen_flags: <defaults>
</compile_context>

<pallas_src>
import functools

import jax
import jax.numpy as jnp
import numpy as np
from jax.experimental import pallas as pl
from jax.experimental.pallas import tpu as pltpu


def _round_up(x, m):
    return ((x + m - 1) // m) * m


def charlstm_kernel(x_ref, wx_ref, whh_ref, bias_ref, wfc_ref, bfc_ref,
                    out_ref, h_ref, c_ref, *,
                    chunk_len, seq_len, padded_steps, mm_dtype):
    """One (batch_block, time_chunk) grid step of the CharLSTM forward.

    x_ref    : (TC*BB, 1) int32   token ids, laid out [t][batch-in-block]
    wx_ref   : (V, 4H)   mm_dtype embedding fused into input proj, gate-fused
    whh_ref  : (H, 4H)   mm_dtype recurrent weights, transposed, gate-fused
    bias_ref : (1, 4H)   f32      b_ih + b_hh
    wfc_ref  : (H, O)    mm_dtype final linear, transposed
    bfc_ref  : (1, O)    f32
    out_ref  : (BB, O)   f32      logits for this batch block
    h_ref/c_ref : (BB, H) f32     VMEM-resident LSTM state carry
    """
    V = wx_ref.shape[0]
    H = whh_ref.shape[0]
    BB = h_ref.shape[0]
    TC = chunk_len
    n_ids = TC * BB

    dot_prec = (jax.lax.Precision.HIGHEST
                if jnp.dtype(mm_dtype) == jnp.dtype(jnp.float32)
                else jax.lax.Precision.DEFAULT)

    chunk = pl.program_id(1)

    @pl.when(chunk == 0)
    def _init():
        h_ref[...] = jnp.zeros_like(h_ref)
        c_ref[...] = jnp.zeros_like(c_ref)

    # Embedding fused into the input projection: one_hot @ (emb @ W_ih.T).
    # All four gates in a single wide (N = 4H) matmul, bias fused in.
    ids = x_ref[...]                                                  # (TC*BB, 1)
    one_hot = (jax.lax.broadcasted_iota(jnp.int32, (n_ids, V), 1)
               == ids).astype(mm_dtype)                               # (TC*BB, V)
    xg = (jnp.dot(one_hot, wx_ref[...], precision=dot_prec,
                  preferred_element_type=jnp.float32)
          + bias_ref[...])                                            # (TC*BB, 4H) f32

    whh = whh_ref[...]                                                # (H, 4H), hoisted
    h = h_ref[...]                                                    # f32 carries
    c = c_ref[...]
    h_mm = h.astype(mm_dtype)                                         # dot operand only

    # TODO(synk): a further MXU win would keep `whh` resident in the systolic
    # array across the unrolled chunk via pltpu.matmul_push_rhs/acc_lhs/pop.
    needs_mask = padded_steps > seq_len                               # static
    for t in range(TC):                                               # statically unrolled
        lo = t * BB                                                   # static, 8-aligned
        gates = xg[lo:lo + BB] + jnp.dot(h_mm, whh, precision=dot_prec,
                                         preferred_element_type=jnp.float32)
        i_g = jax.nn.sigmoid(gates[:, 0 * H:1 * H])                   # PyTorch order i,f,g,o
        f_g = jax.nn.sigmoid(gates[:, 1 * H:2 * H])
        g_g = jnp.tanh(gates[:, 2 * H:3 * H])
        o_g = jax.nn.sigmoid(gates[:, 3 * H:4 * H])
        c_new = f_g * c + i_g * g_g
        h_new = o_g * jnp.tanh(c_new)
        if needs_mask:
            valid = (chunk * TC + t) < seq_len                        # padded tail steps
            c = jnp.where(valid, c_new, c)
            h = jnp.where(valid, h_new, h)
        else:
            c = c_new
            h = h_new
        h_mm = h.astype(mm_dtype)

    h_ref[...] = h
    c_ref[...] = c

    @pl.when(chunk == pl.num_programs(1) - 1)
    def _finalize():
        # TODO(synk): nn.Dropout(p=0.2) is eval-mode identity (inference parity).
        out_ref[...] = (jnp.dot(h_mm, wfc_ref[...], precision=dot_prec,
                                preferred_element_type=jnp.float32)
                        + bfc_ref[...])


def char_lstm_forward(x_ids, params, *, matmul_dtype=jnp.bfloat16,
                      batch_block=256, chunk_cap=512,
                      single_buffer_weights=True):
    """x_ids: (B, T) int token ids.  Returns (B, output_dim) float32 logits."""
    B, T = x_ids.shape
    emb = params["emb"]                               # (V, E)
    w_ih, w_hh = params["w_ih"], params["w_hh"]       # (4H, E), (4H, H)
    b_ih, b_hh = params["b_ih"], params["b_hh"]       # (4H,), (4H,)
    w_fc, b_fc = params["w_fc"], params["b_fc"]       # (O, H), (O,)
    V = emb.shape[0]
    H = w_hh.shape[1]
    O = w_fc.shape[0]
    hi = jax.lax.Precision.HIGHEST

    # ---- wrapper-side layout plumbing (keeps relayouts out of the kernel) ----
    # Embedding fused into the input projection; PyTorch's gate order (i,f,g,o)
    # is already contiguous along the 4H axis, so the gates stay fused.
    wx = jnp.dot(emb, w_ih.T, precision=hi).astype(matmul_dtype)      # (V, 4H)
    whh_t = w_hh.T.astype(matmul_dtype)                               # (H, 4H)
    bias = (b_ih + b_hh).reshape(1, 4 * H).astype(jnp.float32)        # (1, 4H)
    wfc_t = w_fc.T.astype(matmul_dtype)                               # (H, O)
    bfc = b_fc.reshape(1, O).astype(jnp.float32)                      # (1, O)

    # ---- batch padding / blocking (v7x megacore: parallel over batch blocks) ----
    Bp = _round_up(B, 8)
    BB = min(_round_up(batch_block, 8), Bp)
    Bp = _round_up(Bp, BB)
    n_bb = Bp // BB

    # ---- VMEM-aware time chunking (bounded per-chunk projection, no TC=T fallback) ----
    mm_bytes = jnp.dtype(matmul_dtype).itemsize
    lanes_4h = _round_up(4 * H, 128)
    lanes_v = _round_up(V, 128)
    # Live bytes per unrolled time step inside a chunk:
    #   xg slice (f32) + lane-padded id block (x2 buffers) + one_hot row block.
    per_step = BB * (lanes_4h * 4 + 2 * 128 * 4 + lanes_v * mm_bytes)
    xg_budget = 8 << 20                       # conservative: fits v7x's 64 MiB VMEM
    TC = max(1, min(chunk_cap, T, xg_budget // per_step))
    n_chunks = -(-T // TC)
    Tp = n_chunks * TC                        # padded tail steps are masked in-kernel

    # ---- token ids: pre-flattened, trailing dim 1 (no in-kernel reshape) ----
    x_pad = jnp.zeros((Tp, Bp), jnp.int32).at[:T, :B].set(x_ids.T.astype(jnp.int32))
    x_flat = (x_pad.reshape(n_chunks, TC, n_bb, BB)
                   .transpose(2, 0, 1, 3)
                   .reshape(n_bb * n_chunks * TC * BB, 1))

    # ---- VMEM accounting (lane/sublane padded, per-input buffering) ----
    lanes_h = _round_up(H, 128)
    lanes_o = _round_up(O, 128)
    sub_v = _round_up(V, 8)
    sub_h = _round_up(H, 8)
    wbuf = 1 if single_buffer_weights else 2
    vmem_bytes = (
        2 * TC * BB * 128 * 4                 # id block (lane padded), double-buffered
        + wbuf * sub_v * lanes_4h * mm_bytes  # wx
        + wbuf * sub_h * lanes_4h * mm_bytes  # whh
        + wbuf * 8 * lanes_4h * 4             # bias
        + wbuf * sub_h * lanes_o * mm_bytes   # wfc
        + wbuf * 8 * lanes_o * 4              # bfc
        + 2 * BB * lanes_o * 4                # out block
        + 2 * BB * lanes_h * 4                # h/c scratch
        + TC * BB * lanes_4h * 4              # live xg (f32)
        + TC * BB * lanes_v * mm_bytes)       # live one_hot
    vmem_limit = int(min(64 << 20, max(32 << 20, vmem_bytes + (16 << 20))))

    kernel = functools.partial(
        charlstm_kernel, chunk_len=TC, seq_len=T, padded_steps=Tp,
        mm_dtype=matmul_dtype)

    grid = (n_bb, n_chunks)
    ids_spec = pl.BlockSpec((TC * BB, 1), lambda b, i: (b * n_chunks + i, 0))
    out_spec = pl.BlockSpec((BB, O), lambda b, i: (b, 0))
    weight_shapes = [(V, 4 * H), (H, 4 * H), (1, 4 * H), (H, O), (1, O)]

    def build(single_buf):
        def w_spec(shape):
            if single_buf:
                # Grid-invariant weights: one VMEM buffer is enough (v7x headroom).
                return pl.BlockSpec(shape, lambda b, i: (0, 0),
                                    pipeline_mode=pl.Buffered(1))
            return pl.BlockSpec(shape, lambda b, i: (0, 0))
        return pl.pallas_call(
            kernel,
            out_shape=jax.ShapeDtypeStruct((Bp, O), jnp.float32),
            grid=grid,
            in_specs=[ids_spec] + [w_spec(s) for s in weight_shapes],
            out_specs=out_spec,
            scratch_shapes=[pltpu.VMEM((BB, H), jnp.float32),    # h carry
                            pltpu.VMEM((BB, H), jnp.float32)],   # c carry
            compiler_params=pltpu.CompilerParams(
                dimension_semantics=("parallel", "arbitrary"),
                vmem_limit_bytes=vmem_limit),
        )

    args = (x_flat, wx, whh_t, bias, wfc_t, bfc)
    if single_buffer_weights:
        try:
            out_p = build(True)(*args)
        except Exception:
            # pipeline_mode=pl.Buffered(1) unsupported on this JAX version:
            # fall back to default double-buffered weights (correctness unchanged).
            out_p = build(False)(*args)
    else:
        out_p = build(False)(*args)

    return out_p[:B]


def init_params(key, input_dim, output_dim, embedding_dim, hidden_dim):
    """Deterministic PyTorch-style init (shapes from CharLSTM.__init__)."""
    ks = jax.random.split(key, 7)
    emb = jax.random.normal(ks[0], (input_dim, embedding_dim), jnp.float32)
    emb = emb.at[0].set(0.0)                              # padding_idx=0
    k_lstm = 1.0 / np.sqrt(hidden_dim)
    w_ih = jax.random.uniform(ks[1], (4 * hidden_dim, embedding_dim),
                              jnp.float32, -k_lstm, k_lstm)
    w_hh = jax.random.uniform(ks[2], (4 * hidden_dim, hidden_dim),
                              jnp.float32, -k_lstm, k_lstm)
    b_ih = jax.random.uniform(ks[3], (4 * hidden_dim,), jnp.float32, -k_lstm, k_lstm)
    b_hh = jax.random.uniform(ks[4], (4 * hidden_dim,), jnp.float32, -k_lstm, k_lstm)
    k_fc = 1.0 / np.sqrt(hidden_dim)
    w_fc = jax.random.uniform(ks[5], (output_dim, hidden_dim),
                              jnp.float32, -k_fc, k_fc)
    b_fc = jax.random.uniform(ks[6], (output_dim,), jnp.float32, -k_fc, k_fc)
    return dict(emb=emb, w_ih=w_ih, w_hh=w_hh, b_ih=b_ih, b_hh=b_hh,
                w_fc=w_fc, b_fc=b_fc)


def char_lstm_reference(x_ids, params):
    """Pure-JAX f32 reference matching PyTorch semantics (for verification)."""
    hi = jax.lax.Precision.HIGHEST
    emb = params["emb"][x_ids]                            # (B, T, E)
    B, T, E = emb.shape
    H = params["w_hh"].shape[1]
    w_ih_t = params["w_ih"].T
    w_hh_t = params["w_hh"].T
    bias = params["b_ih"] + params["b_hh"]

    def step(carry, x_t):
        h, c = carry
        gates = (jnp.dot(x_t, w_ih_t, precision=hi)
                 + jnp.dot(h, w_hh_t, precision=hi) + bias)
        i = jax.nn.sigmoid(gates[:, 0:H])
        f = jax.nn.sigmoid(gates[:, H:2 * H])
        g = jnp.tanh(gates[:, 2 * H:3 * H])
        o = jax.nn.sigmoid(gates[:, 3 * H:4 * H])
        c = f * c + i * g
        h = o * jnp.tanh(c)
        return (h, c), None

    h0 = jnp.zeros((B, H), jnp.float32)
    c0 = jnp.zeros((B, H), jnp.float32)
    (h_last, _), _ = jax.lax.scan(step, (h0, c0), jnp.swapaxes(emb, 0, 1))
    return jnp.dot(h_last, params["w_fc"].T, precision=hi) + params["b_fc"]


if __name__ == "__main__":
    input_dim = 32      # vocab size
    output_dim = 32
    embedding_dim = 16
    hidden_dim = 32
    batch = 2
    seq = 8

    key = jax.random.PRNGKey(0)
    k_param, k_data = jax.random.split(key)
    params = init_params(k_param, input_dim, output_dim, embedding_dim, hidden_dim)
    x_ids = jax.random.randint(k_data, (batch, seq), 0, input_dim, dtype=jnp.int32)

    ref = jax.block_until_ready(char_lstm_reference(x_ids, params))

    # Exact-parity path (f32 MXU operands): matches the f32 reference to 1e-4.
    out_f32 = jax.block_until_ready(
        char_lstm_forward(x_ids, params, matmul_dtype=jnp.float32))
    assert out_f32.shape == (batch, output_dim)
    np.testing.assert_allclose(np.asarray(out_f32), np.asarray(ref),
                               atol=1e-4, rtol=1e-4)

    # Production path (bf16 MXU operands, f32 accumulation / activations).
    # TODO(synk): re-validate the bf16 tolerance at the production sequence length.
    out_bf16 = jax.block_until_ready(char_lstm_forward(x_ids, params))
    assert out_bf16.shape == (batch, output_dim)
    np.testing.assert_allclose(np.asarray(out_bf16), np.asarray(ref),
                               atol=3e-2, rtol=3e-2)

    print("KERNEL_OK")
</pallas_src>

<mosaic_0001>
module attributes {stable_mosaic.version = 11 : i64} {
  func.func @charlstm_kernel(%arg0: i32, %arg1: i32, %arg2: memref<64x1xi32, #tpu.memory_space<vmem>>, %arg3: memref<32x128xf32, #tpu.memory_space<vmem>>, %arg4: memref<32x128xf32, #tpu.memory_space<vmem>>, %arg5: memref<1x128xf32, #tpu.memory_space<vmem>>, %arg6: memref<32x32xf32, #tpu.memory_space<vmem>>, %arg7: memref<1x32xf32, #tpu.memory_space<vmem>>, %arg8: memref<8x32xf32, #tpu.memory_space<vmem>>, %arg9: memref<8x32xf32, #tpu.memory_space<vmem>>, %arg10: memref<8x32xf32, #tpu.memory_space<vmem>>) attributes {dimension_semantics = [#tpu.dimension_semantics<parallel>, #tpu.dimension_semantics<arbitrary>], iteration_bounds = array<i64: 1, 1>, scalar_prefetch = 0 : i64, scratch_operands = 2 : i64, tpu.core_type = #tpu.core_type<tc>, window_params = [{transform_indices = @transform_0, window_bounds = array<i64: 64, 1>}, {pipeline_mode = #tpu.pipeline_mode<synchronous>, transform_indices = @transform_1, window_bounds = array<i64: 32, 128>}, {pipeline_mode = #tpu.pipeline_mode<synchronous>, transform_indices = @transform_2, window_bounds = array<i64: 32, 128>}, {pipeline_mode = #tpu.pipeline_mode<synchronous>, transform_indices = @transform_3, window_bounds = array<i64: 1, 128>}, {pipeline_mode = #tpu.pipeline_mode<synchronous>, transform_indices = @transform_4, window_bounds = array<i64: 32, 32>}, {pipeline_mode = #tpu.pipeline_mode<synchronous>, transform_indices = @transform_5, window_bounds = array<i64: 1, 32>}, {transform_indices = @transform_6, window_bounds = array<i64: 8, 32>}]} {
    %c0_i32 = arith.constant 0 : i32
    %0 = arith.cmpi eq, %arg1, %c0_i32 : i32
    %1 = arith.extui %0 : i1 to i32
    %c0_i32_0 = arith.constant 0 : i32
    %2 = arith.cmpi ne, %1, %c0_i32_0 : i32
    scf.if %2 {
      %cst_50 = arith.constant 0.000000e+00 : f32
      %246 = vector.broadcast %cst_50 : f32 to vector<8x32xf32>
      %c0_51 = arith.constant 0 : index
      %c0_52 = arith.constant 0 : index
      %247 = vector.load %arg9[%c0_51, %c0_52] : memref<8x32xf32, #tpu.memory_space<vmem>>, vector<8x32xf32>
      tpu.vector_store %arg9[%c0_51, %c0_52], %246 {strides = array<i32>} : memref<8x32xf32, #tpu.memory_space<vmem>>, vector<8x32xf32>,
      %cst_53 = arith.constant 0.000000e+00 : f32
      %248 = vector.broadcast %cst_53 : f32 to vector<8x32xf32>
      %c0_54 = arith.constant 0 : index
      %c0_55 = arith.constant 0 : index
      %249 = vector.load %arg10[%c0_54, %c0_55] : memref<8x32xf32, #tpu.memory_space<vmem>>, vector<8x32xf32>
      tpu.vector_store %arg10[%c0_54, %c0_55], %248 {strides = array<i32>} : memref<8x32xf32, #tpu.memory_space<vmem>>, vector<8x32xf32>,
    } else {
    }
    %c0 = arith.constant 0 : index
    %c0_1 = arith.constant 0 : index
    %3 = vector.load %arg2[%c0, %c0_1] : memref<64x1xi32, #tpu.memory_space<vmem>>, vector<64x1xi32>
    %4 = tpu.iota {dimensions = array<i32: 1>} : vector<64x32xi32>
    %5 = vector.broadcast %3 : vector<64x1xi32> to vector<64x32xi32>
    %6 = arith.cmpi eq, %4, %5 : vector<64x32xi32>
    %7 = arith.extui %6 : vector<64x32xi1> to vector<64x32xi32>
    %8 = arith.sitofp %7 : vector<64x32xi32> to vector<64x32xf32>
    %c0_2 = arith.constant 0 : index
    %c0_3 = arith.constant 0 : index
    %9 = vector.load %arg3[%c0_2, %c0_3] : memref<32x128xf32, #tpu.memory_space<vmem>>, vector<32x128xf32>
    %cst = arith.constant dense<0.000000e+00> : vector<64x128xf32>
    %10 = tpu.matmul %8, %9, %cst {dimension_numbers = #tpu.dot_dimension_numbers<[1], [0], [0], [1], [0, 0, 1, 1], [], []>, precision = #tpu.contract_precision<fp32>} : vector<64x32xf32>, vector<32x128xf32>, vector<64x128xf32> -> vector<64x128xf32>
    %c0_4 = arith.constant 0 : index
    %c0_5 = arith.constant 0 : index
    %11 = vector.load %arg5[%c0_4, %c0_5] : memref<1x128xf32, #tpu.memory_space<vmem>>, vector<1x128xf32>
    %12 = vector.broadcast %11 : vector<1x128xf32> to vector<64x128xf32>
    %13 = arith.addf %10, %12 : vector<64x128xf32>
    %c0_6 = arith.constant 0 : index
    %c0_7 = arith.constant 0 : index
    %14 = vector.load %arg4[%c0_6, %c0_7] : memref<32x128xf32, #tpu.memory_space<vmem>>, vector<32x128xf32>
    %c0_8 = arith.constant 0 : index
    %c0_9 = arith.constant 0 : index
    %15 = vector.load %arg9[%c0_8, %c0_9] : memref<8x32xf32, #tpu.memory_space<vmem>>, vector<8x32xf32>
    %c0_10 = arith.constant 0 : index
    %c0_11 = arith.constant 0 : index
    %16 = vector.load %arg10[%c0_10, %c0_11] : memref<8x32xf32, #tpu.memory_space<vmem>>, vector<8x32xf32>
    %17 = vector.extract_strided_slice %13 {offsets = [0, 0], sizes = [8, 128], strides = [1, 1]} : vector<64x128xf32> to vector<8x128xf32>
    %cst_12 = arith.constant dense<0.000000e+00> : vector<8x128xf32>
    %18 = tpu.matmul %15, %14, %cst_12 {dimension_numbers = #tpu.dot_dimension_numbers<[1], [0], [0], [1], [0, 0, 1, 1], [], []>, precision = #tpu.contract_precision<fp32>} : vector<8x32xf32>, vector<32x128xf32>, vector<8x128xf32> -> vector<8x128xf32>
    %19 = arith.addf %17, %18 : vector<8x128xf32>
    %20 = vector.extract_strided_slice %19 {offsets = [0, 0], sizes = [8, 32], strides = [1, 1]} : vector<8x128xf32> to vector<8x32xf32>
    %21 = arith.negf %20 : vector<8x32xf32>
    %22 = math.exp %21 : vector<8x32xf32>
    %cst_13 = arith.constant 1.000000e+00 : f32
    %23 = vector.broadcast %cst_13 : f32 to vector<8x32xf32>
    %24 = arith.addf %23, %22 : vector<8x32xf32>
    %25 = arith.divf %23, %24 : vector<8x32xf32>
    %26 = vector.extract_strided_slice %19 {offsets = [0, 32], sizes = [8, 32], strides = [1, 1]} : vector<8x128xf32> to vector<8x32xf32>
    %27 = arith.negf %26 : vector<8x32xf32>
    %28 = math.exp %27 : vector<8x32xf32>
    %cst_14 = arith.constant 1.000000e+00 : f32
    %29 = vector.broadcast %cst_14 : f32 to vector<8x32xf32>
    %30 = arith.addf %29, %28 : vector<8x32xf32>
    %31 = arith.divf %29, %30 : vector<8x32xf32>
    %32 = vector.extract_strided_slice %19 {offsets = [0, 64], sizes = [8, 32], strides = [1, 1]} : vector<8x128xf32> to vector<8x32xf32>
    %33 = math.tanh %32 : vector<8x32xf32>
    %34 = vector.extract_strided_slice %19 {offsets = [0, 96], sizes = [8, 32], strides = [1, 1]} : vector<8x128xf32> to vector<8x32xf32>
    %35 = arith.negf %34 : vector<8x32xf32>
    %36 = math.exp %35 : vector<8x32xf32>
    %cst_15 = arith.constant 1.000000e+00 : f32
    %37 = vector.broadcast %cst_15 : f32 to vector<8x32xf32>
    %38 = arith.addf %37, %36 : vector<8x32xf32>
    %39 = arith.divf %37, %38 : vector<8x32xf32>
    %40 = arith.mulf %31, %16 : vector<8x32xf32>
    %41 = arith.mulf %25, %33 : vector<8x32xf32>
    %42 = arith.addf %40, %41 : vector<8x32xf32>
    %43 = math.tanh %42 : vector<8x32xf32>
    %44 = arith.mulf %39, %43 : vector<8x32xf32>
    %45 = vector.extract_strided_slice %13 {offsets = [8, 0], sizes = [8, 128], strides = [1, 1]} : vector<64x128xf32> to vector<8x128xf32>
    %cst_16 = arith.constant dense<0.000000e+00> : vector<8x128xf32>
    %46 = tpu.matmul %44, %14, %cst_16 {dimension_numbers = #tpu.dot_dimension_numbers<[1], [0], [0], [1], [0, 0, 1, 1], [], []>, precision = #tpu.contract_precision<fp32>} : vector<8x32xf32>, vector<32x128xf32>, vector<8x128xf32> -> vector<8x128xf32>
    %47 = arith.addf %45, %46 : vector<8x128xf32>
    %48 = vector.extract_strided_slice %47 {offsets = [0, 0], sizes = [8, 32], strides = [1, 1]} : vector<8x128xf32> to vector<8x32xf32>
    %49 = arith.negf %48 : vector<8x32xf32>
    %50 = math.exp %49 : vector<8x32xf32>
    %cst_17 = arith.constant 1.000000e+00 : f32
    %51 = vector.broadcast %cst_17 : f32 to vector<8x32xf32>
    %52 = arith.addf %51, %50 : vector<8x32xf32>
    %53 = arith.divf %51, %52 : vector<8x32xf32>
    %54 = vector.extract_strided_slice %47 {offsets = [0, 32], sizes = [8, 32], strides = [1, 1]} : vector<8x128xf32> to vector<8x32xf32>
    %55 = arith.negf %54 : vector<8x32xf32>
    %56 = math.exp %55 : vector<8x32xf32>
    %cst_18 = arith.constant 1.000000e+00 : f32
    %57 = vector.broadcast %cst_18 : f32 to vector<8x32xf32>
    %58 = arith.addf %57, %56 : vector<8x32xf32>
    %59 = arith.divf %57, %58 : vector<8x32xf32>
    %60 = vector.extract_strided_slice %47 {offsets = [0, 64], sizes = [8, 32], strides = [1, 1]} : vector<8x128xf32> to vector<8x32xf32>
    %61 = math.tanh %60 : vector<8x32xf32>
    %62 = vector.extract_strided_slice %47 {offsets = [0, 96], sizes = [8, 32], strides = [1, 1]} : vector<8x128xf32> to vector<8x32xf32>
    %63 = arith.negf %62 : vector<8x32xf32>
    %64 = math.exp %63 : vector<8x32xf32>
    %cst_19 = arith.constant 1.000000e+00 : f32
    %65 = vector.broadcast %cst_19 : f32 to vector<8x32xf32>
    %66 = arith.addf %65, %64 : vector<8x32xf32>
    %67 = arith.divf %65, %66 : vector<8x32xf32>
    %68 = arith.mulf %59, %42 : vector<8x32xf32>
    %69 = arith.mulf %53, %61 : vector<8x32xf32>
    %70 = arith.addf %68, %69 : vector<8x32xf32>
    %71 = math.tanh %70 : vector<8x32xf32>
    %72 = arith.mulf %67, %71 : vector<8x32xf32>
    %73 = vector.extract_strided_slice %13 {offsets = [16, 0], sizes = [8, 128], strides = [1, 1]} : vector<64x128xf32> to vector<8x128xf32>
    %cst_20 = arith.constant dense<0.000000e+00> : vector<8x128xf32>
    %74 = tpu.matmul %72, %14, %cst_20 {dimension_numbers = #tpu.dot_dimension_numbers<[1], [0], [0], [1], [0, 0, 1, 1], [], []>, precision = #tpu.contract_precision<fp32>} : vector<8x32xf32>, vector<32x128xf32>, vector<8x128xf32> -> vector<8x128xf32>
    %75 = arith.addf %73, %74 : vector<8x128xf32>
    %76 = vector.extract_strided_slice %75 {offsets = [0, 0], sizes = [8, 32], strides = [1, 1]} : vector<8x128xf32> to vector<8x32xf32>
    %77 = arith.negf %76 : vector<8x32xf32>
    %78 = math.exp %77 : vector<8x32xf32>
    %cst_21 = arith.constant 1.000000e+00 : f32
    %79 = vector.broadcast %cst_21 : f32 to vector<8x32xf32>
    %80 = arith.addf %79, %78 : vector<8x32xf32>
    %81 = arith.divf %79, %80 : vector<8x32xf32>
    %82 = vector.extract_strided_slice %75 {offsets = [0, 32], sizes = [8, 32], strides = [1, 1]} : vector<8x128xf32> to vector<8x32xf32>
    %83 = arith.negf %82 : vector<8x32xf32>
    %84 = math.exp %83 : vector<8x32xf32>
    %cst_22 = arith.constant 1.000000e+00 : f32
    %85 = vector.broadcast %cst_22 : f32 to vector<8x32xf32>
    %86 = arith.addf %85, %84 : vector<8x32xf32>
    %87 = arith.divf %85, %86 : vector<8x32xf32>
    %88 = vector.extract_strided_slice %75 {offsets = [0, 64], sizes = [8, 32], strides = [1, 1]} : vector<8x128xf32> to vector<8x32xf32>
    %89 = math.tanh %88 : vector<8x32xf32>
    %90 = vector.extract_strided_slice %75 {offsets = [0, 96], sizes = [8, 32], strides = [1, 1]} : vector<8x128xf32> to vector<8x32xf32>
    %91 = arith.negf %90 : vector<8x32xf32>
    %92 = math.exp %91 : vector<8x32xf32>
    %cst_23 = arith.constant 1.000000e+00 : f32
    %93 = vector.broadcast %cst_23 : f32 to vector<8x32xf32>
    %94 = arith.addf %93, %92 : vector<8x32xf32>
    %95 = arith.divf %93, %94 : vector<8x32xf32>
    %96 = arith.mulf %87, %70 : vector<8x32xf32>
    %97 = arith.mulf %81, %89 : vector<8x32xf32>
    %98 = arith.addf %96, %97 : vector<8x32xf32>
    %99 = math.tanh %98 : vector<8x32xf32>
    %100 = arith.mulf %95, %99 : vector<8x32xf32>
    %101 = vector.extract_strided_slice %13 {offsets = [24, 0], sizes = [8, 128], strides = [1, 1]} : vector<64x128xf32> to vector<8x128xf32>
    %cst_24 = arith.constant dense<0.000000e+00> : vector<8x128xf32>
    %102 = tpu.matmul %100, %14, %cst_24 {dimension_numbers = #tpu.dot_dimension_numbers<[1], [0], [0], [1], [0, 0, 1, 1], [], []>, precision = #tpu.contract_precision<fp32>} : vector<8x32xf32>, vector<32x128xf32>, vector<8x128xf32> -> vector<8x128xf32>
    %103 = arith.addf %101, %102 : vector<8x128xf32>
    %104 = vector.extract_strided_slice %103 {offsets = [0, 0], sizes = [8, 32], strides = [1, 1]} : vector<8x128xf32> to vector<8x32xf32>
    %105 = arith.negf %104 : vector<8x32xf32>
    %106 = math.exp %105 : vector<8x32xf32>
    %cst_25 = arith.constant 1.000000e+00 : f32
    %107 = vector.broadcast %cst_25 : f32 to vector<8x32xf32>
    %108 = arith.addf %107, %106 : vector<8x32xf32>
    %109 = arith.divf %107, %108 : vector<8x32xf32>
    %110 = vector.extract_strided_slice %103 {offsets = [0, 32], sizes = [8, 32], strides = [1, 1]} : vector<8x128xf32> to vector<8x32xf32>
    %111 = arith.negf %110 : vector<8x32xf32>
    %112 = math.exp %111 : vector<8x32xf32>
    %cst_26 = arith.constant 1.000000e+00 : f32
    %113 = vector.broadcast %cst_26 : f32 to vector<8x32xf32>
    %114 = arith.addf %113, %112 : vector<8x32xf32>
    %115 = arith.divf %113, %114 : vector<8x32xf32>
    %116 = vector.extract_strided_slice %103 {offsets = [0, 64], sizes = [8, 32], strides = [1, 1]} : vector<8x128xf32> to vector<8x32xf32>
    %117 = math.tanh %116 : vector<8x32xf32>
    %118 = vector.extract_strided_slice %103 {offsets = [0, 96], sizes = [8, 32], strides = [1, 1]} : vector<8x128xf32> to vector<8x32xf32>
    %119 = arith.negf %118 : vector<8x32xf32>
    %120 = math.exp %119 : vector<8x32xf32>
    %cst_27 = arith.constant 1.000000e+00 : f32
    %121 = vector.broadcast %cst_27 : f32 to vector<8x32xf32>
    %122 = arith.addf %121, %120 : vector<8x32xf32>
    %123 = arith.divf %121, %122 : vector<8x32xf32>
    %124 = arith.mulf %115, %98 : vector<8x32xf32>
    %125 = arith.mulf %109, %117 : vector<8x32xf32>
    %126 = arith.addf %124, %125 : vector<8x32xf32>
    %127 = math.tanh %126 : vector<8x32xf32>
    %128 = arith.mulf %123, %127 : vector<8x32xf32>
    %129 = vector.extract_strided_slice %13 {offsets = [32, 0], sizes = [8, 128], strides = [1, 1]} : vector<64x128xf32> to vector<8x128xf32>
    %cst_28 = arith.constant dense<0.000000e+00> : vector<8x128xf32>
    %130 = tpu.matmul %128, %14, %cst_28 {dimension_numbers = #tpu.dot_dimension_numbers<[1], [0], [0], [1], [0, 0, 1, 1], [], []>, precision = #tpu.contract_precision<fp32>} : vector<8x32xf32>, vector<32x128xf32>, vector<8x128xf32> -> vector<8x128xf32>
    %131 = arith.addf %129, %130 : vector<8x128xf32>
    %132 = vector.extract_strided_slice %131 {offsets = [0, 0], sizes = [8, 32], strides = [1, 1]} : vector<8x128xf32> to vector<8x32xf32>
    %133 = arith.negf %132 : vector<8x32xf32>
    %134 = math.exp %133 : vector<8x32xf32>
    %cst_29 = arith.constant 1.000000e+00 : f32
    %135 = vector.broadcast %cst_29 : f32 to vector<8x32xf32>
    %136 = arith.addf %135, %134 : vector<8x32xf32>
    %137 = arith.divf %135, %136 : vector<8x32xf32>
    %138 = vector.extract_strided_slice %131 {offsets = [0, 32], sizes = [8, 32], strides = [1, 1]} : vector<8x128xf32> to vector<8x32xf32>
    %139 = arith.negf %138 : vector<8x32xf32>
    %140 = math.exp %139 : vector<8x32xf32>
    %cst_30 = arith.constant 1.000000e+00 : f32
    %141 = vector.broadcast %cst_30 : f32 to vector<8x32xf32>
    %142 = arith.addf %141, %140 : vector<8x32xf32>
    %143 = arith.divf %141, %142 : vector<8x32xf32>
    %144 = vector.extract_strided_slice %131 {offsets = [0, 64], sizes = [8, 32], strides = [1, 1]} : vector<8x128xf32> to vector<8x32xf32>
    %145 = math.tanh %144 : vector<8x32xf32>
    %146 = vector.extract_strided_slice %131 {offsets = [0, 96], sizes = [8, 32], strides = [1, 1]} : vector<8x128xf32> to vector<8x32xf32>
    %147 = arith.negf %146 : vector<8x32xf32>
    %148 = math.exp %147 : vector<8x32xf32>
    %cst_31 = arith.constant 1.000000e+00 : f32
    %149 = vector.broadcast %cst_31 : f32 to vector<8x32xf32>
    %150 = arith.addf %149, %148 : vector<8x32xf32>
    %151 = arith.divf %149, %150 : vector<8x32xf32>
    %152 = arith.mulf %143, %126 : vector<8x32xf32>
    %153 = arith.mulf %137, %145 : vector<8x32xf32>
    %154 = arith.addf %152, %153 : vector<8x32xf32>
    %155 = math.tanh %154 : vector<8x32xf32>
    %156 = arith.mulf %151, %155 : vector<8x32xf32>
    %157 = vector.extract_strided_slice %13 {offsets = [40, 0], sizes = [8, 128], strides = [1, 1]} : vector<64x128xf32> to vector<8x128xf32>
    %cst_32 = arith.constant dense<0.000000e+00> : vector<8x128xf32>
    %158 = tpu.matmul %156, %14, %cst_32 {dimension_numbers = #tpu.dot_dimension_numbers<[1], [0], [0], [1], [0, 0, 1, 1], [], []>, precision = #tpu.contract_precision<fp32>} : vector<8x32xf32>, vector<32x128xf32>, vector<8x128xf32> -> vector<8x128xf32>
    %159 = arith.addf %157, %158 : vector<8x128xf32>
    %160 = vector.extract_strided_slice %159 {offsets = [0, 0], sizes = [8, 32], strides = [1, 1]} : vector<8x128xf32> to vector<8x32xf32>
    %161 = arith.negf %160 : vector<8x32xf32>
    %162 = math.exp %161 : vector<8x32xf32>
    %cst_33 = arith.constant 1.000000e+00 : f32
    %163 = vector.broadcast %cst_33 : f32 to vector<8x32xf32>
    %164 = arith.addf %163, %162 : vector<8x32xf32>
    %165 = arith.divf %163, %164 : vector<8x32xf32>
    %166 = vector.extract_strided_slice %159 {offsets = [0, 32], sizes = [8, 32], strides = [1, 1]} : vector<8x128xf32> to vector<8x32xf32>
    %167 = arith.negf %166 : vector<8x32xf32>
    %168 = math.exp %167 : vector<8x32xf32>
    %cst_34 = arith.constant 1.000000e+00 : f32
    %169 = vector.broadcast %cst_34 : f32 to vector<8x32xf32>
    %170 = arith.addf %169, %168 : vector<8x32xf32>
    %171 = arith.divf %169, %170 : vector<8x32xf32>
    %172 = vector.extract_strided_slice %159 {offsets = [0, 64], sizes = [8, 32], strides = [1, 1]} : vector<8x128xf32> to vector<8x32xf32>
    %173 = math.tanh %172 : vector<8x32xf32>
    %174 = vector.extract_strided_slice %159 {offsets = [0, 96], sizes = [8, 32], strides = [1, 1]} : vector<8x128xf32> to vector<8x32xf32>
    %175 = arith.negf %174 : vector<8x32xf32>
    %176 = math.exp %175 : vector<8x32xf32>
    %cst_35 = arith.constant 1.000000e+00 : f32
    %177 = vector.broadcast %cst_35 : f32 to vector<8x32xf32>
    %178 = arith.addf %177, %176 : vector<8x32xf32>
    %179 = arith.divf %177, %178 : vector<8x32xf32>
    %180 = arith.mulf %171, %154 : vector<8x32xf32>
    %181 = arith.mulf %165, %173 : vector<8x32xf32>
    %182 = arith.addf %180, %181 : vector<8x32xf32>
    %183 = math.tanh %182 : vector<8x32xf32>
    %184 = arith.mulf %179, %183 : vector<8x32xf32>
    %185 = vector.extract_strided_slice %13 {offsets = [48, 0], sizes = [8, 128], strides = [1, 1]} : vector<64x128xf32> to vector<8x128xf32>
    %cst_36 = arith.constant dense<0.000000e+00> : vector<8x128xf32>
    %186 = tpu.matmul %184, %14, %cst_36 {dimension_numbers = #tpu.dot_dimension_numbers<[1], [0], [0], [1], [0, 0, 1, 1], [], []>, precision = #tpu.contract_precision<fp32>} : vector<8x32xf32>, vector<32x128xf32>, vector<8x128xf32> -> vector<8x128xf32>
    %187 = arith.addf %185, %186 : vector<8x128xf32>
    %188 = vector.extract_strided_slice %187 {offsets = [0, 0], sizes = [8, 32], strides = [1, 1]} : vector<8x128xf32> to vector<8x32xf32>
    %189 = arith.negf %188 : vector<8x32xf32>
    %190 = math.exp %189 : vector<8x32xf32>
    %cst_37 = arith.constant 1.000000e+00 : f32
    %191 = vector.broadcast %cst_37 : f32 to vector<8x32xf32>
    %192 = arith.addf %191, %190 : vector<8x32xf32>
    %193 = arith.divf %191, %192 : vector<8x32xf32>
    %194 = vector.extract_strided_slice %187 {offsets = [0, 32], sizes = [8, 32], strides = [1, 1]} : vector<8x128xf32> to vector<8x32xf32>
    %195 = arith.negf %194 : vector<8x32xf32>
    %196 = math.exp %195 : vector<8x32xf32>
    %cst_38 = arith.constant 1.000000e+00 : f32
    %197 = vector.broadcast %cst_38 : f32 to vector<8x32xf32>
    %198 = arith.addf %197, %196 : vector<8x32xf32>
    %199 = arith.divf %197, %198 : vector<8x32xf32>
    %200 = vector.extract_strided_slice %187 {offsets = [0, 64], sizes = [8, 32], strides = [1, 1]} : vector<8x128xf32> to vector<8x32xf32>
    %201 = math.tanh %200 : vector<8x32xf32>
    %202 = vector.extract_strided_slice %187 {offsets = [0, 96], sizes = [8, 32], strides = [1, 1]} : vector<8x128xf32> to vector<8x32xf32>
    %203 = arith.negf %202 : vector<8x32xf32>
    %204 = math.exp %203 : vector<8x32xf32>
    %cst_39 = arith.constant 1.000000e+00 : f32
    %205 = vector.broadcast %cst_39 : f32 to vector<8x32xf32>
    %206 = arith.addf %205, %204 : vector<8x32xf32>
    %207 = arith.divf %205, %206 : vector<8x32xf32>
    %208 = arith.mulf %199, %182 : vector<8x32xf32>
    %209 = arith.mulf %193, %201 : vector<8x32xf32>
    %210 = arith.addf %208, %209 : vector<8x32xf32>
    %211 = math.tanh %210 : vector<8x32xf32>
    %212 = arith.mulf %207, %211 : vector<8x32xf32>
    %213 = vector.extract_strided_slice %13 {offsets = [56, 0], sizes = [8, 128], strides = [1, 1]} : vector<64x128xf32> to vector<8x128xf32>
    %cst_40 = arith.constant dense<0.000000e+00> : vector<8x128xf32>
    %214 = tpu.matmul %212, %14, %cst_40 {dimension_numbers = #tpu.dot_dimension_numbers<[1], [0], [0], [1], [0, 0, 1, 1], [], []>, precision = #tpu.contract_precision<fp32>} : vector<8x32xf32>, vector<32x128xf32>, vector<8x128xf32> -> vector<8x128xf32>
    %215 = arith.addf %213, %214 : vector<8x128xf32>
    %216 = vector.extract_strided_slice %215 {offsets = [0, 0], sizes = [8, 32], strides = [1, 1]} : vector<8x128xf32> to vector<8x32xf32>
    %217 = arith.negf %216 : vector<8x32xf32>
    %218 = math.exp %217 : vector<8x32xf32>
    %cst_41 = arith.constant 1.000000e+00 : f32
    %219 = vector.broadcast %cst_41 : f32 to vector<8x32xf32>
    %220 = arith.addf %219, %218 : vector<8x32xf32>
    %221 = arith.divf %219, %220 : vector<8x32xf32>
    %222 = vector.extract_strided_slice %215 {offsets = [0, 32], sizes = [8, 32], strides = [1, 1]} : vector<8x128xf32> to vector<8x32xf32>
    %223 = arith.negf %222 : vector<8x32xf32>
    %224 = math.exp %223 : vector<8x32xf32>
    %cst_42 = arith.constant 1.000000e+00 : f32
    %225 = vector.broadcast %cst_42 : f32 to vector<8x32xf32>
    %226 = arith.addf %225, %224 : vector<8x32xf32>
    %227 = arith.divf %225, %226 : vector<8x32xf32>
    %228 = vector.extract_strided_slice %215 {offsets = [0, 64], sizes = [8, 32], strides = [1, 1]} : vector<8x128xf32> to vector<8x32xf32>
    %229 = math.tanh %228 : vector<8x32xf32>
    %230 = vector.extract_strided_slice %215 {offsets = [0, 96], sizes = [8, 32], strides = [1, 1]} : vector<8x128xf32> to vector<8x32xf32>
    %231 = arith.negf %230 : vector<8x32xf32>
    %232 = math.exp %231 : vector<8x32xf32>
    %cst_43 = arith.constant 1.000000e+00 : f32
    %233 = vector.broadcast %cst_43 : f32 to vector<8x32xf32>
    %234 = arith.addf %233, %232 : vector<8x32xf32>
    %235 = arith.divf %233, %234 : vector<8x32xf32>
    %236 = arith.mulf %227, %210 : vector<8x32xf32>
    %237 = arith.mulf %221, %229 : vector<8x32xf32>
    %238 = arith.addf %236, %237 : vector<8x32xf32>
    %239 = math.tanh %238 : vector<8x32xf32>
    %240 = arith.mulf %235, %239 : vector<8x32xf32>
    %c0_44 = arith.constant 0 : index
    %c0_45 = arith.constant 0 : index
    %241 = vector.load %arg9[%c0_44, %c0_45] : memref<8x32xf32, #tpu.memory_space<vmem>>, vector<8x32xf32>
    tpu.vector_store %arg9[%c0_44, %c0_45], %240 {strides = array<i32>} : memref<8x32xf32, #tpu.memory_space<vmem>>, vector<8x32xf32>,
    %c0_46 = arith.constant 0 : index
    %c0_47 = arith.constant 0 : index
    %242 = vector.load %arg10[%c0_46, %c0_47] : memref<8x32xf32, #tpu.memory_space<vmem>>, vector<8x32xf32>
    tpu.vector_store %arg10[%c0_46, %c0_47], %238 {strides = array<i32>} : memref<8x32xf32, #tpu.memory_space<vmem>>, vector<8x32xf32>,
    %c0_i32_48 = arith.constant 0 : i32
    %243 = arith.cmpi eq, %arg1, %c0_i32_48 : i32
    %244 = arith.extui %243 : i1 to i32
    %c0_i32_49 = arith.constant 0 : i32
    %245 = arith.cmpi ne, %244, %c0_i32_49 : i32
    scf.if %245 {
      %c0_50 = arith.constant 0 : index
      %c0_51 = arith.constant 0 : index
      %246 = vector.load %arg6[%c0_50, %c0_51] : memref<32x32xf32, #tpu.memory_space<vmem>>, vector<32x32xf32>
      %cst_52 = arith.constant dense<0.000000e+00> : vector<8x32xf32>
      %247 = tpu.matmul %240, %246, %cst_52 {dimension_numbers = #tpu.dot_dimension_numbers<[1], [0], [0], [1], [0, 0, 1, 1], [], []>, precision = #tpu.contract_precision<fp32>} : vector<8x32xf32>, vector<32x32xf32>, vector<8x32xf32> -> vector<8x32xf32>
      %c0_53 = arith.constant 0 : index
      %c0_54 = arith.constant 0 : index
      %248 = vector.load %arg7[%c0_53, %c0_54] : memref<1x32xf32, #tpu.memory_space<vmem>>, vector<1x32xf32>
      %249 = vector.broadcast %248 : vector<1x32xf32> to vector<8x32xf32>
      %250 = arith.addf %247, %249 : vector<8x32xf32>
      %c0_55 = arith.constant 0 : index
      %c0_56 = arith.constant 0 : index
      %251 = vector.load %arg8[%c0_55, %c0_56] : memref<8x32xf32, #tpu.memory_space<vmem>>, vector<8x32xf32>
      tpu.vector_store %arg8[%c0_55, %c0_56], %250 {strides = array<i32>} : memref<8x32xf32, #tpu.memory_space<vmem>>, vector<8x32xf32>,
    } else {
    }
    return
  }
  func.func @transform_0(%arg0: i32, %arg1: i32) -> (i32, i32) {
    %c1_i32 = arith.constant 1 : i32
    %0 = arith.muli %arg0, %c1_i32 : i32
    %1 = arith.addi %0, %arg1 : i32
    %c0_i32 = arith.constant 0 : i32
    %c0_i32_0 = arith.constant 0 : i32
    return %1, %c0_i32 : i32, i32
  }
  func.func @transform_1(%arg0: i32, %arg1: i32) -> (i32, i32) {
    %c0_i32 = arith.constant 0 : i32
    %c0_i32_0 = arith.constant 0 : i32
    %c0_i32_1 = arith.constant 0 : i32
    return %c0_i32, %c0_i32_0 : i32, i32
  }
  func.func @transform_2(%arg0: i32, %arg1: i32) -> (i32, i32) {
    %c0_i32 = arith.constant 0 : i32
    %c0_i32_0 = arith.constant 0 : i32
    %c0_i32_1 = arith.constant 0 : i32
    return %c0_i32, %c0_i32_0 : i32, i32
  }
  func.func @transform_3(%arg0: i32, %arg1: i32) -> (i32, i32) {
    %c0_i32 = arith.constant 0 : i32
    %c0_i32_0 = arith.constant 0 : i32
    %c0_i32_1 = arith.constant 0 : i32
    return %c0_i32, %c0_i32_0 : i32, i32
  }
  func.func @transform_4(%arg0: i32, %arg1: i32) -> (i32, i32) {
    %c0_i32 = arith.constant 0 : i32
    %c0_i32_0 = arith.constant 0 : i32
    %c0_i32_1 = arith.constant 0 : i32
    return %c0_i32, %c0_i32_0 : i32, i32
  }
  func.func @transform_5(%arg0: i32, %arg1: i32) -> (i32, i32) {
    %c0_i32 = arith.constant 0 : i32
    %c0_i32_0 = arith.constant 0 : i32
    %c0_i32_1 = arith.constant 0 : i32
    return %c0_i32, %c0_i32_0 : i32, i32
  }
  func.func @transform_6(%arg0: i32, %arg1: i32) -> (i32, i32) {
    %c0_i32 = arith.constant 0 : i32
    %c0_i32_0 = arith.constant 0 : i32
    return %arg0, %c0_i32 : i32, i32
  }
}

module attributes {stable_mosaic.version = 11 : i64} {
  func.func @charlstm_kernel(%arg0: i32, %arg1: i32, %arg2: memref<64x1xi32, #tpu.memory_space<vmem>>, %arg3: memref<32x128xf32, #tpu.memory_space<vmem>>, %arg4: memref<32x128xf32, #tpu.memory_space<vmem>>, %arg5: memref<1x128xf32, #tpu.memory_space<vmem>>, %arg6: memref<32x32xf32, #tpu.memory_space<vmem>>, %arg7: memref<1x32xf32, #tpu.memory_space<vmem>>, %arg8: memref<8x32xf32, #tpu.memory_space<vmem>>, %arg9: memref<8x32xf32, #tpu.memory_space<vmem>>, %arg10: memref<8x32xf32, #tpu.memory_space<vmem>>) attributes {dimension_semantics = [#tpu.dimension_semantics<parallel>, #tpu.dimension_semantics<arbitrary>], iteration_bounds = array<i64: 1, 1>, scalar_prefetch = 0 : i64, scratch_operands = 2 : i64, tpu.core_type = #tpu.core_type<tc>, window_params = [{transform_indices = @transform_0, window_bounds = array<i64: 64, 1>}, {pipeline_mode = #tpu.pipeline_mode<synchronous>, transform_indices = @transform_1, window_bounds = array<i64: 32, 128>}, {pipeline_mode = #tpu.pipeline_mode<synchronous>, transform_indices = @transform_2, window_bounds = array<i64: 32, 128>}, {pipeline_mode = #tpu.pipeline_mode<synchronous>, transform_indices = @transform_3, window_bounds = array<i64: 1, 128>}, {pipeline_mode = #tpu.pipeline_mode<synchronous>, transform_indices = @transform_4, window_bounds = array<i64: 32, 32>}, {pipeline_mode = #tpu.pipeline_mode<synchronous>, transform_indices = @transform_5, window_bounds = array<i64: 1, 32>}, {transform_indices = @transform_6, window_bounds = array<i64: 8, 32>}]} {
    %c0_i32 = arith.constant 0 : i32
    %0 = arith.cmpi eq, %arg1, %c0_i32 : i32
    %1 = arith.extui %0 : i1 to i32
    %c0_i32_0 = arith.constant 0 : i32
    %2 = arith.cmpi ne, %1, %c0_i32_0 : i32
    scf.if %2 {
      %cst_50 = arith.constant 0.000000e+00 : f32
      %246 = vector.broadcast %cst_50 : f32 to vector<8x32xf32>
      %c0_51 = arith.constant 0 : index
      %c0_52 = arith.constant 0 : index
      %247 = vector.load %arg9[%c0_51, %c0_52] : memref<8x32xf32, #tpu.memory_space<vmem>>, vector<8x32xf32>
      tpu.vector_store %arg9[%c0_51, %c0_52], %246 {strides = array<i32>} : memref<8x32xf32, #tpu.memory_space<vmem>>, vector<8x32xf32>,
      %cst_53 = arith.constant 0.000000e+00 : f32
      %248 = vector.broadcast %cst_53 : f32 to vector<8x32xf32>
      %c0_54 = arith.constant 0 : index
      %c0_55 = arith.constant 0 : index
      %249 = vector.load %arg10[%c0_54, %c0_55] : memref<8x32xf32, #tpu.memory_space<vmem>>, vector<8x32xf32>
      tpu.vector_store %arg10[%c0_54, %c0_55], %248 {strides = array<i32>} : memref<8x32xf32, #tpu.memory_space<vmem>>, vector<8x32xf32>,
    } else {
    }
    %c0 = arith.constant 0 : index
    %c0_1 = arith.constant 0 : index
    %3 = vector.load %arg2[%c0, %c0_1] : memref<64x1xi32, #tpu.memory_space<vmem>>, vector<64x1xi32>
    %4 = tpu.iota {dimensions = array<i32: 1>} : vector<64x32xi32>
    %5 = vector.broadcast %3 : vector<64x1xi32> to vector<64x32xi32>
    %6 = arith.cmpi eq, %4, %5 : vector<64x32xi32>
    %7 = arith.extui %6 : vector<64x32xi1> to vector<64x32xi32>
    %8 = arith.sitofp %7 : vector<64x32xi32> to vector<64x32xf32>
    %c0_2 = arith.constant 0 : index
    %c0_3 = arith.constant 0 : index
    %9 = vector.load %arg3[%c0_2, %c0_3] : memref<32x128xf32, #tpu.memory_space<vmem>>, vector<32x128xf32>
    %cst = arith.constant dense<0.000000e+00> : vector<64x128xf32>
    %10 = tpu.matmul %8, %9, %cst {dimension_numbers = #tpu.dot_dimension_numbers<[1], [0], [0], [1], [0, 0, 1, 1], [], []>, precision = #tpu.contract_precision<fp32>} : vector<64x32xf32>, vector<32x128xf32>, vector<64x128xf32> -> vector<64x128xf32>
    %c0_4 = arith.constant 0 : index
    %c0_5 = arith.constant 0 : index
    %11 = vector.load %arg5[%c0_4, %c0_5] : memref<1x128xf32, #tpu.memory_space<vmem>>, vector<1x128xf32>
    %12 = vector.broadcast %11 : vector<1x128xf32> to vector<64x128xf32>
    %13 = arith.addf %10, %12 : vector<64x128xf32>
    %c0_6 = arith.constant 0 : index
    %c0_7 = arith.constant 0 : index
    %14 = vector.load %arg4[%c0_6, %c0_7] : memref<32x128xf32, #tpu.memory_space<vmem>>, vector<32x128xf32>
    %c0_8 = arith.constant 0 : index
    %c0_9 = arith.constant 0 : index
    %15 = vector.load %arg9[%c0_8, %c0_9] : memref<8x32xf32, #tpu.memory_space<vmem>>, vector<8x32xf32>
    %c0_10 = arith.constant 0 : index
    %c0_11 = arith.constant 0 : index
    %16 = vector.load %arg10[%c0_10, %c0_11] : memref<8x32xf32, #tpu.memory_space<vmem>>, vector<8x32xf32>
    %17 = vector.extract_strided_slice %13 {offsets = [0, 0], sizes = [8, 128], strides = [1, 1]} : vector<64x128xf32> to vector<8x128xf32>
    %cst_12 = arith.constant dense<0.000000e+00> : vector<8x128xf32>
    %18 = tpu.matmul %15, %14, %cst_12 {dimension_numbers = #tpu.dot_dimension_numbers<[1], [0], [0], [1], [0, 0, 1, 1], [], []>, precision = #tpu.contract_precision<fp32>} : vector<8x32xf32>, vector<32x128xf32>, vector<8x128xf32> -> vector<8x128xf32>
    %19 = arith.addf %17, %18 : vector<8x128xf32>
    %20 = vector.extract_strided_slice %19 {offsets = [0, 0], sizes = [8, 32], strides = [1, 1]} : vector<8x128xf32> to vector<8x32xf32>
    %21 = arith.negf %20 : vector<8x32xf32>
    %22 = math.exp %21 : vector<8x32xf32>
    %cst_13 = arith.constant 1.000000e+00 : f32
    %23 = vector.broadcast %cst_13 : f32 to vector<8x32xf32>
    %24 = arith.addf %23, %22 : vector<8x32xf32>
    %25 = arith.divf %23, %24 : vector<8x32xf32>
    %26 = vector.extract_strided_slice %19 {offsets = [0, 32], sizes = [8, 32], strides = [1, 1]} : vector<8x128xf32> to vector<8x32xf32>
    %27 = arith.negf %26 : vector<8x32xf32>
    %28 = math.exp %27 : vector<8x32xf32>
    %cst_14 = arith.constant 1.000000e+00 : f32
    %29 = vector.broadcast %cst_14 : f32 to vector<8x32xf32>
    %30 = arith.addf %29, %28 : vector<8x32xf32>
    %31 = arith.divf %29, %30 : vector<8x32xf32>
    %32 = vector.extract_strided_slice %19 {offsets = [0, 64], sizes = [8, 32], strides = [1, 1]} : vector<8x128xf32> to vector<8x32xf32>
    %33 = math.tanh %32 : vector<8x32xf32>
    %34 = vector.extract_strided_slice %19 {offsets = [0, 96], sizes = [8, 32], strides = [1, 1]} : vector<8x128xf32> to vector<8x32xf32>
    %35 = arith.negf %34 : vector<8x32xf32>
    %36 = math.exp %35 : vector<8x32xf32>
    %cst_15 = arith.constant 1.000000e+00 : f32
    %37 = vector.broadcast %cst_15 : f32 to vector<8x32xf32>
    %38 = arith.addf %37, %36 : vector<8x32xf32>
    %39 = arith.divf %37, %38 : vector<8x32xf32>
    %40 = arith.mulf %31, %16 : vector<8x32xf32>
    %41 = arith.mulf %25, %33 : vector<8x32xf32>
    %42 = arith.addf %40, %41 : vector<8x32xf32>
    %43 = math.tanh %42 : vector<8x32xf32>
    %44 = arith.mulf %39, %43 : vector<8x32xf32>
    %45 = vector.extract_strided_slice %13 {offsets = [8, 0], sizes = [8, 128], strides = [1, 1]} : vector<64x128xf32> to vector<8x128xf32>
    %cst_16 = arith.constant dense<0.000000e+00> : vector<8x128xf32>
    %46 = tpu.matmul %44, %14, %cst_16 {dimension_numbers = #tpu.dot_dimension_numbers<[1], [0], [0], [1], [0, 0, 1, 1], [], []>, precision = #tpu.contract_precision<fp32>} : vector<8x32xf32>, vector<32x128xf32>, vector<8x128xf32> -> vector<8x128xf32>
    %47 = arith.addf %45, %46 : vector<8x128xf32>
    %48 = vector.extract_strided_slice %47 {offsets = [0, 0], sizes = [8, 32], strides = [1, 1]} : vector<8x128xf32> to vector<8x32xf32>
    %49 = arith.negf %48 : vector<8x32xf32>
    %50 = math.exp %49 : vector<8x32xf32>
    %cst_17 = arith.constant 1.000000e+00 : f32
    %51 = vector.broadcast %cst_17 : f32 to vector<8x32xf32>
    %52 = arith.addf %51, %50 : vector<8x32xf32>
    %53 = arith.divf %51, %52 : vector<8x32xf32>
    %54 = vector.extract_strided_slice %47 {offsets = [0, 32], sizes = [8, 32], strides = [1, 1]} : vector<8x128xf32> to vector<8x32xf32>
    %55 = arith.negf %54 : vector<8x32xf32>
    %56 = math.exp %55 : vector<8x32xf32>
    %cst_18 = arith.constant 1.000000e+00 : f32
    %57 = vector.broadcast %cst_18 : f32 to vector<8x32xf32>
    %58 = arith.addf %57, %56 : vector<8x32xf32>
    %59 = arith.divf %57, %58 : vector<8x32xf32>
    %60 = vector.extract_strided_slice %47 {offsets = [0, 64], sizes = [8, 32], strides = [1, 1]} : vector<8x128xf32> to vector<8x32xf32>
    %61 = math.tanh %60 : vector<8x32xf32>
    %62 = vector.extract_strided_slice %47 {offsets = [0, 96], sizes = [8, 32], strides = [1, 1]} : vector<8x128xf32> to vector<8x32xf32>
    %63 = arith.negf %62 : vector<8x32xf32>
    %64 = math.exp %63 : vector<8x32xf32>
    %cst_19 = arith.constant 1.000000e+00 : f32
    %65 = vector.broadcast %cst_19 : f32 to vector<8x32xf32>
    %66 = arith.addf %65, %64 : vector<8x32xf32>
    %67 = arith.divf %65, %66 : vector<8x32xf32>
    %68 = arith.mulf %59, %42 : vector<8x32xf32>
    %69 = arith.mulf %53, %61 : vector<8x32xf32>
    %70 = arith.addf %68, %69 : vector<8x32xf32>
    %71 = math.tanh %70 : vector<8x32xf32>
    %72 = arith.mulf %67, %71 : vector<8x32xf32>
    %73 = vector.extract_strided_slice %13 {offsets = [16, 0], sizes = [8, 128], strides = [1, 1]} : vector<64x128xf32> to vector<8x128xf32>
    %cst_20 = arith.constant dense<0.000000e+00> : vector<8x128xf32>
    %74 = tpu.matmul %72, %14, %cst_20 {dimension_numbers = #tpu.dot_dimension_numbers<[1], [0], [0], [1], [0, 0, 1, 1], [], []>, precision = #tpu.contract_precision<fp32>} : vector<8x32xf32>, vector<32x128xf32>, vector<8x128xf32> -> vector<8x128xf32>
    %75 = arith.addf %73, %74 : vector<8x128xf32>
    %76 = vector.extract_strided_slice %75 {offsets = [0, 0], sizes = [8, 32], strides = [1, 1]} : vector<8x128xf32> to vector<8x32xf32>
    %77 = arith.negf %76 : vector<8x32xf32>
    %78 = math.exp %77 : vector<8x32xf32>
    %cst_21 = arith.constant 1.000000e+00 : f32
    %79 = vector.broadcast %cst_21 : f32 to vector<8x32xf32>
    %80 = arith.addf %79, %78 : vector<8x32xf32>
    %81 = arith.divf %79, %80 : vector<8x32xf32>
    %82 = vector.extract_strided_slice %75 {offsets = [0, 32], sizes = [8, 32], strides = [1, 1]} : vector<8x128xf32> to vector<8x32xf32>
    %83 = arith.negf %82 : vector<8x32xf32>
    %84 = math.exp %83 : vector<8x32xf32>
    %cst_22 = arith.constant 1.000000e+00 : f32
    %85 = vector.broadcast %cst_22 : f32 to vector<8x32xf32>
    %86 = arith.addf %85, %84 : vector<8x32xf32>
    %87 = arith.divf %85, %86 : vector<8x32xf32>
    %88 = vector.extract_strided_slice %75 {offsets = [0, 64], sizes = [8, 32], strides = [1, 1]} : vector<8x128xf32> to vector<8x32xf32>
    %89 = math.tanh %88 : vector<8x32xf32>
    %90 = vector.extract_strided_slice %75 {offsets = [0, 96], sizes = [8, 32], strides = [1, 1]} : vector<8x128xf32> to vector<8x32xf32>
    %91 = arith.negf %90 : vector<8x32xf32>
    %92 = math.exp %91 : vector<8x32xf32>
    %cst_23 = arith.constant 1.000000e+00 : f32
    %93 = vector.broadcast %cst_23 : f32 to vector<8x32xf32>
    %94 = arith.addf %93, %92 : vector<8x32xf32>
    %95 = arith.divf %93, %94 : vector<8x32xf32>
    %96 = arith.mulf %87, %70 : vector<8x32xf32>
    %97 = arith.mulf %81, %89 : vector<8x32xf32>
    %98 = arith.addf %96, %97 : vector<8x32xf32>
    %99 = math.tanh %98 : vector<8x32xf32>
    %100 = arith.mulf %95, %99 : vector<8x32xf32>
    %101 = vector.extract_strided_slice %13 {offsets = [24, 0], sizes = [8, 128], strides = [1, 1]} : vector<64x128xf32> to vector<8x128xf32>
    %cst_24 = arith.constant dense<0.000000e+00> : vector<8x128xf32>
    %102 = tpu.matmul %100, %14, %cst_24 {dimension_numbers = #tpu.dot_dimension_numbers<[1], [0], [0], [1], [0, 0, 1, 1], [], []>, precision = #tpu.contract_precision<fp32>} : vector<8x32xf32>, vector<32x128xf32>, vector<8x128xf32> -> vector<8x128xf32>
    %103 = arith.addf %101, %102 : vector<8x128xf32>
    %104 = vector.extract_strided_slice %103 {offsets = [0, 0], sizes = [8, 32], strides = [1, 1]} : vector<8x128xf32> to vector<8x32xf32>
    %105 = arith.negf %104 : vector<8x32xf32>
    %106 = math.exp %105 : vector<8x32xf32>
    %cst_25 = arith.constant 1.000000e+00 : f32
    %107 = vector.broadcast %cst_25 : f32 to vector<8x32xf32>
    %108 = arith.addf %107, %106 : vector<8x32xf32>
    %109 = arith.divf %107, %108 : vector<8x32xf32>
    %110 = vector.extract_strided_slice %103 {offsets = [0, 32], sizes = [8, 32], strides = [1, 1]} : vector<8x128xf32> to vector<8x32xf32>
    %111 = arith.negf %110 : vector<8x32xf32>
    %112 = math.exp %111 : vector<8x32xf32>
    %cst_26 = arith.constant 1.000000e+00 : f32
    %113 = vector.broadcast %cst_26 : f32 to vector<8x32xf32>
    %114 = arith.addf %113, %112 : vector<8x32xf32>
    %115 = arith.divf %113, %114 : vector<8x32xf32>
    %116 = vector.extract_strided_slice %103 {offsets = [0, 64], sizes = [8, 32], strides = [1, 1]} : vector<8x128xf32> to vector<8x32xf32>
    %117 = math.tanh %116 : vector<8x32xf32>
    %118 = vector.extract_strided_slice %103 {offsets = [0, 96], sizes = [8, 32], strides = [1, 1]} : vector<8x128xf32> to vector<8x32xf32>
    %119 = arith.negf %118 : vector<8x32xf32>
    %120 = math.exp %119 : vector<8x32xf32>
    %cst_27 = arith.constant 1.000000e+00 : f32
    %121 = vector.broadcast %cst_27 : f32 to vector<8x32xf32>
    %122 = arith.addf %121, %120 : vector<8x32xf32>
    %123 = arith.divf %121, %122 : vector<8x32xf32>
    %124 = arith.mulf %115, %98 : vector<8x32xf32>
    %125 = arith.mulf %109, %117 : vector<8x32xf32>
    %126 = arith.addf %124, %125 : vector<8x32xf32>
    %127 = math.tanh %126 : vector<8x32xf32>
    %128 = arith.mulf %123, %127 : vector<8x32xf32>
    %129 = vector.extract_strided_slice %13 {offsets = [32, 0], sizes = [8, 128], strides = [1, 1]} : vector<64x128xf32> to vector<8x128xf32>
    %cst_28 = arith.constant dense<0.000000e+00> : vector<8x128xf32>
    %130 = tpu.matmul %128, %14, %cst_28 {dimension_numbers = #tpu.dot_dimension_numbers<[1], [0], [0], [1], [0, 0, 1, 1], [], []>, precision = #tpu.contract_precision<fp32>} : vector<8x32xf32>, vector<32x128xf32>, vector<8x128xf32> -> vector<8x128xf32>
    %131 = arith.addf %129, %130 : vector<8x128xf32>
    %132 = vector.extract_strided_slice %131 {offsets = [0, 0], sizes = [8, 32], strides = [1, 1]} : vector<8x128xf32> to vector<8x32xf32>
    %133 = arith.negf %132 : vector<8x32xf32>
    %134 = math.exp %133 : vector<8x32xf32>
    %cst_29 = arith.constant 1.000000e+00 : f32
    %135 = vector.broadcast %cst_29 : f32 to vector<8x32xf32>
    %136 = arith.addf %135, %134 : vector<8x32xf32>
    %137 = arith.divf %135, %136 : vector<8x32xf32>
    %138 = vector.extract_strided_slice %131 {offsets = [0, 32], sizes = [8, 32], strides = [1, 1]} : vector<8x128xf32> to vector<8x32xf32>
    %139 = arith.negf %138 : vector<8x32xf32>
    %140 = math.exp %139 : vector<8x32xf32>
    %cst_30 = arith.constant 1.000000e+00 : f32
    %141 = vector.broadcast %cst_30 : f32 to vector<8x32xf32>
    %142 = arith.addf %141, %140 : vector<8x32xf32>
    %143 = arith.divf %141, %142 : vector<8x32xf32>
    %144 = vector.extract_strided_slice %131 {offsets = [0, 64], sizes = [8, 32], strides = [1, 1]} : vector<8x128xf32> to vector<8x32xf32>
    %145 = math.tanh %144 : vector<8x32xf32>
    %146 = vector.extract_strided_slice %131 {offsets = [0, 96], sizes = [8, 32], strides = [1, 1]} : vector<8x128xf32> to vector<8x32xf32>
    %147 = arith.negf %146 : vector<8x32xf32>
    %148 = math.exp %147 : vector<8x32xf32>
    %cst_31 = arith.constant 1.000000e+00 : f32
    %149 = vector.broadcast %cst_31 : f32 to vector<8x32xf32>
    %150 = arith.addf %149, %148 : vector<8x32xf32>
    %151 = arith.divf %149, %150 : vector<8x32xf32>
    %152 = arith.mulf %143, %126 : vector<8x32xf32>
    %153 = arith.mulf %137, %145 : vector<8x32xf32>
    %154 = arith.addf %152, %153 : vector<8x32xf32>
    %155 = math.tanh %154 : vector<8x32xf32>
    %156 = arith.mulf %151, %155 : vector<8x32xf32>
    %157 = vector.extract_strided_slice %13 {offsets = [40, 0], sizes = [8, 128], strides = [1, 1]} : vector<64x128xf32> to vector<8x128xf32>
    %cst_32 = arith.constant dense<0.000000e+00> : vector<8x128xf32>
    %158 = tpu.matmul %156, %14, %cst_32 {dimension_numbers = #tpu.dot_dimension_numbers<[1], [0], [0], [1], [0, 0, 1, 1], [], []>, precision = #tpu.contract_precision<fp32>} : vector<8x32xf32>, vector<32x128xf32>, vector<8x128xf32> -> vector<8x128xf32>
    %159 = arith.addf %157, %158 : vector<8x128xf32>
    %160 = vector.extract_strided_slice %159 {offsets = [0, 0], sizes = [8, 32], strides = [1, 1]} : vector<8x128xf32> to vector<8x32xf32>
    %161 = arith.negf %160 : vector<8x32xf32>
    %162 = math.exp %161 : vector<8x32xf32>
    %cst_33 = arith.constant 1.000000e+00 : f32
    %163 = vector.broadcast %cst_33 : f32 to vector<8x32xf32>
    %164 = arith.addf %163, %162 : vector<8x32xf32>
    %165 = arith.divf %163, %164 : vector<8x32xf32>
    %166 = vector.extract_strided_slice %159 {offsets = [0, 32], sizes = [8, 32], strides = [1, 1]} : vector<8x128xf32> to vector<8x32xf32>
    %167 = arith.negf %166 : vector<8x32xf32>
    %168 = math.exp %167 : vector<8x32xf32>
    %cst_34 = arith.constant 1.000000e+00 : f32
    %169 = vector.broadcast %cst_34 : f32 to vector<8x32xf32>
    %170 = arith.addf %169, %168 : vector<8x32xf32>
    %171 = arith.divf %169, %170 : vector<8x32xf32>
    %172 = vector.extract_strided_slice %159 {offsets = [0, 64], sizes = [8, 32], strides = [1, 1]} : vector<8x128xf32> to vector<8x32xf32>
    %173 = math.tanh %172 : vector<8x32xf32>
    %174 = vector.extract_strided_slice %159 {offsets = [0, 96], sizes = [8, 32], strides = [1, 1]} : vector<8x128xf32> to vector<8x32xf32>
    %175 = arith.negf %174 : vector<8x32xf32>
    %176 = math.exp %175 : vector<8x32xf32>
    %cst_35 = arith.constant 1.000000e+00 : f32
    %177 = vector.broadcast %cst_35 : f32 to vector<8x32xf32>
    %178 = arith.addf %177, %176 : vector<8x32xf32>
    %179 = arith.divf %177, %178 : vector<8x32xf32>
    %180 = arith.mulf %171, %154 : vector<8x32xf32>
    %181 = arith.mulf %165, %173 : vector<8x32xf32>
    %182 = arith.addf %180, %181 : vector<8x32xf32>
    %183 = math.tanh %182 : vector<8x32xf32>
    %184 = arith.mulf %179, %183 : vector<8x32xf32>
    %185 = vector.extract_strided_slice %13 {offsets = [48, 0], sizes = [8, 128], strides = [1, 1]} : vector<64x128xf32> to vector<8x128xf32>
    %cst_36 = arith.constant dense<0.000000e+00> : vector<8x128xf32>
    %186 = tpu.matmul %184, %14, %cst_36 {dimension_numbers = #tpu.dot_dimension_numbers<[1], [0], [0], [1], [0, 0, 1, 1], [], []>, precision = #tpu.contract_precision<fp32>} : vector<8x32xf32>, vector<32x128xf32>, vector<8x128xf32> -> vector<8x128xf32>
    %187 = arith.addf %185, %186 : vector<8x128xf32>
    %188 = vector.extract_strided_slice %187 {offsets = [0, 0], sizes = [8, 32], strides = [1, 1]} : vector<8x128xf32> to vector<8x32xf32>
    %189 = arith.negf %188 : vector<8x32xf32>
    %190 = math.exp %189 : vector<8x32xf32>
    %cst_37 = arith.constant 1.000000e+00 : f32
    %191 = vector.broadcast %cst_37 : f32 to vector<8x32xf32>
    %192 = arith.addf %191, %190 : vector<8x32xf32>
    %193 = arith.divf %191, %192 : vector<8x32xf32>
    %194 = vector.extract_strided_slice %187 {offsets = [0, 32], sizes = [8, 32], strides = [1, 1]} : vector<8x128xf32> to vector<8x32xf32>
    %195 = arith.negf %194 : vector<8x32xf32>
    %196 = math.exp %195 : vector<8x32xf32>
    %cst_38 = arith.constant 1.000000e+00 : f32
    %197 = vector.broadcast %cst_38 : f32 to vector<8x32xf32>
    %198 = arith.addf %197, %196 : vector<8x32xf32>
    %199 = arith.divf %197, %198 : vector<8x32xf32>
    %200 = vector.extract_strided_slice %187 {offsets = [0, 64], sizes = [8, 32], strides = [1, 1]} : vector<8x128xf32> to vector<8x32xf32>
    %201 = math.tanh %200 : vector<8x32xf32>
    %202 = vector.extract_strided_slice %187 {offsets = [0, 96], sizes = [8, 32], strides = [1, 1]} : vector<8x128xf32> to vector<8x32xf32>
    %203 = arith.negf %202 : vector<8x32xf32>
    %204 = math.exp %203 : vector<8x32xf32>
    %cst_39 = arith.constant 1.000000e+00 : f32
    %205 = vector.broadcast %cst_39 : f32 to vector<8x32xf32>
    %206 = arith.addf %205, %204 : vector<8x32xf32>
    %207 = arith.divf %205, %206 : vector<8x32xf32>
    %208 = arith.mulf %199, %182 : vector<8x32xf32>
    %209 = arith.mulf %193, %201 : vector<8x32xf32>
    %210 = arith.addf %208, %209 : vector<8x32xf32>
    %211 = math.tanh %210 : vector<8x32xf32>
    %212 = arith.mulf %207, %211 : vector<8x32xf32>
    %213 = vector.extract_strided_slice %13 {offsets = [56, 0], sizes = [8, 128], strides = [1, 1]} : vector<64x128xf32> to vector<8x128xf32>
    %cst_40 = arith.constant dense<0.000000e+00> : vector<8x128xf32>
    %214 = tpu.matmul %212, %14, %cst_40 {dimension_numbers = #tpu.dot_dimension_numbers<[1], [0], [0], [1], [0, 0, 1, 1], [], []>, precision = #tpu.contract_precision<fp32>} : vector<8x32xf32>, vector<32x128xf32>, vector<8x128xf32> -> vector<8x128xf32>
    %215 = arith.addf %213, %214 : vector<8x128xf32>
    %216 = vector.extract_strided_slice %215 {offsets = [0, 0], sizes = [8, 32], strides = [1, 1]} : vector<8x128xf32> to vector<8x32xf32>
    %217 = arith.negf %216 : vector<8x32xf32>
    %218 = math.exp %217 : vector<8x32xf32>
    %cst_41 = arith.constant 1.000000e+00 : f32
    %219 = vector.broadcast %cst_41 : f32 to vector<8x32xf32>
    %220 = arith.addf %219, %218 : vector<8x32xf32>
    %221 = arith.divf %219, %220 : vector<8x32xf32>
    %222 = vector.extract_strided_slice %215 {offsets = [0, 32], sizes = [8, 32], strides = [1, 1]} : vector<8x128xf32> to vector<8x32xf32>
    %223 = arith.negf %222 : vector<8x32xf32>
    %224 = math.exp %223 : vector<8x32xf32>
    %cst_42 = arith.constant 1.000000e+00 : f32
    %225 = vector.broadcast %cst_42 : f32 to vector<8x32xf32>
    %226 = arith.addf %225, %224 : vector<8x32xf32>
    %227 = arith.divf %225, %226 : vector<8x32xf32>
    %228 = vector.extract_strided_slice %215 {offsets = [0, 64], sizes = [8, 32], strides = [1, 1]} : vector<8x128xf32> to vector<8x32xf32>
    %229 = math.tanh %228 : vector<8x32xf32>
    %230 = vector.extract_strided_slice %215 {offsets = [0, 96], sizes = [8, 32], strides = [1, 1]} : vector<8x128xf32> to vector<8x32xf32>
    %231 = arith.negf %230 : vector<8x32xf32>
    %232 = math.exp %231 : vector<8x32xf32>
    %cst_43 = arith.constant 1.000000e+00 : f32
    %233 = vector.broadcast %cst_43 : f32 to vector<8x32xf32>
    %234 = arith.addf %233, %232 : vector<8x32xf32>
    %235 = arith.divf %233, %234 : vector<8x32xf32>
    %236 = arith.mulf %227, %210 : vector<8x32xf32>
    %237 = arith.mulf %221, %229 : vector<8x32xf32>
    %238 = arith.addf %236, %237 : vector<8x32xf32>
    %239 = math.tanh %238 : vector<8x32xf32>
    %240 = arith.mulf %235, %239 : vector<8x32xf32>
    %c0_44 = arith.constant 0 : index
    %c0_45 = arith.constant 0 : index
    %241 = vector.load %arg9[%c0_44, %c0_45] : memref<8x32xf32, #tpu.memory_space<vmem>>, vector<8x32xf32>
    tpu.vector_store %arg9[%c0_44, %c0_45], %240 {strides = array<i32>} : memref<8x32xf32, #tpu.memory_space<vmem>>, vector<8x32xf32>,
    %c0_46 = arith.constant 0 : index
    %c0_47 = arith.constant 0 : index
    %242 = vector.load %arg10[%c0_46, %c0_47] : memref<8x32xf32, #tpu.memory_space<vmem>>, vector<8x32xf32>
    tpu.vector_store %arg10[%c0_46, %c0_47], %238 {strides = array<i32>} : memref<8x32xf32, #tpu.memory_space<vmem>>, vector<8x32xf32>,
    %c0_i32_48 = arith.constant 0 : i32
    %243 = arith.cmpi eq, %arg1, %c0_i32_48 : i32
    %244 = arith.extui %243 : i1 to i32
    %c0_i32_49 = arith.constant 0 : i32
    %245 = arith.cmpi ne, %244, %c0_i32_49 : i32
    scf.if %245 {
      %c0_50 = arith.constant 0 : index
      %c0_51 = arith.constant 0 : index
      %246 = vector.load %arg6[%c0_50, %c0_51] : memref<32x32xf32, #tpu.memory_space<vmem>>, vector<32x32xf32>
      %cst_52 = arith.constant dense<0.000000e+00> : vector<8x32xf32>
      %247 = tpu.matmul %240, %246, %cst_52 {dimension_numbers = #tpu.dot_dimension_numbers<[1], [0], [0], [1], [0, 0, 1, 1], [], []>, precision = #tpu.contract_precision<fp32>} : vector<8x32xf32>, vector<32x32xf32>, vector<8x32xf32> -> vector<8x32xf32>
      %c0_53 = arith.constant 0 : index
      %c0_54 = arith.constant 0 : index
      %248 = vector.load %arg7[%c0_53, %c0_54] : memref<1x32xf32, #tpu.memory_space<vmem>>, vector<1x32xf32>
      %249 = vector.broadcast %248 : vector<1x32xf32> to vector<8x32xf32>
      %250 = arith.addf %247, %249 : vector<8x32xf32>
      %c0_55 = arith.constant 0 : index
      %c0_56 = arith.constant 0 : index
      %251 = vector.load %arg8[%c0_55, %c0_56] : memref<8x32xf32, #tpu.memory_space<vmem>>, vector<8x32xf32>
      tpu.vector_store %arg8[%c0_55, %c0_56], %250 {strides = array<i32>} : memref<8x32xf32, #tpu.memory_space<vmem>>, vector<8x32xf32>,
    } else {
    }
    return
  }
  func.func @transform_0(%arg0: i32, %arg1: i32) -> (i32, i32) {
    %c1_i32 = arith.constant 1 : i32
    %0 = arith.muli %arg0, %c1_i32 : i32
    %1 = arith.addi %0, %arg1 : i32
    %c0_i32 = arith.constant 0 : i32
    %c0_i32_0 = arith.constant 0 : i32
    return %1, %c0_i32 : i32, i32
  }
  func.func @transform_1(%arg0: i32, %arg1: i32) -> (i32, i32) {
    %c0_i32 = arith.constant 0 : i32
    %c0_i32_0 = arith.constant 0 : i32
    %c0_i32_1 = arith.constant 0 : i32
    return %c0_i32, %c0_i32_0 : i32, i32
  }
  func.func @transform_2(%arg0: i32, %arg1: i32) -> (i32, i32) {
    %c0_i32 = arith.constant 0 : i32
    %c0_i32_0 = arith.constant 0 : i32
    %c0_i32_1 = arith.constant 0 : i32
    return %c0_i32, %c0_i32_0 : i32, i32
  }
  func.func @transform_3(%arg0: i32, %arg1: i32) -> (i32, i32) {
    %c0_i32 = arith.constant 0 : i32
    %c0_i32_0 = arith.constant 0 : i32
    %c0_i32_1 = arith.constant 0 : i32
    return %c0_i32, %c0_i32_0 : i32, i32
  }
  func.func @transform_4(%arg0: i32, %arg1: i32) -> (i32, i32) {
    %c0_i32 = arith.constant 0 : i32
    %c0_i32_0 = arith.constant 0 : i32
    %c0_i32_1 = arith.constant 0 : i32
    return %c0_i32, %c0_i32_0 : i32, i32
  }
  func.func @transform_5(%arg0: i32, %arg1: i32) -> (i32, i32) {
    %c0_i32 = arith.constant 0 : i32
    %c0_i32_0 = arith.constant 0 : i32
    %c0_i32_1 = arith.constant 0 : i32
    return %c0_i32, %c0_i32_0 : i32, i32
  }
  func.func @transform_6(%arg0: i32, %arg1: i32) -> (i32, i32) {
    %c0_i32 = arith.constant 0 : i32
    %c0_i32_0 = arith.constant 0 : i32
    return %arg0, %c0_i32 : i32, i32
  }
}

</mosaic_0001>

<llo_original>
// kernel: tpu_custom_call.1
$region0: #{tpu_custom_call.1}
  #allocation0 [shape = 'u32[]', space=smem, size = 0x4, offset = 0x4, fixed_abs, tag = 'smem constant byte address 0x4 - core index']
  #allocation1 [shape = 'u32[144,128]{1,0:T(1,128)}', space=vmem, size = 0x12000, scoped, tag = 'internal scratch']
  #allocation2 [shape = 'f32[8,32]{1,0:T(8,128)}', space=vmem, size = 0x1000, scoped, tag = 'scratch operand']
  #allocation3 [shape = 'f32[8,32]{1,0:T(8,128)}', space=vmem, size = 0x1000, scoped, tag = 'scratch operand']
  %s0 = inlined_call_operand.vmem [shape: s32[64,1], index: 0, kind: input, shape index: {}]
  %s1 = inlined_call_operand.vmem [shape: f32[32,128], index: 1, kind: input, shape index: {}]
  %s2 = inlined_call_operand.vmem [shape: f32[32,128], index: 2, kind: input, shape index: {}]
  %s3 = inlined_call_operand.vmem [shape: f32[1,128], index: 3, kind: input, shape index: {}]
  %s4 = inlined_call_operand.hbm [shape: f32[32,32], index: 4, kind: input, shape index: {}]
  %s5 = inlined_call_operand.vmem [shape: f32[1,32], index: 5, kind: input, shape index: {}]
  %s6 = inlined_call_operand.hbm [shape: f32[8,32], index: 6, kind: output, shape index: {}]
  %s7 = sld [smem:[#allocation0]]
  $region46: #{tpu_custom_call.1} parent=0
    _
  %s9 = ssub.s32 1, %s7
  %s10 = scalar_select 0, %s9, %s7
  $region1: #{tpu_custom_call.1} parent=0
    #allocation4 [shape = 'u8[16384]{0}', space=vmem, size = 0x4000, scoped, tag = 'input window, operand 4, single buffered']
    #allocation5 [shape = 's32[1]{0}', space=sflag, size = 0x4, scoped, tag = 'scoped memory for tpu_custom_call.1']
    #allocation6 [shape = 's32[1]{0}', space=sflag, size = 0x4, scoped, tag = 'scoped memory for tpu_custom_call.1']
    #allocation7 [shape = 'u8[4096]{0}', space=vmem, size = 0x1000, scoped, tag = 'output window, operand 0, single buffered']
    %11 = vsyncpa [#allocation5], 0
    %12 = vsyncpa [#allocation6], 0
    // Predicated region
    $region2: #{tpu_custom_call.1} parent=1 // pred_check
      _
    $region3: #{tpu_custom_call.1} parent=1 // pred_check_branch
      %14 = sbr.rel (0) target = $region5
    $region4: #{tpu_custom_call.1} parent=1 // pred_region
      %s15 = sadd.s32 0, 0
      %s16 = smul.u32 8, %s15
      %p17 = scmp.lt.s32.totalorder %s16, 7
      %s18 = scalar_select %p17, %s16, 7
      %s19 = smul.addr %s18, 8
      %s20 = scalar_lea.vmem %s0, %s19
      %s21 = sadd.s32 0, 0
      %s22 = smul.u32 8, %s21
    $region5: #{tpu_custom_call.1} parent=1 // pred_fallthru
      _
    // Predicated region
    $region6: #{tpu_custom_call.1} parent=1 // pred_check
      _
    $region7: #{tpu_custom_call.1} parent=1 // pred_check_branch
      %24 = sbr.rel (0) target = $region9
    $region8: #{tpu_custom_call.1} parent=1 // pred_region
      _
    $region9: #{tpu_custom_call.1} parent=1 // pred_fallthru
      _
    // Predicated region
    $region10: #{tpu_custom_call.1} parent=1 // pred_check
      _
    $region11: #{tpu_custom_call.1} parent=1 // pred_check_branch
      %26 = sbr.rel (0) target = $region13
    $region12: #{tpu_custom_call.1} parent=1 // pred_region
      _
    $region13: #{tpu_custom_call.1} parent=1 // pred_fallthru
      _
    // Predicated region
    $region14: #{tpu_custom_call.1} parent=1 // pred_check
      _
    $region15: #{tpu_custom_call.1} parent=1 // pred_check_branch
      %28 = sbr.rel (0) target = $region17
    $region16: #{tpu_custom_call.1} parent=1 // pred_region
      _
    $region17: #{tpu_custom_call.1} parent=1 // pred_fallthru
      _
    // Predicated region
    $region18: #{tpu_custom_call.1} parent=1 // pred_check
      _
    $region19: #{tpu_custom_call.1} parent=1 // pred_check_branch
      %30 = sbr.rel (0) target = $region21
    $region20: #{tpu_custom_call.1} parent=1 // pred_region
      %s32 = ssub.s32 512, 512
      %33 = vsyncadd [#allocation5], %s32
      %s34 = sshll.u32 [#allocation4], 4
      %s35 = int_to_ptr.vmem [resolvable:$true] %s34
      %40 = dma.hbm_to_vmem [thread:$0]  %s4, 512, %s35, [#allocation5], 128, 128, 8
    $region21: #{tpu_custom_call.1} parent=1 // pred_fallthru
      _
    // Predicated region
    $region22: #{tpu_custom_call.1} parent=1 // pred_check
      _
    $region23: #{tpu_custom_call.1} parent=1 // pred_check_branch
      %42 = sbr.rel (0) target = $region25
    $region24: #{tpu_custom_call.1} parent=1 // pred_region
      _
    $region25: #{tpu_custom_call.1} parent=1 // pred_fallthru
      _
    // Predicated region
    $region26: #{tpu_custom_call.1} parent=1 // pred_check
      _
    $region27: #{tpu_custom_call.1} parent=1 // pred_check_branch
      %44 = sbr.rel (0) target = $region29
    $region28: #{tpu_custom_call.1} parent=1 // pred_region
      %45 = dma.done [#allocation5], 512
    $region29: #{tpu_custom_call.1} parent=1 // pred_fallthru
      _
    %s46 = sadd.s32 0, 0
    %s47 = smul.u32 8, %s46
    %p48 = scmp.lt.s32.totalorder %s47, 7
    %s49 = scalar_select %p48, %s47, 7
    %s50 = smul.addr %s49, 8
    %s51 = scalar_lea.vmem %s0, %s50
    %s52 = sadd.s32 0, 0
    %s53 = smul.u32 8, %s52
    %p54 = scmp.lt.s32.totalorder %s53, 7
    %s55 = scalar_select %p54, %s53, 7
    %s56 = smul.addr %s55, 8
    %s57 = scalar_lea.vmem %s0, %s56
    %s58 = sadd.s32 0, 0
    %s59 = smul.u32 8, %s58
    %p60 = scmp.eq.s32.totalorder 0, 0
    // Predicated region
    $region30: #{tpu_custom_call.1} parent=1 // pred_check
      %p61 = pneg %p60
    $region31: #{tpu_custom_call.1} parent=1 // pred_check_branch
      %63 = sbr.rel (%p61) target = $region33
    $region32: #{tpu_custom_call.1} parent=1 // pred_region
      %vm64 = vcmask 261120
      %65 = vst.msk [vmem:[#allocation2] sm:$0xff] %vm64, 0.0
      %66 = vst.msk [vmem:[#allocation3] sm:$0xff] %vm64, 0.0
    $region33: #{tpu_custom_call.1} parent=1 // pred_fallthru
      _
    %v67 = vld [vmem:[%s57] sm:$0xff]
    %v68 = vld [vmem:[%s57 + $0x8] sm:$0xff]
    %v69 = vld [vmem:[%s57 + $0x10] sm:$0xff]
    %v70 = vld [vmem:[%s57 + $0x18] sm:$0xff]
    %v71 = vld [vmem:[%s57 + $0x20] sm:$0xff]
    %v72 = vld [vmem:[%s57 + $0x28] sm:$0xff]
    %v73 = vld [vmem:[%s57 + $0x30] sm:$0xff]
    %v74 = vld [vmem:[%s57 + $0x38] sm:$0xff]
    %v75 = vlaneseq
    %v76 = vand.u32 %v75, 127
    %77 = vset.pattern.permute.xlu0 0
    %78 = vperm.xlu0 %77, %v67
    %v79 = vpop.permute.xlu0 %78
    %80 = vset.pattern.permute.xlu0 0
    %81 = vperm.xlu0 %80, %v68
    %v82 = vpop.permute.xlu0 %81
    %83 = vset.pattern.permute.xlu0 0
    %84 = vperm.xlu0 %83, %v69
    %v85 = vpop.permute.xlu0 %84
    %86 = vset.pattern.permute.xlu0 0
    %87 = vperm.xlu0 %86, %v70
    %v88 = vpop.permute.xlu0 %87
    %89 = vset.pattern.permute.xlu0 0
    %90 = vperm.xlu0 %89, %v71
    %v91 = vpop.permute.xlu0 %90
    %92 = vset.pattern.permute.xlu0 0
    %93 = vperm.xlu0 %92, %v72
    %v94 = vpop.permute.xlu0 %93
    %95 = vset.pattern.permute.xlu0 0
    %96 = vperm.xlu0 %95, %v73
    %v97 = vpop.permute.xlu0 %96
    %98 = vset.pattern.permute.xlu0 0
    %99 = vperm.xlu0 %98, %v74
    %v100 = vpop.permute.xlu0 %99
    %vm101 = vcmp.eq.s32.totalorder %v76, %v79
    %vm102 = vcmp.eq.s32.totalorder %v76, %v82
    %vm103 = vcmp.eq.s32.totalorder %v76, %v85
    %vm104 = vcmp.eq.s32.totalorder %v76, %v88
    %vm105 = vcmp.eq.s32.totalorder %v76, %v91
    %vm106 = vcmp.eq.s32.totalorder %v76, %v94
    %vm107 = vcmp.eq.s32.totalorder %v76, %v97
    %vm108 = vcmp.eq.s32.totalorder %v76, %v100
    %v109 = vsel %vm101, 1, 0
    %v110 = vsel %vm102, 1, 0
    %v111 = vsel %vm103, 1, 0
    %v112 = vsel %vm104, 1, 0
    %v113 = vsel %vm105, 1, 0
    %v114 = vsel %vm106, 1, 0
    %v115 = vsel %vm107, 1, 0
    %v116 = vsel %vm108, 1, 0
    %v117 = vcvt.s32.f32 %v109
    %v118 = vcvt.s32.f32 %v110
    %v119 = vcvt.s32.f32 %v111
    %v120 = vcvt.s32.f32 %v112
    %v121 = vcvt.s32.f32 %v113
    %v122 = vcvt.s32.f32 %v114
    %v123 = vcvt.s32.f32 %v115
    %v124 = vcvt.s32.f32 %v116
    %v125 = vld [vmem:[%s1] sm:$0xff]
    %v126 = vld [vmem:[%s1 + $0x8] sm:$0xff]
    %v127 = vld [vmem:[%s1 + $0x10] sm:$0xff]
    %v128 = vld [vmem:[%s1 + $0x18] sm:$0xff]
    %v129 = vld [vmem:[%s3] sm:$0x1]
    %v131 = vlaneseq
    %v132 = vshrl.u32 %v131, 7
    %v133 = vsub.s32 0, %v132
    %v134 = vrot.slane %v129, %v133
    %vm136 = vcmask 261120
    %v138 = vsel %vm136, %v117, 0
    %v141 = vsel %vm136, %v118, 0
    %v144 = vsel %vm136, %v119, 0
    %v147 = vsel %vm136, %v120, 0
    %v150 = vsel %vm136, %v121, 0
    %v153 = vsel %vm136, %v122, 0
    %v156 = vsel %vm136, %v123, 0
    %v159 = vsel %vm136, %v124, 0
    %161 = vmatprep.subr.mxu0 0.0
    %162 = vmatpush1.msra.mxu0 0.0
    %163 = vmatprep.subr.mxu0 0.0
    %164 = vmatpush1.msra.mxu0 0.0
    %165 = vmatprep.subr.mxu0 0.0
    %166 = vmatpush1.msra.mxu0 0.0
    %167 = vmatprep.subr.mxu0 0.0
    %168 = vmatpush1.msra.mxu0 0.0
    %169 = vmatprep.subr.mxu0 0.0
    %170 = vmatpush1.msra.mxu0 0.0
    %171 = vmatprep.subr.mxu0 0.0
    %172 = vmatpush1.msra.mxu0 0.0
    %173 = vmatprep.subr.mxu0 0.0
    %174 = vmatpush1.msra.mxu0 0.0
    %175 = vmatprep.subr.mxu0 0.0
    %176 = vmatpush1.msra.mxu0 0.0
    %177 = vmatprep.subr.mxu0 0.0
    %178 = vmatpush1.msra.mxu0 0.0
    %179 = vmatprep.subr.mxu0 0.0
    %180 = vmatpush1.msra.mxu0 0.0
    %181 = vmatprep.subr.mxu0 0.0
    %182 = vmatpush1.msra.mxu0 0.0
    %183 = vmatprep.subr.mxu0 0.0
    %184 = vmatpush1.msra.mxu0 0.0
    %185 = vmatprep.subr.mxu0 0.0
    %v186 = vand.u32 %v128, 4294901760
    %187 = vmatpush1.msra.mxu0 %v186
    %188 = vmatprep.subr.mxu0 0.0
    %v189 = vand.u32 %v127, 4294901760
    %190 = vmatpush1.msra.mxu0 %v189
    %191 = vmatprep.subr.mxu0 0.0
    %v192 = vand.u32 %v126, 4294901760
    %193 = vmatpush1.msra.mxu0 %v192
    %194 = vmatprep.subr.mxu0 0.0
    %v195 = vand.u32 %v125, 4294901760
    %196 = vmatpush1.msra.mxu0 %v195
    %197 = vmatprep.subr.mxu0 0.0
    %198 = vmatpush2.msra.mxu0 0.0
    %199 = vmatprep.subr.mxu0 0.0
    %200 = vmatpush2.msra.mxu0 0.0
    %201 = vmatprep.subr.mxu0 0.0
    %202 = vmatpush2.msra.mxu0 0.0
    %203 = vmatprep.subr.mxu0 0.0
    %204 = vmatpush2.msra.mxu0 0.0
    %205 = vmatprep.subr.mxu0 0.0
    %206 = vmatpush2.msra.mxu0 0.0
    %207 = vmatprep.subr.mxu0 0.0
    %208 = vmatpush2.msra.mxu0 0.0
    %209 = vmatprep.subr.mxu0 0.0
    %210 = vmatpush2.msra.mxu0 0.0
    %211 = vmatprep.subr.mxu0 0.0
    %212 = vmatpush2.msra.mxu0 0.0
    %213 = vmatprep.subr.mxu0 0.0
    %214 = vmatpush2.msra.mxu0 0.0
    %215 = vmatprep.subr.mxu0 0.0
    %216 = vmatpush2.msra.mxu0 0.0
    %217 = vmatprep.subr.mxu0 0.0
    %218 = vmatpush2.msra.mxu0 0.0
    %219 = vmatprep.subr.mxu0 0.0
    %220 = vmatpush2.msra.mxu0 0.0
    %221 = vmatprep.subr.mxu0 0.0
    %222 = vmatpush2.msra.mxu0 0.0
    %223 = vmatprep.subr.mxu0 0.0
    %224 = vmatpush2.msra.mxu0 0.0
    %225 = vmatprep.subr.mxu0 0.0
    %226 = vmatpush2.msra.mxu0 0.0
    %227 = vmatprep.subr.mxu0 0.0
    %228 = vmatpush2.msra.mxu0 0.0
    %229 = vmatprep.mubr.f32.mxu0 0.0
    %v230 = vand.u32 %v138, 4294901760
    %v231 = vsub.f32 %v138, %v230
    %v232 = vand.u32 %v231, 4294901760
    %v233 = vsub.f32 %v231, %v232
    %v234 = vand.u32 %v233, 4294901760
    %235 = vmatmul.mubr.f32.gmra.mxu0 %v234
    %v236 = vpop.f32.mrf.mxu0
    %v237 = vadd.f32 %v134, %v236
    %v238 = vpop.f32.mrf.mxu0
    %239 = vmatprep.mubr.f32.mxu0 0.0
    %v240 = vand.u32 %v141, 4294901760
    %v241 = vsub.f32 %v141, %v240
    %v242 = vand.u32 %v241, 4294901760
    %v243 = vsub.f32 %v241, %v242
    %v244 = vand.u32 %v243, 4294901760
    %245 = vmatmul.mubr.f32.gmra.mxu0 %v244
    %v246 = vpop.f32.mrf.mxu0
    %v247 = vadd.f32 %v134, %v246
    %v248 = vpop.f32.mrf.mxu0
    %249 = vmatprep.mubr.f32.mxu0 0.0
    %v250 = vand.u32 %v144, 4294901760
    %v251 = vsub.f32 %v144, %v250
    %v252 = vand.u32 %v251, 4294901760
    %v253 = vsub.f32 %v251, %v252
    %v254 = vand.u32 %v253, 4294901760
    %255 = vmatmul.mubr.f32.gmra.mxu0 %v254
    %v256 = vpop.f32.mrf.mxu0
    %v257 = vadd.f32 %v134, %v256
    %v258 = vpop.f32.mrf.mxu0
    %259 = vmatprep.mubr.f32.mxu0 0.0
    %v260 = vand.u32 %v147, 4294901760
    %v261 = vsub.f32 %v147, %v260
    %v262 = vand.u32 %v261, 4294901760
    %v263 = vsub.f32 %v261, %v262
    %v264 = vand.u32 %v263, 4294901760
    %265 = vmatmul.mubr.f32.gmra.mxu0 %v264
    %v266 = vpop.f32.mrf.mxu0
    %v267 = vadd.f32 %v134, %v266
    %v268 = vpop.f32.mrf.mxu0
    %269 = vmatprep.mubr.f32.mxu0 0.0
    %v270 = vand.u32 %v150, 4294901760
    %v271 = vsub.f32 %v150, %v270
    %v272 = vand.u32 %v271, 4294901760
    %v273 = vsub.f32 %v271, %v272
    %v274 = vand.u32 %v273, 4294901760
    %275 = vmatmul.mubr.f32.gmra.mxu0 %v274
    %v276 = vpop.f32.mrf.mxu0
    %v277 = vadd.f32 %v134, %v276
    %v278 = vpop.f32.mrf.mxu0
    %279 = vmatprep.mubr.f32.mxu0 0.0
    %v280 = vand.u32 %v153, 4294901760
    %v281 = vsub.f32 %v153, %v280
    %v282 = vand.u32 %v281, 4294901760
    %v283 = vsub.f32 %v281, %v282
    %v284 = vand.u32 %v283, 4294901760
    %285 = vmatmul.mubr.f32.gmra.mxu0 %v284
    %v286 = vpop.f32.mrf.mxu0
    %v287 = vadd.f32 %v134, %v286
    %v288 = vpop.f32.mrf.mxu0
    %289 = vmatprep.mubr.f32.mxu0 0.0
    %v290 = vand.u32 %v156, 4294901760
    %v291 = vsub.f32 %v156, %v290
    %v292 = vand.u32 %v291, 4294901760
    %v293 = vsub.f32 %v291, %v292
    %v294 = vand.u32 %v293, 4294901760
    %295 = vmatmul.mubr.f32.gmra.mxu0 %v294
    %v296 = vpop.f32.mrf.mxu0
    %v297 = vadd.f32 %v134, %v296
    %v298 = vpop.f32.mrf.mxu0
    %299 = vmatprep.mubr.f32.mxu0 0.0
    %v300 = vand.u32 %v159, 4294901760
    %v301 = vsub.f32 %v159, %v300
    %v302 = vand.u32 %v301, 4294901760
    %v303 = vsub.f32 %v301, %v302
    %v304 = vand.u32 %v303, 4294901760
    %305 = vmatmul.mubr.f32.gmra.mxu0 %v304
    %v306 = vpop.f32.mrf.mxu0
    %v307 = vadd.f32 %v134, %v306
    %v308 = vpop.f32.mrf.mxu0
    %309 = vdwg.mxu0
    %310 = vmatprep.subr.mxu0 0.0
    %311 = vmatpush1.msra.mxu0 0.0
    %312 = vmatprep.subr.mxu0 0.0
    %313 = vmatpush1.msra.mxu0 0.0
    %314 = vmatprep.subr.mxu0 0.0
    %315 = vmatpush1.msra.mxu0 0.0
    %316 = vmatprep.subr.mxu0 0.0
    %317 = vmatpush1.msra.mxu0 0.0
    %318 = vmatprep.subr.mxu0 0.0
    %319 = vmatpush1.msra.mxu0 0.0
    %320 = vmatprep.subr.mxu0 0.0
    %321 = vmatpush1.msra.mxu0 0.0
    %322 = vmatprep.subr.mxu0 0.0
    %323 = vmatpush1.msra.mxu0 0.0
    %324 = vmatprep.subr.mxu0 0.0
    %325 = vmatpush1.msra.mxu0 0.0
    %326 = vmatprep.subr.mxu0 0.0
    %327 = vmatpush1.msra.mxu0 0.0
    %328 = vmatprep.subr.mxu0 0.0
    %329 = vmatpush1.msra.mxu0 0.0
    %330 = vmatprep.subr.mxu0 0.0
    %331 = vmatpush1.msra.mxu0 0.0
    %332 = vmatprep.subr.mxu0 0.0
    %333 = vmatpush1.msra.mxu0 0.0
    %334 = vmatprep.subr.mxu0 0.0
    %v335 = vand.u32 %v128, 4294901760
    %v336 = vsub.f32 %v128, %v335
    %v337 = vand.u32 %v336, 4294901760
    %v338 = vsub.f32 %v336, %v337
    %v339 = vand.u32 %v338, 4294901760
    %340 = vmatpush1.msra.mxu0 %v339
    %341 = vmatprep.subr.mxu0 0.0
    %v342 = vand.u32 %v127, 4294901760
    %v343 = vsub.f32 %v127, %v342
    %v344 = vand.u32 %v343, 4294901760
    %v345 = vsub.f32 %v343, %v344
    %v346 = vand.u32 %v345, 4294901760
    %347 = vmatpush1.msra.mxu0 %v346
    %348 = vmatprep.subr.mxu0 0.0
    %v349 = vand.u32 %v126, 4294901760
    %v350 = vsub.f32 %v126, %v349
    %v351 = vand.u32 %v350, 4294901760
    %v352 = vsub.f32 %v350, %v351
    %v353 = vand.u32 %v352, 4294901760
    %354 = vmatpush1.msra.mxu0 %v353
    %355 = vmatprep.subr.mxu0 0.0
    %v356 = vand.u32 %v125, 4294901760
    %v357 = vsub.f32 %v125, %v356
    %v358 = vand.u32 %v357, 4294901760
    %v359 = vsub.f32 %v357, %v358
    %v360 = vand.u32 %v359, 4294901760
    %361 = vmatpush1.msra.mxu0 %v360
    %362 = vmatprep.subr.mxu0 0.0
    %363 = vmatpush2.msra.mxu0 0.0
    %364 = vmatprep.subr.mxu0 0.0
    %365 = vmatpush2.msra.mxu0 0.0
    %366 = vmatprep.subr.mxu0 0.0
    %367 = vmatpush2.msra.mxu0 0.0
    %368 = vmatprep.subr.mxu0 0.0
    %369 = vmatpush2.msra.mxu0 0.0
    %370 = vmatprep.subr.mxu0 0.0
    %371 = vmatpush2.msra.mxu0 0.0
    %372 = vmatprep.subr.mxu0 0.0
    %373 = vmatpush2.msra.mxu0 0.0
    %374 = vmatprep.subr.mxu0 0.0
    %375 = vmatpush2.msra.mxu0 0.0
    %376 = vmatprep.subr.mxu0 0.0
    %377 = vmatpush2.msra.mxu0 0.0
    %378 = vmatprep.subr.mxu0 0.0
    %379 = vmatpush2.msra.mxu0 0.0
    %380 = vmatprep.subr.mxu0 0.0
    %381 = vmatpush2.msra.mxu0 0.0
    %382 = vmatprep.subr.mxu0 0.0
    %383 = vmatpush2.msra.mxu0 0.0
    %384 = vmatprep.subr.mxu0 0.0
    %385 = vmatpush2.msra.mxu0 0.0
    %386 = vmatprep.subr.mxu0 0.0
    %387 = vmatpush2.msra.mxu0 0.0
    %388 = vmatprep.subr.mxu0 0.0
    %389 = vmatpush2.msra.mxu0 0.0
    %390 = vmatprep.subr.mxu0 0.0
    %391 = vmatpush2.msra.mxu0 0.0
    %392 = vmatprep.subr.mxu0 0.0
    %393 = vmatpush2.msra.mxu0 0.0
    %394 = vmatprep.mubr.f32.mxu0 0.0
    %v395 = vand.u32 %v138, 4294901760
    %396 = vmatmul.mubr.f32.gmra.mxu0 %v395
    %v397 = vpop.f32.mrf.mxu0
    %v398 = vadd.f32 %v237, %v397
    %v399 = vpop.f32.mrf.mxu0
    %400 = vmatprep.mubr.f32.mxu0 0.0
    %v401 = vand.u32 %v141, 4294901760
    %402 = vmatmul.mubr.f32.gmra.mxu0 %v401
    %v403 = vpop.f32.mrf.mxu0
    %v404 = vadd.f32 %v247, %v403
    %v405 = vpop.f32.mrf.mxu0
    %406 = vmatprep.mubr.f32.mxu0 0.0
    %v407 = vand.u32 %v144, 4294901760
    %408 = vmatmul.mubr.f32.gmra.mxu0 %v407
    %v409 = vpop.f32.mrf.mxu0
    %v410 = vadd.f32 %v257, %v409
    %v411 = vpop.f32.mrf.mxu0
    %412 = vmatprep.mubr.f32.mxu0 0.0
    %v413 = vand.u32 %v147, 4294901760
    %414 = vmatmul.mubr.f32.gmra.mxu0 %v413
    %v415 = vpop.f32.mrf.mxu0
    %v416 = vadd.f32 %v267, %v415
    %v417 = vpop.f32.mrf.mxu0
    %418 = vmatprep.mubr.f32.mxu0 0.0
    %v419 = vand.u32 %v150, 4294901760
    %420 = vmatmul.mubr.f32.gmra.mxu0 %v419
    %v421 = vpop.f32.mrf.mxu0
    %v422 = vadd.f32 %v277, %v421
    %v423 = vpop.f32.mrf.mxu0
    %424 = vmatprep.mubr.f32.mxu0 0.0
    %v425 = vand.u32 %v153, 4294901760
    %426 = vmatmul.mubr.f32.gmra.mxu0 %v425
    %v427 = vpop.f32.mrf.mxu0
    %v428 = vadd.f32 %v287, %v427
    %v429 = vpop.f32.mrf.mxu0
    %430 = vmatprep.mubr.f32.mxu0 0.0
    %v431 = vand.u32 %v156, 4294901760
    %432 = vmatmul.mubr.f32.gmra.mxu0 %v431
    %v433 = vpop.f32.mrf.mxu0
    %v434 = vadd.f32 %v297, %v433
    %v435 = vpop.f32.mrf.mxu0
    %436 = vmatprep.mubr.f32.mxu0 0.0
    %v437 = vand.u32 %v159, 4294901760
    %438 = vmatmul.mubr.f32.gmra.mxu0 %v437
    %v439 = vpop.f32.mrf.mxu0
    %v440 = vadd.f32 %v307, %v439
    %v441 = vpop.f32.mrf.mxu0
    %442 = vdwg.mxu0
    %443 = vmatprep.subr.mxu0 0.0
    %444 = vmatpush1.msra.mxu0 0.0
    %445 = vmatprep.subr.mxu0 0.0
    %446 = vmatpush1.msra.mxu0 0.0
    %447 = vmatprep.subr.mxu0 0.0
    %448 = vmatpush1.msra.mxu0 0.0
    %449 = vmatprep.subr.mxu0 0.0
    %450 = vmatpush1.msra.mxu0 0.0
    %451 = vmatprep.subr.mxu0 0.0
    %452 = vmatpush1.msra.mxu0 0.0
    %453 = vmatprep.subr.mxu0 0.0
    %454 = vmatpush1.msra.mxu0 0.0
    %455 = vmatprep.subr.mxu0 0.0
    %456 = vmatpush1.msra.mxu0 0.0
    %457 = vmatprep.subr.mxu0 0.0
    %458 = vmatpush1.msra.mxu0 0.0
    %459 = vmatprep.subr.mxu0 0.0
    %460 = vmatpush1.msra.mxu0 0.0
    %461 = vmatprep.subr.mxu0 0.0
    %462 = vmatpush1.msra.mxu0 0.0
    %463 = vmatprep.subr.mxu0 0.0
    %464 = vmatpush1.msra.mxu0 0.0
    %465 = vmatprep.subr.mxu0 0.0
    %466 = vmatpush1.msra.mxu0 0.0
    %467 = vmatprep.subr.mxu0 0.0
    %v468 = vand.u32 %v128, 4294901760
    %v469 = vsub.f32 %v128, %v468
    %470 = vmatpush1.msra.mxu0 %v469
    %471 = vmatprep.subr.mxu0 0.0
    %v472 = vand.u32 %v127, 4294901760
    %v473 = vsub.f32 %v127, %v472
    %474 = vmatpush1.msra.mxu0 %v473
    %475 = vmatprep.subr.mxu0 0.0
    %v476 = vand.u32 %v126, 4294901760
    %v477 = vsub.f32 %v126, %v476
    %478 = vmatpush1.msra.mxu0 %v477
    %479 = vmatprep.subr.mxu0 0.0
    %v480 = vand.u32 %v125, 4294901760
    %v481 = vsub.f32 %v125, %v480
    %482 = vmatpush1.msra.mxu0 %v481
    %483 = vmatprep.subr.mxu0 0.0
    %484 = vmatpush2.msra.mxu0 0.0
    %485 = vmatprep.subr.mxu0 0.0
    %486 = vmatpush2.msra.mxu0 0.0
    %487 = vmatprep.subr.mxu0 0.0
    %488 = vmatpush2.msra.mxu0 0.0
    %489 = vmatprep.subr.mxu0 0.0
    %490 = vmatpush2.msra.mxu0 0.0
    %491 = vmatprep.subr.mxu0 0.0
    %492 = vmatpush2.msra.mxu0 0.0
    %493 = vmatprep.subr.mxu0 0.0
    %494 = vmatpush2.msra.mxu0 0.0
    %495 = vmatprep.subr.mxu0 0.0
    %496 = vmatpush2.msra.mxu0 0.0
    %497 = vmatprep.subr.mxu0 0.0
    %498 = vmatpush2.msra.mxu0 0.0
    %499 = vmatprep.subr.mxu0 0.0
    %500 = vmatpush2.msra.mxu0 0.0
    %501 = vmatprep.subr.mxu0 0.0
    %502 = vmatpush2.msra.mxu0 0.0
    %503 = vmatprep.subr.mxu0 0.0
    %504 = vmatpush2.msra.mxu0 0.0
    %505 = vmatprep.subr.mxu0 0.0
    %506 = vmatpush2.msra.mxu0 0.0
    %507 = vmatprep.subr.mxu0 0.0
    %508 = vmatpush2.msra.mxu0 0.0
    %509 = vmatprep.subr.mxu0 0.0
    %510 = vmatpush2.msra.mxu0 0.0
    %511 = vmatprep.subr.mxu0 0.0
    %512 = vmatpush2.msra.mxu0 0.0
    %513 = vmatprep.subr.mxu0 0.0
    %514 = vmatpush2.msra.mxu0 0.0
    %515 = vmatprep.mubr.f32.mxu0 0.0
    %v516 = vand.u32 %v138, 4294901760
    %v517 = vsub.f32 %v138, %v516
    %518 = vmatmul.mubr.f32.gmra.mxu0 %v517
    %v519 = vpop.f32.mrf.mxu0
    %v520 = vadd.f32 %v398, %v519
    %v521 = vpop.f32.mrf.mxu0
    %522 = vmatprep.mubr.f32.mxu0 0.0
    %v523 = vand.u32 %v141, 4294901760
    %v524 = vsub.f32 %v141, %v523
    %525 = vmatmul.mubr.f32.gmra.mxu0 %v524
    %v526 = vpop.f32.mrf.mxu0
    %v527 = vadd.f32 %v404, %v526
    %v528 = vpop.f32.mrf.mxu0
    %529 = vmatprep.mubr.f32.mxu0 0.0
    %v530 = vand.u32 %v144, 4294901760
    %v531 = vsub.f32 %v144, %v530
    %532 = vmatmul.mubr.f32.gmra.mxu0 %v531
    %v533 = vpop.f32.mrf.mxu0
    %v534 = vadd.f32 %v410, %v533
    %v535 = vpop.f32.mrf.mxu0
    %536 = vmatprep.mubr.f32.mxu0 0.0
    %v537 = vand.u32 %v147, 4294901760
    %v538 = vsub.f32 %v147, %v537
    %539 = vmatmul.mubr.f32.gmra.mxu0 %v538
    %v540 = vpop.f32.mrf.mxu0
    %v541 = vadd.f32 %v416, %v540
    %v542 = vpop.f32.mrf.mxu0
    %543 = vmatprep.mubr.f32.mxu0 0.0
    %v544 = vand.u32 %v150, 4294901760
    %v545 = vsub.f32 %v150, %v544
    %546 = vmatmul.mubr.f32.gmra.mxu0 %v545
    %v547 = vpop.f32.mrf.mxu0
    %v548 = vadd.f32 %v422, %v547
    %v549 = vpop.f32.mrf.mxu0
    %550 = vmatprep.mubr.f32.mxu0 0.0
    %v551 = vand.u32 %v153, 4294901760
    %v552 = vsub.f32 %v153, %v551
    %553 = vmatmul.mubr.f32.gmra.mxu0 %v552
    %v554 = vpop.f32.mrf.mxu0
    %v555 = vadd.f32 %v428, %v554
    %v556 = vpop.f32.mrf.mxu0
    %557 = vmatprep.mubr.f32.mxu0 0.0
    %v558 = vand.u32 %v156, 4294901760
    %v559 = vsub.f32 %v156, %v558
    %560 = vmatmul.mubr.f32.gmra.mxu0 %v559
    %v561 = vpop.f32.mrf.mxu0
    %v562 = vadd.f32 %v434, %v561
    %v563 = vpop.f32.mrf.mxu0
    %564 = vmatprep.mubr.f32.mxu0 0.0
    %v565 = vand.u32 %v159, 4294901760
    %v566 = vsub.f32 %v159, %v565
    %567 = vmatmul.mubr.f32.gmra.mxu0 %v566
    %v568 = vpop.f32.mrf.mxu0
    %v569 = vadd.f32 %v440, %v568
    %v570 = vpop.f32.mrf.mxu0
    %571 = vdwg.mxu0
    %572 = vmatprep.subr.mxu0 0.0
    %573 = vmatpush1.msra.mxu0 0.0
    %574 = vmatprep.subr.mxu0 0.0
    %575 = vmatpush1.msra.mxu0 0.0
    %576 = vmatprep.subr.mxu0 0.0
    %577 = vmatpush1.msra.mxu0 0.0
    %578 = vmatprep.subr.mxu0 0.0
    %579 = vmatpush1.msra.mxu0 0.0
    %580 = vmatprep.subr.mxu0 0.0
    %581 = vmatpush1.msra.mxu0 0.0
    %582 = vmatprep.subr.mxu0 0.0
    %583 = vmatpush1.msra.mxu0 0.0
    %584 = vmatprep.subr.mxu0 0.0
    %585 = vmatpush1.msra.mxu0 0.0
    %586 = vmatprep.subr.mxu0 0.0
    %587 = vmatpush1.msra.mxu0 0.0
    %588 = vmatprep.subr.mxu0 0.0
    %589 = vmatpush1.msra.mxu0 0.0
    %590 = vmatprep.subr.mxu0 0.0
    %591 = vmatpush1.msra.mxu0 0.0
    %592 = vmatprep.subr.mxu0 0.0
    %593 = vmatpush1.msra.mxu0 0.0
    %594 = vmatprep.subr.mxu0 0.0
    %595 = vmatpush1.msra.mxu0 0.0
    %596 = vmatprep.subr.mxu0 0.0
    %v597 = vand.u32 %v128, 4294901760
    %598 = vmatpush1.msra.mxu0 %v597
    %599 = vmatprep.subr.mxu0 0.0
    %v600 = vand.u32 %v127, 4294901760
    %601 = vmatpush1.msra.mxu0 %v600
    %602 = vmatprep.subr.mxu0 0.0
    %v603 = vand.u32 %v126, 4294901760
    %604 = vmatpush1.msra.mxu0 %v603
    %605 = vmatprep.subr.mxu0 0.0
    %v606 = vand.u32 %v125, 4294901760
    %607 = vmatpush1.msra.mxu0 %v606
    %608 = vmatprep.subr.mxu0 0.0
    %609 = vmatpush2.msra.mxu0 0.0
    %610 = vmatprep.subr.mxu0 0.0
    %611 = vmatpush2.msra.mxu0 0.0
    %612 = vmatprep.subr.mxu0 0.0
    %613 = vmatpush2.msra.mxu0 0.0
    %614 = vmatprep.subr.mxu0 0.0
    %615 = vmatpush2.msra.mxu0 0.0
    %616 = vmatprep.subr.mxu0 0.0
    %617 = vmatpush2.msra.mxu0 0.0
    %618 = vmatprep.subr.mxu0 0.0
    %619 = vmatpush2.msra.mxu0 0.0
    %620 = vmatprep.subr.mxu0 0.0
    %621 = vmatpush2.msra.mxu0 0.0
    %622 = vmatprep.subr.mxu0 0.0
    %623 = vmatpush2.msra.mxu0 0.0
    %624 = vmatprep.subr.mxu0 0.0
    %625 = vmatpush2.msra.mxu0 0.0
    %626 = vmatprep.subr.mxu0 0.0
    %627 = vmatpush2.msra.mxu0 0.0
    %628 = vmatprep.subr.mxu0 0.0
    %629 = vmatpush2.msra.mxu0 0.0
    %630 = vmatprep.subr.mxu0 0.0
    %631 = vmatpush2.msra.mxu0 0.0
    %632 = vmatprep.subr.mxu0 0.0
    %633 = vmatpush2.msra.mxu0 0.0
    %634 = vmatprep.subr.mxu0 0.0
    %635 = vmatpush2.msra.mxu0 0.0
    %636 = vmatprep.subr.mxu0 0.0
    %637 = vmatpush2.msra.mxu0 0.0
    %638 = vmatprep.subr.mxu0 0.0
    %639 = vmatpush2.msra.mxu0 0.0
    %640 = vmatprep.mubr.f32.mxu0 0.0
    %v641 = vand.u32 %v138, 4294901760
    %v642 = vsub.f32 %v138, %v641
    %v643 = vand.u32 %v642, 4294901760
    %644 = vmatmul.mubr.f32.gmra.mxu0 %v643
    %v645 = vpop.f32.mrf.mxu0
    %v646 = vadd.f32 %v520, %v645
    %v647 = vpop.f32.mrf.mxu0
    %648 = vmatprep.mubr.f32.mxu0 0.0
    %v649 = vand.u32 %v141, 4294901760
    %v650 = vsub.f32 %v141, %v649
    %v651 = vand.u32 %v650, 4294901760
    %652 = vmatmul.mubr.f32.gmra.mxu0 %v651
    %v653 = vpop.f32.mrf.mxu0
    %v654 = vadd.f32 %v527, %v653
    %v655 = vpop.f32.mrf.mxu0
    %656 = vmatprep.mubr.f32.mxu0 0.0
    %v657 = vand.u32 %v144, 4294901760
    %v658 = vsub.f32 %v144, %v657
    %v659 = vand.u32 %v658, 4294901760
    %660 = vmatmul.mubr.f32.gmra.mxu0 %v659
    %v661 = vpop.f32.mrf.mxu0
    %v662 = vadd.f32 %v534, %v661
    %v663 = vpop.f32.mrf.mxu0
    %664 = vmatprep.mubr.f32.mxu0 0.0
    %v665 = vand.u32 %v147, 4294901760
    %v666 = vsub.f32 %v147, %v665
    %v667 = vand.u32 %v666, 4294901760
    %668 = vmatmul.mubr.f32.gmra.mxu0 %v667
    %v669 = vpop.f32.mrf.mxu0
    %v670 = vadd.f32 %v541, %v669
    %v671 = vpop.f32.mrf.mxu0
    %672 = vmatprep.mubr.f32.mxu0 0.0
    %v673 = vand.u32 %v150, 4294901760
    %v674 = vsub.f32 %v150, %v673
    %v675 = vand.u32 %v674, 4294901760
    %676 = vmatmul.mubr.f32.gmra.mxu0 %v675
    %v677 = vpop.f32.mrf.mxu0
    %v678 = vadd.f32 %v548, %v677
    %v679 = vpop.f32.mrf.mxu0
    %680 = vmatprep.mubr.f32.mxu0 0.0
    %v681 = vand.u32 %v153, 4294901760
    %v682 = vsub.f32 %v153, %v681
    %v683 = vand.u32 %v682, 4294901760
    %684 = vmatmul.mubr.f32.gmra.mxu0 %v683
    %v685 = vpop.f32.mrf.mxu0
    %v686 = vadd.f32 %v555, %v685
    %v687 = vpop.f32.mrf.mxu0
    %688 = vmatprep.mubr.f32.mxu0 0.0
    %v689 = vand.u32 %v156, 4294901760
    %v690 = vsub.f32 %v156, %v689
    %v691 = vand.u32 %v690, 4294901760
    %692 = vmatmul.mubr.f32.gmra.mxu0 %v691
    %v693 = vpop.f32.mrf.mxu0
    %v694 = vadd.f32 %v562, %v693
    %v695 = vpop.f32.mrf.mxu0
    %696 = vmatprep.mubr.f32.mxu0 0.0
    %v697 = vand.u32 %v159, 4294901760
    %v698 = vsub.f32 %v159, %v697
    %v699 = vand.u32 %v698, 4294901760
    %700 = vmatmul.mubr.f32.gmra.mxu0 %v699
    %v701 = vpop.f32.mrf.mxu0
    %v702 = vadd.f32 %v569, %v701
    %v703 = vpop.f32.mrf.mxu0
    %704 = vdwg.mxu0
    %705 = vmatprep.subr.mxu0 0.0
    %706 = vmatpush1.msra.mxu0 0.0
    %707 = vmatprep.subr.mxu0 0.0
    %708 = vmatpush1.msra.mxu0 0.0
    %709 = vmatprep.subr.mxu0 0.0
    %710 = vmatpush1.msra.mxu0 0.0
    %711 = vmatprep.subr.mxu0 0.0
    %712 = vmatpush1.msra.mxu0 0.0
    %713 = vmatprep.subr.mxu0 0.0
    %714 = vmatpush1.msra.mxu0 0.0
    %715 = vmatprep.subr.mxu0 0.0
    %716 = vmatpush1.msra.mxu0 0.0
    %717 = vmatprep.subr.mxu0 0.0
    %718 = vmatpush1.msra.mxu0 0.0
    %719 = vmatprep.subr.mxu0 0.0
    %720 = vmatpush1.msra.mxu0 0.0
    %721 = vmatprep.subr.mxu0 0.0
    %722 = vmatpush1.msra.mxu0 0.0
    %723 = vmatprep.subr.mxu0 0.0
    %724 = vmatpush1.msra.mxu0 0.0
    %725 = vmatprep.subr.mxu0 0.0
    %726 = vmatpush1.msra.mxu0 0.0
    %727 = vmatprep.subr.mxu0 0.0
    %728 = vmatpush1.msra.mxu0 0.0
    %729 = vmatprep.subr.mxu0 0.0
    %v730 = vand.u32 %v128, 4294901760
    %v731 = vsub.f32 %v128, %v730
    %v732 = vand.u32 %v731, 4294901760
    %733 = vmatpush1.msra.mxu0 %v732
    %734 = vmatprep.subr.mxu0 0.0
    %v735 = vand.u32 %v127, 4294901760
    %v736 = vsub.f32 %v127, %v735
    %v737 = vand.u32 %v736, 4294901760
    %738 = vmatpush1.msra.mxu0 %v737
    %739 = vmatprep.subr.mxu0 0.0
    %v740 = vand.u32 %v126, 4294901760
    %v741 = vsub.f32 %v126, %v740
    %v742 = vand.u32 %v741, 4294901760
    %743 = vmatpush1.msra.mxu0 %v742
    %744 = vmatprep.subr.mxu0 0.0
    %v745 = vand.u32 %v125, 4294901760
    %v746 = vsub.f32 %v125, %v745
    %v747 = vand.u32 %v746, 4294901760
    %748 = vmatpush1.msra.mxu0 %v747
    %749 = vmatprep.subr.mxu0 0.0
    %750 = vmatpush2.msra.mxu0 0.0
    %751 = vmatprep.subr.mxu0 0.0
    %752 = vmatpush2.msra.mxu0 0.0
    %753 = vmatprep.subr.mxu0 0.0
    %754 = vmatpush2.msra.mxu0 0.0
    %755 = vmatprep.subr.mxu0 0.0
    %756 = vmatpush2.msra.mxu0 0.0
    %757 = vmatprep.subr.mxu0 0.0
    %758 = vmatpush2.msra.mxu0 0.0
    %759 = vmatprep.subr.mxu0 0.0
    %760 = vmatpush2.msra.mxu0 0.0
    %761 = vmatprep.subr.mxu0 0.0
    %762 = vmatpush2.msra.mxu0 0.0
    %763 = vmatprep.subr.mxu0 0.0
    %764 = vmatpush2.msra.mxu0 0.0
    %765 = vmatprep.subr.mxu0 0.0
    %766 = vmatpush2.msra.mxu0 0.0
    %767 = vmatprep.subr.mxu0 0.0
    %768 = vmatpush2.msra.mxu0 0.0
    %769 = vmatprep.subr.mxu0 0.0
    %770 = vmatpush2.msra.mxu0 0.0
    %771 = vmatprep.subr.mxu0 0.0
    %772 = vmatpush2.msra.mxu0 0.0
    %773 = vmatprep.subr.mxu0 0.0
    %774 = vmatpush2.msra.mxu0 0.0
    %775 = vmatprep.subr.mxu0 0.0
    %776 = vmatpush2.msra.mxu0 0.0
    %777 = vmatprep.subr.mxu0 0.0
    %778 = vmatpush2.msra.mxu0 0.0
    %779 = vmatprep.subr.mxu0 0.0
    %780 = vmatpush2.msra.mxu0 0.0
    %781 = vmatprep.mubr.f32.mxu0 0.0
    %v782 = vand.u32 %v138, 4294901760
    %783 = vmatmul.mubr.f32.gmra.mxu0 %v782
    %v784 = vpop.f32.mrf.mxu0
    %v785 = vadd.f32 %v646, %v784
    %v786 = vpop.f32.mrf.mxu0
    %787 = vmatprep.mubr.f32.mxu0 0.0
    %v788 = vand.u32 %v141, 4294901760
    %789 = vmatmul.mubr.f32.gmra.mxu0 %v788
    %v790 = vpop.f32.mrf.mxu0
    %v791 = vadd.f32 %v654, %v790
    %v792 = vpop.f32.mrf.mxu0
    %793 = vmatprep.mubr.f32.mxu0 0.0
    %v794 = vand.u32 %v144, 4294901760
    %795 = vmatmul.mubr.f32.gmra.mxu0 %v794
    %v796 = vpop.f32.mrf.mxu0
    %v797 = vadd.f32 %v662, %v796
    %v798 = vpop.f32.mrf.mxu0
    %799 = vmatprep.mubr.f32.mxu0 0.0
    %v800 = vand.u32 %v147, 4294901760
    %801 = vmatmul.mubr.f32.gmra.mxu0 %v800
    %v802 = vpop.f32.mrf.mxu0
    %v803 = vadd.f32 %v670, %v802
    %v804 = vpop.f32.mrf.mxu0
    %805 = vmatprep.mubr.f32.mxu0 0.0
    %v806 = vand.u32 %v150, 4294901760
    %807 = vmatmul.mubr.f32.gmra.mxu0 %v806
    %v808 = vpop.f32.mrf.mxu0
    %v809 = vadd.f32 %v678, %v808
    %v810 = vpop.f32.mrf.mxu0
    %811 = vmatprep.mubr.f32.mxu0 0.0
    %v812 = vand.u32 %v153, 4294901760
    %813 = vmatmul.mubr.f32.gmra.mxu0 %v812
    %v814 = vpop.f32.mrf.mxu0
    %v815 = vadd.f32 %v686, %v814
    %v816 = vpop.f32.mrf.mxu0
    %817 = vmatprep.mubr.f32.mxu0 0.0
    %v818 = vand.u32 %v156, 4294901760
    %819 = vmatmul.mubr.f32.gmra.mxu0 %v818
    %v820 = vpop.f32.mrf.mxu0
    %v821 = vadd.f32 %v694, %v820
    %v822 = vpop.f32.mrf.mxu0
    %823 = vmatprep.mubr.f32.mxu0 0.0
    %v824 = vand.u32 %v159, 4294901760
    %825 = vmatmul.mubr.f32.gmra.mxu0 %v824
    %v826 = vpop.f32.mrf.mxu0
    %v827 = vadd.f32 %v702, %v826
    %v828 = vpop.f32.mrf.mxu0
    %829 = vdwg.mxu0
    %830 = vmatprep.subr.mxu0 0.0
    %831 = vmatpush1.msra.mxu0 0.0
    %832 = vmatprep.subr.mxu0 0.0
    %833 = vmatpush1.msra.mxu0 0.0
    %834 = vmatprep.subr.mxu0 0.0
    %835 = vmatpush1.msra.mxu0 0.0
    %836 = vmatprep.subr.mxu0 0.0
    %837 = vmatpush1.msra.mxu0 0.0
    %838 = vmatprep.subr.mxu0 0.0
    %839 = vmatpush1.msra.mxu0 0.0
    %840 = vmatprep.subr.mxu0 0.0
    %841 = vmatpush1.msra.mxu0 0.0
    %842 = vmatprep.subr.mxu0 0.0
    %843 = vmatpush1.msra.mxu0 0.0
    %844 = vmatprep.subr.mxu0 0.0
    %845 = vmatpush1.msra.mxu0 0.0
    %846 = vmatprep.subr.mxu0 0.0
    %847 = vmatpush1.msra.mxu0 0.0
    %848 = vmatprep.subr.mxu0 0.0
    %849 = vmatpush1.msra.mxu0 0.0
    %850 = vmatprep.subr.mxu0 0.0
    %851 = vmatpush1.msra.mxu0 0.0
    %852 = vmatprep.subr.mxu0 0.0
    %853 = vmatpush1.msra.mxu0 0.0
    %854 = vmatprep.subr.mxu0 0.0
    %v855 = vand.u32 %v128, 4294901760
    %856 = vmatpush1.msra.mxu0 %v855
    %857 = vmatprep.subr.mxu0 0.0
    %v858 = vand.u32 %v127, 4294901760
    %859 = vmatpush1.msra.mxu0 %v858
    %860 = vmatprep.subr.mxu0 0.0
    %v861 = vand.u32 %v126, 4294901760
    %862 = vmatpush1.msra.mxu0 %v861
    %863 = vmatprep.subr.mxu0 0.0
    %v864 = vand.u32 %v125, 4294901760
    %865 = vmatpush1.msra.mxu0 %v864
    %866 = vmatprep.subr.mxu0 0.0
    %867 = vmatpush2.msra.mxu0 0.0
    %868 = vmatprep.subr.mxu0 0.0
    %869 = vmatpush2.msra.mxu0 0.0
    %870 = vmatprep.subr.mxu0 0.0
    %871 = vmatpush2.msra.mxu0 0.0
    %872 = vmatprep.subr.mxu0 0.0
    %873 = vmatpush2.msra.mxu0 0.0
    %874 = vmatprep.subr.mxu0 0.0
    %875 = vmatpush2.msra.mxu0 0.0
    %876 = vmatprep.subr.mxu0 0.0
    %877 = vmatpush2.msra.mxu0 0.0
    %878 = vmatprep.subr.mxu0 0.0
    %879 = vmatpush2.msra.mxu0 0.0
    %880 = vmatprep.subr.mxu0 0.0
    %881 = vmatpush2.msra.mxu0 0.0
    %882 = vmatprep.subr.mxu0 0.0
    %883 = vmatpush2.msra.mxu0 0.0
    %884 = vmatprep.subr.mxu0 0.0
    %885 = vmatpush2.msra.mxu0 0.0
    %886 = vmatprep.subr.mxu0 0.0
    %887 = vmatpush2.msra.mxu0 0.0
    %888 = vmatprep.subr.mxu0 0.0
    %889 = vmatpush2.msra.mxu0 0.0
    %890 = vmatprep.subr.mxu0 0.0
    %891 = vmatpush2.msra.mxu0 0.0
    %892 = vmatprep.subr.mxu0 0.0
    %893 = vmatpush2.msra.mxu0 0.0
    %894 = vmatprep.subr.mxu0 0.0
    %895 = vmatpush2.msra.mxu0 0.0
    %896 = vmatprep.subr.mxu0 0.0
    %897 = vmatpush2.msra.mxu0 0.0
    %898 = vmatprep.mubr.f32.mxu0 0.0
    %v899 = vand.u32 %v138, 4294901760
    %900 = vmatmul.mubr.f32.gmra.mxu0 %v899
    %v901 = vpop.f32.mrf.mxu0
    %v902 = vadd.f32 %v785, %v901
    %v903 = vpop.f32.mrf.mxu0
    %904 = vmatprep.mubr.f32.mxu0 0.0
    %v905 = vand.u32 %v141, 4294901760
    %906 = vmatmul.mubr.f32.gmra.mxu0 %v905
    %v907 = vpop.f32.mrf.mxu0
    %v908 = vadd.f32 %v791, %v907
    %v909 = vpop.f32.mrf.mxu0
    %910 = vmatprep.mubr.f32.mxu0 0.0
    %v911 = vand.u32 %v144, 4294901760
    %912 = vmatmul.mubr.f32.gmra.mxu0 %v911
    %v913 = vpop.f32.mrf.mxu0
    %v914 = vadd.f32 %v797, %v913
    %v915 = vpop.f32.mrf.mxu0
    %916 = vmatprep.mubr.f32.mxu0 0.0
    %v917 = vand.u32 %v147, 4294901760
    %918 = vmatmul.mubr.f32.gmra.mxu0 %v917
    %v919 = vpop.f32.mrf.mxu0
    %v920 = vadd.f32 %v803, %v919
    %v921 = vpop.f32.mrf.mxu0
    %922 = vmatprep.mubr.f32.mxu0 0.0
    %v923 = vand.u32 %v150, 4294901760
    %924 = vmatmul.mubr.f32.gmra.mxu0 %v923
    %v925 = vpop.f32.mrf.mxu0
    %v926 = vadd.f32 %v809, %v925
    %v927 = vpop.f32.mrf.mxu0
    %928 = vmatprep.mubr.f32.mxu0 0.0
    %v929 = vand.u32 %v153, 4294901760
    %930 = vmatmul.mubr.f32.gmra.mxu0 %v929
    %v931 = vpop.f32.mrf.mxu0
    %v932 = vadd.f32 %v815, %v931
    %v933 = vpop.f32.mrf.mxu0
    %934 = vmatprep.mubr.f32.mxu0 0.0
    %v935 = vand.u32 %v156, 4294901760
    %936 = vmatmul.mubr.f32.gmra.mxu0 %v935
    %v937 = vpop.f32.mrf.mxu0
    %v938 = vadd.f32 %v821, %v937
    %v939 = vpop.f32.mrf.mxu0
    %940 = vmatprep.mubr.f32.mxu0 0.0
    %v941 = vand.u32 %v159, 4294901760
    %942 = vmatmul.mubr.f32.gmra.mxu0 %v941
    %v943 = vpop.f32.mrf.mxu0
    %v944 = vadd.f32 %v827, %v943
    %v945 = vpop.f32.mrf.mxu0
    %946 = vdwg.mxu0
    %v947 = vld [vmem:[%s2] sm:$0xff]
    %v948 = vld [vmem:[%s2 + $0x8] sm:$0xff]
    %v949 = vld [vmem:[%s2 + $0x10] sm:$0xff]
    %v950 = vld [vmem:[%s2 + $0x18] sm:$0xff]
    %v951 = vld [vmem:[#allocation2] sm:$0xff]
    %v952 = vld [vmem:[#allocation3] sm:$0xff]
    %v954 = vsel %vm136, %v951, 0
    %956 = vmatprep.subr.mxu0 0.0
    %957 = vmatpush1.msra.mxu0 0.0
    %958 = vmatprep.subr.mxu0 0.0
    %959 = vmatpush1.msra.mxu0 0.0
    %960 = vmatprep.subr.mxu0 0.0
    %961 = vmatpush1.msra.mxu0 0.0
    %962 = vmatprep.subr.mxu0 0.0
    %963 = vmatpush1.msra.mxu0 0.0
    %964 = vmatprep.subr.mxu0 0.0
    %965 = vmatpush1.msra.mxu0 0.0
    %966 = vmatprep.subr.mxu0 0.0
    %967 = vmatpush1.msra.mxu0 0.0
    %968 = vmatprep.subr.mxu0 0.0
    %969 = vmatpush1.msra.mxu0 0.0
    %970 = vmatprep.subr.mxu0 0.0
    %971 = vmatpush1.msra.mxu0 0.0
    %972 = vmatprep.subr.mxu0 0.0
    %973 = vmatpush1.msra.mxu0 0.0
    %974 = vmatprep.subr.mxu0 0.0
    %975 = vmatpush1.msra.mxu0 0.0
    %976 = vmatprep.subr.mxu0 0.0
    %977 = vmatpush1.msra.mxu0 0.0
    %978 = vmatprep.subr.mxu0 0.0
    %979 = vmatpush1.msra.mxu0 0.0
    %980 = vmatprep.subr.mxu0 0.0
    %v981 = vand.u32 %v950, 4294901760
    %982 = vmatpush1.msra.mxu0 %v981
    %983 = vmatprep.subr.mxu0 0.0
    %v984 = vand.u32 %v949, 4294901760
    %985 = vmatpush1.msra.mxu0 %v984
    %986 = vmatprep.subr.mxu0 0.0
    %v987 = vand.u32 %v948, 4294901760
    %988 = vmatpush1.msra.mxu0 %v987
    %989 = vmatprep.subr.mxu0 0.0
    %v990 = vand.u32 %v947, 4294901760
    %991 = vmatpush1.msra.mxu0 %v990
    %992 = vmatprep.subr.mxu0 0.0
    %993 = vmatpush2.msra.mxu0 0.0
    %994 = vmatprep.subr.mxu0 0.0
    %995 = vmatpush2.msra.mxu0 0.0
    %996 = vmatprep.subr.mxu0 0.0
    %997 = vmatpush2.msra.mxu0 0.0
    %998 = vmatprep.subr.mxu0 0.0
    %999 = vmatpush2.msra.mxu0 0.0
    %1000 = vmatprep.subr.mxu0 0.0
    %1001 = vmatpush2.msra.mxu0 0.0
    %1002 = vmatprep.subr.mxu0 0.0
    %1003 = vmatpush2.msra.mxu0 0.0
    %1004 = vmatprep.subr.mxu0 0.0
    %1005 = vmatpush2.msra.mxu0 0.0
    %1006 = vmatprep.subr.mxu0 0.0
    %1007 = vmatpush2.msra.mxu0 0.0
    %1008 = vmatprep.subr.mxu0 0.0
    %1009 = vmatpush2.msra.mxu0 0.0
    %1010 = vmatprep.subr.mxu0 0.0
    %1011 = vmatpush2.msra.mxu0 0.0
    %1012 = vmatprep.subr.mxu0 0.0
    %1013 = vmatpush2.msra.mxu0 0.0
    %1014 = vmatprep.subr.mxu0 0.0
    %1015 = vmatpush2.msra.mxu0 0.0
    %1016 = vmatprep.subr.mxu0 0.0
    %1017 = vmatpush2.msra.mxu0 0.0
    %1018 = vmatprep.subr.mxu0 0.0
    %1019 = vmatpush2.msra.mxu0 0.0
    %1020 = vmatprep.subr.mxu0 0.0
    %1021 = vmatpush2.msra.mxu0 0.0
    %1022 = vmatprep.subr.mxu0 0.0
    %1023 = vmatpush2.msra.mxu0 0.0
    %1024 = vmatprep.mubr.f32.mxu0 0.0
    %v1025 = vand.u32 %v954, 4294901760
    %v1026 = vsub.f32 %v954, %v1025
    %v1027 = vand.u32 %v1026, 4294901760
    %v1028 = vsub.f32 %v1026, %v1027
    %v1029 = vand.u32 %v1028, 4294901760
    %1030 = vmatmul.mubr.f32.gmra.mxu0 %v1029
    %v1031 = vpop.f32.mrf.mxu0
    %v1032 = vadd.f32 0.0, %v1031
    %v1033 = vpop.f32.mrf.mxu0
    %1034 = vdwg.mxu0
    %1035 = vmatprep.subr.mxu0 0.0
    %1036 = vmatpush1.msra.mxu0 0.0
    %1037 = vmatprep.subr.mxu0 0.0
    %1038 = vmatpush1.msra.mxu0 0.0
    %1039 = vmatprep.subr.mxu0 0.0
    %1040 = vmatpush1.msra.mxu0 0.0
    %1041 = vmatprep.subr.mxu0 0.0
    %1042 = vmatpush1.msra.mxu0 0.0
    %1043 = vmatprep.subr.mxu0 0.0
    %1044 = vmatpush1.msra.mxu0 0.0
    %1045 = vmatprep.subr.mxu0 0.0
    %1046 = vmatpush1.msra.mxu0 0.0
    %1047 = vmatprep.subr.mxu0 0.0
    %1048 = vmatpush1.msra.mxu0 0.0
    %1049 = vmatprep.subr.mxu0 0.0
    %1050 = vmatpush1.msra.mxu0 0.0
    %1051 = vmatprep.subr.mxu0 0.0
    %1052 = vmatpush1.msra.mxu0 0.0
    %1053 = vmatprep.subr.mxu0 0.0
    %1054 = vmatpush1.msra.mxu0 0.0
    %1055 = vmatprep.subr.mxu0 0.0
    %1056 = vmatpush1.msra.mxu0 0.0
    %1057 = vmatprep.subr.mxu0 0.0
    %1058 = vmatpush1.msra.mxu0 0.0
    %1059 = vmatprep.subr.mxu0 0.0
    %v1060 = vand.u32 %v950, 4294901760
    %v1061 = vsub.f32 %v950, %v1060
    %v1062 = vand.u32 %v1061, 4294901760
    %v1063 = vsub.f32 %v1061, %v1062
    %v1064 = vand.u32 %v1063, 4294901760
    %1065 = vmatpush1.msra.mxu0 %v1064
    %1066 = vmatprep.subr.mxu0 0.0
    %v1067 = vand.u32 %v949, 4294901760
    %v1068 = vsub.f32 %v949, %v1067
    %v1069 = vand.u32 %v1068, 4294901760
    %v1070 = vsub.f32 %v1068, %v1069
    %v1071 = vand.u32 %v1070, 4294901760
    %1072 = vmatpush1.msra.mxu0 %v1071
    %1073 = vmatprep.subr.mxu0 0.0
    %v1074 = vand.u32 %v948, 4294901760
    %v1075 = vsub.f32 %v948, %v1074
    %v1076 = vand.u32 %v1075, 4294901760
    %v1077 = vsub.f32 %v1075, %v1076
    %v1078 = vand.u32 %v1077, 4294901760
    %1079 = vmatpush1.msra.mxu0 %v1078
    %1080 = vmatprep.subr.mxu0 0.0
    %v1081 = vand.u32 %v947, 4294901760
    %v1082 = vsub.f32 %v947, %v1081
    %v1083 = vand.u32 %v1082, 4294901760
    %v1084 = vsub.f32 %v1082, %v1083
    %v1085 = vand.u32 %v1084, 4294901760
    %1086 = vmatpush1.msra.mxu0 %v1085
    %1087 = vmatprep.subr.mxu0 0.0
    %1088 = vmatpush2.msra.mxu0 0.0
    %1089 = vmatprep.subr.mxu0 0.0
    %1090 = vmatpush2.msra.mxu0 0.0
    %1091 = vmatprep.subr.mxu0 0.0
    %1092 = vmatpush2.msra.mxu0 0.0
    %1093 = vmatprep.subr.mxu0 0.0
    %1094 = vmatpush2.msra.mxu0 0.0
    %1095 = vmatprep.subr.mxu0 0.0
    %1096 = vmatpush2.msra.mxu0 0.0
    %1097 = vmatprep.subr.mxu0 0.0
    %1098 = vmatpush2.msra.mxu0 0.0
    %1099 = vmatprep.subr.mxu0 0.0
    %1100 = vmatpush2.msra.mxu0 0.0
    %1101 = vmatprep.subr.mxu0 0.0
    %1102 = vmatpush2.msra.mxu0 0.0
    %1103 = vmatprep.subr.mxu0 0.0
    %1104 = vmatpush2.msra.mxu0 0.0
    %1105 = vmatprep.subr.mxu0 0.0
    %1106 = vmatpush2.msra.mxu0 0.0
    %1107 = vmatprep.subr.mxu0 0.0
    %1108 = vmatpush2.msra.mxu0 0.0
    %1109 = vmatprep.subr.mxu0 0.0
    %1110 = vmatpush2.msra.mxu0 0.0
    %1111 = vmatprep.subr.mxu0 0.0
    %1112 = vmatpush2.msra.mxu0 0.0
    %1113 = vmatprep.subr.mxu0 0.0
    %1114 = vmatpush2.msra.mxu0 0.0
    %1115 = vmatprep.subr.mxu0 0.0
    %1116 = vmatpush2.msra.mxu0 0.0
    %1117 = vmatprep.subr.mxu0 0.0
    %1118 = vmatpush2.msra.mxu0 0.0
    %1119 = vmatprep.mubr.f32.mxu0 0.0
    %v1120 = vand.u32 %v954, 4294901760
    %1121 = vmatmul.mubr.f32.gmra.mxu0 %v1120
    %v1122 = vpop.f32.mrf.mxu0
    %v1123 = vadd.f32 %v1032, %v1122
    %v1124 = vpop.f32.mrf.mxu0
    %1125 = vdwg.mxu0
    %1126 = vmatprep.subr.mxu0 0.0
    %1127 = vmatpush1.msra.mxu0 0.0
    %1128 = vmatprep.subr.mxu0 0.0
    %1129 = vmatpush1.msra.mxu0 0.0
    %1130 = vmatprep.subr.mxu0 0.0
    %1131 = vmatpush1.msra.mxu0 0.0
    %1132 = vmatprep.subr.mxu0 0.0
    %1133 = vmatpush1.msra.mxu0 0.0
    %1134 = vmatprep.subr.mxu0 0.0
    %1135 = vmatpush1.msra.mxu0 0.0
    %1136 = vmatprep.subr.mxu0 0.0
    %1137 = vmatpush1.msra.mxu0 0.0
    %1138 = vmatprep.subr.mxu0 0.0
    %1139 = vmatpush1.msra.mxu0 0.0
    %1140 = vmatprep.subr.mxu0 0.0
    %1141 = vmatpush1.msra.mxu0 0.0
    %1142 = vmatprep.subr.mxu0 0.0
    %1143 = vmatpush1.msra.mxu0 0.0
    %1144 = vmatprep.subr.mxu0 0.0
    %1145 = vmatpush1.msra.mxu0 0.0
    %1146 = vmatprep.subr.mxu0 0.0
    %1147 = vmatpush1.msra.mxu0 0.0
    %1148 = vmatprep.subr.mxu0 0.0
    %1149 = vmatpush1.msra.mxu0 0.0
    %1150 = vmatprep.subr.mxu0 0.0
    %v1151 = vand.u32 %v950, 4294901760
    %v1152 = vsub.f32 %v950, %v1151
    %1153 = vmatpush1.msra.mxu0 %v1152
    %1154 = vmatprep.subr.mxu0 0.0
    %v1155 = vand.u32 %v949, 4294901760
    %v1156 = vsub.f32 %v949, %v1155
    %1157 = vmatpush1.msra.mxu0 %v1156
    %1158 = vmatprep.subr.mxu0 0.0
    %v1159 = vand.u32 %v948, 4294901760
    %v1160 = vsub.f32 %v948, %v1159
    %1161 = vmatpush1.msra.mxu0 %v1160
    %1162 = vmatprep.subr.mxu0 0.0
    %v1163 = vand.u32 %v947, 4294901760
    %v1164 = vsub.f32 %v947, %v1163
    %1165 = vmatpush1.msra.mxu0 %v1164
    %1166 = vmatprep.subr.mxu0 0.0
    %1167 = vmatpush2.msra.mxu0 0.0
    %1168 = vmatprep.subr.mxu0 0.0
    %1169 = vmatpush2.msra.mxu0 0.0
    %1170 = vmatprep.subr.mxu0 0.0
    %1171 = vmatpush2.msra.mxu0 0.0
    %1172 = vmatprep.subr.mxu0 0.0
    %1173 = vmatpush2.msra.mxu0 0.0
    %1174 = vmatprep.subr.mxu0 0.0
    %1175 = vmatpush2.msra.mxu0 0.0
    %1176 = vmatprep.subr.mxu0 0.0
    %1177 = vmatpush2.msra.mxu0 0.0
    %1178 = vmatprep.subr.mxu0 0.0
    %1179 = vmatpush2.msra.mxu0 0.0
    %1180 = vmatprep.subr.mxu0 0.0
    %1181 = vmatpush2.msra.mxu0 0.0
    %1182 = vmatprep.subr.mxu0 0.0
    %1183 = vmatpush2.msra.mxu0 0.0
    %1184 = vmatprep.subr.mxu0 0.0
    %1185 = vmatpush2.msra.mxu0 0.0
    %1186 = vmatprep.subr.mxu0 0.0
    %1187 = vmatpush2.msra.mxu0 0.0
    %1188 = vmatprep.subr.mxu0 0.0
    %1189 = vmatpush2.msra.mxu0 0.0
    %1190 = vmatprep.subr.mxu0 0.0
    %1191 = vmatpush2.msra.mxu0 0.0
    %1192 = vmatprep.subr.mxu0 0.0
    %1193 = vmatpush2.msra.mxu0 0.0
    %1194 = vmatprep.subr.mxu0 0.0
    %1195 = vmatpush2.msra.mxu0 0.0
    %1196 = vmatprep.subr.mxu0 0.0
    %1197 = vmatpush2.msra.mxu0 0.0
    %1198 = vmatprep.mubr.f32.mxu0 0.0
    %v1199 = vand.u32 %v954, 4294901760
    %v1200 = vsub.f32 %v954, %v1199
    %1201 = vmatmul.mubr.f32.gmra.mxu0 %v1200
    %v1202 = vpop.f32.mrf.mxu0
    %v1203 = vadd.f32 %v1123, %v1202
    %v1204 = vpop.f32.mrf.mxu0
    %1205 = vdwg.mxu0
    %1206 = vmatprep.subr.mxu0 0.0
    %1207 = vmatpush1.msra.mxu0 0.0
    %1208 = vmatprep.subr.mxu0 0.0
    %1209 = vmatpush1.msra.mxu0 0.0
    %1210 = vmatprep.subr.mxu0 0.0
    %1211 = vmatpush1.msra.mxu0 0.0
    %1212 = vmatprep.subr.mxu0 0.0
    %1213 = vmatpush1.msra.mxu0 0.0
    %1214 = vmatprep.subr.mxu0 0.0
    %1215 = vmatpush1.msra.mxu0 0.0
    %1216 = vmatprep.subr.mxu0 0.0
    %1217 = vmatpush1.msra.mxu0 0.0
    %1218 = vmatprep.subr.mxu0 0.0
    %1219 = vmatpush1.msra.mxu0 0.0
    %1220 = vmatprep.subr.mxu0 0.0
    %1221 = vmatpush1.msra.mxu0 0.0
    %1222 = vmatprep.subr.mxu0 0.0
    %1223 = vmatpush1.msra.mxu0 0.0
    %1224 = vmatprep.subr.mxu0 0.0
    %1225 = vmatpush1.msra.mxu0 0.0
    %1226 = vmatprep.subr.mxu0 0.0
    %1227 = vmatpush1.msra.mxu0 0.0
    %1228 = vmatprep.subr.mxu0 0.0
    %1229 = vmatpush1.msra.mxu0 0.0
    %1230 = vmatprep.subr.mxu0 0.0
    %v1231 = vand.u32 %v950, 4294901760
    %1232 = vmatpush1.msra.mxu0 %v1231
    %1233 = vmatprep.subr.mxu0 0.0
    %v1234 = vand.u32 %v949, 4294901760
    %1235 = vmatpush1.msra.mxu0 %v1234
    %1236 = vmatprep.subr.mxu0 0.0
    %v1237 = vand.u32 %v948, 4294901760
    %1238 = vmatpush1.msra.mxu0 %v1237
    %1239 = vmatprep.subr.mxu0 0.0
    %v1240 = vand.u32 %v947, 4294901760
    %1241 = vmatpush1.msra.mxu0 %v1240
    %1242 = vmatprep.subr.mxu0 0.0
    %1243 = vmatpush2.msra.mxu0 0.0
    %1244 = vmatprep.subr.mxu0 0.0
    %1245 = vmatpush2.msra.mxu0 0.0
    %1246 = vmatprep.subr.mxu0 0.0
    %1247 = vmatpush2.msra.mxu0 0.0
    %1248 = vmatprep.subr.mxu0 0.0
    %1249 = vmatpush2.msra.mxu0 0.0
    %1250 = vmatprep.subr.mxu0 0.0
    %1251 = vmatpush2.msra.mxu0 0.0
    %1252 = vmatprep.subr.mxu0 0.0
    %1253 = vmatpush2.msra.mxu0 0.0
    %1254 = vmatprep.subr.mxu0 0.0
    %1255 = vmatpush2.msra.mxu0 0.0
    %1256 = vmatprep.subr.mxu0 0.0
    %1257 = vmatpush2.msra.mxu0 0.0
    %1258 = vmatprep.subr.mxu0 0.0
    %1259 = vmatpush2.msra.mxu0 0.0
    %1260 = vmatprep.subr.mxu0 0.0
    %1261 = vmatpush2.msra.mxu0 0.0
    %1262 = vmatprep.subr.mxu0 0.0
    %1263 = vmatpush2.msra.mxu0 0.0
    %1264 = vmatprep.subr.mxu0 0.0
    %1265 = vmatpush2.msra.mxu0 0.0
    %1266 = vmatprep.subr.mxu0 0.0
    %1267 = vmatpush2.msra.mxu0 0.0
    %1268 = vmatprep.subr.mxu0 0.0
    %1269 = vmatpush2.msra.mxu0 0.0
    %1270 = vmatprep.subr.mxu0 0.0
    %1271 = vmatpush2.msra.mxu0 0.0
    %1272 = vmatprep.subr.mxu0 0.0
    %1273 = vmatpush2.msra.mxu0 0.0
    %1274 = vmatprep.mubr.f32.mxu0 0.0
    %v1275 = vand.u32 %v954, 4294901760
    %v1276 = vsub.f32 %v954, %v1275
    %v1277 = vand.u32 %v1276, 4294901760
    %1278 = vmatmul.mubr.f32.gmra.mxu0 %v1277
    %v1279 = vpop.f32.mrf.mxu0
    %v1280 = vadd.f32 %v1203, %v1279
    %v1281 = vpop.f32.mrf.mxu0
    %1282 = vdwg.mxu0
    %1283 = vmatprep.subr.mxu0 0.0
    %1284 = vmatpush1.msra.mxu0 0.0
    %1285 = vmatprep.subr.mxu0 0.0
    %1286 = vmatpush1.msra.mxu0 0.0
    %1287 = vmatprep.subr.mxu0 0.0
    %1288 = vmatpush1.msra.mxu0 0.0
    %1289 = vmatprep.subr.mxu0 0.0
    %1290 = vmatpush1.msra.mxu0 0.0
    %1291 = vmatprep.subr.mxu0 0.0
    %1292 = vmatpush1.msra.mxu0 0.0
    %1293 = vmatprep.subr.mxu0 0.0
    %1294 = vmatpush1.msra.mxu0 0.0
    %1295 = vmatprep.subr.mxu0 0.0
    %1296 = vmatpush1.msra.mxu0 0.0
    %1297 = vmatprep.subr.mxu0 0.0
    %1298 = vmatpush1.msra.mxu0 0.0
    %1299 = vmatprep.subr.mxu0 0.0
    %1300 = vmatpush1.msra.mxu0 0.0
    %1301 = vmatprep.subr.mxu0 0.0
    %1302 = vmatpush1.msra.mxu0 0.0
    %1303 = vmatprep.subr.mxu0 0.0
    %1304 = vmatpush1.msra.mxu0 0.0
    %1305 = vmatprep.subr.mxu0 0.0
    %1306 = vmatpush1.msra.mxu0 0.0
    %1307 = vmatprep.subr.mxu0 0.0
    %v1308 = vand.u32 %v950, 4294901760
    %v1309 = vsub.f32 %v950, %v1308
    %v1310 = vand.u32 %v1309, 4294901760
    %1311 = vmatpush1.msra.mxu0 %v1310
    %1312 = vmatprep.subr.mxu0 0.0
    %v1313 = vand.u32 %v949, 4294901760
    %v1314 = vsub.f32 %v949, %v1313
    %v1315 = vand.u32 %v1314, 4294901760
    %1316 = vmatpush1.msra.mxu0 %v1315
    %1317 = vmatprep.subr.mxu0 0.0
    %v1318 = vand.u32 %v948, 4294901760
    %v1319 = vsub.f32 %v948, %v1318
    %v1320 = vand.u32 %v1319, 4294901760
    %1321 = vmatpush1.msra.mxu0 %v1320
    %1322 = vmatprep.subr.mxu0 0.0
    %v1323 = vand.u32 %v947, 4294901760
    %v1324 = vsub.f32 %v947, %v1323
    %v1325 = vand.u32 %v1324, 4294901760
    %1326 = vmatpush1.msra.mxu0 %v1325
    %1327 = vmatprep.subr.mxu0 0.0
    %1328 = vmatpush2.msra.mxu0 0.0
    %1329 = vmatprep.subr.mxu0 0.0
    %1330 = vmatpush2.msra.mxu0 0.0
    %1331 = vmatprep.subr.mxu0 0.0
    %1332 = vmatpush2.msra.mxu0 0.0
    %1333 = vmatprep.subr.mxu0 0.0
    %1334 = vmatpush2.msra.mxu0 0.0
    %1335 = vmatprep.subr.mxu0 0.0
    %1336 = vmatpush2.msra.mxu0 0.0
    %1337 = vmatprep.subr.mxu0 0.0
    %1338 = vmatpush2.msra.mxu0 0.0
    %1339 = vmatprep.subr.mxu0 0.0
    %1340 = vmatpush2.msra.mxu0 0.0
    %1341 = vmatprep.subr.mxu0 0.0
    %1342 = vmatpush2.msra.mxu0 0.0
    %1343 = vmatprep.subr.mxu0 0.0
    %1344 = vmatpush2.msra.mxu0 0.0
    %1345 = vmatprep.subr.mxu0 0.0
    %1346 = vmatpush2.msra.mxu0 0.0
    %1347 = vmatprep.subr.mxu0 0.0
    %1348 = vmatpush2.msra.mxu0 0.0
    %1349 = vmatprep.subr.mxu0 0.0
    %1350 = vmatpush2.msra.mxu0 0.0
    %1351 = vmatprep.subr.mxu0 0.0
    %1352 = vmatpush2.msra.mxu0 0.0
    %1353 = vmatprep.subr.mxu0 0.0
    %1354 = vmatpush2.msra.mxu0 0.0
    %1355 = vmatprep.subr.mxu0 0.0
    %1356 = vmatpush2.msra.mxu0 0.0
    %1357 = vmatprep.subr.mxu0 0.0
    %1358 = vmatpush2.msra.mxu0 0.0
    %1359 = vmatprep.mubr.f32.mxu0 0.0
    %v1360 = vand.u32 %v954, 4294901760
    %1361 = vmatmul.mubr.f32.gmra.mxu0 %v1360
    %v1362 = vpop.f32.mrf.mxu0
    %v1363 = vadd.f32 %v1280, %v1362
    %v1364 = vpop.f32.mrf.mxu0
    %1365 = vdwg.mxu0
    %1366 = vmatprep.subr.mxu0 0.0
    %1367 = vmatpush1.msra.mxu0 0.0
    %1368 = vmatprep.subr.mxu0 0.0
    %1369 = vmatpush1.msra.mxu0 0.0
    %1370 = vmatprep.subr.mxu0 0.0
    %1371 = vmatpush1.msra.mxu0 0.0
    %1372 = vmatprep.subr.mxu0 0.0
    %1373 = vmatpush1.msra.mxu0 0.0
    %1374 = vmatprep.subr.mxu0 0.0
    %1375 = vmatpush1.msra.mxu0 0.0
    %1376 = vmatprep.subr.mxu0 0.0
    %1377 = vmatpush1.msra.mxu0 0.0
    %1378 = vmatprep.subr.mxu0 0.0
    %1379 = vmatpush1.msra.mxu0 0.0
    %1380 = vmatprep.subr.mxu0 0.0
    %1381 = vmatpush1.msra.mxu0 0.0
    %1382 = vmatprep.subr.mxu0 0.0
    %1383 = vmatpush1.msra.mxu0 0.0
    %1384 = vmatprep.subr.mxu0 0.0
    %1385 = vmatpush1.msra.mxu0 0.0
    %1386 = vmatprep.subr.mxu0 0.0
    %1387 = vmatpush1.msra.mxu0 0.0
    %1388 = vmatprep.subr.mxu0 0.0
    %1389 = vmatpush1.msra.mxu0 0.0
    %1390 = vmatprep.subr.mxu0 0.0
    %v1391 = vand.u32 %v950, 4294901760
    %1392 = vmatpush1.msra.mxu0 %v1391
    %1393 = vmatprep.subr.mxu0 0.0
    %v1394 = vand.u32 %v949, 4294901760
    %1395 = vmatpush1.msra.mxu0 %v1394
    %1396 = vmatprep.subr.mxu0 0.0
    %v1397 = vand.u32 %v948, 4294901760
    %1398 = vmatpush1.msra.mxu0 %v1397
    %1399 = vmatprep.subr.mxu0 0.0
    %v1400 = vand.u32 %v947, 4294901760
    %1401 = vmatpush1.msra.mxu0 %v1400
    %1402 = vmatprep.subr.mxu0 0.0
    %1403 = vmatpush2.msra.mxu0 0.0
    %1404 = vmatprep.subr.mxu0 0.0
    %1405 = vmatpush2.msra.mxu0 0.0
    %1406 = vmatprep.subr.mxu0 0.0
    %1407 = vmatpush2.msra.mxu0 0.0
    %1408 = vmatprep.subr.mxu0 0.0
    %1409 = vmatpush2.msra.mxu0 0.0
    %1410 = vmatprep.subr.mxu0 0.0
    %1411 = vmatpush2.msra.mxu0 0.0
    %1412 = vmatprep.subr.mxu0 0.0
    %1413 = vmatpush2.msra.mxu0 0.0
    %1414 = vmatprep.subr.mxu0 0.0
    %1415 = vmatpush2.msra.mxu0 0.0
    %1416 = vmatprep.subr.mxu0 0.0
    %1417 = vmatpush2.msra.mxu0 0.0
    %1418 = vmatprep.subr.mxu0 0.0
    %1419 = vmatpush2.msra.mxu0 0.0
    %1420 = vmatprep.subr.mxu0 0.0
    %1421 = vmatpush2.msra.mxu0 0.0
    %1422 = vmatprep.subr.mxu0 0.0
    %1423 = vmatpush2.msra.mxu0 0.0
    %1424 = vmatprep.subr.mxu0 0.0
    %1425 = vmatpush2.msra.mxu0 0.0
    %1426 = vmatprep.subr.mxu0 0.0
    %1427 = vmatpush2.msra.mxu0 0.0
    %1428 = vmatprep.subr.mxu0 0.0
    %1429 = vmatpush2.msra.mxu0 0.0
    %1430 = vmatprep.subr.mxu0 0.0
    %1431 = vmatpush2.msra.mxu0 0.0
    %1432 = vmatprep.subr.mxu0 0.0
    %1433 = vmatpush2.msra.mxu0 0.0
    %1434 = vmatprep.mubr.f32.mxu0 0.0
    %v1435 = vand.u32 %v954, 4294901760
    %1436 = vmatmul.mubr.f32.gmra.mxu0 %v1435
    %v1437 = vpop.f32.mrf.mxu0
    %v1438 = vadd.f32 %v1363, %v1437
    %v1439 = vpop.f32.mrf.mxu0
    %1440 = vdwg.mxu0
    %v1441 = vadd.f32 %v902, %v1438
    %v1442 = vxor.u32 %v1441, 2147483648
    %v1443 = vmul.f32 %v1442, 1.442695
    %v1444 = vpow.pop %v1443
    %v1445 = vadd.f32 %v1444, 1.0
    %v1446 = vrcp.pop %v1445
    %v1447 = vmul.f32 1.0, %v1446
    %v1448 = vtanh.pop %v1441
    %1450 = vrot.lane.b32.xlu0 %v952, 32
    %v1451 = vpop.permute.xlu0 %1450
    %v1453 = vmul.f32 %v1447, %v1451
    %1455 = vrot.lane.b32.xlu0 %v1448, 64
    %v1456 = vpop.permute.xlu0 %1455
    %v1458 = vmul.f32 %v1447, %v1456
    %1460 = vrot.lane.b32.xlu0 %v1458, 32
    %v1461 = vpop.permute.xlu0 %1460
    %v1463 = vadd.f32 %v1453, %v1461
    %v1464 = vtanh.pop %v1463
    %1466 = vrot.lane.b32.xlu0 %v1464, 64
    %v1467 = vpop.permute.xlu0 %1466
    %v1469 = vmul.f32 %v1447, %v1467
    %1471 = vrot.lane.b32.xlu0 %v1469, 32
    %v1472 = vpop.permute.xlu0 %1471
    %v1473 = vsel %vm136, %v1472, 0
    %1475 = vmatprep.subr.mxu0 0.0
    %1476 = vmatpush1.msra.mxu0 0.0
    %1477 = vmatprep.subr.mxu0 0.0
    %1478 = vmatpush1.msra.mxu0 0.0
    %1479 = vmatprep.subr.mxu0 0.0
    %1480 = vmatpush1.msra.mxu0 0.0
    %1481 = vmatprep.subr.mxu0 0.0
    %1482 = vmatpush1.msra.mxu0 0.0
    %1483 = vmatprep.subr.mxu0 0.0
    %1484 = vmatpush1.msra.mxu0 0.0
    %1485 = vmatprep.subr.mxu0 0.0
    %1486 = vmatpush1.msra.mxu0 0.0
    %1487 = vmatprep.subr.mxu0 0.0
    %1488 = vmatpush1.msra.mxu0 0.0
    %1489 = vmatprep.subr.mxu0 0.0
    %1490 = vmatpush1.msra.mxu0 0.0
    %1491 = vmatprep.subr.mxu0 0.0
    %1492 = vmatpush1.msra.mxu0 0.0
    %1493 = vmatprep.subr.mxu0 0.0
    %1494 = vmatpush1.msra.mxu0 0.0
    %1495 = vmatprep.subr.mxu0 0.0
    %1496 = vmatpush1.msra.mxu0 0.0
    %1497 = vmatprep.subr.mxu0 0.0
    %1498 = vmatpush1.msra.mxu0 0.0
    %1499 = vmatprep.subr.mxu0 0.0
    %v1500 = vand.u32 %v950, 4294901760
    %1501 = vmatpush1.msra.mxu0 %v1500
    %1502 = vmatprep.subr.mxu0 0.0
    %v1503 = vand.u32 %v949, 4294901760
    %1504 = vmatpush1.msra.mxu0 %v1503
    %1505 = vmatprep.subr.mxu0 0.0
    %v1506 = vand.u32 %v948, 4294901760
    %1507 = vmatpush1.msra.mxu0 %v1506
    %1508 = vmatprep.subr.mxu0 0.0
    %v1509 = vand.u32 %v947, 4294901760
    %1510 = vmatpush1.msra.mxu0 %v1509
    %1511 = vmatprep.subr.mxu0 0.0
    %1512 = vmatpush2.msra.mxu0 0.0
    %1513 = vmatprep.subr.mxu0 0.0
    %1514 = vmatpush2.msra.mxu0 0.0
    %1515 = vmatprep.subr.mxu0 0.0
    %1516 = vmatpush2.msra.mxu0 0.0
    %1517 = vmatprep.subr.mxu0 0.0
    %1518 = vmatpush2.msra.mxu0 0.0
    %1519 = vmatprep.subr.mxu0 0.0
    %1520 = vmatpush2.msra.mxu0 0.0
    %1521 = vmatprep.subr.mxu0 0.0
    %1522 = vmatpush2.msra.mxu0 0.0
    %1523 = vmatprep.subr.mxu0 0.0
    %1524 = vmatpush2.msra.mxu0 0.0
    %1525 = vmatprep.subr.mxu0 0.0
    %1526 = vmatpush2.msra.mxu0 0.0
    %1527 = vmatprep.subr.mxu0 0.0
    %1528 = vmatpush2.msra.mxu0 0.0
    %1529 = vmatprep.subr.mxu0 0.0
    %1530 = vmatpush2.msra.mxu0 0.0
    %1531 = vmatprep.subr.mxu0 0.0
    %1532 = vmatpush2.msra.mxu0 0.0
    %1533 = vmatprep.subr.mxu0 0.0
    %1534 = vmatpush2.msra.mxu0 0.0
    %1535 = vmatprep.subr.mxu0 0.0
    %1536 = vmatpush2.msra.mxu0 0.0
    %1537 = vmatprep.subr.mxu0 0.0
    %1538 = vmatpush2.msra.mxu0 0.0
    %1539 = vmatprep.subr.mxu0 0.0
    %1540 = vmatpush2.msra.mxu0 0.0
    %1541 = vmatprep.subr.mxu0 0.0
    %1542 = vmatpush2.msra.mxu0 0.0
    %1543 = vmatprep.mubr.f32.mxu0 0.0
    %v1544 = vand.u32 %v1473, 4294901760
    %v1545 = vsub.f32 %v1473, %v1544
    %v1546 = vand.u32 %v1545, 4294901760
    %v1547 = vsub.f32 %v1545, %v1546
    %v1548 = vand.u32 %v1547, 4294901760
    %1549 = vmatmul.mubr.f32.gmra.mxu0 %v1548
    %v1550 = vpop.f32.mrf.mxu0
    %v1551 = vadd.f32 0.0, %v1550
    %v1552 = vpop.f32.mrf.mxu0
    %1553 = vdwg.mxu0
    %1554 = vmatprep.subr.mxu0 0.0
    %1555 = vmatpush1.msra.mxu0 0.0
    %1556 = vmatprep.subr.mxu0 0.0
    %1557 = vmatpush1.msra.mxu0 0.0
    %1558 = vmatprep.subr.mxu0 0.0
    %1559 = vmatpush1.msra.mxu0 0.0
    %1560 = vmatprep.subr.mxu0 0.0
    %1561 = vmatpush1.msra.mxu0 0.0
    %1562 = vmatprep.subr.mxu0 0.0
    %1563 = vmatpush1.msra.mxu0 0.0
    %1564 = vmatprep.subr.mxu0 0.0
    %1565 = vmatpush1.msra.mxu0 0.0
    %1566 = vmatprep.subr.mxu0 0.0
    %1567 = vmatpush1.msra.mxu0 0.0
    %1568 = vmatprep.subr.mxu0 0.0
    %1569 = vmatpush1.msra.mxu0 0.0
    %1570 = vmatprep.subr.mxu0 0.0
    %1571 = vmatpush1.msra.mxu0 0.0
    %1572 = vmatprep.subr.mxu0 0.0
    %1573 = vmatpush1.msra.mxu0 0.0
    %1574 = vmatprep.subr.mxu0 0.0
    %1575 = vmatpush1.msra.mxu0 0.0
    %1576 = vmatprep.subr.mxu0 0.0
    %1577 = vmatpush1.msra.mxu0 0.0
    %1578 = vmatprep.subr.mxu0 0.0
    %v1579 = vand.u32 %v950, 4294901760
    %v1580 = vsub.f32 %v950, %v1579
    %v1581 = vand.u32 %v1580, 4294901760
    %v1582 = vsub.f32 %v1580, %v1581
    %v1583 = vand.u32 %v1582, 4294901760
    %1584 = vmatpush1.msra.mxu0 %v1583
    %1585 = vmatprep.subr.mxu0 0.0
    %v1586 = vand.u32 %v949, 4294901760
    %v1587 = vsub.f32 %v949, %v1586
    %v1588 = vand.u32 %v1587, 4294901760
    %v1589 = vsub.f32 %v1587, %v1588
    %v1590 = vand.u32 %v1589, 4294901760
    %1591 = vmatpush1.msra.mxu0 %v1590
    %1592 = vmatprep.subr.mxu0 0.0
    %v1593 = vand.u32 %v948, 4294901760
    %v1594 = vsub.f32 %v948, %v1593
    %v1595 = vand.u32 %v1594, 4294901760
    %v1596 = vsub.f32 %v1594, %v1595
    %v1597 = vand.u32 %v1596, 4294901760
    %1598 = vmatpush1.msra.mxu0 %v1597
    %1599 = vmatprep.subr.mxu0 0.0
    %v1600 = vand.u32 %v947, 4294901760
    %v1601 = vsub.f32 %v947, %v1600
    %v1602 = vand.u32 %v1601, 4294901760
    %v1603 = vsub.f32 %v1601, %v1602
    %v1604 = vand.u32 %v1603, 4294901760
    %1605 = vmatpush1.msra.mxu0 %v1604
    %1606 = vmatprep.subr.mxu0 0.0
    %1607 = vmatpush2.msra.mxu0 0.0
    %1608 = vmatprep.subr.mxu0 0.0
    %1609 = vmatpush2.msra.mxu0 0.0
    %1610 = vmatprep.subr.mxu0 0.0
    %1611 = vmatpush2.msra.mxu0 0.0
    %1612 = vmatprep.subr.mxu0 0.0
    %1613 = vmatpush2.msra.mxu0 0.0
    %1614 = vmatprep.subr.mxu0 0.0
    %1615 = vmatpush2.msra.mxu0 0.0
    %1616 = vmatprep.subr.mxu0 0.0
    %1617 = vmatpush2.msra.mxu0 0.0
    %1618 = vmatprep.subr.mxu0 0.0
    %1619 = vmatpush2.msra.mxu0 0.0
    %1620 = vmatprep.subr.mxu0 0.0
    %1621 = vmatpush2.msra.mxu0 0.0
    %1622 = vmatprep.subr.mxu0 0.0
    %1623 = vmatpush2.msra.mxu0 0.0
    %1624 = vmatprep.subr.mxu0 0.0
    %1625 = vmatpush2.msra.mxu0 0.0
    %1626 = vmatprep.subr.mxu0 0.0
    %1627 = vmatpush2.msra.mxu0 0.0
    %1628 = vmatprep.subr.mxu0 0.0
    %1629 = vmatpush2.msra.mxu0 0.0
    %1630 = vmatprep.subr.mxu0 0.0
    %1631 = vmatpush2.msra.mxu0 0.0
    %1632 = vmatprep.subr.mxu0 0.0
    %1633 = vmatpush2.msra.mxu0 0.0
    %1634 = vmatprep.subr.mxu0 0.0
    %1635 = vmatpush2.msra.mxu0 0.0
    %1636 = vmatprep.subr.mxu0 0.0
    %1637 = vmatpush2.msra.mxu0 0.0
    %1638 = vmatprep.mubr.f32.mxu0 0.0
    %v1639 = vand.u32 %v1473, 4294901760
    %1640 = vmatmul.mubr.f32.gmra.mxu0 %v1639
    %v1641 = vpop.f32.mrf.mxu0
    %v1642 = vadd.f32 %v1551, %v1641
    %v1643 = vpop.f32.mrf.mxu0
    %1644 = vdwg.mxu0
    %1645 = vmatprep.subr.mxu0 0.0
    %1646 = vmatpush1.msra.mxu0 0.0
    %1647 = vmatprep.subr.mxu0 0.0
    %1648 = vmatpush1.msra.mxu0 0.0
    %1649 = vmatprep.subr.mxu0 0.0
    %1650 = vmatpush1.msra.mxu0 0.0
    %1651 = vmatprep.subr.mxu0 0.0
    %1652 = vmatpush1.msra.mxu0 0.0
    %1653 = vmatprep.subr.mxu0 0.0
    %1654 = vmatpush1.msra.mxu0 0.0
    %1655 = vmatprep.subr.mxu0 0.0
    %1656 = vmatpush1.msra.mxu0 0.0
    %1657 = vmatprep.subr.mxu0 0.0
    %1658 = vmatpush1.msra.mxu0 0.0
    %1659 = vmatprep.subr.mxu0 0.0
    %1660 = vmatpush1.msra.mxu0 0.0
    %1661 = vmatprep.subr.mxu0 0.0
    %1662 = vmatpush1.msra.mxu0 0.0
    %1663 = vmatprep.subr.mxu0 0.0
    %1664 = vmatpush1.msra.mxu0 0.0
    %1665 = vmatprep.subr.mxu0 0.0
    %1666 = vmatpush1.msra.mxu0 0.0
    %1667 = vmatprep.subr.mxu0 0.0
    %1668 = vmatpush1.msra.mxu0 0.0
    %1669 = vmatprep.subr.mxu0 0.0
    %v1670 = vand.u32 %v950, 4294901760
    %v1671 = vsub.f32 %v950, %v1670
    %1672 = vmatpush1.msra.mxu0 %v1671
    %1673 = vmatprep.subr.mxu0 0.0
    %v1674 = vand.u32 %v949, 4294901760
    %v1675 = vsub.f32 %v949, %v1674
    %1676 = vmatpush1.msra.mxu0 %v1675
    %1677 = vmatprep.subr.mxu0 0.0
    %v1678 = vand.u32 %v948, 4294901760
    %v1679 = vsub.f32 %v948, %v1678
    %1680 = vmatpush1.msra.mxu0 %v1679
    %1681 = vmatprep.subr.mxu0 0.0
    %v1682 = vand.u32 %v947, 4294901760
    %v1683 = vsub.f32 %v947, %v1682
    %1684 = vmatpush1.msra.mxu0 %v1683
    %1685 = vmatprep.subr.mxu0 0.0
    %1686 = vmatpush2.msra.mxu0 0.0
    %1687 = vmatprep.subr.mxu0 0.0
    %1688 = vmatpush2.msra.mxu0 0.0
    %1689 = vmatprep.subr.mxu0 0.0
    %1690 = vmatpush2.msra.mxu0 0.0
    %1691 = vmatprep.subr.mxu0 0.0
    %1692 = vmatpush2.msra.mxu0 0.0
    %1693 = vmatprep.subr.mxu0 0.0
    %1694 = vmatpush2.msra.mxu0 0.0
    %1695 = vmatprep.subr.mxu0 0.0
    %1696 = vmatpush2.msra.mxu0 0.0
    %1697 = vmatprep.subr.mxu0 0.0
    %1698 = vmatpush2.msra.mxu0 0.0
    %1699 = vmatprep.subr.mxu0 0.0
    %1700 = vmatpush2.msra.mxu0 0.0
    %1701 = vmatprep.subr.mxu0 0.0
    %1702 = vmatpush2.msra.mxu0 0.0
    %1703 = vmatprep.subr.mxu0 0.0
    %1704 = vmatpush2.msra.mxu0 0.0
    %1705 = vmatprep.subr.mxu0 0.0
    %1706 = vmatpush2.msra.mxu0 0.0
    %1707 = vmatprep.subr.mxu0 0.0
    %1708 = vmatpush2.msra.mxu0 0.0
    %1709 = vmatprep.subr.mxu0 0.0
    %1710 = vmatpush2.msra.mxu0 0.0
    %1711 = vmatprep.subr.mxu0 0.0
    %1712 = vmatpush2.msra.mxu0 0.0
    %1713 = vmatprep.subr.mxu0 0.0
    %1714 = vmatpush2.msra.mxu0 0.0
    %1715 = vmatprep.subr.mxu0 0.0
    %1716 = vmatpush2.msra.mxu0 0.0
    %1717 = vmatprep.mubr.f32.mxu0 0.0
    %v1718 = vand.u32 %v1473, 4294901760
    %v1719 = vsub.f32 %v1473, %v1718
    %1720 = vmatmul.mubr.f32.gmra.mxu0 %v1719
    %v1721 = vpop.f32.mrf.mxu0
    %v1722 = vadd.f32 %v1642, %v1721
    %v1723 = vpop.f32.mrf.mxu0
    %1724 = vdwg.mxu0
    %1725 = vmatprep.subr.mxu0 0.0
    %1726 = vmatpush1.msra.mxu0 0.0
    %1727 = vmatprep.subr.mxu0 0.0
    %1728 = vmatpush1.msra.mxu0 0.0
    %1729 = vmatprep.subr.mxu0 0.0
    %1730 = vmatpush1.msra.mxu0 0.0
    %1731 = vmatprep.subr.mxu0 0.0
    %1732 = vmatpush1.msra.mxu0 0.0
    %1733 = vmatprep.subr.mxu0 0.0
    %1734 = vmatpush1.msra.mxu0 0.0
    %1735 = vmatprep.subr.mxu0 0.0
    %1736 = vmatpush1.msra.mxu0 0.0
    %1737 = vmatprep.subr.mxu0 0.0
    %1738 = vmatpush1.msra.mxu0 0.0
    %1739 = vmatprep.subr.mxu0 0.0
    %1740 = vmatpush1.msra.mxu0 0.0
    %1741 = vmatprep.subr.mxu0 0.0
    %1742 = vmatpush1.msra.mxu0 0.0
    %1743 = vmatprep.subr.mxu0 0.0
    %1744 = vmatpush1.msra.mxu0 0.0
    %1745 = vmatprep.subr.mxu0 0.0
    %1746 = vmatpush1.msra.mxu0 0.0
    %1747 = vmatprep.subr.mxu0 0.0
    %1748 = vmatpush1.msra.mxu0 0.0
    %1749 = vmatprep.subr.mxu0 0.0
    %v1750 = vand.u32 %v950, 4294901760
    %1751 = vmatpush1.msra.mxu0 %v1750
    %1752 = vmatprep.subr.mxu0 0.0
    %v1753 = vand.u32 %v949, 4294901760
    %1754 = vmatpush1.msra.mxu0 %v1753
    %1755 = vmatprep.subr.mxu0 0.0
    %v1756 = vand.u32 %v948, 4294901760
    %1757 = vmatpush1.msra.mxu0 %v1756
    %1758 = vmatprep.subr.mxu0 0.0
    %v1759 = vand.u32 %v947, 4294901760
    %1760 = vmatpush1.msra.mxu0 %v1759
    %1761 = vmatprep.subr.mxu0 0.0
    %1762 = vmatpush2.msra.mxu0 0.0
    %1763 = vmatprep.subr.mxu0 0.0
    %1764 = vmatpush2.msra.mxu0 0.0
    %1765 = vmatprep.subr.mxu0 0.0
    %1766 = vmatpush2.msra.mxu0 0.0
    %1767 = vmatprep.subr.mxu0 0.0
    %1768 = vmatpush2.msra.mxu0 0.0
    %1769 = vmatprep.subr.mxu0 0.0
    %1770 = vmatpush2.msra.mxu0 0.0
    %1771 = vmatprep.subr.mxu0 0.0
    %1772 = vmatpush2.msra.mxu0 0.0
    %1773 = vmatprep.subr.mxu0 0.0
    %1774 = vmatpush2.msra.mxu0 0.0
    %1775 = vmatprep.subr.mxu0 0.0
    %1776 = vmatpush2.msra.mxu0 0.0
    %1777 = vmatprep.subr.mxu0 0.0
    %1778 = vmatpush2.msra.mxu0 0.0
    %1779 = vmatprep.subr.mxu0 0.0
    %1780 = vmatpush2.msra.mxu0 0.0
    %1781 = vmatprep.subr.mxu0 0.0
    %1782 = vmatpush2.msra.mxu0 0.0
    %1783 = vmatprep.subr.mxu0 0.0
    %1784 = vmatpush2.msra.mxu0 0.0
    %1785 = vmatprep.subr.mxu0 0.0
    %1786 = vmatpush2.msra.mxu0 0.0
    %1787 = vmatprep.subr.mxu0 0.0
    %1788 = vmatpush2.msra.mxu0 0.0
    %1789 = vmatprep.subr.mxu0 0.0
    %1790 = vmatpush2.msra.mxu0 0.0
    %1791 = vmatprep.subr.mxu0 0.0
    %1792 = vmatpush2.msra.mxu0 0.0
    %1793 = vmatprep.mubr.f32.mxu0 0.0
    %v1794 = vand.u32 %v1473, 4294901760
    %v1795 = vsub.f32 %v1473, %v1794
    %v1796 = vand.u32 %v1795, 4294901760
    %1797 = vmatmul.mubr.f32.gmra.mxu0 %v1796
    %v1798 = vpop.f32.mrf.mxu0
    %v1799 = vadd.f32 %v1722, %v1798
    %v1800 = vpop.f32.mrf.mxu0
    %1801 = vdwg.mxu0
    %1802 = vmatprep.subr.mxu0 0.0
    %1803 = vmatpush1.msra.mxu0 0.0
    %1804 = vmatprep.subr.mxu0 0.0
    %1805 = vmatpush1.msra.mxu0 0.0
    %1806 = vmatprep.subr.mxu0 0.0
    %1807 = vmatpush1.msra.mxu0 0.0
    %1808 = vmatprep.subr.mxu0 0.0
    %1809 = vmatpush1.msra.mxu0 0.0
    %1810 = vmatprep.subr.mxu0 0.0
    %1811 = vmatpush1.msra.mxu0 0.0
    %1812 = vmatprep.subr.mxu0 0.0
    %1813 = vmatpush1.msra.mxu0 0.0
    %1814 = vmatprep.subr.mxu0 0.0
    %1815 = vmatpush1.msra.mxu0 0.0
    %1816 = vmatprep.subr.mxu0 0.0
    %1817 = vmatpush1.msra.mxu0 0.0
    %1818 = vmatprep.subr.mxu0 0.0
    %1819 = vmatpush1.msra.mxu0 0.0
    %1820 = vmatprep.subr.mxu0 0.0
    %1821 = vmatpush1.msra.mxu0 0.0
    %1822 = vmatprep.subr.mxu0 0.0
    %1823 = vmatpush1.msra.mxu0 0.0
    %1824 = vmatprep.subr.mxu0 0.0
    %1825 = vmatpush1.msra.mxu0 0.0
    %1826 = vmatprep.subr.mxu0 0.0
    %v1827 = vand.u32 %v950, 4294901760
    %v1828 = vsub.f32 %v950, %v1827
    %v1829 = vand.u32 %v1828, 4294901760
    %1830 = vmatpush1.msra.mxu0 %v1829
    %1831 = vmatprep.subr.mxu0 0.0
    %v1832 = vand.u32 %v949, 4294901760
    %v1833 = vsub.f32 %v949, %v1832
    %v1834 = vand.u32 %v1833, 4294901760
    %1835 = vmatpush1.msra.mxu0 %v1834
    %1836 = vmatprep.subr.mxu0 0.0
    %v1837 = vand.u32 %v948, 4294901760
    %v1838 = vsub.f32 %v948, %v1837
    %v1839 = vand.u32 %v1838, 4294901760
    %1840 = vmatpush1.msra.mxu0 %v1839
    %1841 = vmatprep.subr.mxu0 0.0
    %v1842 = vand.u32 %v947, 4294901760
    %v1843 = vsub.f32 %v947, %v1842
    %v1844 = vand.u32 %v1843, 4294901760
    %1845 = vmatpush1.msra.mxu0 %v1844
    %1846 = vmatprep.subr.mxu0 0.0
    %1847 = vmatpush2.msra.mxu0 0.0
    %1848 = vmatprep.subr.mxu0 0.0
    %1849 = vmatpush2.msra.mxu0 0.0
    %1850 = vmatprep.subr.mxu0 0.0
    %1851 = vmatpush2.msra.mxu0 0.0
    %1852 = vmatprep.subr.mxu0 0.0
    %1853 = vmatpush2.msra.mxu0 0.0
    %1854 = vmatprep.subr.mxu0 0.0
    %1855 = vmatpush2.msra.mxu0 0.0
    %1856 = vmatprep.subr.mxu0 0.0
    %1857 = vmatpush2.msra.mxu0 0.0
    %1858 = vmatprep.subr.mxu0 0.0
    %1859 = vmatpush2.msra.mxu0 0.0
    %1860 = vmatprep.subr.mxu0 0.0
    %1861 = vmatpush2.msra.mxu0 0.0
    %1862 = vmatprep.subr.mxu0 0.0
    %1863 = vmatpush2.msra.mxu0 0.0
    %1864 = vmatprep.subr.mxu0 0.0
    %1865 = vmatpush2.msra.mxu0 0.0
    %1866 = vmatprep.subr.mxu0 0.0
    %1867 = vmatpush2.msra.mxu0 0.0
    %1868 = vmatprep.subr.mxu0 0.0
    %1869 = vmatpush2.msra.mxu0 0.0
    %1870 = vmatprep.subr.mxu0 0.0
    %1871 = vmatpush2.msra.mxu0 0.0
    %1872 = vmatprep.subr.mxu0 0.0
    %1873 = vmatpush2.msra.mxu0 0.0
    %1874 = vmatprep.subr.mxu0 0.0
    %1875 = vmatpush2.msra.mxu0 0.0
    %1876 = vmatprep.subr.mxu0 0.0
    %1877 = vmatpush2.msra.mxu0 0.0
    %1878 = vmatprep.mubr.f32.mxu0 0.0
    %v1879 = vand.u32 %v1473, 4294901760
    %1880 = vmatmul.mubr.f32.gmra.mxu0 %v1879
    %v1881 = vpop.f32.mrf.mxu0
    %v1882 = vadd.f32 %v1799, %v1881
    %v1883 = vpop.f32.mrf.mxu0
    %1884 = vdwg.mxu0
    %1885 = vmatprep.subr.mxu0 0.0
    %1886 = vmatpush1.msra.mxu0 0.0
    %1887 = vmatprep.subr.mxu0 0.0
    %1888 = vmatpush1.msra.mxu0 0.0
    %1889 = vmatprep.subr.mxu0 0.0
    %1890 = vmatpush1.msra.mxu0 0.0
    %1891 = vmatprep.subr.mxu0 0.0
    %1892 = vmatpush1.msra.mxu0 0.0
    %1893 = vmatprep.subr.mxu0 0.0
    %1894 = vmatpush1.msra.mxu0 0.0
    %1895 = vmatprep.subr.mxu0 0.0
    %1896 = vmatpush1.msra.mxu0 0.0
    %1897 = vmatprep.subr.mxu0 0.0
    %1898 = vmatpush1.msra.mxu0 0.0
    %1899 = vmatprep.subr.mxu0 0.0
    %1900 = vmatpush1.msra.mxu0 0.0
    %1901 = vmatprep.subr.mxu0 0.0
    %1902 = vmatpush1.msra.mxu0 0.0
    %1903 = vmatprep.subr.mxu0 0.0
    %1904 = vmatpush1.msra.mxu0 0.0
    %1905 = vmatprep.subr.mxu0 0.0
    %1906 = vmatpush1.msra.mxu0 0.0
    %1907 = vmatprep.subr.mxu0 0.0
    %1908 = vmatpush1.msra.mxu0 0.0
    %1909 = vmatprep.subr.mxu0 0.0
    %v1910 = vand.u32 %v950, 4294901760
    %1911 = vmatpush1.msra.mxu0 %v1910
    %1912 = vmatprep.subr.mxu0 0.0
    %v1913 = vand.u32 %v949, 4294901760
    %1914 = vmatpush1.msra.mxu0 %v1913
    %1915 = vmatprep.subr.mxu0 0.0
    %v1916 = vand.u32 %v948, 4294901760
    %1917 = vmatpush1.msra.mxu0 %v1916
    %1918 = vmatprep.subr.mxu0 0.0
    %v1919 = vand.u32 %v947, 4294901760
    %1920 = vmatpush1.msra.mxu0 %v1919
    %1921 = vmatprep.subr.mxu0 0.0
    %1922 = vmatpush2.msra.mxu0 0.0
    %1923 = vmatprep.subr.mxu0 0.0
    %1924 = vmatpush2.msra.mxu0 0.0
    %1925 = vmatprep.subr.mxu0 0.0
    %1926 = vmatpush2.msra.mxu0 0.0
    %1927 = vmatprep.subr.mxu0 0.0
    %1928 = vmatpush2.msra.mxu0 0.0
    %1929 = vmatprep.subr.mxu0 0.0
    %1930 = vmatpush2.msra.mxu0 0.0
    %1931 = vmatprep.subr.mxu0 0.0
    %1932 = vmatpush2.msra.mxu0 0.0
    %1933 = vmatprep.subr.mxu0 0.0
    %1934 = vmatpush2.msra.mxu0 0.0
    %1935 = vmatprep.subr.mxu0 0.0
    %1936 = vmatpush2.msra.mxu0 0.0
    %1937 = vmatprep.subr.mxu0 0.0
    %1938 = vmatpush2.msra.mxu0 0.0
    %1939 = vmatprep.subr.mxu0 0.0
    %1940 = vmatpush2.msra.mxu0 0.0
    %1941 = vmatprep.subr.mxu0 0.0
    %1942 = vmatpush2.msra.mxu0 0.0
    %1943 = vmatprep.subr.mxu0 0.0
    %1944 = vmatpush2.msra.mxu0 0.0
    %1945 = vmatprep.subr.mxu0 0.0
    %1946 = vmatpush2.msra.mxu0 0.0
    %1947 = vmatprep.subr.mxu0 0.0
    %1948 = vmatpush2.msra.mxu0 0.0
    %1949 = vmatprep.subr.mxu0 0.0
    %1950 = vmatpush2.msra.mxu0 0.0
    %1951 = vmatprep.subr.mxu0 0.0
    %1952 = vmatpush2.msra.mxu0 0.0
    %1953 = vmatprep.mubr.f32.mxu0 0.0
    %v1954 = vand.u32 %v1473, 4294901760
    %1955 = vmatmul.mubr.f32.gmra.mxu0 %v1954
    %v1956 = vpop.f32.mrf.mxu0
    %v1957 = vadd.f32 %v1882, %v1956
    %v1958 = vpop.f32.mrf.mxu0
    %1959 = vdwg.mxu0
    %v1960 = vadd.f32 %v908, %v1957
    %v1961 = vxor.u32 %v1960, 2147483648
    %v1962 = vmul.f32 %v1961, 1.442695
    %v1963 = vpow.pop %v1962
    %v1964 = vadd.f32 %v1963, 1.0
    %v1965 = vrcp.pop %v1964
    %v1966 = vmul.f32 1.0, %v1965
    %v1967 = vtanh.pop %v1960
    %v1968 = vmul.f32 %v1966, %v1463
    %1970 = vrot.lane.b32.xlu0 %v1967, 64
    %v1971 = vpop.permute.xlu0 %1970
    %v1973 = vmul.f32 %v1966, %v1971
    %1975 = vrot.lane.b32.xlu0 %v1973, 32
    %v1976 = vpop.permute.xlu0 %1975
    %v1978 = vadd.f32 %v1968, %v1976
    %v1979 = vtanh.pop %v1978
    %1981 = vrot.lane.b32.xlu0 %v1979, 64
    %v1982 = vpop.permute.xlu0 %1981
    %v1984 = vmul.f32 %v1966, %v1982
    %1986 = vrot.lane.b32.xlu0 %v1984, 32
    %v1987 = vpop.permute.xlu0 %1986
    %v1988 = vsel %vm136, %v1987, 0
    %1990 = vmatprep.subr.mxu0 0.0
    %1991 = vmatpush1.msra.mxu0 0.0
    %1992 = vmatprep.subr.mxu0 0.0
    %1993 = vmatpush1.msra.mxu0 0.0
    %1994 = vmatprep.subr.mxu0 0.0
    %1995 = vmatpush1.msra.mxu0 0.0
    %1996 = vmatprep.subr.mxu0 0.0
    %1997 = vmatpush1.msra.mxu0 0.0
    %1998 = vmatprep.subr.mxu0 0.0
    %1999 = vmatpush1.msra.mxu0 0.0
    %2000 = vmatprep.subr.mxu0 0.0
    %2001 = vmatpush1.msra.mxu0 0.0
    %2002 = vmatprep.subr.mxu0 0.0
    %2003 = vmatpush1.msra.mxu0 0.0
    %2004 = vmatprep.subr.mxu0 0.0
    %2005 = vmatpush1.msra.mxu0 0.0
    %2006 = vmatprep.subr.mxu0 0.0
    %2007 = vmatpush1.msra.mxu0 0.0
    %2008 = vmatprep.subr.mxu0 0.0
    %2009 = vmatpush1.msra.mxu0 0.0
    %2010 = vmatprep.subr.mxu0 0.0
    %2011 = vmatpush1.msra.mxu0 0.0
    %2012 = vmatprep.subr.mxu0 0.0
    %2013 = vmatpush1.msra.mxu0 0.0
    %2014 = vmatprep.subr.mxu0 0.0
    %v2015 = vand.u32 %v950, 4294901760
    %2016 = vmatpush1.msra.mxu0 %v2015
    %2017 = vmatprep.subr.mxu0 0.0
    %v2018 = vand.u32 %v949, 4294901760
    %2019 = vmatpush1.msra.mxu0 %v2018
    %2020 = vmatprep.subr.mxu0 0.0
    %v2021 = vand.u32 %v948, 4294901760
    %2022 = vmatpush1.msra.mxu0 %v2021
    %2023 = vmatprep.subr.mxu0 0.0
    %v2024 = vand.u32 %v947, 4294901760
    %2025 = vmatpush1.msra.mxu0 %v2024
    %2026 = vmatprep.subr.mxu0 0.0
    %2027 = vmatpush2.msra.mxu0 0.0
    %2028 = vmatprep.subr.mxu0 0.0
    %2029 = vmatpush2.msra.mxu0 0.0
    %2030 = vmatprep.subr.mxu0 0.0
    %2031 = vmatpush2.msra.mxu0 0.0
    %2032 = vmatprep.subr.mxu0 0.0
    %2033 = vmatpush2.msra.mxu0 0.0
    %2034 = vmatprep.subr.mxu0 0.0
    %2035 = vmatpush2.msra.mxu0 0.0
    %2036 = vmatprep.subr.mxu0 0.0
    %2037 = vmatpush2.msra.mxu0 0.0
    %2038 = vmatprep.subr.mxu0 0.0
    %2039 = vmatpush2.msra.mxu0 0.0
    %2040 = vmatprep.subr.mxu0 0.0
    %2041 = vmatpush2.msra.mxu0 0.0
    %2042 = vmatprep.subr.mxu0 0.0
    %2043 = vmatpush2.msra.mxu0 0.0
    %2044 = vmatprep.subr.mxu0 0.0
    %2045 = vmatpush2.msra.mxu0 0.0
    %2046 = vmatprep.subr.mxu0 0.0
    %2047 = vmatpush2.msra.mxu0 0.0
    %2048 = vmatprep.subr.mxu0 0.0
    %2049 = vmatpush2.msra.mxu0 0.0
    %2050 = vmatprep.subr.mxu0 0.0
    %2051 = vmatpush2.msra.mxu0 0.0
    %2052 = vmatprep.subr.mxu0 0.0
    %2053 = vmatpush2.msra.mxu0 0.0
    %2054 = vmatprep.subr.mxu0 0.0
    %2055 = vmatpush2.msra.mxu0 0.0
    %2056 = vmatprep.subr.mxu0 0.0
    %2057 = vmatpush2.msra.mxu0 0.0
    %2058 = vmatprep.mubr.f32.mxu0 0.0
    %v2059 = vand.u32 %v1988, 4294901760
    %v2060 = vsub.f32 %v1988, %v2059
    %v2061 = vand.u32 %v2060, 4294901760
    %v2062 = vsub.f32 %v2060, %v2061
    %v2063 = vand.u32 %v2062, 4294901760
    %2064 = vmatmul.mubr.f32.gmra.mxu0 %v2063
    %v2065 = vpop.f32.mrf.mxu0
    %v2066 = vadd.f32 0.0, %v2065
    %v2067 = vpop.f32.mrf.mxu0
    %2068 = vdwg.mxu0
    %2069 = vmatprep.subr.mxu0 0.0
    %2070 = vmatpush1.msra.mxu0 0.0
    %2071 = vmatprep.subr.mxu0 0.0
    %2072 = vmatpush1.msra.mxu0 0.0
    %2073 = vmatprep.subr.mxu0 0.0
    %2074 = vmatpush1.msra.mxu0 0.0
    %2075 = vmatprep.subr.mxu0 0.0
    %2076 = vmatpush1.msra.mxu0 0.0
    %2077 = vmatprep.subr.mxu0 0.0
    %2078 = vmatpush1.msra.mxu0 0.0
    %2079 = vmatprep.subr.mxu0 0.0
    %2080 = vmatpush1.msra.mxu0 0.0
    %2081 = vmatprep.subr.mxu0 0.0
    %2082 = vmatpush1.msra.mxu0 0.0
    %2083 = vmatprep.subr.mxu0 0.0
    %2084 = vmatpush1.msra.mxu0 0.0
    %2085 = vmatprep.subr.mxu0 0.0
    %2086 = vmatpush1.msra.mxu0 0.0
    %2087 = vmatprep.subr.mxu0 0.0
    %2088 = vmatpush1.msra.mxu0 0.0
    %2089 = vmatprep.subr.mxu0 0.0
    %2090 = vmatpush1.msra.mxu0 0.0
    %2091 = vmatprep.subr.mxu0 0.0
    %2092 = vmatpush1.msra.mxu0 0.0
    %2093 = vmatprep.subr.mxu0 0.0
    %v2094 = vand.u32 %v950, 4294901760
    %v2095 = vsub.f32 %v950, %v2094
    %v2096 = vand.u32 %v2095, 4294901760
    %v2097 = vsub.f32 %v2095, %v2096
    %v2098 = vand.u32 %v2097, 4294901760
    %2099 = vmatpush1.msra.mxu0 %v2098
    %2100 = vmatprep.subr.mxu0 0.0
    %v2101 = vand.u32 %v949, 4294901760
    %v2102 = vsub.f32 %v949, %v2101
    %v2103 = vand.u32 %v2102, 4294901760
    %v2104 = vsub.f32 %v2102, %v2103
    %v2105 = vand.u32 %v2104, 4294901760
    %2106 = vmatpush1.msra.mxu0 %v2105
    %2107 = vmatprep.subr.mxu0 0.0
    %v2108 = vand.u32 %v948, 4294901760
    %v2109 = vsub.f32 %v948, %v2108
    %v2110 = vand.u32 %v2109, 4294901760
    %v2111 = vsub.f32 %v2109, %v2110
    %v2112 = vand.u32 %v2111, 4294901760
    %2113 = vmatpush1.msra.mxu0 %v2112
    %2114 = vmatprep.subr.mxu0 0.0
    %v2115 = vand.u32 %v947, 4294901760
    %v2116 = vsub.f32 %v947, %v2115
    %v2117 = vand.u32 %v2116, 4294901760
    %v2118 = vsub.f32 %v2116, %v2117
    %v2119 = vand.u32 %v2118, 4294901760
    %2120 = vmatpush1.msra.mxu0 %v2119
    %2121 = vmatprep.subr.mxu0 0.0
    %2122 = vmatpush2.msra.mxu0 0.0
    %2123 = vmatprep.subr.mxu0 0.0
    %2124 = vmatpush2.msra.mxu0 0.0
    %2125 = vmatprep.subr.mxu0 0.0
    %2126 = vmatpush2.msra.mxu0 0.0
    %2127 = vmatprep.subr.mxu0 0.0
    %2128 = vmatpush2.msra.mxu0 0.0
    %2129 = vmatprep.subr.mxu0 0.0
    %2130 = vmatpush2.msra.mxu0 0.0
    %2131 = vmatprep.subr.mxu0 0.0
    %2132 = vmatpush2.msra.mxu0 0.0
    %2133 = vmatprep.subr.mxu0 0.0
    %2134 = vmatpush2.msra.mxu0 0.0
    %2135 = vmatprep.subr.mxu0 0.0
    %2136 = vmatpush2.msra.mxu0 0.0
    %2137 = vmatprep.subr.mxu0 0.0
    %2138 = vmatpush2.msra.mxu0 0.0
    %2139 = vmatprep.subr.mxu0 0.0
    %2140 = vmatpush2.msra.mxu0 0.0
    %2141 = vmatprep.subr.mxu0 0.0
    %2142 = vmatpush2.msra.mxu0 0.0
    %2143 = vmatprep.subr.mxu0 0.0
    %2144 = vmatpush2.msra.mxu0 0.0
    %2145 = vmatprep.subr.mxu0 0.0
    %2146 = vmatpush2.msra.mxu0 0.0
    %2147 = vmatprep.subr.mxu0 0.0
    %2148 = vmatpush2.msra.mxu0 0.0
    %2149 = vmatprep.subr.mxu0 0.0
    %2150 = vmatpush2.msra.mxu0 0.0
    %2151 = vmatprep.subr.mxu0 0.0
    %2152 = vmatpush2.msra.mxu0 0.0
    %2153 = vmatprep.mubr.f32.mxu0 0.0
    %v2154 = vand.u32 %v1988, 4294901760
    %2155 = vmatmul.mubr.f32.gmra.mxu0 %v2154
    %v2156 = vpop.f32.mrf.mxu0
    %v2157 = vadd.f32 %v2066, %v2156
    %v2158 = vpop.f32.mrf.mxu0
    %2159 = vdwg.mxu0
    %2160 = vmatprep.subr.mxu0 0.0
    %2161 = vmatpush1.msra.mxu0 0.0
    %2162 = vmatprep.subr.mxu0 0.0
    %2163 = vmatpush1.msra.mxu0 0.0
    %2164 = vmatprep.subr.mxu0 0.0
    %2165 = vmatpush1.msra.mxu0 0.0
    %2166 = vmatprep.subr.mxu0 0.0
    %2167 = vmatpush1.msra.mxu0 0.0
    %2168 = vmatprep.subr.mxu0 0.0
    %2169 = vmatpush1.msra.mxu0 0.0
    %2170 = vmatprep.subr.mxu0 0.0
    %2171 = vmatpush1.msra.mxu0 0.0
    %2172 = vmatprep.subr.mxu0 0.0
    %2173 = vmatpush1.msra.mxu0 0.0
    %2174 = vmatprep.subr.mxu0 0.0
    %2175 = vmatpush1.msra.mxu0 0.0
    %2176 = vmatprep.subr.mxu0 0.0
    %2177 = vmatpush1.msra.mxu0 0.0
    %2178 = vmatprep.subr.mxu0 0.0
    %2179 = vmatpush1.msra.mxu0 0.0
    %2180 = vmatprep.subr.mxu0 0.0
    %2181 = vmatpush1.msra.mxu0 0.0
    %2182 = vmatprep.subr.mxu0 0.0
    %2183 = vmatpush1.msra.mxu0 0.0
    %2184 = vmatprep.subr.mxu0 0.0
    %v2185 = vand.u32 %v950, 4294901760
    %v2186 = vsub.f32 %v950, %v2185
    %2187 = vmatpush1.msra.mxu0 %v2186
    %2188 = vmatprep.subr.mxu0 0.0
    %v2189 = vand.u32 %v949, 4294901760
    %v2190 = vsub.f32 %v949, %v2189
    %2191 = vmatpush1.msra.mxu0 %v2190
    %2192 = vmatprep.subr.mxu0 0.0
    %v2193 = vand.u32 %v948, 4294901760
    %v2194 = vsub.f32 %v948, %v2193
    %2195 = vmatpush1.msra.mxu0 %v2194
    %2196 = vmatprep.subr.mxu0 0.0
    %v2197 = vand.u32 %v947, 4294901760
    %v2198 = vsub.f32 %v947, %v2197
    %2199 = vmatpush1.msra.mxu0 %v2198
    %2200 = vmatprep.subr.mxu0 0.0
    %2201 = vmatpush2.msra.mxu0 0.0
    %2202 = vmatprep.subr.mxu0 0.0
    %2203 = vmatpush2.msra.mxu0 0.0
    %2204 = vmatprep.subr.mxu0 0.0
    %2205 = vmatpush2.msra.mxu0 0.0
    %2206 = vmatprep.subr.mxu0 0.0
    %2207 = vmatpush2.msra.mxu0 0.0
    %2208 = vmatprep.subr.mxu0 0.0
    %2209 = vmatpush2.msra.mxu0 0.0
    %2210 = vmatprep.subr.mxu0 0.0
    %2211 = vmatpush2.msra.mxu0 0.0
    %2212 = vmatprep.subr.mxu0 0.0
    %2213 = vmatpush2.msra.mxu0 0.0
    %2214 = vmatprep.subr.mxu0 0.0
    %2215 = vmatpush2.msra.mxu0 0.0
    %2216 = vmatprep.subr.mxu0 0.0
    %2217 = vmatpush2.msra.mxu0 0.0
    %2218 = vmatprep.subr.mxu0 0.0
    %2219 = vmatpush2.msra.mxu0 0.0
    %2220 = vmatprep.subr.mxu0 0.0
    %2221 = vmatpush2.msra.mxu0 0.0
    %2222 = vmatprep.subr.mxu0 0.0
    %2223 = vmatpush2.msra.mxu0 0.0
    %2224 = vmatprep.subr.mxu0 0.0
    %2225 = vmatpush2.msra.mxu0 0.0
    %2226 = vmatprep.subr.mxu0 0.0
    %2227 = vmatpush2.msra.mxu0 0.0
    %2228 = vmatprep.subr.mxu0 0.0
    %2229 = vmatpush2.msra.mxu0 0.0
    %2230 = vmatprep.subr.mxu0 0.0
    %2231 = vmatpush2.msra.mxu0 0.0
    %2232 = vmatprep.mubr.f32.mxu0 0.0
    %v2233 = vand.u32 %v1988, 4294901760
    %v2234 = vsub.f32 %v1988, %v2233
    %2235 = vmatmul.mubr.f32.gmra.mxu0 %v2234
    %v2236 = vpop.f32.mrf.mxu0
    %v2237 = vadd.f32 %v2157, %v2236
    %v2238 = vpop.f32.mrf.mxu0
    %2239 = vdwg.mxu0
    %2240 = vmatprep.subr.mxu0 0.0
    %2241 = vmatpush1.msra.mxu0 0.0
    %2242 = vmatprep.subr.mxu0 0.0
    %2243 = vmatpush1.msra.mxu0 0.0
    %2244 = vmatprep.subr.mxu0 0.0
    %2245 = vmatpush1.msra.mxu0 0.0
    %2246 = vmatprep.subr.mxu0 0.0
    %2247 = vmatpush1.msra.mxu0 0.0
    %2248 = vmatprep.subr.mxu0 0.0
    %2249 = vmatpush1.msra.mxu0 0.0
    %2250 = vmatprep.subr.mxu0 0.0
    %2251 = vmatpush1.msra.mxu0 0.0
    %2252 = vmatprep.subr.mxu0 0.0
    %2253 = vmatpush1.msra.mxu0 0.0
    %2254 = vmatprep.subr.mxu0 0.0
    %2255 = vmatpush1.msra.mxu0 0.0
    %2256 = vmatprep.subr.mxu0 0.0
    %2257 = vmatpush1.msra.mxu0 0.0
    %2258 = vmatprep.subr.mxu0 0.0
    %2259 = vmatpush1.msra.mxu0 0.0
    %2260 = vmatprep.subr.mxu0 0.0
    %2261 = vmatpush1.msra.mxu0 0.0
    %2262 = vmatprep.subr.mxu0 0.0
    %2263 = vmatpush1.msra.mxu0 0.0
    %2264 = vmatprep.subr.mxu0 0.0
    %v2265 = vand.u32 %v950, 4294901760
    %2266 = vmatpush1.msra.mxu0 %v2265
    %2267 = vmatprep.subr.mxu0 0.0
    %v2268 = vand.u32 %v949, 4294901760
    %2269 = vmatpush1.msra.mxu0 %v2268
    %2270 = vmatprep.subr.mxu0 0.0
    %v2271 = vand.u32 %v948, 4294901760
    %2272 = vmatpush1.msra.mxu0 %v2271
    %2273 = vmatprep.subr.mxu0 0.0
    %v2274 = vand.u32 %v947, 4294901760
    %2275 = vmatpush1.msra.mxu0 %v2274
    %2276 = vmatprep.subr.mxu0 0.0
    %2277 = vmatpush2.msra.mxu0 0.0
    %2278 = vmatprep.subr.mxu0 0.0
    %2279 = vmatpush2.msra.mxu0 0.0
    %2280 = vmatprep.subr.mxu0 0.0
    %2281 = vmatpush2.msra.mxu0 0.0
    %2282 = vmatprep.subr.mxu0 0.0
    %2283 = vmatpush2.msra.mxu0 0.0
    %2284 = vmatprep.subr.mxu0 0.0
    %2285 = vmatpush2.msra.mxu0 0.0
    %2286 = vmatprep.subr.mxu0 0.0
    %2287 = vmatpush2.msra.mxu0 0.0
    %2288 = vmatprep.subr.mxu0 0.0
    %2289 = vmatpush2.msra.mxu0 0.0
    %2290 = vmatprep.subr.mxu0 0.0
    %2291 = vmatpush2.msra.mxu0 0.0
    %2292 = vmatprep.subr.mxu0 0.0
    %2293 = vmatpush2.msra.mxu0 0.0
    %2294 = vmatprep.subr.mxu0 0.0
    %2295 = vmatpush2.msra.mxu0 0.0
    %2296 = vmatprep.subr.mxu0 0.0
    %2297 = vmatpush2.msra.mxu0 0.0
    %2298 = vmatprep.subr.mxu0 0.0
    %2299 = vmatpush2.msra.mxu0 0.0
    %2300 = vmatprep.subr.mxu0 0.0
    %2301 = vmatpush2.msra.mxu0 0.0
    %2302 = vmatprep.subr.mxu0 0.0
    %2303 = vmatpush2.msra.mxu0 0.0
    %2304 = vmatprep.subr.mxu0 0.0
    %2305 = vmatpush2.msra.mxu0 0.0
    %2306 = vmatprep.subr.mxu0 0.0
    %2307 = vmatpush2.msra.mxu0 0.0
    %2308 = vmatprep.mubr.f32.mxu0 0.0
    %v2309 = vand.u32 %v1988, 4294901760
    %v2310 = vsub.f32 %v1988, %v2309
    %v2311 = vand.u32 %v2310, 4294901760
    %2312 = vmatmul.mubr.f32.gmra.mxu0 %v2311
    %v2313 = vpop.f32.mrf.mxu0
    %v2314 = vadd.f32 %v2237, %v2313
    %v2315 = vpop.f32.mrf.mxu0
    %2316 = vdwg.mxu0
    %2317 = vmatprep.subr.mxu0 0.0
    %2318 = vmatpush1.msra.mxu0 0.0
    %2319 = vmatprep.subr.mxu0 0.0
    %2320 = vmatpush1.msra.mxu0 0.0
    %2321 = vmatprep.subr.mxu0 0.0
    %2322 = vmatpush1.msra.mxu0 0.0
    %2323 = vmatprep.subr.mxu0 0.0
    %2324 = vmatpush1.msra.mxu0 0.0
    %2325 = vmatprep.subr.mxu0 0.0
    %2326 = vmatpush1.msra.mxu0 0.0
    %2327 = vmatprep.subr.mxu0 0.0
    %2328 = vmatpush1.msra.mxu0 0.0
    %2329 = vmatprep.subr.mxu0 0.0
    %2330 = vmatpush1.msra.mxu0 0.0
    %2331 = vmatprep.subr.mxu0 0.0
    %2332 = vmatpush1.msra.mxu0 0.0
    %2333 = vmatprep.subr.mxu0 0.0
    %2334 = vmatpush1.msra.mxu0 0.0
    %2335 = vmatprep.subr.mxu0 0.0
    %2336 = vmatpush1.msra.mxu0 0.0
    %2337 = vmatprep.subr.mxu0 0.0
    %2338 = vmatpush1.msra.mxu0 0.0
    %2339 = vmatprep.subr.mxu0 0.0
    %2340 = vmatpush1.msra.mxu0 0.0
    %2341 = vmatprep.subr.mxu0 0.0
    %v2342 = vand.u32 %v950, 4294901760
    %v2343 = vsub.f32 %v950, %v2342
    %v2344 = vand.u32 %v2343, 4294901760
    %2345 = vmatpush1.msra.mxu0 %v2344
    %2346 = vmatprep.subr.mxu0 0.0
    %v2347 = vand.u32 %v949, 4294901760
    %v2348 = vsub.f32 %v949, %v2347
    %v2349 = vand.u32 %v2348, 4294901760
    %2350 = vmatpush1.msra.mxu0 %v2349
    %2351 = vmatprep.subr.mxu0 0.0
    %v2352 = vand.u32 %v948, 4294901760
    %v2353 = vsub.f32 %v948, %v2352
    %v2354 = vand.u32 %v2353, 4294901760
    %2355 = vmatpush1.msra.mxu0 %v2354
    %2356 = vmatprep.subr.mxu0 0.0
    %v2357 = vand.u32 %v947, 4294901760
    %v2358 = vsub.f32 %v947, %v2357
    %v2359 = vand.u32 %v2358, 4294901760
    %2360 = vmatpush1.msra.mxu0 %v2359
    %2361 = vmatprep.subr.mxu0 0.0
    %2362 = vmatpush2.msra.mxu0 0.0
    %2363 = vmatprep.subr.mxu0 0.0
    %2364 = vmatpush2.msra.mxu0 0.0
    %2365 = vmatprep.subr.mxu0 0.0
    %2366 = vmatpush2.msra.mxu0 0.0
    %2367 = vmatprep.subr.mxu0 0.0
    %2368 = vmatpush2.msra.mxu0 0.0
    %2369 = vmatprep.subr.mxu0 0.0
    %2370 = vmatpush2.msra.mxu0 0.0
    %2371 = vmatprep.subr.mxu0 0.0
    %2372 = vmatpush2.msra.mxu0 0.0
    %2373 = vmatprep.subr.mxu0 0.0
    %2374 = vmatpush2.msra.mxu0 0.0
    %2375 = vmatprep.subr.mxu0 0.0
    %2376 = vmatpush2.msra.mxu0 0.0
    %2377 = vmatprep.subr.mxu0 0.0
    %2378 = vmatpush2.msra.mxu0 0.0
    %2379 = vmatprep.subr.mxu0 0.0
    %2380 = vmatpush2.msra.mxu0 0.0
    %2381 = vmatprep.subr.mxu0 0.0
    %2382 = vmatpush2.msra.mxu0 0.0
    %2383 = vmatprep.subr.mxu0 0.0
    %2384 = vmatpush2.msra.mxu0 0.0
    %2385 = vmatprep.subr.mxu0 0.0
    %2386 = vmatpush2.msra.mxu0 0.0
    %2387 = vmatprep.subr.mxu0 0.0
    %2388 = vmatpush2.msra.mxu0 0.0
    %2389 = vmatprep.subr.mxu0 0.0
    %2390 = vmatpush2.msra.mxu0 0.0
    %2391 = vmatprep.subr.mxu0 0.0
    %2392 = vmatpush2.msra.mxu0 0.0
    %2393 = vmatprep.mubr.f32.mxu0 0.0
    %v2394 = vand.u32 %v1988, 4294901760
    %2395 = vmatmul.mubr.f32.gmra.mxu0 %v2394
    %v2396 = vpop.f32.mrf.mxu0
    %v2397 = vadd.f32 %v2314, %v2396
    %v2398 = vpop.f32.mrf.mxu0
    %2399 = vdwg.mxu0
    %2400 = vmatprep.subr.mxu0 0.0
    %2401 = vmatpush1.msra.mxu0 0.0
    %2402 = vmatprep.subr.mxu0 0.0
    %2403 = vmatpush1.msra.mxu0 0.0
    %2404 = vmatprep.subr.mxu0 0.0
    %2405 = vmatpush1.msra.mxu0 0.0
    %2406 = vmatprep.subr.mxu0 0.0
    %2407 = vmatpush1.msra.mxu0 0.0
    %2408 = vmatprep.subr.mxu0 0.0
    %2409 = vmatpush1.msra.mxu0 0.0
    %2410 = vmatprep.subr.mxu0 0.0
    %2411 = vmatpush1.msra.mxu0 0.0
    %2412 = vmatprep.subr.mxu0 0.0
    %2413 = vmatpush1.msra.mxu0 0.0
    %2414 = vmatprep.subr.mxu0 0.0
    %2415 = vmatpush1.msra.mxu0 0.0
    %2416 = vmatprep.subr.mxu0 0.0
    %2417 = vmatpush1.msra.mxu0 0.0
    %2418 = vmatprep.subr.mxu0 0.0
    %2419 = vmatpush1.msra.mxu0 0.0
    %2420 = vmatprep.subr.mxu0 0.0
    %2421 = vmatpush1.msra.mxu0 0.0
    %2422 = vmatprep.subr.mxu0 0.0
    %2423 = vmatpush1.msra.mxu0 0.0
    %2424 = vmatprep.subr.mxu0 0.0
    %v2425 = vand.u32 %v950, 4294901760
    %2426 = vmatpush1.msra.mxu0 %v2425
    %2427 = vmatprep.subr.mxu0 0.0
    %v2428 = vand.u32 %v949, 4294901760
    %2429 = vmatpush1.msra.mxu0 %v2428
    %2430 = vmatprep.subr.mxu0 0.0
    %v2431 = vand.u32 %v948, 4294901760
    %2432 = vmatpush1.msra.mxu0 %v2431
    %2433 = vmatprep.subr.mxu0 0.0
    %v2434 = vand.u32 %v947, 4294901760
    %2435 = vmatpush1.msra.mxu0 %v2434
    %2436 = vmatprep.subr.mxu0 0.0
    %2437 = vmatpush2.msra.mxu0 0.0
    %2438 = vmatprep.subr.mxu0 0.0
    %2439 = vmatpush2.msra.mxu0 0.0
    %2440 = vmatprep.subr.mxu0 0.0
    %2441 = vmatpush2.msra.mxu0 0.0
    %2442 = vmatprep.subr.mxu0 0.0
    %2443 = vmatpush2.msra.mxu0 0.0
    %2444 = vmatprep.subr.mxu0 0.0
    %2445 = vmatpush2.msra.mxu0 0.0
    %2446 = vmatprep.subr.mxu0 0.0
    %2447 = vmatpush2.msra.mxu0 0.0
    %2448 = vmatprep.subr.mxu0 0.0
    %2449 = vmatpush2.msra.mxu0 0.0
    %2450 = vmatprep.subr.mxu0 0.0
    %2451 = vmatpush2.msra.mxu0 0.0
    %2452 = vmatprep.subr.mxu0 0.0
    %2453 = vmatpush2.msra.mxu0 0.0
    %2454 = vmatprep.subr.mxu0 0.0
    %2455 = vmatpush2.msra.mxu0 0.0
    %2456 = vmatprep.subr.mxu0 0.0
    %2457 = vmatpush2.msra.mxu0 0.0
    %2458 = vmatprep.subr.mxu0 0.0
    %2459 = vmatpush2.msra.mxu0 0.0
    %2460 = vmatprep.subr.mxu0 0.0
    %2461 = vmatpush2.msra.mxu0 0.0
    %2462 = vmatprep.subr.mxu0 0.0
    %2463 = vmatpush2.msra.mxu0 0.0
    %2464 = vmatprep.subr.mxu0 0.0
    %2465 = vmatpush2.msra.mxu0 0.0
    %2466 = vmatprep.subr.mxu0 0.0
    %2467 = vmatpush2.msra.mxu0 0.0
    %2468 = vmatprep.mubr.f32.mxu0 0.0
    %v2469 = vand.u32 %v1988, 4294901760
    %2470 = vmatmul.mubr.f32.gmra.mxu0 %v2469
    %v2471 = vpop.f32.mrf.mxu0
    %v2472 = vadd.f32 %v2397, %v2471
    %v2473 = vpop.f32.mrf.mxu0
    %2474 = vdwg.mxu0
    %v2475 = vadd.f32 %v914, %v2472
    %v2476 = vxor.u32 %v2475, 2147483648
    %v2477 = vmul.f32 %v2476, 1.442695
    %v2478 = vpow.pop %v2477
    %v2479 = vadd.f32 %v2478, 1.0
    %v2480 = vrcp.pop %v2479
    %v2481 = vmul.f32 1.0, %v2480
    %v2482 = vtanh.pop %v2475
    %v2483 = vmul.f32 %v2481, %v1978
    %2485 = vrot.lane.b32.xlu0 %v2482, 64
    %v2486 = vpop.permute.xlu0 %2485
    %v2488 = vmul.f32 %v2481, %v2486
    %2490 = vrot.lane.b32.xlu0 %v2488, 32
    %v2491 = vpop.permute.xlu0 %2490
    %v2493 = vadd.f32 %v2483, %v2491
    %v2494 = vtanh.pop %v2493
    %2496 = vrot.lane.b32.xlu0 %v2494, 64
    %v2497 = vpop.permute.xlu0 %2496
    %v2499 = vmul.f32 %v2481, %v2497
    %2501 = vrot.lane.b32.xlu0 %v2499, 32
    %v2502 = vpop.permute.xlu0 %2501
    %v2503 = vsel %vm136, %v2502, 0
    %2505 = vmatprep.subr.mxu0 0.0
    %2506 = vmatpush1.msra.mxu0 0.0
    %2507 = vmatprep.subr.mxu0 0.0
    %2508 = vmatpush1.msra.mxu0 0.0
    %2509 = vmatprep.subr.mxu0 0.0
    %2510 = vmatpush1.msra.mxu0 0.0
    %2511 = vmatprep.subr.mxu0 0.0
    %2512 = vmatpush1.msra.mxu0 0.0
    %2513 = vmatprep.subr.mxu0 0.0
    %2514 = vmatpush1.msra.mxu0 0.0
    %2515 = vmatprep.subr.mxu0 0.0
    %2516 = vmatpush1.msra.mxu0 0.0
    %2517 = vmatprep.subr.mxu0 0.0
    %2518 = vmatpush1.msra.mxu0 0.0
    %2519 = vmatprep.subr.mxu0 0.0
    %2520 = vmatpush1.msra.mxu0 0.0
    %2521 = vmatprep.subr.mxu0 0.0
    %2522 = vmatpush1.msra.mxu0 0.0
    %2523 = vmatprep.subr.mxu0 0.0
    %2524 = vmatpush1.msra.mxu0 0.0
    %2525 = vmatprep.subr.mxu0 0.0
    %2526 = vmatpush1.msra.mxu0 0.0
    %2527 = vmatprep.subr.mxu0 0.0
    %2528 = vmatpush1.msra.mxu0 0.0
    %2529 = vmatprep.subr.mxu0 0.0
    %v2530 = vand.u32 %v950, 4294901760
    %2531 = vmatpush1.msra.mxu0 %v2530
    %2532 = vmatprep.subr.mxu0 0.0
    %v2533 = vand.u32 %v949, 4294901760
    %2534 = vmatpush1.msra.mxu0 %v2533
    %2535 = vmatprep.subr.mxu0 0.0
    %v2536 = vand.u32 %v948, 4294901760
    %2537 = vmatpush1.msra.mxu0 %v2536
    %2538 = vmatprep.subr.mxu0 0.0
    %v2539 = vand.u32 %v947, 4294901760
    %2540 = vmatpush1.msra.mxu0 %v2539
    %2541 = vmatprep.subr.mxu0 0.0
    %2542 = vmatpush2.msra.mxu0 0.0
    %2543 = vmatprep.subr.mxu0 0.0
    %2544 = vmatpush2.msra.mxu0 0.0
    %2545 = vmatprep.subr.mxu0 0.0
    %2546 = vmatpush2.msra.mxu0 0.0
    %2547 = vmatprep.subr.mxu0 0.0
    %2548 = vmatpush2.msra.mxu0 0.0
    %2549 = vmatprep.subr.mxu0 0.0
    %2550 = vmatpush2.msra.mxu0 0.0
    %2551 = vmatprep.subr.mxu0 0.0
    %2552 = vmatpush2.msra.mxu0 0.0
    %2553 = vmatprep.subr.mxu0 0.0
    %2554 = vmatpush2.msra.mxu0 0.0
    %2555 = vmatprep.subr.mxu0 0.0
    %2556 = vmatpush2.msra.mxu0 0.0
    %2557 = vmatprep.subr.mxu0 0.0
    %2558 = vmatpush2.msra.mxu0 0.0
    %2559 = vmatprep.subr.mxu0 0.0
    %2560 = vmatpush2.msra.mxu0 0.0
    %2561 = vmatprep.subr.mxu0 0.0
    %2562 = vmatpush2.msra.mxu0 0.0
    %2563 = vmatprep.subr.mxu0 0.0
    %2564 = vmatpush2.msra.mxu0 0.0
    %2565 = vmatprep.subr.mxu0 0.0
    %2566 = vmatpush2.msra.mxu0 0.0
    %2567 = vmatprep.subr.mxu0 0.0
    %2568 = vmatpush2.msra.mxu0 0.0
    %2569 = vmatprep.subr.mxu0 0.0
    %2570 = vmatpush2.msra.mxu0 0.0
    %2571 = vmatprep.subr.mxu0 0.0
    %2572 = vmatpush2.msra.mxu0 0.0
    %2573 = vmatprep.mubr.f32.mxu0 0.0
    %v2574 = vand.u32 %v2503, 4294901760
    %v2575 = vsub.f32 %v2503, %v2574
    %v2576 = vand.u32 %v2575, 4294901760
    %v2577 = vsub.f32 %v2575, %v2576
    %v2578 = vand.u32 %v2577, 4294901760
    %2579 = vmatmul.mubr.f32.gmra.mxu0 %v2578
    %v2580 = vpop.f32.mrf.mxu0
    %v2581 = vadd.f32 0.0, %v2580
    %v2582 = vpop.f32.mrf.mxu0
    %2583 = vdwg.mxu0
    %2584 = vmatprep.subr.mxu0 0.0
    %2585 = vmatpush1.msra.mxu0 0.0
    %2586 = vmatprep.subr.mxu0 0.0
    %2587 = vmatpush1.msra.mxu0 0.0
    %2588 = vmatprep.subr.mxu0 0.0
    %2589 = vmatpush1.msra.mxu0 0.0
    %2590 = vmatprep.subr.mxu0 0.0
    %2591 = vmatpush1.msra.mxu0 0.0
    %2592 = vmatprep.subr.mxu0 0.0
    %2593 = vmatpush1.msra.mxu0 0.0
    %2594 = vmatprep.subr.mxu0 0.0
    %2595 = vmatpush1.msra.mxu0 0.0
    %2596 = vmatprep.subr.mxu0 0.0
    %2597 = vmatpush1.msra.mxu0 0.0
    %2598 = vmatprep.subr.mxu0 0.0
    %2599 = vmatpush1.msra.mxu0 0.0
    %2600 = vmatprep.subr.mxu0 0.0
    %2601 = vmatpush1.msra.mxu0 0.0
    %2602 = vmatprep.subr.mxu0 0.0
    %2603 = vmatpush1.msra.mxu0 0.0
    %2604 = vmatprep.subr.mxu0 0.0
    %2605 = vmatpush1.msra.mxu0 0.0
    %2606 = vmatprep.subr.mxu0 0.0
    %2607 = vmatpush1.msra.mxu0 0.0
    %2608 = vmatprep.subr.mxu0 0.0
    %v2609 = vand.u32 %v950, 4294901760
    %v2610 = vsub.f32 %v950, %v2609
    %v2611 = vand.u32 %v2610, 4294901760
    %v2612 = vsub.f32 %v2610, %v2611
    %v2613 = vand.u32 %v2612, 4294901760
    %2614 = vmatpush1.msra.mxu0 %v2613
    %2615 = vmatprep.subr.mxu0 0.0
    %v2616 = vand.u32 %v949, 4294901760
    %v2617 = vsub.f32 %v949, %v2616
    %v2618 = vand.u32 %v2617, 4294901760
    %v2619 = vsub.f32 %v2617, %v2618
    %v2620 = vand.u32 %v2619, 4294901760
    %2621 = vmatpush1.msra.mxu0 %v2620
    %2622 = vmatprep.subr.mxu0 0.0
    %v2623 = vand.u32 %v948, 4294901760
    %v2624 = vsub.f32 %v948, %v2623
    %v2625 = vand.u32 %v2624, 4294901760
    %v2626 = vsub.f32 %v2624, %v2625
    %v2627 = vand.u32 %v2626, 4294901760
    %2628 = vmatpush1.msra.mxu0 %v2627
    %2629 = vmatprep.subr.mxu0 0.0
    %v2630 = vand.u32 %v947, 4294901760
    %v2631 = vsub.f32 %v947, %v2630
    %v2632 = vand.u32 %v2631, 4294901760
    %v2633 = vsub.f32 %v2631, %v2632
    %v2634 = vand.u32 %v2633, 4294901760
    %2635 = vmatpush1.msra.mxu0 %v2634
    %2636 = vmatprep.subr.mxu0 0.0
    %2637 = vmatpush2.msra.mxu0 0.0
    %2638 = vmatprep.subr.mxu0 0.0
    %2639 = vmatpush2.msra.mxu0 0.0
    %2640 = vmatprep.subr.mxu0 0.0
    %2641 = vmatpush2.msra.mxu0 0.0
    %2642 = vmatprep.subr.mxu0 0.0
    %2643 = vmatpush2.msra.mxu0 0.0
    %2644 = vmatprep.subr.mxu0 0.0
    %2645 = vmatpush2.msra.mxu0 0.0
    %2646 = vmatprep.subr.mxu0 0.0
    %2647 = vmatpush2.msra.mxu0 0.0
    %2648 = vmatprep.subr.mxu0 0.0
    %2649 = vmatpush2.msra.mxu0 0.0
    %2650 = vmatprep.subr.mxu0 0.0
    %2651 = vmatpush2.msra.mxu0 0.0
    %2652 = vmatprep.subr.mxu0 0.0
    %2653 = vmatpush2.msra.mxu0 0.0
    %2654 = vmatprep.subr.mxu0 0.0
    %2655 = vmatpush2.msra.mxu0 0.0
    %2656 = vmatprep.subr.mxu0 0.0
    %2657 = vmatpush2.msra.mxu0 0.0
    %2658 = vmatprep.subr.mxu0 0.0
    %2659 = vmatpush2.msra.mxu0 0.0
    %2660 = vmatprep.subr.mxu0 0.0
    %2661 = vmatpush2.msra.mxu0 0.0
    %2662 = vmatprep.subr.mxu0 0.0
    %2663 = vmatpush2.msra.mxu0 0.0
    %2664 = vmatprep.subr.mxu0 0.0
    %2665 = vmatpush2.msra.mxu0 0.0
    %2666 = vmatprep.subr.mxu0 0.0
    %2667 = vmatpush2.msra.mxu0 0.0
    %2668 = vmatprep.mubr.f32.mxu0 0.0
    %v2669 = vand.u32 %v2503, 4294901760
    %2670 = vmatmul.mubr.f32.gmra.mxu0 %v2669
    %v2671 = vpop.f32.mrf.mxu0
    %v2672 = vadd.f32 %v2581, %v2671
    %v2673 = vpop.f32.mrf.mxu0
    %2674 = vdwg.mxu0
    %2675 = vmatprep.subr.mxu0 0.0
    %2676 = vmatpush1.msra.mxu0 0.0
    %2677 = vmatprep.subr.mxu0 0.0
    %2678 = vmatpush1.msra.mxu0 0.0
    %2679 = vmatprep.subr.mxu0 0.0
    %2680 = vmatpush1.msra.mxu0 0.0
    %2681 = vmatprep.subr.mxu0 0.0
    %2682 = vmatpush1.msra.mxu0 0.0
    %2683 = vmatprep.subr.mxu0 0.0
    %2684 = vmatpush1.msra.mxu0 0.0
    %2685 = vmatprep.subr.mxu0 0.0
    %2686 = vmatpush1.msra.mxu0 0.0
    %2687 = vmatprep.subr.mxu0 0.0
    %2688 = vmatpush1.msra.mxu0 0.0
    %2689 = vmatprep.subr.mxu0 0.0
    %2690 = vmatpush1.msra.mxu0 0.0
    %2691 = vmatprep.subr.mxu0 0.0
    %2692 = vmatpush1.msra.mxu0 0.0
    %2693 = vmatprep.subr.mxu0 0.0
    %2694 = vmatpush1.msra.mxu0 0.0
    %2695 = vmatprep.subr.mxu0 0.0
    %2696 = vmatpush1.msra.mxu0 0.0
    %2697 = vmatprep.subr.mxu0 0.0
    %2698 = vmatpush1.msra.mxu0 0.0
    %2699 = vmatprep.subr.mxu0 0.0
    %v2700 = vand.u32 %v950, 4294901760
    %v2701 = vsub.f32 %v950, %v2700
    %2702 = vmatpush1.msra.mxu0 %v2701
    %2703 = vmatprep.subr.mxu0 0.0
    %v2704 = vand.u32 %v949, 4294901760
    %v2705 = vsub.f32 %v949, %v2704
    %2706 = vmatpush1.msra.mxu0 %v2705
    %2707 = vmatprep.subr.mxu0 0.0
    %v2708 = vand.u32 %v948, 4294901760
    %v2709 = vsub.f32 %v948, %v2708
    %2710 = vmatpush1.msra.mxu0 %v2709
    %2711 = vmatprep.subr.mxu0 0.0
    %v2712 = vand.u32 %v947, 4294901760
    %v2713 = vsub.f32 %v947, %v2712
    %2714 = vmatpush1.msra.mxu0 %v2713
    %2715 = vmatprep.subr.mxu0 0.0
    %2716 = vmatpush2.msra.mxu0 0.0
    %2717 = vmatprep.subr.mxu0 0.0
    %2718 = vmatpush2.msra.mxu0 0.0
    %2719 = vmatprep.subr.mxu0 0.0
    %2720 = vmatpush2.msra.mxu0 0.0
    %2721 = vmatprep.subr.mxu0 0.0
    %2722 = vmatpush2.msra.mxu0 0.0
    %2723 = vmatprep.subr.mxu0 0.0
    %2724 = vmatpush2.msra.mxu0 0.0
    %2725 = vmatprep.subr.mxu0 0.0
    %2726 = vmatpush2.msra.mxu0 0.0
    %2727 = vmatprep.subr.mxu0 0.0
    %2728 = vmatpush2.msra.mxu0 0.0
    %2729 = vmatprep.subr.mxu0 0.0
    %2730 = vmatpush2.msra.mxu0 0.0
    %2731 = vmatprep.subr.mxu0 0.0
    %2732 = vmatpush2.msra.mxu0 0.0
    %2733 = vmatprep.subr.mxu0 0.0
    %2734 = vmatpush2.msra.mxu0 0.0
    %2735 = vmatprep.subr.mxu0 0.0
    %2736 = vmatpush2.msra.mxu0 0.0
    %2737 = vmatprep.subr.mxu0 0.0
    %2738 = vmatpush2.msra.mxu0 0.0
    %2739 = vmatprep.subr.mxu0 0.0
    %2740 = vmatpush2.msra.mxu0 0.0
    %2741 = vmatprep.subr.mxu0 0.0
    %2742 = vmatpush2.msra.mxu0 0.0
    %2743 = vmatprep.subr.mxu0 0.0
    %2744 = vmatpush2.msra.mxu0 0.0
    %2745 = vmatprep.subr.mxu0 0.0
    %2746 = vmatpush2.msra.mxu0 0.0
    %2747 = vmatprep.mubr.f32.mxu0 0.0
    %v2748 = vand.u32 %v2503, 4294901760
    %v2749 = vsub.f32 %v2503, %v2748
    %2750 = vmatmul.mubr.f32.gmra.mxu0 %v2749
    %v2751 = vpop.f32.mrf.mxu0
    %v2752 = vadd.f32 %v2672, %v2751
    %v2753 = vpop.f32.mrf.mxu0
    %2754 = vdwg.mxu0
    %2755 = vmatprep.subr.mxu0 0.0
    %2756 = vmatpush1.msra.mxu0 0.0
    %2757 = vmatprep.subr.mxu0 0.0
    %2758 = vmatpush1.msra.mxu0 0.0
    %2759 = vmatprep.subr.mxu0 0.0
    %2760 = vmatpush1.msra.mxu0 0.0
    %2761 = vmatprep.subr.mxu0 0.0
    %2762 = vmatpush1.msra.mxu0 0.0
    %2763 = vmatprep.subr.mxu0 0.0
    %2764 = vmatpush1.msra.mxu0 0.0
    %2765 = vmatprep.subr.mxu0 0.0
    %2766 = vmatpush1.msra.mxu0 0.0
    %2767 = vmatprep.subr.mxu0 0.0
    %2768 = vmatpush1.msra.mxu0 0.0
    %2769 = vmatprep.subr.mxu0 0.0
    %2770 = vmatpush1.msra.mxu0 0.0
    %2771 = vmatprep.subr.mxu0 0.0
    %2772 = vmatpush1.msra.mxu0 0.0
    %2773 = vmatprep.subr.mxu0 0.0
    %2774 = vmatpush1.msra.mxu0 0.0
    %2775 = vmatprep.subr.mxu0 0.0
    %2776 = vmatpush1.msra.mxu0 0.0
    %2777 = vmatprep.subr.mxu0 0.0
    %2778 = vmatpush1.msra.mxu0 0.0
    %2779 = vmatprep.subr.mxu0 0.0
    %v2780 = vand.u32 %v950, 4294901760
    %2781 = vmatpush1.msra.mxu0 %v2780
    %2782 = vmatprep.subr.mxu0 0.0
    %v2783 = vand.u32 %v949, 4294901760
    %2784 = vmatpush1.msra.mxu0 %v2783
    %2785 = vmatprep.subr.mxu0 0.0
    %v2786 = vand.u32 %v948, 4294901760
    %2787 = vmatpush1.msra.mxu0 %v2786
    %2788 = vmatprep.subr.mxu0 0.0
    %v2789 = vand.u32 %v947, 4294901760
    %2790 = vmatpush1.msra.mxu0 %v2789
    %2791 = vmatprep.subr.mxu0 0.0
    %2792 = vmatpush2.msra.mxu0 0.0
    %2793 = vmatprep.subr.mxu0 0.0
    %2794 = vmatpush2.msra.mxu0 0.0
    %2795 = vmatprep.subr.mxu0 0.0
    %2796 = vmatpush2.msra.mxu0 0.0
    %2797 = vmatprep.subr.mxu0 0.0
    %2798 = vmatpush2.msra.mxu0 0.0
    %2799 = vmatprep.subr.mxu0 0.0
    %2800 = vmatpush2.msra.mxu0 0.0
    %2801 = vmatprep.subr.mxu0 0.0
    %2802 = vmatpush2.msra.mxu0 0.0
    %2803 = vmatprep.subr.mxu0 0.0
    %2804 = vmatpush2.msra.mxu0 0.0
    %2805 = vmatprep.subr.mxu0 0.0
    %2806 = vmatpush2.msra.mxu0 0.0
    %2807 = vmatprep.subr.mxu0 0.0
    %2808 = vmatpush2.msra.mxu0 0.0
    %2809 = vmatprep.subr.mxu0 0.0
    %2810 = vmatpush2.msra.mxu0 0.0
    %2811 = vmatprep.subr.mxu0 0.0
    %2812 = vmatpush2.msra.mxu0 0.0
    %2813 = vmatprep.subr.mxu0 0.0
    %2814 = vmatpush2.msra.mxu0 0.0
    %2815 = vmatprep.subr.mxu0 0.0
    %2816 = vmatpush2.msra.mxu0 0.0
    %2817 = vmatprep.subr.mxu0 0.0
    %2818 = vmatpush2.msra.mxu0 0.0
    %2819 = vmatprep.subr.mxu0 0.0
    %2820 = vmatpush2.msra.mxu0 0.0
    %2821 = vmatprep.subr.mxu0 0.0
    %2822 = vmatpush2.msra.mxu0 0.0
    %2823 = vmatprep.mubr.f32.mxu0 0.0
    %v2824 = vand.u32 %v2503, 4294901760
    %v2825 = vsub.f32 %v2503, %v2824
    %v2826 = vand.u32 %v2825, 4294901760
    %2827 = vmatmul.mubr.f32.gmra.mxu0 %v2826
    %v2828 = vpop.f32.mrf.mxu0
    %v2829 = vadd.f32 %v2752, %v2828
    %v2830 = vpop.f32.mrf.mxu0
    %2831 = vdwg.mxu0
    %2832 = vmatprep.subr.mxu0 0.0
    %2833 = vmatpush1.msra.mxu0 0.0
    %2834 = vmatprep.subr.mxu0 0.0
    %2835 = vmatpush1.msra.mxu0 0.0
    %2836 = vmatprep.subr.mxu0 0.0
    %2837 = vmatpush1.msra.mxu0 0.0
    %2838 = vmatprep.subr.mxu0 0.0
    %2839 = vmatpush1.msra.mxu0 0.0
    %2840 = vmatprep.subr.mxu0 0.0
    %2841 = vmatpush1.msra.mxu0 0.0
    %2842 = vmatprep.subr.mxu0 0.0
    %2843 = vmatpush1.msra.mxu0 0.0
    %2844 = vmatprep.subr.mxu0 0.0
    %2845 = vmatpush1.msra.mxu0 0.0
    %2846 = vmatprep.subr.mxu0 0.0
    %2847 = vmatpush1.msra.mxu0 0.0
    %2848 = vmatprep.subr.mxu0 0.0
    %2849 = vmatpush1.msra.mxu0 0.0
    %2850 = vmatprep.subr.mxu0 0.0
    %2851 = vmatpush1.msra.mxu0 0.0
    %2852 = vmatprep.subr.mxu0 0.0
    %2853 = vmatpush1.msra.mxu0 0.0
    %2854 = vmatprep.subr.mxu0 0.0
    %2855 = vmatpush1.msra.mxu0 0.0
    %2856 = vmatprep.subr.mxu0 0.0
    %v2857 = vand.u32 %v950, 4294901760
    %v2858 = vsub.f32 %v950, %v2857
    %v2859 = vand.u32 %v2858, 4294901760
    %2860 = vmatpush1.msra.mxu0 %v2859
    %2861 = vmatprep.subr.mxu0 0.0
    %v2862 = vand.u32 %v949, 4294901760
    %v2863 = vsub.f32 %v949, %v2862
    %v2864 = vand.u32 %v2863, 4294901760
    %2865 = vmatpush1.msra.mxu0 %v2864
    %2866 = vmatprep.subr.mxu0 0.0
    %v2867 = vand.u32 %v948, 4294901760
    %v2868 = vsub.f32 %v948, %v2867
    %v2869 = vand.u32 %v2868, 4294901760
    %2870 = vmatpush1.msra.mxu0 %v2869
    %2871 = vmatprep.subr.mxu0 0.0
    %v2872 = vand.u32 %v947, 4294901760
    %v2873 = vsub.f32 %v947, %v2872
    %v2874 = vand.u32 %v2873, 4294901760
    %2875 = vmatpush1.msra.mxu0 %v2874
    %2876 = vmatprep.subr.mxu0 0.0
    %2877 = vmatpush2.msra.mxu0 0.0
    %2878 = vmatprep.subr.mxu0 0.0
    %2879 = vmatpush2.msra.mxu0 0.0
    %2880 = vmatprep.subr.mxu0 0.0
    %2881 = vmatpush2.msra.mxu0 0.0
    %2882 = vmatprep.subr.mxu0 0.0
    %2883 = vmatpush2.msra.mxu0 0.0
    %2884 = vmatprep.subr.mxu0 0.0
    %2885 = vmatpush2.msra.mxu0 0.0
    %2886 = vmatprep.subr.mxu0 0.0
    %2887 = vmatpush2.msra.mxu0 0.0
    %2888 = vmatprep.subr.mxu0 0.0
    %2889 = vmatpush2.msra.mxu0 0.0
    %2890 = vmatprep.subr.mxu0 0.0
    %2891 = vmatpush2.msra.mxu0 0.0
    %2892 = vmatprep.subr.mxu0 0.0
    %2893 = vmatpush2.msra.mxu0 0.0
    %2894 = vmatprep.subr.mxu0 0.0
    %2895 = vmatpush2.msra.mxu0 0.0
    %2896 = vmatprep.subr.mxu0 0.0
    %2897 = vmatpush2.msra.mxu0 0.0
    %2898 = vmatprep.subr.mxu0 0.0
    %2899 = vmatpush2.msra.mxu0 0.0
    %2900 = vmatprep.subr.mxu0 0.0
    %2901 = vmatpush2.msra.mxu0 0.0
    %2902 = vmatprep.subr.mxu0 0.0
    %2903 = vmatpush2.msra.mxu0 0.0
    %2904 = vmatprep.subr.mxu0 0.0
    %2905 = vmatpush2.msra.mxu0 0.0
    %2906 = vmatprep.subr.mxu0 0.0
    %2907 = vmatpush2.msra.mxu0 0.0
    %2908 = vmatprep.mubr.f32.mxu0 0.0
    %v2909 = vand.u32 %v2503, 4294901760
    %2910 = vmatmul.mubr.f32.gmra.mxu0 %v2909
    %v2911 = vpop.f32.mrf.mxu0
    %v2912 = vadd.f32 %v2829, %v2911
    %v2913 = vpop.f32.mrf.mxu0
    %2914 = vdwg.mxu0
    %2915 = vmatprep.subr.mxu0 0.0
    %2916 = vmatpush1.msra.mxu0 0.0
    %2917 = vmatprep.subr.mxu0 0.0
    %2918 = vmatpush1.msra.mxu0 0.0
    %2919 = vmatprep.subr.mxu0 0.0
    %2920 = vmatpush1.msra.mxu0 0.0
    %2921 = vmatprep.subr.mxu0 0.0
    %2922 = vmatpush1.msra.mxu0 0.0
    %2923 = vmatprep.subr.mxu0 0.0
    %2924 = vmatpush1.msra.mxu0 0.0
    %2925 = vmatprep.subr.mxu0 0.0
    %2926 = vmatpush1.msra.mxu0 0.0
    %2927 = vmatprep.subr.mxu0 0.0
    %2928 = vmatpush1.msra.mxu0 0.0
    %2929 = vmatprep.subr.mxu0 0.0
    %2930 = vmatpush1.msra.mxu0 0.0
    %2931 = vmatprep.subr.mxu0 0.0
    %2932 = vmatpush1.msra.mxu0 0.0
    %2933 = vmatprep.subr.mxu0 0.0
    %2934 = vmatpush1.msra.mxu0 0.0
    %2935 = vmatprep.subr.mxu0 0.0
    %2936 = vmatpush1.msra.mxu0 0.0
    %2937 = vmatprep.subr.mxu0 0.0
    %2938 = vmatpush1.msra.mxu0 0.0
    %2939 = vmatprep.subr.mxu0 0.0
    %v2940 = vand.u32 %v950, 4294901760
    %2941 = vmatpush1.msra.mxu0 %v2940
    %2942 = vmatprep.subr.mxu0 0.0
    %v2943 = vand.u32 %v949, 4294901760
    %2944 = vmatpush1.msra.mxu0 %v2943
    %2945 = vmatprep.subr.mxu0 0.0
    %v2946 = vand.u32 %v948, 4294901760
    %2947 = vmatpush1.msra.mxu0 %v2946
    %2948 = vmatprep.subr.mxu0 0.0
    %v2949 = vand.u32 %v947, 4294901760
    %2950 = vmatpush1.msra.mxu0 %v2949
    %2951 = vmatprep.subr.mxu0 0.0
    %2952 = vmatpush2.msra.mxu0 0.0
    %2953 = vmatprep.subr.mxu0 0.0
    %2954 = vmatpush2.msra.mxu0 0.0
    %2955 = vmatprep.subr.mxu0 0.0
    %2956 = vmatpush2.msra.mxu0 0.0
    %2957 = vmatprep.subr.mxu0 0.0
    %2958 = vmatpush2.msra.mxu0 0.0
    %2959 = vmatprep.subr.mxu0 0.0
    %2960 = vmatpush2.msra.mxu0 0.0
    %2961 = vmatprep.subr.mxu0 0.0
    %2962 = vmatpush2.msra.mxu0 0.0
    %2963 = vmatprep.subr.mxu0 0.0
    %2964 = vmatpush2.msra.mxu0 0.0
    %2965 = vmatprep.subr.mxu0 0.0
    %2966 = vmatpush2.msra.mxu0 0.0
    %2967 = vmatprep.subr.mxu0 0.0
    %2968 = vmatpush2.msra.mxu0 0.0
    %2969 = vmatprep.subr.mxu0 0.0
    %2970 = vmatpush2.msra.mxu0 0.0
    %2971 = vmatprep.subr.mxu0 0.0
    %2972 = vmatpush2.msra.mxu0 0.0
    %2973 = vmatprep.subr.mxu0 0.0
    %2974 = vmatpush2.msra.mxu0 0.0
    %2975 = vmatprep.subr.mxu0 0.0
    %2976 = vmatpush2.msra.mxu0 0.0
    %2977 = vmatprep.subr.mxu0 0.0
    %2978 = vmatpush2.msra.mxu0 0.0
    %2979 = vmatprep.subr.mxu0 0.0
    %2980 = vmatpush2.msra.mxu0 0.0
    %2981 = vmatprep.subr.mxu0 0.0
    %2982 = vmatpush2.msra.mxu0 0.0
    %2983 = vmatprep.mubr.f32.mxu0 0.0
    %v2984 = vand.u32 %v2503, 4294901760
    %2985 = vmatmul.mubr.f32.gmra.mxu0 %v2984
    %v2986 = vpop.f32.mrf.mxu0
    %v2987 = vadd.f32 %v2912, %v2986
    %v2988 = vpop.f32.mrf.mxu0
    %2989 = vdwg.mxu0
    %v2990 = vadd.f32 %v920, %v2987
    %v2991 = vxor.u32 %v2990, 2147483648
    %v2992 = vmul.f32 %v2991, 1.442695
    %v2993 = vpow.pop %v2992
    %v2994 = vadd.f32 %v2993, 1.0
    %v2995 = vrcp.pop %v2994
    %v2996 = vmul.f32 1.0, %v2995
    %v2997 = vtanh.pop %v2990
    %v2998 = vmul.f32 %v2996, %v2493
    %3000 = vrot.lane.b32.xlu0 %v2997, 64
    %v3001 = vpop.permute.xlu0 %3000
    %v3003 = vmul.f32 %v2996, %v3001
    %3005 = vrot.lane.b32.xlu0 %v3003, 32
    %v3006 = vpop.permute.xlu0 %3005
    %v3008 = vadd.f32 %v2998, %v3006
    %v3009 = vtanh.pop %v3008
    %3011 = vrot.lane.b32.xlu0 %v3009, 64
    %v3012 = vpop.permute.xlu0 %3011
    %v3014 = vmul.f32 %v2996, %v3012
    %3016 = vrot.lane.b32.xlu0 %v3014, 32
    %v3017 = vpop.permute.xlu0 %3016
    %v3018 = vsel %vm136, %v3017, 0
    %3020 = vmatprep.subr.mxu0 0.0
    %3021 = vmatpush1.msra.mxu0 0.0
    %3022 = vmatprep.subr.mxu0 0.0
    %3023 = vmatpush1.msra.mxu0 0.0
    %3024 = vmatprep.subr.mxu0 0.0
    %3025 = vmatpush1.msra.mxu0 0.0
    %3026 = vmatprep.subr.mxu0 0.0
    %3027 = vmatpush1.msra.mxu0 0.0
    %3028 = vmatprep.subr.mxu0 0.0
    %3029 = vmatpush1.msra.mxu0 0.0
    %3030 = vmatprep.subr.mxu0 0.0
    %3031 = vmatpush1.msra.mxu0 0.0
    %3032 = vmatprep.subr.mxu0 0.0
    %3033 = vmatpush1.msra.mxu0 0.0
    %3034 = vmatprep.subr.mxu0 0.0
    %3035 = vmatpush1.msra.mxu0 0.0
    %3036 = vmatprep.subr.mxu0 0.0
    %3037 = vmatpush1.msra.mxu0 0.0
    %3038 = vmatprep.subr.mxu0 0.0
    %3039 = vmatpush1.msra.mxu0 0.0
    %3040 = vmatprep.subr.mxu0 0.0
    %3041 = vmatpush1.msra.mxu0 0.0
    %3042 = vmatprep.subr.mxu0 0.0
    %3043 = vmatpush1.msra.mxu0 0.0
    %3044 = vmatprep.subr.mxu0 0.0
    %v3045 = vand.u32 %v950, 4294901760
    %3046 = vmatpush1.msra.mxu0 %v3045
    %3047 = vmatprep.subr.mxu0 0.0
    %v3048 = vand.u32 %v949, 4294901760
    %3049 = vmatpush1.msra.mxu0 %v3048
    %3050 = vmatprep.subr.mxu0 0.0
    %v3051 = vand.u32 %v948, 4294901760
    %3052 = vmatpush1.msra.mxu0 %v3051
    %3053 = vmatprep.subr.mxu0 0.0
    %v3054 = vand.u32 %v947, 4294901760
    %3055 = vmatpush1.msra.mxu0 %v3054
    %3056 = vmatprep.subr.mxu0 0.0
    %3057 = vmatpush2.msra.mxu0 0.0
    %3058 = vmatprep.subr.mxu0 0.0
    %3059 = vmatpush2.msra.mxu0 0.0
    %3060 = vmatprep.subr.mxu0 0.0
    %3061 = vmatpush2.msra.mxu0 0.0
    %3062 = vmatprep.subr.mxu0 0.0
    %3063 = vmatpush2.msra.mxu0 0.0
    %3064 = vmatprep.subr.mxu0 0.0
    %3065 = vmatpush2.msra.mxu0 0.0
    %3066 = vmatprep.subr.mxu0 0.0
    %3067 = vmatpush2.msra.mxu0 0.0
    %3068 = vmatprep.subr.mxu0 0.0
    %3069 = vmatpush2.msra.mxu0 0.0
    %3070 = vmatprep.subr.mxu0 0.0
    %3071 = vmatpush2.msra.mxu0 0.0
    %3072 = vmatprep.subr.mxu0 0.0
    %3073 = vmatpush2.msra.mxu0 0.0
    %3074 = vmatprep.subr.mxu0 0.0
    %3075 = vmatpush2.msra.mxu0 0.0
    %3076 = vmatprep.subr.mxu0 0.0
    %3077 = vmatpush2.msra.mxu0 0.0
    %3078 = vmatprep.subr.mxu0 0.0
    %3079 = vmatpush2.msra.mxu0 0.0
    %3080 = vmatprep.subr.mxu0 0.0
    %3081 = vmatpush2.msra.mxu0 0.0
    %3082 = vmatprep.subr.mxu0 0.0
    %3083 = vmatpush2.msra.mxu0 0.0
    %3084 = vmatprep.subr.mxu0 0.0
    %3085 = vmatpush2.msra.mxu0 0.0
    %3086 = vmatprep.subr.mxu0 0.0
    %3087 = vmatpush2.msra.mxu0 0.0
    %3088 = vmatprep.mubr.f32.mxu0 0.0
    %v3089 = vand.u32 %v3018, 4294901760
    %v3090 = vsub.f32 %v3018, %v3089
    %v3091 = vand.u32 %v3090, 4294901760
    %v3092 = vsub.f32 %v3090, %v3091
    %v3093 = vand.u32 %v3092, 4294901760
    %3094 = vmatmul.mubr.f32.gmra.mxu0 %v3093
    %v3095 = vpop.f32.mrf.mxu0
    %v3096 = vadd.f32 0.0, %v3095
    %v3097 = vpop.f32.mrf.mxu0
    %3098 = vdwg.mxu0
    %3099 = vmatprep.subr.mxu0 0.0
    %3100 = vmatpush1.msra.mxu0 0.0
    %3101 = vmatprep.subr.mxu0 0.0
    %3102 = vmatpush1.msra.mxu0 0.0
    %3103 = vmatprep.subr.mxu0 0.0
    %3104 = vmatpush1.msra.mxu0 0.0
    %3105 = vmatprep.subr.mxu0 0.0
    %3106 = vmatpush1.msra.mxu0 0.0
    %3107 = vmatprep.subr.mxu0 0.0
    %3108 = vmatpush1.msra.mxu0 0.0
    %3109 = vmatprep.subr.mxu0 0.0
    %3110 = vmatpush1.msra.mxu0 0.0
    %3111 = vmatprep.subr.mxu0 0.0
    %3112 = vmatpush1.msra.mxu0 0.0
    %3113 = vmatprep.subr.mxu0 0.0
    %3114 = vmatpush1.msra.mxu0 0.0
    %3115 = vmatprep.subr.mxu0 0.0
    %3116 = vmatpush1.msra.mxu0 0.0
    %3117 = vmatprep.subr.mxu0 0.0
    %3118 = vmatpush1.msra.mxu0 0.0
    %3119 = vmatprep.subr.mxu0 0.0
    %3120 = vmatpush1.msra.mxu0 0.0
    %3121 = vmatprep.subr.mxu0 0.0
    %3122 = vmatpush1.msra.mxu0 0.0
    %3123 = vmatprep.subr.mxu0 0.0
    %v3124 = vand.u32 %v950, 4294901760
    %v3125 = vsub.f32 %v950, %v3124
    %v3126 = vand.u32 %v3125, 4294901760
    %v3127 = vsub.f32 %v3125, %v3126
    %v3128 = vand.u32 %v3127, 4294901760
    %3129 = vmatpush1.msra.mxu0 %v3128
    %3130 = vmatprep.subr.mxu0 0.0
    %v3131 = vand.u32 %v949, 4294901760
    %v3132 = vsub.f32 %v949, %v3131
    %v3133 = vand.u32 %v3132, 4294901760
    %v3134 = vsub.f32 %v3132, %v3133
    %v3135 = vand.u32 %v3134, 4294901760
    %3136 = vmatpush1.msra.mxu0 %v3135
    %3137 = vmatprep.subr.mxu0 0.0
    %v3138 = vand.u32 %v948, 4294901760
    %v3139 = vsub.f32 %v948, %v3138
    %v3140 = vand.u32 %v3139, 4294901760
    %v3141 = vsub.f32 %v3139, %v3140
    %v3142 = vand.u32 %v3141, 4294901760
    %3143 = vmatpush1.msra.mxu0 %v3142
    %3144 = vmatprep.subr.mxu0 0.0
    %v3145 = vand.u32 %v947, 4294901760
    %v3146 = vsub.f32 %v947, %v3145
    %v3147 = vand.u32 %v3146, 4294901760
    %v3148 = vsub.f32 %v3146, %v3147
    %v3149 = vand.u32 %v3148, 4294901760
    %3150 = vmatpush1.msra.mxu0 %v3149
    %3151 = vmatprep.subr.mxu0 0.0
    %3152 = vmatpush2.msra.mxu0 0.0
    %3153 = vmatprep.subr.mxu0 0.0
    %3154 = vmatpush2.msra.mxu0 0.0
    %3155 = vmatprep.subr.mxu0 0.0
    %3156 = vmatpush2.msra.mxu0 0.0
    %3157 = vmatprep.subr.mxu0 0.0
    %3158 = vmatpush2.msra.mxu0 0.0
    %3159 = vmatprep.subr.mxu0 0.0
    %3160 = vmatpush2.msra.mxu0 0.0
    %3161 = vmatprep.subr.mxu0 0.0
    %3162 = vmatpush2.msra.mxu0 0.0
    %3163 = vmatprep.subr.mxu0 0.0
    %3164 = vmatpush2.msra.mxu0 0.0
    %3165 = vmatprep.subr.mxu0 0.0
    %3166 = vmatpush2.msra.mxu0 0.0
    %3167 = vmatprep.subr.mxu0 0.0
    %3168 = vmatpush2.msra.mxu0 0.0
    %3169 = vmatprep.subr.mxu0 0.0
    %3170 = vmatpush2.msra.mxu0 0.0
    %3171 = vmatprep.subr.mxu0 0.0
    %3172 = vmatpush2.msra.mxu0 0.0
    %3173 = vmatprep.subr.mxu0 0.0
    %3174 = vmatpush2.msra.mxu0 0.0
    %3175 = vmatprep.subr.mxu0 0.0
    %3176 = vmatpush2.msra.mxu0 0.0
    %3177 = vmatprep.subr.mxu0 0.0
    %3178 = vmatpush2.msra.mxu0 0.0
    %3179 = vmatprep.subr.mxu0 0.0
    %3180 = vmatpush2.msra.mxu0 0.0
    %3181 = vmatprep.subr.mxu0 0.0
    %3182 = vmatpush2.msra.mxu0 0.0
    %3183 = vmatprep.mubr.f32.mxu0 0.0
    %v3184 = vand.u32 %v3018, 4294901760
    %3185 = vmatmul.mubr.f32.gmra.mxu0 %v3184
    %v3186 = vpop.f32.mrf.mxu0
    %v3187 = vadd.f32 %v3096, %v3186
    %v3188 = vpop.f32.mrf.mxu0
    %3189 = vdwg.mxu0
    %3190 = vmatprep.subr.mxu0 0.0
    %3191 = vmatpush1.msra.mxu0 0.0
    %3192 = vmatprep.subr.mxu0 0.0
    %3193 = vmatpush1.msra.mxu0 0.0
    %3194 = vmatprep.subr.mxu0 0.0
    %3195 = vmatpush1.msra.mxu0 0.0
    %3196 = vmatprep.subr.mxu0 0.0
    %3197 = vmatpush1.msra.mxu0 0.0
    %3198 = vmatprep.subr.mxu0 0.0
    %3199 = vmatpush1.msra.mxu0 0.0
    %3200 = vmatprep.subr.mxu0 0.0
    %3201 = vmatpush1.msra.mxu0 0.0
    %3202 = vmatprep.subr.mxu0 0.0
    %3203 = vmatpush1.msra.mxu0 0.0
    %3204 = vmatprep.subr.mxu0 0.0
    %3205 = vmatpush1.msra.mxu0 0.0
    %3206 = vmatprep.subr.mxu0 0.0
    %3207 = vmatpush1.msra.mxu0 0.0
    %3208 = vmatprep.subr.mxu0 0.0
    %3209 = vmatpush1.msra.mxu0 0.0
    %3210 = vmatprep.subr.mxu0 0.0
    %3211 = vmatpush1.msra.mxu0 0.0
    %3212 = vmatprep.subr.mxu0 0.0
    %3213 = vmatpush1.msra.mxu0 0.0
    %3214 = vmatprep.subr.mxu0 0.0
    %v3215 = vand.u32 %v950, 4294901760
    %v3216 = vsub.f32 %v950, %v3215
    %3217 = vmatpush1.msra.mxu0 %v3216
    %3218 = vmatprep.subr.mxu0 0.0
    %v3219 = vand.u32 %v949, 4294901760
    %v3220 = vsub.f32 %v949, %v3219
    %3221 = vmatpush1.msra.mxu0 %v3220
    %3222 = vmatprep.subr.mxu0 0.0
    %v3223 = vand.u32 %v948, 4294901760
    %v3224 = vsub.f32 %v948, %v3223
    %3225 = vmatpush1.msra.mxu0 %v3224
    %3226 = vmatprep.subr.mxu0 0.0
    %v3227 = vand.u32 %v947, 4294901760
    %v3228 = vsub.f32 %v947, %v3227
    %3229 = vmatpush1.msra.mxu0 %v3228
    %3230 = vmatprep.subr.mxu0 0.0
    %3231 = vmatpush2.msra.mxu0 0.0
    %3232 = vmatprep.subr.mxu0 0.0
    %3233 = vmatpush2.msra.mxu0 0.0
    %3234 = vmatprep.subr.mxu0 0.0
    %3235 = vmatpush2.msra.mxu0 0.0
    %3236 = vmatprep.subr.mxu0 0.0
    %3237 = vmatpush2.msra.mxu0 0.0
    %3238 = vmatprep.subr.mxu0 0.0
    %3239 = vmatpush2.msra.mxu0 0.0
    %3240 = vmatprep.subr.mxu0 0.0
    %3241 = vmatpush2.msra.mxu0 0.0
    %3242 = vmatprep.subr.mxu0 0.0
    %3243 = vmatpush2.msra.mxu0 0.0
    %3244 = vmatprep.subr.mxu0 0.0
    %3245 = vmatpush2.msra.mxu0 0.0
    %3246 = vmatprep.subr.mxu0 0.0
    %3247 = vmatpush2.msra.mxu0 0.0
    %3248 = vmatprep.subr.mxu0 0.0
    %3249 = vmatpush2.msra.mxu0 0.0
    %3250 = vmatprep.subr.mxu0 0.0
    %3251 = vmatpush2.msra.mxu0 0.0
    %3252 = vmatprep.subr.mxu0 0.0
    %3253 = vmatpush2.msra.mxu0 0.0
    %3254 = vmatprep.subr.mxu0 0.0
    %3255 = vmatpush2.msra.mxu0 0.0
    %3256 = vmatprep.subr.mxu0 0.0
    %3257 = vmatpush2.msra.mxu0 0.0
    %3258 = vmatprep.subr.mxu0 0.0
    %3259 = vmatpush2.msra.mxu0 0.0
    %3260 = vmatprep.subr.mxu0 0.0
    %3261 = vmatpush2.msra.mxu0 0.0
    %3262 = vmatprep.mubr.f32.mxu0 0.0
    %v3263 = vand.u32 %v3018, 4294901760
    %v3264 = vsub.f32 %v3018, %v3263
    %3265 = vmatmul.mubr.f32.gmra.mxu0 %v3264
    %v3266 = vpop.f32.mrf.mxu0
    %v3267 = vadd.f32 %v3187, %v3266
    %v3268 = vpop.f32.mrf.mxu0
    %3269 = vdwg.mxu0
    %3270 = vmatprep.subr.mxu0 0.0
    %3271 = vmatpush1.msra.mxu0 0.0
    %3272 = vmatprep.subr.mxu0 0.0
    %3273 = vmatpush1.msra.mxu0 0.0
    %3274 = vmatprep.subr.mxu0 0.0
    %3275 = vmatpush1.msra.mxu0 0.0
    %3276 = vmatprep.subr.mxu0 0.0
    %3277 = vmatpush1.msra.mxu0 0.0
    %3278 = vmatprep.subr.mxu0 0.0
    %3279 = vmatpush1.msra.mxu0 0.0
    %3280 = vmatprep.subr.mxu0 0.0
    %3281 = vmatpush1.msra.mxu0 0.0
    %3282 = vmatprep.subr.mxu0 0.0
    %3283 = vmatpush1.msra.mxu0 0.0
    %3284 = vmatprep.subr.mxu0 0.0
    %3285 = vmatpush1.msra.mxu0 0.0
    %3286 = vmatprep.subr.mxu0 0.0
    %3287 = vmatpush1.msra.mxu0 0.0
    %3288 = vmatprep.subr.mxu0 0.0
    %3289 = vmatpush1.msra.mxu0 0.0
    %3290 = vmatprep.subr.mxu0 0.0
    %3291 = vmatpush1.msra.mxu0 0.0
    %3292 = vmatprep.subr.mxu0 0.0
    %3293 = vmatpush1.msra.mxu0 0.0
    %3294 = vmatprep.subr.mxu0 0.0
    %v3295 = vand.u32 %v950, 4294901760
    %3296 = vmatpush1.msra.mxu0 %v3295
    %3297 = vmatprep.subr.mxu0 0.0
    %v3298 = vand.u32 %v949, 4294901760
    %3299 = vmatpush1.msra.mxu0 %v3298
    %3300 = vmatprep.subr.mxu0 0.0
    %v3301 = vand.u32 %v948, 4294901760
    %3302 = vmatpush1.msra.mxu0 %v3301
    %3303 = vmatprep.subr.mxu0 0.0
    %v3304 = vand.u32 %v947, 4294901760
    %3305 = vmatpush1.msra.mxu0 %v3304
    %3306 = vmatprep.subr.mxu0 0.0
    %3307 = vmatpush2.msra.mxu0 0.0
    %3308 = vmatprep.subr.mxu0 0.0
    %3309 = vmatpush2.msra.mxu0 0.0
    %3310 = vmatprep.subr.mxu0 0.0
    %3311 = vmatpush2.msra.mxu0 0.0
    %3312 = vmatprep.subr.mxu0 0.0
    %3313 = vmatpush2.msra.mxu0 0.0
    %3314 = vmatprep.subr.mxu0 0.0
    %3315 = vmatpush2.msra.mxu0 0.0
    %3316 = vmatprep.subr.mxu0 0.0
    %3317 = vmatpush2.msra.mxu0 0.0
    %3318 = vmatprep.subr.mxu0 0.0
    %3319 = vmatpush2.msra.mxu0 0.0
    %3320 = vmatprep.subr.mxu0 0.0
    %3321 = vmatpush2.msra.mxu0 0.0
    %3322 = vmatprep.subr.mxu0 0.0
    %3323 = vmatpush2.msra.mxu0 0.0
    %3324 = vmatprep.subr.mxu0 0.0
    %3325 = vmatpush2.msra.mxu0 0.0
    %3326 = vmatprep.subr.mxu0 0.0
    %3327 = vmatpush2.msra.mxu0 0.0
    %3328 = vmatprep.subr.mxu0 0.0
    %3329 = vmatpush2.msra.mxu0 0.0
    %3330 = vmatprep.subr.mxu0 0.0
    %3331 = vmatpush2.msra.mxu0 0.0
    %3332 = vmatprep.subr.mxu0 0.0
    %3333 = vmatpush2.msra.mxu0 0.0
    %3334 = vmatprep.subr.mxu0 0.0
    %3335 = vmatpush2.msra.mxu0 0.0
    %3336 = vmatprep.subr.mxu0 0.0
    %3337 = vmatpush2.msra.mxu0 0.0
    %3338 = vmatprep.mubr.f32.mxu0 0.0
    %v3339 = vand.u32 %v3018, 4294901760
    %v3340 = vsub.f32 %v3018, %v3339
    %v3341 = vand.u32 %v3340, 4294901760
    %3342 = vmatmul.mubr.f32.gmra.mxu0 %v3341
    %v3343 = vpop.f32.mrf.mxu0
    %v3344 = vadd.f32 %v3267, %v3343
    %v3345 = vpop.f32.mrf.mxu0
    %3346 = vdwg.mxu0
    %3347 = vmatprep.subr.mxu0 0.0
    %3348 = vmatpush1.msra.mxu0 0.0
    %3349 = vmatprep.subr.mxu0 0.0
    %3350 = vmatpush1.msra.mxu0 0.0
    %3351 = vmatprep.subr.mxu0 0.0
    %3352 = vmatpush1.msra.mxu0 0.0
    %3353 = vmatprep.subr.mxu0 0.0
    %3354 = vmatpush1.msra.mxu0 0.0
    %3355 = vmatprep.subr.mxu0 0.0
    %3356 = vmatpush1.msra.mxu0 0.0
    %3357 = vmatprep.subr.mxu0 0.0
    %3358 = vmatpush1.msra.mxu0 0.0
    %3359 = vmatprep.subr.mxu0 0.0
    %3360 = vmatpush1.msra.mxu0 0.0
    %3361 = vmatprep.subr.mxu0 0.0
    %3362 = vmatpush1.msra.mxu0 0.0
    %3363 = vmatprep.subr.mxu0 0.0
    %3364 = vmatpush1.msra.mxu0 0.0
    %3365 = vmatprep.subr.mxu0 0.0
    %3366 = vmatpush1.msra.mxu0 0.0
    %3367 = vmatprep.subr.mxu0 0.0
    %3368 = vmatpush1.msra.mxu0 0.0
    %3369 = vmatprep.subr.mxu0 0.0
    %3370 = vmatpush1.msra.mxu0 0.0
    %3371 = vmatprep.subr.mxu0 0.0
    %v3372 = vand.u32 %v950, 4294901760
    %v3373 = vsub.f32 %v950, %v3372
    %v3374 = vand.u32 %v3373, 4294901760
    %3375 = vmatpush1.msra.mxu0 %v3374
    %3376 = vmatprep.subr.mxu0 0.0
    %v3377 = vand.u32 %v949, 4294901760
    %v3378 = vsub.f32 %v949, %v3377
    %v3379 = vand.u32 %v3378, 4294901760
    %3380 = vmatpush1.msra.mxu0 %v3379
    %3381 = vmatprep.subr.mxu0 0.0
    %v3382 = vand.u32 %v948, 4294901760
    %v3383 = vsub.f32 %v948, %v3382
    %v3384 = vand.u32 %v3383, 4294901760
    %3385 = vmatpush1.msra.mxu0 %v3384
    %3386 = vmatprep.subr.mxu0 0.0
    %v3387 = vand.u32 %v947, 4294901760
    %v3388 = vsub.f32 %v947, %v3387
    %v3389 = vand.u32 %v3388, 4294901760
    %3390 = vmatpush1.msra.mxu0 %v3389
    %3391 = vmatprep.subr.mxu0 0.0
    %3392 = vmatpush2.msra.mxu0 0.0
    %3393 = vmatprep.subr.mxu0 0.0
    %3394 = vmatpush2.msra.mxu0 0.0
    %3395 = vmatprep.subr.mxu0 0.0
    %3396 = vmatpush2.msra.mxu0 0.0
    %3397 = vmatprep.subr.mxu0 0.0
    %3398 = vmatpush2.msra.mxu0 0.0
    %3399 = vmatprep.subr.mxu0 0.0
    %3400 = vmatpush2.msra.mxu0 0.0
    %3401 = vmatprep.subr.mxu0 0.0
    %3402 = vmatpush2.msra.mxu0 0.0
    %3403 = vmatprep.subr.mxu0 0.0
    %3404 = vmatpush2.msra.mxu0 0.0
    %3405 = vmatprep.subr.mxu0 0.0
    %3406 = vmatpush2.msra.mxu0 0.0
    %3407 = vmatprep.subr.mxu0 0.0
    %3408 = vmatpush2.msra.mxu0 0.0
    %3409 = vmatprep.subr.mxu0 0.0
    %3410 = vmatpush2.msra.mxu0 0.0
    %3411 = vmatprep.subr.mxu0 0.0
    %3412 = vmatpush2.msra.mxu0 0.0
    %3413 = vmatprep.subr.mxu0 0.0
    %3414 = vmatpush2.msra.mxu0 0.0
    %3415 = vmatprep.subr.mxu0 0.0
    %3416 = vmatpush2.msra.mxu0 0.0
    %3417 = vmatprep.subr.mxu0 0.0
    %3418 = vmatpush2.msra.mxu0 0.0
    %3419 = vmatprep.subr.mxu0 0.0
    %3420 = vmatpush2.msra.mxu0 0.0
    %3421 = vmatprep.subr.mxu0 0.0
    %3422 = vmatpush2.msra.mxu0 0.0
    %3423 = vmatprep.mubr.f32.mxu0 0.0
    %v3424 = vand.u32 %v3018, 4294901760
    %3425 = vmatmul.mubr.f32.gmra.mxu0 %v3424
    %v3426 = vpop.f32.mrf.mxu0
    %v3427 = vadd.f32 %v3344, %v3426
    %v3428 = vpop.f32.mrf.mxu0
    %3429 = vdwg.mxu0
    %3430 = vmatprep.subr.mxu0 0.0
    %3431 = vmatpush1.msra.mxu0 0.0
    %3432 = vmatprep.subr.mxu0 0.0
    %3433 = vmatpush1.msra.mxu0 0.0
    %3434 = vmatprep.subr.mxu0 0.0
    %3435 = vmatpush1.msra.mxu0 0.0
    %3436 = vmatprep.subr.mxu0 0.0
    %3437 = vmatpush1.msra.mxu0 0.0
    %3438 = vmatprep.subr.mxu0 0.0
    %3439 = vmatpush1.msra.mxu0 0.0
    %3440 = vmatprep.subr.mxu0 0.0
    %3441 = vmatpush1.msra.mxu0 0.0
    %3442 = vmatprep.subr.mxu0 0.0
    %3443 = vmatpush1.msra.mxu0 0.0
    %3444 = vmatprep.subr.mxu0 0.0
    %3445 = vmatpush1.msra.mxu0 0.0
    %3446 = vmatprep.subr.mxu0 0.0
    %3447 = vmatpush1.msra.mxu0 0.0
    %3448 = vmatprep.subr.mxu0 0.0
    %3449 = vmatpush1.msra.mxu0 0.0
    %3450 = vmatprep.subr.mxu0 0.0
    %3451 = vmatpush1.msra.mxu0 0.0
    %3452 = vmatprep.subr.mxu0 0.0
    %3453 = vmatpush1.msra.mxu0 0.0
    %3454 = vmatprep.subr.mxu0 0.0
    %v3455 = vand.u32 %v950, 4294901760
    %3456 = vmatpush1.msra.mxu0 %v3455
    %3457 = vmatprep.subr.mxu0 0.0
    %v3458 = vand.u32 %v949, 4294901760
    %3459 = vmatpush1.msra.mxu0 %v3458
    %3460 = vmatprep.subr.mxu0 0.0
    %v3461 = vand.u32 %v948, 4294901760
    %3462 = vmatpush1.msra.mxu0 %v3461
    %3463 = vmatprep.subr.mxu0 0.0
    %v3464 = vand.u32 %v947, 4294901760
    %3465 = vmatpush1.msra.mxu0 %v3464
    %3466 = vmatprep.subr.mxu0 0.0
    %3467 = vmatpush2.msra.mxu0 0.0
    %3468 = vmatprep.subr.mxu0 0.0
    %3469 = vmatpush2.msra.mxu0 0.0
    %3470 = vmatprep.subr.mxu0 0.0
    %3471 = vmatpush2.msra.mxu0 0.0
    %3472 = vmatprep.subr.mxu0 0.0
    %3473 = vmatpush2.msra.mxu0 0.0
    %3474 = vmatprep.subr.mxu0 0.0
    %3475 = vmatpush2.msra.mxu0 0.0
    %3476 = vmatprep.subr.mxu0 0.0
    %3477 = vmatpush2.msra.mxu0 0.0
    %3478 = vmatprep.subr.mxu0 0.0
    %3479 = vmatpush2.msra.mxu0 0.0
    %3480 = vmatprep.subr.mxu0 0.0
    %3481 = vmatpush2.msra.mxu0 0.0
    %3482 = vmatprep.subr.mxu0 0.0
    %3483 = vmatpush2.msra.mxu0 0.0
    %3484 = vmatprep.subr.mxu0 0.0
    %3485 = vmatpush2.msra.mxu0 0.0
    %3486 = vmatprep.subr.mxu0 0.0
    %3487 = vmatpush2.msra.mxu0 0.0
    %3488 = vmatprep.subr.mxu0 0.0
    %3489 = vmatpush2.msra.mxu0 0.0
    %3490 = vmatprep.subr.mxu0 0.0
    %3491 = vmatpush2.msra.mxu0 0.0
    %3492 = vmatprep.subr.mxu0 0.0
    %3493 = vmatpush2.msra.mxu0 0.0
    %3494 = vmatprep.subr.mxu0 0.0
    %3495 = vmatpush2.msra.mxu0 0.0
    %3496 = vmatprep.subr.mxu0 0.0
    %3497 = vmatpush2.msra.mxu0 0.0
    %3498 = vmatprep.mubr.f32.mxu0 0.0
    %v3499 = vand.u32 %v3018, 4294901760
    %3500 = vmatmul.mubr.f32.gmra.mxu0 %v3499
    %v3501 = vpop.f32.mrf.mxu0
    %v3502 = vadd.f32 %v3427, %v3501
    %v3503 = vpop.f32.mrf.mxu0
    %3504 = vdwg.mxu0
    %v3505 = vadd.f32 %v926, %v3502
    %v3506 = vxor.u32 %v3505, 2147483648
    %v3507 = vmul.f32 %v3506, 1.442695
    %v3508 = vpow.pop %v3507
    %v3509 = vadd.f32 %v3508, 1.0
    %v3510 = vrcp.pop %v3509
    %v3511 = vmul.f32 1.0, %v3510
    %v3512 = vtanh.pop %v3505
    %v3513 = vmul.f32 %v3511, %v3008
    %3515 = vrot.lane.b32.xlu0 %v3512, 64
    %v3516 = vpop.permute.xlu0 %3515
    %v3518 = vmul.f32 %v3511, %v3516
    %3520 = vrot.lane.b32.xlu0 %v3518, 32
    %v3521 = vpop.permute.xlu0 %3520
    %v3523 = vadd.f32 %v3513, %v3521
    %v3524 = vtanh.pop %v3523
    %3526 = vrot.lane.b32.xlu0 %v3524, 64
    %v3527 = vpop.permute.xlu0 %3526
    %v3529 = vmul.f32 %v3511, %v3527
    %3531 = vrot.lane.b32.xlu0 %v3529, 32
    %v3532 = vpop.permute.xlu0 %3531
    %v3533 = vsel %vm136, %v3532, 0
    %3535 = vmatprep.subr.mxu0 0.0
    %3536 = vmatpush1.msra.mxu0 0.0
    %3537 = vmatprep.subr.mxu0 0.0
    %3538 = vmatpush1.msra.mxu0 0.0
    %3539 = vmatprep.subr.mxu0 0.0
    %3540 = vmatpush1.msra.mxu0 0.0
    %3541 = vmatprep.subr.mxu0 0.0
    %3542 = vmatpush1.msra.mxu0 0.0
    %3543 = vmatprep.subr.mxu0 0.0
    %3544 = vmatpush1.msra.mxu0 0.0
    %3545 = vmatprep.subr.mxu0 0.0
    %3546 = vmatpush1.msra.mxu0 0.0
    %3547 = vmatprep.subr.mxu0 0.0
    %3548 = vmatpush1.msra.mxu0 0.0
    %3549 = vmatprep.subr.mxu0 0.0
    %3550 = vmatpush1.msra.mxu0 0.0
    %3551 = vmatprep.subr.mxu0 0.0
    %3552 = vmatpush1.msra.mxu0 0.0
    %3553 = vmatprep.subr.mxu0 0.0
    %3554 = vmatpush1.msra.mxu0 0.0
    %3555 = vmatprep.subr.mxu0 0.0
    %3556 = vmatpush1.msra.mxu0 0.0
    %3557 = vmatprep.subr.mxu0 0.0
    %3558 = vmatpush1.msra.mxu0 0.0
    %3559 = vmatprep.subr.mxu0 0.0
    %v3560 = vand.u32 %v950, 4294901760
    %3561 = vmatpush1.msra.mxu0 %v3560
    %3562 = vmatprep.subr.mxu0 0.0
    %v3563 = vand.u32 %v949, 4294901760
    %3564 = vmatpush1.msra.mxu0 %v3563
    %3565 = vmatprep.subr.mxu0 0.0
    %v3566 = vand.u32 %v948, 4294901760
    %3567 = vmatpush1.msra.mxu0 %v3566
    %3568 = vmatprep.subr.mxu0 0.0
    %v3569 = vand.u32 %v947, 4294901760
    %3570 = vmatpush1.msra.mxu0 %v3569
    %3571 = vmatprep.subr.mxu0 0.0
    %3572 = vmatpush2.msra.mxu0 0.0
    %3573 = vmatprep.subr.mxu0 0.0
    %3574 = vmatpush2.msra.mxu0 0.0
    %3575 = vmatprep.subr.mxu0 0.0
    %3576 = vmatpush2.msra.mxu0 0.0
    %3577 = vmatprep.subr.mxu0 0.0
    %3578 = vmatpush2.msra.mxu0 0.0
    %3579 = vmatprep.subr.mxu0 0.0
    %3580 = vmatpush2.msra.mxu0 0.0
    %3581 = vmatprep.subr.mxu0 0.0
    %3582 = vmatpush2.msra.mxu0 0.0
    %3583 = vmatprep.subr.mxu0 0.0
    %3584 = vmatpush2.msra.mxu0 0.0
    %3585 = vmatprep.subr.mxu0 0.0
    %3586 = vmatpush2.msra.mxu0 0.0
    %3587 = vmatprep.subr.mxu0 0.0
    %3588 = vmatpush2.msra.mxu0 0.0
    %3589 = vmatprep.subr.mxu0 0.0
    %3590 = vmatpush2.msra.mxu0 0.0
    %3591 = vmatprep.subr.mxu0 0.0
    %3592 = vmatpush2.msra.mxu0 0.0
    %3593 = vmatprep.subr.mxu0 0.0
    %3594 = vmatpush2.msra.mxu0 0.0
    %3595 = vmatprep.subr.mxu0 0.0
    %3596 = vmatpush2.msra.mxu0 0.0
    %3597 = vmatprep.subr.mxu0 0.0
    %3598 = vmatpush2.msra.mxu0 0.0
    %3599 = vmatprep.subr.mxu0 0.0
    %3600 = vmatpush2.msra.mxu0 0.0
    %3601 = vmatprep.subr.mxu0 0.0
    %3602 = vmatpush2.msra.mxu0 0.0
    %3603 = vmatprep.mubr.f32.mxu0 0.0
    %v3604 = vand.u32 %v3533, 4294901760
    %v3605 = vsub.f32 %v3533, %v3604
    %v3606 = vand.u32 %v3605, 4294901760
    %v3607 = vsub.f32 %v3605, %v3606
    %v3608 = vand.u32 %v3607, 4294901760
    %3609 = vmatmul.mubr.f32.gmra.mxu0 %v3608
    %v3610 = vpop.f32.mrf.mxu0
    %v3611 = vadd.f32 0.0, %v3610
    %v3612 = vpop.f32.mrf.mxu0
    %3613 = vdwg.mxu0
    %3614 = vmatprep.subr.mxu0 0.0
    %3615 = vmatpush1.msra.mxu0 0.0
    %3616 = vmatprep.subr.mxu0 0.0
    %3617 = vmatpush1.msra.mxu0 0.0
    %3618 = vmatprep.subr.mxu0 0.0
    %3619 = vmatpush1.msra.mxu0 0.0
    %3620 = vmatprep.subr.mxu0 0.0
    %3621 = vmatpush1.msra.mxu0 0.0
    %3622 = vmatprep.subr.mxu0 0.0
    %3623 = vmatpush1.msra.mxu0 0.0
    %3624 = vmatprep.subr.mxu0 0.0
    %3625 = vmatpush1.msra.mxu0 0.0
    %3626 = vmatprep.subr.mxu0 0.0
    %3627 = vmatpush1.msra.mxu0 0.0
    %3628 = vmatprep.subr.mxu0 0.0
    %3629 = vmatpush1.msra.mxu0 0.0
    %3630 = vmatprep.subr.mxu0 0.0
    %3631 = vmatpush1.msra.mxu0 0.0
    %3632 = vmatprep.subr.mxu0 0.0
    %3633 = vmatpush1.msra.mxu0 0.0
    %3634 = vmatprep.subr.mxu0 0.0
    %3635 = vmatpush1.msra.mxu0 0.0
    %3636 = vmatprep.subr.mxu0 0.0
    %3637 = vmatpush1.msra.mxu0 0.0
    %3638 = vmatprep.subr.mxu0 0.0
    %v3639 = vand.u32 %v950, 4294901760
    %v3640 = vsub.f32 %v950, %v3639
    %v3641 = vand.u32 %v3640, 4294901760
    %v3642 = vsub.f32 %v3640, %v3641
    %v3643 = vand.u32 %v3642, 4294901760
    %3644 = vmatpush1.msra.mxu0 %v3643
    %3645 = vmatprep.subr.mxu0 0.0
    %v3646 = vand.u32 %v949, 4294901760
    %v3647 = vsub.f32 %v949, %v3646
    %v3648 = vand.u32 %v3647, 4294901760
    %v3649 = vsub.f32 %v3647, %v3648
    %v3650 = vand.u32 %v3649, 4294901760
    %3651 = vmatpush1.msra.mxu0 %v3650
    %3652 = vmatprep.subr.mxu0 0.0
    %v3653 = vand.u32 %v948, 4294901760
    %v3654 = vsub.f32 %v948, %v3653
    %v3655 = vand.u32 %v3654, 4294901760
    %v3656 = vsub.f32 %v3654, %v3655
    %v3657 = vand.u32 %v3656, 4294901760
    %3658 = vmatpush1.msra.mxu0 %v3657
    %3659 = vmatprep.subr.mxu0 0.0
    %v3660 = vand.u32 %v947, 4294901760
    %v3661 = vsub.f32 %v947, %v3660
    %v3662 = vand.u32 %v3661, 4294901760
    %v3663 = vsub.f32 %v3661, %v3662
    %v3664 = vand.u32 %v3663, 4294901760
    %3665 = vmatpush1.msra.mxu0 %v3664
    %3666 = vmatprep.subr.mxu0 0.0
    %3667 = vmatpush2.msra.mxu0 0.0
    %3668 = vmatprep.subr.mxu0 0.0
    %3669 = vmatpush2.msra.mxu0 0.0
    %3670 = vmatprep.subr.mxu0 0.0
    %3671 = vmatpush2.msra.mxu0 0.0
    %3672 = vmatprep.subr.mxu0 0.0
    %3673 = vmatpush2.msra.mxu0 0.0
    %3674 = vmatprep.subr.mxu0 0.0
    %3675 = vmatpush2.msra.mxu0 0.0
    %3676 = vmatprep.subr.mxu0 0.0
    %3677 = vmatpush2.msra.mxu0 0.0
    %3678 = vmatprep.subr.mxu0 0.0
    %3679 = vmatpush2.msra.mxu0 0.0
    %3680 = vmatprep.subr.mxu0 0.0
    %3681 = vmatpush2.msra.mxu0 0.0
    %3682 = vmatprep.subr.mxu0 0.0
    %3683 = vmatpush2.msra.mxu0 0.0
    %3684 = vmatprep.subr.mxu0 0.0
    %3685 = vmatpush2.msra.mxu0 0.0
    %3686 = vmatprep.subr.mxu0 0.0
    %3687 = vmatpush2.msra.mxu0 0.0
    %3688 = vmatprep.subr.mxu0 0.0
    %3689 = vmatpush2.msra.mxu0 0.0
    %3690 = vmatprep.subr.mxu0 0.0
    %3691 = vmatpush2.msra.mxu0 0.0
    %3692 = vmatprep.subr.mxu0 0.0
    %3693 = vmatpush2.msra.mxu0 0.0
    %3694 = vmatprep.subr.mxu0 0.0
    %3695 = vmatpush2.msra.mxu0 0.0
    %3696 = vmatprep.subr.mxu0 0.0
    %3697 = vmatpush2.msra.mxu0 0.0
    %3698 = vmatprep.mubr.f32.mxu0 0.0
    %v3699 = vand.u32 %v3533, 4294901760
    %3700 = vmatmul.mubr.f32.gmra.mxu0 %v3699
    %v3701 = vpop.f32.mrf.mxu0
    %v3702 = vadd.f32 %v3611, %v3701
    %v3703 = vpop.f32.mrf.mxu0
    %3704 = vdwg.mxu0
    %3705 = vmatprep.subr.mxu0 0.0
    %3706 = vmatpush1.msra.mxu0 0.0
    %3707 = vmatprep.subr.mxu0 0.0
    %3708 = vmatpush1.msra.mxu0 0.0
    %3709 = vmatprep.subr.mxu0 0.0
    %3710 = vmatpush1.msra.mxu0 0.0
    %3711 = vmatprep.subr.mxu0 0.0
    %3712 = vmatpush1.msra.mxu0 0.0
    %3713 = vmatprep.subr.mxu0 0.0
    %3714 = vmatpush1.msra.mxu0 0.0
    %3715 = vmatprep.subr.mxu0 0.0
    %3716 = vmatpush1.msra.mxu0 0.0
    %3717 = vmatprep.subr.mxu0 0.0
    %3718 = vmatpush1.msra.mxu0 0.0
    %3719 = vmatprep.subr.mxu0 0.0
    %3720 = vmatpush1.msra.mxu0 0.0
    %3721 = vmatprep.subr.mxu0 0.0
    %3722 = vmatpush1.msra.mxu0 0.0
    %3723 = vmatprep.subr.mxu0 0.0
    %3724 = vmatpush1.msra.mxu0 0.0
    %3725 = vmatprep.subr.mxu0 0.0
    %3726 = vmatpush1.msra.mxu0 0.0
    %3727 = vmatprep.subr.mxu0 0.0
    %3728 = vmatpush1.msra.mxu0 0.0
    %3729 = vmatprep.subr.mxu0 0.0
    %v3730 = vand.u32 %v950, 4294901760
    %v3731 = vsub.f32 %v950, %v3730
    %3732 = vmatpush1.msra.mxu0 %v3731
    %3733 = vmatprep.subr.mxu0 0.0
    %v3734 = vand.u32 %v949, 4294901760
    %v3735 = vsub.f32 %v949, %v3734
    %3736 = vmatpush1.msra.mxu0 %v3735
    %3737 = vmatprep.subr.mxu0 0.0
    %v3738 = vand.u32 %v948, 4294901760
    %v3739 = vsub.f32 %v948, %v3738
    %3740 = vmatpush1.msra.mxu0 %v3739
    %3741 = vmatprep.subr.mxu0 0.0
    %v3742 = vand.u32 %v947, 4294901760
    %v3743 = vsub.f32 %v947, %v3742
    %3744 = vmatpush1.msra.mxu0 %v3743
    %3745 = vmatprep.subr.mxu0 0.0
    %3746 = vmatpush2.msra.mxu0 0.0
    %3747 = vmatprep.subr.mxu0 0.0
    %3748 = vmatpush2.msra.mxu0 0.0
    %3749 = vmatprep.subr.mxu0 0.0
    %3750 = vmatpush2.msra.mxu0 0.0
    %3751 = vmatprep.subr.mxu0 0.0
    %3752 = vmatpush2.msra.mxu0 0.0
    %3753 = vmatprep.subr.mxu0 0.0
    %3754 = vmatpush2.msra.mxu0 0.0
    %3755 = vmatprep.subr.mxu0 0.0
    %3756 = vmatpush2.msra.mxu0 0.0
    %3757 = vmatprep.subr.mxu0 0.0
    %3758 = vmatpush2.msra.mxu0 0.0
    %3759 = vmatprep.subr.mxu0 0.0
    %3760 = vmatpush2.msra.mxu0 0.0
    %3761 = vmatprep.subr.mxu0 0.0
    %3762 = vmatpush2.msra.mxu0 0.0
    %3763 = vmatprep.subr.mxu0 0.0
    %3764 = vmatpush2.msra.mxu0 0.0
    %3765 = vmatprep.subr.mxu0 0.0
    %3766 = vmatpush2.msra.mxu0 0.0
    %3767 = vmatprep.subr.mxu0 0.0
    %3768 = vmatpush2.msra.mxu0 0.0
    %3769 = vmatprep.subr.mxu0 0.0
    %3770 = vmatpush2.msra.mxu0 0.0
    %3771 = vmatprep.subr.mxu0 0.0
    %3772 = vmatpush2.msra.mxu0 0.0
    %3773 = vmatprep.subr.mxu0 0.0
    %3774 = vmatpush2.msra.mxu0 0.0
    %3775 = vmatprep.subr.mxu0 0.0
    %3776 = vmatpush2.msra.mxu0 0.0
    %3777 = vmatprep.mubr.f32.mxu0 0.0
    %v3778 = vand.u32 %v3533, 4294901760
    %v3779 = vsub.f32 %v3533, %v3778
    %3780 = vmatmul.mubr.f32.gmra.mxu0 %v3779
    %v3781 = vpop.f32.mrf.mxu0
    %v3782 = vadd.f32 %v3702, %v3781
    %v3783 = vpop.f32.mrf.mxu0
    %3784 = vdwg.mxu0
    %3785 = vmatprep.subr.mxu0 0.0
    %3786 = vmatpush1.msra.mxu0 0.0
    %3787 = vmatprep.subr.mxu0 0.0
    %3788 = vmatpush1.msra.mxu0 0.0
    %3789 = vmatprep.subr.mxu0 0.0
    %3790 = vmatpush1.msra.mxu0 0.0
    %3791 = vmatprep.subr.mxu0 0.0
    %3792 = vmatpush1.msra.mxu0 0.0
    %3793 = vmatprep.subr.mxu0 0.0
    %3794 = vmatpush1.msra.mxu0 0.0
    %3795 = vmatprep.subr.mxu0 0.0
    %3796 = vmatpush1.msra.mxu0 0.0
    %3797 = vmatprep.subr.mxu0 0.0
    %3798 = vmatpush1.msra.mxu0 0.0
    %3799 = vmatprep.subr.mxu0 0.0
    %3800 = vmatpush1.msra.mxu0 0.0
    %3801 = vmatprep.subr.mxu0 0.0
    %3802 = vmatpush1.msra.mxu0 0.0
    %3803 = vmatprep.subr.mxu0 0.0
    %3804 = vmatpush1.msra.mxu0 0.0
    %3805 = vmatprep.subr.mxu0 0.0
    %3806 = vmatpush1.msra.mxu0 0.0
    %3807 = vmatprep.subr.mxu0 0.0
    %3808 = vmatpush1.msra.mxu0 0.0
    %3809 = vmatprep.subr.mxu0 0.0
    %v3810 = vand.u32 %v950, 4294901760
    %3811 = vmatpush1.msra.mxu0 %v3810
    %3812 = vmatprep.subr.mxu0 0.0
    %v3813 = vand.u32 %v949, 4294901760
    %3814 = vmatpush1.msra.mxu0 %v3813
    %3815 = vmatprep.subr.mxu0 0.0
    %v3816 = vand.u32 %v948, 4294901760
    %3817 = vmatpush1.msra.mxu0 %v3816
    %3818 = vmatprep.subr.mxu0 0.0
    %v3819 = vand.u32 %v947, 4294901760
    %3820 = vmatpush1.msra.mxu0 %v3819
    %3821 = vmatprep.subr.mxu0 0.0
    %3822 = vmatpush2.msra.mxu0 0.0
    %3823 = vmatprep.subr.mxu0 0.0
    %3824 = vmatpush2.msra.mxu0 0.0
    %3825 = vmatprep.subr.mxu0 0.0
    %3826 = vmatpush2.msra.mxu0 0.0
    %3827 = vmatprep.subr.mxu0 0.0
    %3828 = vmatpush2.msra.mxu0 0.0
    %3829 = vmatprep.subr.mxu0 0.0
    %3830 = vmatpush2.msra.mxu0 0.0
    %3831 = vmatprep.subr.mxu0 0.0
    %3832 = vmatpush2.msra.mxu0 0.0
    %3833 = vmatprep.subr.mxu0 0.0
    %3834 = vmatpush2.msra.mxu0 0.0
    %3835 = vmatprep.subr.mxu0 0.0
    %3836 = vmatpush2.msra.mxu0 0.0
    %3837 = vmatprep.subr.mxu0 0.0
    %3838 = vmatpush2.msra.mxu0 0.0
    %3839 = vmatprep.subr.mxu0 0.0
    %3840 = vmatpush2.msra.mxu0 0.0
    %3841 = vmatprep.subr.mxu0 0.0
    %3842 = vmatpush2.msra.mxu0 0.0
    %3843 = vmatprep.subr.mxu0 0.0
    %3844 = vmatpush2.msra.mxu0 0.0
    %3845 = vmatprep.subr.mxu0 0.0
    %3846 = vmatpush2.msra.mxu0 0.0
    %3847 = vmatprep.subr.mxu0 0.0
    %3848 = vmatpush2.msra.mxu0 0.0
    %3849 = vmatprep.subr.mxu0 0.0
    %3850 = vmatpush2.msra.mxu0 0.0
    %3851 = vmatprep.subr.mxu0 0.0
    %3852 = vmatpush2.msra.mxu0 0.0
    %3853 = vmatprep.mubr.f32.mxu0 0.0
    %v3854 = vand.u32 %v3533, 4294901760
    %v3855 = vsub.f32 %v3533, %v3854
    %v3856 = vand.u32 %v3855, 4294901760
    %3857 = vmatmul.mubr.f32.gmra.mxu0 %v3856
    %v3858 = vpop.f32.mrf.mxu0
    %v3859 = vadd.f32 %v3782, %v3858
    %v3860 = vpop.f32.mrf.mxu0
    %3861 = vdwg.mxu0
    %3862 = vmatprep.subr.mxu0 0.0
    %3863 = vmatpush1.msra.mxu0 0.0
    %3864 = vmatprep.subr.mxu0 0.0
    %3865 = vmatpush1.msra.mxu0 0.0
    %3866 = vmatprep.subr.mxu0 0.0
    %3867 = vmatpush1.msra.mxu0 0.0
    %3868 = vmatprep.subr.mxu0 0.0
    %3869 = vmatpush1.msra.mxu0 0.0
    %3870 = vmatprep.subr.mxu0 0.0
    %3871 = vmatpush1.msra.mxu0 0.0
    %3872 = vmatprep.subr.mxu0 0.0
    %3873 = vmatpush1.msra.mxu0 0.0
    %3874 = vmatprep.subr.mxu0 0.0
    %3875 = vmatpush1.msra.mxu0 0.0
    %3876 = vmatprep.subr.mxu0 0.0
    %3877 = vmatpush1.msra.mxu0 0.0
    %3878 = vmatprep.subr.mxu0 0.0
    %3879 = vmatpush1.msra.mxu0 0.0
    %3880 = vmatprep.subr.mxu0 0.0
    %3881 = vmatpush1.msra.mxu0 0.0
    %3882 = vmatprep.subr.mxu0 0.0
    %3883 = vmatpush1.msra.mxu0 0.0
    %3884 = vmatprep.subr.mxu0 0.0
    %3885 = vmatpush1.msra.mxu0 0.0
    %3886 = vmatprep.subr.mxu0 0.0
    %v3887 = vand.u32 %v950, 4294901760
    %v3888 = vsub.f32 %v950, %v3887
    %v3889 = vand.u32 %v3888, 4294901760
    %3890 = vmatpush1.msra.mxu0 %v3889
    %3891 = vmatprep.subr.mxu0 0.0
    %v3892 = vand.u32 %v949, 4294901760
    %v3893 = vsub.f32 %v949, %v3892
    %v3894 = vand.u32 %v3893, 4294901760
    %3895 = vmatpush1.msra.mxu0 %v3894
    %3896 = vmatprep.subr.mxu0 0.0
    %v3897 = vand.u32 %v948, 4294901760
    %v3898 = vsub.f32 %v948, %v3897
    %v3899 = vand.u32 %v3898, 4294901760
    %3900 = vmatpush1.msra.mxu0 %v3899
    %3901 = vmatprep.subr.mxu0 0.0
    %v3902 = vand.u32 %v947, 4294901760
    %v3903 = vsub.f32 %v947, %v3902
    %v3904 = vand.u32 %v3903, 4294901760
    %3905 = vmatpush1.msra.mxu0 %v3904
    %3906 = vmatprep.subr.mxu0 0.0
    %3907 = vmatpush2.msra.mxu0 0.0
    %3908 = vmatprep.subr.mxu0 0.0
    %3909 = vmatpush2.msra.mxu0 0.0
    %3910 = vmatprep.subr.mxu0 0.0
    %3911 = vmatpush2.msra.mxu0 0.0
    %3912 = vmatprep.subr.mxu0 0.0
    %3913 = vmatpush2.msra.mxu0 0.0
    %3914 = vmatprep.subr.mxu0 0.0
    %3915 = vmatpush2.msra.mxu0 0.0
    %3916 = vmatprep.subr.mxu0 0.0
    %3917 = vmatpush2.msra.mxu0 0.0
    %3918 = vmatprep.subr.mxu0 0.0
    %3919 = vmatpush2.msra.mxu0 0.0
    %3920 = vmatprep.subr.mxu0 0.0
    %3921 = vmatpush2.msra.mxu0 0.0
    %3922 = vmatprep.subr.mxu0 0.0
    %3923 = vmatpush2.msra.mxu0 0.0
    %3924 = vmatprep.subr.mxu0 0.0
    %3925 = vmatpush2.msra.mxu0 0.0
    %3926 = vmatprep.subr.mxu0 0.0
    %3927 = vmatpush2.msra.mxu0 0.0
    %3928 = vmatprep.subr.mxu0 0.0
    %3929 = vmatpush2.msra.mxu0 0.0
    %3930 = vmatprep.subr.mxu0 0.0
    %3931 = vmatpush2.msra.mxu0 0.0
    %3932 = vmatprep.subr.mxu0 0.0
    %3933 = vmatpush2.msra.mxu0 0.0
    %3934 = vmatprep.subr.mxu0 0.0
    %3935 = vmatpush2.msra.mxu0 0.0
    %3936 = vmatprep.subr.mxu0 0.0
    %3937 = vmatpush2.msra.mxu0 0.0
    %3938 = vmatprep.mubr.f32.mxu0 0.0
    %v3939 = vand.u32 %v3533, 4294901760
    %3940 = vmatmul.mubr.f32.gmra.mxu0 %v3939
    %v3941 = vpop.f32.mrf.mxu0
    %v3942 = vadd.f32 %v3859, %v3941
    %v3943 = vpop.f32.mrf.mxu0
    %3944 = vdwg.mxu0
    %3945 = vmatprep.subr.mxu0 0.0
    %3946 = vmatpush1.msra.mxu0 0.0
    %3947 = vmatprep.subr.mxu0 0.0
    %3948 = vmatpush1.msra.mxu0 0.0
    %3949 = vmatprep.subr.mxu0 0.0
    %3950 = vmatpush1.msra.mxu0 0.0
    %3951 = vmatprep.subr.mxu0 0.0
    %3952 = vmatpush1.msra.mxu0 0.0
    %3953 = vmatprep.subr.mxu0 0.0
    %3954 = vmatpush1.msra.mxu0 0.0
    %3955 = vmatprep.subr.mxu0 0.0
    %3956 = vmatpush1.msra.mxu0 0.0
    %3957 = vmatprep.subr.mxu0 0.0
    %3958 = vmatpush1.msra.mxu0 0.0
    %3959 = vmatprep.subr.mxu0 0.0
    %3960 = vmatpush1.msra.mxu0 0.0
    %3961 = vmatprep.subr.mxu0 0.0
    %3962 = vmatpush1.msra.mxu0 0.0
    %3963 = vmatprep.subr.mxu0 0.0
    %3964 = vmatpush1.msra.mxu0 0.0
    %3965 = vmatprep.subr.mxu0 0.0
    %3966 = vmatpush1.msra.mxu0 0.0
    %3967 = vmatprep.subr.mxu0 0.0
    %3968 = vmatpush1.msra.mxu0 0.0
    %3969 = vmatprep.subr.mxu0 0.0
    %v3970 = vand.u32 %v950, 4294901760
    %3971 = vmatpush1.msra.mxu0 %v3970
    %3972 = vmatprep.subr.mxu0 0.0
    %v3973 = vand.u32 %v949, 4294901760
    %3974 = vmatpush1.msra.mxu0 %v3973
    %3975 = vmatprep.subr.mxu0 0.0
    %v3976 = vand.u32 %v948, 4294901760
    %3977 = vmatpush1.msra.mxu0 %v3976
    %3978 = vmatprep.subr.mxu0 0.0
    %v3979 = vand.u32 %v947, 4294901760
    %3980 = vmatpush1.msra.mxu0 %v3979
    %3981 = vmatprep.subr.mxu0 0.0
    %3982 = vmatpush2.msra.mxu0 0.0
    %3983 = vmatprep.subr.mxu0 0.0
    %3984 = vmatpush2.msra.mxu0 0.0
    %3985 = vmatprep.subr.mxu0 0.0
    %3986 = vmatpush2.msra.mxu0 0.0
    %3987 = vmatprep.subr.mxu0 0.0
    %3988 = vmatpush2.msra.mxu0 0.0
    %3989 = vmatprep.subr.mxu0 0.0
    %3990 = vmatpush2.msra.mxu0 0.0
    %3991 = vmatprep.subr.mxu0 0.0
    %3992 = vmatpush2.msra.mxu0 0.0
    %3993 = vmatprep.subr.mxu0 0.0
    %3994 = vmatpush2.msra.mxu0 0.0
    %3995 = vmatprep.subr.mxu0 0.0
    %3996 = vmatpush2.msra.mxu0 0.0
    %3997 = vmatprep.subr.mxu0 0.0
    %3998 = vmatpush2.msra.mxu0 0.0
    %3999 = vmatprep.subr.mxu0 0.0
    %4000 = vmatpush2.msra.mxu0 0.0
    %4001 = vmatprep.subr.mxu0 0.0
    %4002 = vmatpush2.msra.mxu0 0.0
    %4003 = vmatprep.subr.mxu0 0.0
    %4004 = vmatpush2.msra.mxu0 0.0
    %4005 = vmatprep.subr.mxu0 0.0
    %4006 = vmatpush2.msra.mxu0 0.0
    %4007 = vmatprep.subr.mxu0 0.0
    %4008 = vmatpush2.msra.mxu0 0.0
    %4009 = vmatprep.subr.mxu0 0.0
    %4010 = vmatpush2.msra.mxu0 0.0
    %4011 = vmatprep.subr.mxu0 0.0
    %4012 = vmatpush2.msra.mxu0 0.0
    %4013 = vmatprep.mubr.f32.mxu0 0.0
    %v4014 = vand.u32 %v3533, 4294901760
    %4015 = vmatmul.mubr.f32.gmra.mxu0 %v4014
    %v4016 = vpop.f32.mrf.mxu0
    %v4017 = vadd.f32 %v3942, %v4016
    %v4018 = vpop.f32.mrf.mxu0
    %4019 = vdwg.mxu0
    %v4020 = vadd.f32 %v932, %v4017
    %v4021 = vxor.u32 %v4020, 2147483648
    %v4022 = vmul.f32 %v4021, 1.442695
    %v4023 = vpow.pop %v4022
    %v4024 = vadd.f32 %v4023, 1.0
    %v4025 = vrcp.pop %v4024
    %v4026 = vmul.f32 1.0, %v4025
    %v4027 = vtanh.pop %v4020
    %v4028 = vmul.f32 %v4026, %v3523
    %4030 = vrot.lane.b32.xlu0 %v4027, 64
    %v4031 = vpop.permute.xlu0 %4030
    %v4033 = vmul.f32 %v4026, %v4031
    %4035 = vrot.lane.b32.xlu0 %v4033, 32
    %v4036 = vpop.permute.xlu0 %4035
    %v4038 = vadd.f32 %v4028, %v4036
    %v4039 = vtanh.pop %v4038
    %4041 = vrot.lane.b32.xlu0 %v4039, 64
    %v4042 = vpop.permute.xlu0 %4041
    %v4044 = vmul.f32 %v4026, %v4042
    %4046 = vrot.lane.b32.xlu0 %v4044, 32
    %v4047 = vpop.permute.xlu0 %4046
    %v4048 = vsel %vm136, %v4047, 0
    %4050 = vmatprep.subr.mxu0 0.0
    %4051 = vmatpush1.msra.mxu0 0.0
    %4052 = vmatprep.subr.mxu0 0.0
    %4053 = vmatpush1.msra.mxu0 0.0
    %4054 = vmatprep.subr.mxu0 0.0
    %4055 = vmatpush1.msra.mxu0 0.0
    %4056 = vmatprep.subr.mxu0 0.0
    %4057 = vmatpush1.msra.mxu0 0.0
    %4058 = vmatprep.subr.mxu0 0.0
    %4059 = vmatpush1.msra.mxu0 0.0
    %4060 = vmatprep.subr.mxu0 0.0
    %4061 = vmatpush1.msra.mxu0 0.0
    %4062 = vmatprep.subr.mxu0 0.0
    %4063 = vmatpush1.msra.mxu0 0.0
    %4064 = vmatprep.subr.mxu0 0.0
    %4065 = vmatpush1.msra.mxu0 0.0
    %4066 = vmatprep.subr.mxu0 0.0
    %4067 = vmatpush1.msra.mxu0 0.0
    %4068 = vmatprep.subr.mxu0 0.0
    %4069 = vmatpush1.msra.mxu0 0.0
    %4070 = vmatprep.subr.mxu0 0.0
    %4071 = vmatpush1.msra.mxu0 0.0
    %4072 = vmatprep.subr.mxu0 0.0
    %4073 = vmatpush1.msra.mxu0 0.0
    %4074 = vmatprep.subr.mxu0 0.0
    %v4075 = vand.u32 %v950, 4294901760
    %4076 = vmatpush1.msra.mxu0 %v4075
    %4077 = vmatprep.subr.mxu0 0.0
    %v4078 = vand.u32 %v949, 4294901760
    %4079 = vmatpush1.msra.mxu0 %v4078
    %4080 = vmatprep.subr.mxu0 0.0
    %v4081 = vand.u32 %v948, 4294901760
    %4082 = vmatpush1.msra.mxu0 %v4081
    %4083 = vmatprep.subr.mxu0 0.0
    %v4084 = vand.u32 %v947, 4294901760
    %4085 = vmatpush1.msra.mxu0 %v4084
    %4086 = vmatprep.subr.mxu0 0.0
    %4087 = vmatpush2.msra.mxu0 0.0
    %4088 = vmatprep.subr.mxu0 0.0
    %4089 = vmatpush2.msra.mxu0 0.0
    %4090 = vmatprep.subr.mxu0 0.0
    %4091 = vmatpush2.msra.mxu0 0.0
    %4092 = vmatprep.subr.mxu0 0.0
    %4093 = vmatpush2.msra.mxu0 0.0
    %4094 = vmatprep.subr.mxu0 0.0
    %4095 = vmatpush2.msra.mxu0 0.0
    %4096 = vmatprep.subr.mxu0 0.0
    %4097 = vmatpush2.msra.mxu0 0.0
    %4098 = vmatprep.subr.mxu0 0.0
    %4099 = vmatpush2.msra.mxu0 0.0
    %4100 = vmatprep.subr.mxu0 0.0
    %4101 = vmatpush2.msra.mxu0 0.0
    %4102 = vmatprep.subr.mxu0 0.0
    %4103 = vmatpush2.msra.mxu0 0.0
    %4104 = vmatprep.subr.mxu0 0.0
    %4105 = vmatpush2.msra.mxu0 0.0
    %4106 = vmatprep.subr.mxu0 0.0
    %4107 = vmatpush2.msra.mxu0 0.0
    %4108 = vmatprep.subr.mxu0 0.0
    %4109 = vmatpush2.msra.mxu0 0.0
    %4110 = vmatprep.subr.mxu0 0.0
    %4111 = vmatpush2.msra.mxu0 0.0
    %4112 = vmatprep.subr.mxu0 0.0
    %4113 = vmatpush2.msra.mxu0 0.0
    %4114 = vmatprep.subr.mxu0 0.0
    %4115 = vmatpush2.msra.mxu0 0.0
    %4116 = vmatprep.subr.mxu0 0.0
    %4117 = vmatpush2.msra.mxu0 0.0
    %4118 = vmatprep.mubr.f32.mxu0 0.0
    %v4119 = vand.u32 %v4048, 4294901760
    %v4120 = vsub.f32 %v4048, %v4119
    %v4121 = vand.u32 %v4120, 4294901760
    %v4122 = vsub.f32 %v4120, %v4121
    %v4123 = vand.u32 %v4122, 4294901760
    %4124 = vmatmul.mubr.f32.gmra.mxu0 %v4123
    %v4125 = vpop.f32.mrf.mxu0
    %v4126 = vadd.f32 0.0, %v4125
    %v4127 = vpop.f32.mrf.mxu0
    %4128 = vdwg.mxu0
    %4129 = vmatprep.subr.mxu0 0.0
    %4130 = vmatpush1.msra.mxu0 0.0
    %4131 = vmatprep.subr.mxu0 0.0
    %4132 = vmatpush1.msra.mxu0 0.0
    %4133 = vmatprep.subr.mxu0 0.0
    %4134 = vmatpush1.msra.mxu0 0.0
    %4135 = vmatprep.subr.mxu0 0.0
    %4136 = vmatpush1.msra.mxu0 0.0
    %4137 = vmatprep.subr.mxu0 0.0
    %4138 = vmatpush1.msra.mxu0 0.0
    %4139 = vmatprep.subr.mxu0 0.0
    %4140 = vmatpush1.msra.mxu0 0.0
    %4141 = vmatprep.subr.mxu0 0.0
    %4142 = vmatpush1.msra.mxu0 0.0
    %4143 = vmatprep.subr.mxu0 0.0
    %4144 = vmatpush1.msra.mxu0 0.0
    %4145 = vmatprep.subr.mxu0 0.0
    %4146 = vmatpush1.msra.mxu0 0.0
    %4147 = vmatprep.subr.mxu0 0.0
    %4148 = vmatpush1.msra.mxu0 0.0
    %4149 = vmatprep.subr.mxu0 0.0
    %4150 = vmatpush1.msra.mxu0 0.0
    %4151 = vmatprep.subr.mxu0 0.0
    %4152 = vmatpush1.msra.mxu0 0.0
    %4153 = vmatprep.subr.mxu0 0.0
    %v4154 = vand.u32 %v950, 4294901760
    %v4155 = vsub.f32 %v950, %v4154
    %v4156 = vand.u32 %v4155, 4294901760
    %v4157 = vsub.f32 %v4155, %v4156
    %v4158 = vand.u32 %v4157, 4294901760
    %4159 = vmatpush1.msra.mxu0 %v4158
    %4160 = vmatprep.subr.mxu0 0.0
    %v4161 = vand.u32 %v949, 4294901760
    %v4162 = vsub.f32 %v949, %v4161
    %v4163 = vand.u32 %v4162, 4294901760
    %v4164 = vsub.f32 %v4162, %v4163
    %v4165 = vand.u32 %v4164, 4294901760
    %4166 = vmatpush1.msra.mxu0 %v4165
    %4167 = vmatprep.subr.mxu0 0.0
    %v4168 = vand.u32 %v948, 4294901760
    %v4169 = vsub.f32 %v948, %v4168
    %v4170 = vand.u32 %v4169, 4294901760
    %v4171 = vsub.f32 %v4169, %v4170
    %v4172 = vand.u32 %v4171, 4294901760
    %4173 = vmatpush1.msra.mxu0 %v4172
    %4174 = vmatprep.subr.mxu0 0.0
    %v4175 = vand.u32 %v947, 4294901760
    %v4176 = vsub.f32 %v947, %v4175
    %v4177 = vand.u32 %v4176, 4294901760
    %v4178 = vsub.f32 %v4176, %v4177
    %v4179 = vand.u32 %v4178, 4294901760
    %4180 = vmatpush1.msra.mxu0 %v4179
    %4181 = vmatprep.subr.mxu0 0.0
    %4182 = vmatpush2.msra.mxu0 0.0
    %4183 = vmatprep.subr.mxu0 0.0
    %4184 = vmatpush2.msra.mxu0 0.0
    %4185 = vmatprep.subr.mxu0 0.0
    %4186 = vmatpush2.msra.mxu0 0.0
    %4187 = vmatprep.subr.mxu0 0.0
    %4188 = vmatpush2.msra.mxu0 0.0
    %4189 = vmatprep.subr.mxu0 0.0
    %4190 = vmatpush2.msra.mxu0 0.0
    %4191 = vmatprep.subr.mxu0 0.0
    %4192 = vmatpush2.msra.mxu0 0.0
    %4193 = vmatprep.subr.mxu0 0.0
    %4194 = vmatpush2.msra.mxu0 0.0
    %4195 = vmatprep.subr.mxu0 0.0
    %4196 = vmatpush2.msra.mxu0 0.0
    %4197 = vmatprep.subr.mxu0 0.0
    %4198 = vmatpush2.msra.mxu0 0.0
    %4199 = vmatprep.subr.mxu0 0.0
    %4200 = vmatpush2.msra.mxu0 0.0
    %4201 = vmatprep.subr.mxu0 0.0
    %4202 = vmatpush2.msra.mxu0 0.0
    %4203 = vmatprep.subr.mxu0 0.0
    %4204 = vmatpush2.msra.mxu0 0.0
    %4205 = vmatprep.subr.mxu0 0.0
    %4206 = vmatpush2.msra.mxu0 0.0
    %4207 = vmatprep.subr.mxu0 0.0
    %4208 = vmatpush2.msra.mxu0 0.0
    %4209 = vmatprep.subr.mxu0 0.0
    %4210 = vmatpush2.msra.mxu0 0.0
    %4211 = vmatprep.subr.mxu0 0.0
    %4212 = vmatpush2.msra.mxu0 0.0
    %4213 = vmatprep.mubr.f32.mxu0 0.0
    %v4214 = vand.u32 %v4048, 4294901760
    %4215 = vmatmul.mubr.f32.gmra.mxu0 %v4214
    %v4216 = vpop.f32.mrf.mxu0
    %v4217 = vadd.f32 %v4126, %v4216
    %v4218 = vpop.f32.mrf.mxu0
    %4219 = vdwg.mxu0
    %4220 = vmatprep.subr.mxu0 0.0
    %4221 = vmatpush1.msra.mxu0 0.0
    %4222 = vmatprep.subr.mxu0 0.0
    %4223 = vmatpush1.msra.mxu0 0.0
    %4224 = vmatprep.subr.mxu0 0.0
    %4225 = vmatpush1.msra.mxu0 0.0
    %4226 = vmatprep.subr.mxu0 0.0
    %4227 = vmatpush1.msra.mxu0 0.0
    %4228 = vmatprep.subr.mxu0 0.0
    %4229 = vmatpush1.msra.mxu0 0.0
    %4230 = vmatprep.subr.mxu0 0.0
    %4231 = vmatpush1.msra.mxu0 0.0
    %4232 = vmatprep.subr.mxu0 0.0
    %4233 = vmatpush1.msra.mxu0 0.0
    %4234 = vmatprep.subr.mxu0 0.0
    %4235 = vmatpush1.msra.mxu0 0.0
    %4236 = vmatprep.subr.mxu0 0.0
    %4237 = vmatpush1.msra.mxu0 0.0
    %4238 = vmatprep.subr.mxu0 0.0
    %4239 = vmatpush1.msra.mxu0 0.0
    %4240 = vmatprep.subr.mxu0 0.0
    %4241 = vmatpush1.msra.mxu0 0.0
    %4242 = vmatprep.subr.mxu0 0.0
    %4243 = vmatpush1.msra.mxu0 0.0
    %4244 = vmatprep.subr.mxu0 0.0
    %v4245 = vand.u32 %v950, 4294901760
    %v4246 = vsub.f32 %v950, %v4245
    %4247 = vmatpush1.msra.mxu0 %v4246
    %4248 = vmatprep.subr.mxu0 0.0
    %v4249 = vand.u32 %v949, 4294901760
    %v4250 = vsub.f32 %v949, %v4249
    %4251 = vmatpush1.msra.mxu0 %v4250
    %4252 = vmatprep.subr.mxu0 0.0
    %v4253 = vand.u32 %v948, 4294901760
    %v4254 = vsub.f32 %v948, %v4253
    %4255 = vmatpush1.msra.mxu0 %v4254
    %4256 = vmatprep.subr.mxu0 0.0
    %v4257 = vand.u32 %v947, 4294901760
    %v4258 = vsub.f32 %v947, %v4257
    %4259 = vmatpush1.msra.mxu0 %v4258
    %4260 = vmatprep.subr.mxu0 0.0
    %4261 = vmatpush2.msra.mxu0 0.0
    %4262 = vmatprep.subr.mxu0 0.0
    %4263 = vmatpush2.msra.mxu0 0.0
    %4264 = vmatprep.subr.mxu0 0.0
    %4265 = vmatpush2.msra.mxu0 0.0
    %4266 = vmatprep.subr.mxu0 0.0
    %4267 = vmatpush2.msra.mxu0 0.0
    %4268 = vmatprep.subr.mxu0 0.0
    %4269 = vmatpush2.msra.mxu0 0.0
    %4270 = vmatprep.subr.mxu0 0.0
    %4271 = vmatpush2.msra.mxu0 0.0
    %4272 = vmatprep.subr.mxu0 0.0
    %4273 = vmatpush2.msra.mxu0 0.0
    %4274 = vmatprep.subr.mxu0 0.0
    %4275 = vmatpush2.msra.mxu0 0.0
    %4276 = vmatprep.subr.mxu0 0.0
    %4277 = vmatpush2.msra.mxu0 0.0
    %4278 = vmatprep.subr.mxu0 0.0
    %4279 = vmatpush2.msra.mxu0 0.0
    %4280 = vmatprep.subr.mxu0 0.0
    %4281 = vmatpush2.msra.mxu0 0.0
    %4282 = vmatprep.subr.mxu0 0.0
    %4283 = vmatpush2.msra.mxu0 0.0
    %4284 = vmatprep.subr.mxu0 0.0
    %4285 = vmatpush2.msra.mxu0 0.0
    %4286 = vmatprep.subr.mxu0 0.0
    %4287 = vmatpush2.msra.mxu0 0.0
    %4288 = vmatprep.subr.mxu0 0.0
    %4289 = vmatpush2.msra.mxu0 0.0
    %4290 = vmatprep.subr.mxu0 0.0
    %4291 = vmatpush2.msra.mxu0 0.0
    %4292 = vmatprep.mubr.f32.mxu0 0.0
    %v4293 = vand.u32 %v4048, 4294901760
    %v4294 = vsub.f32 %v4048, %v4293
    %4295 = vmatmul.mubr.f32.gmra.mxu0 %v4294
    %v4296 = vpop.f32.mrf.mxu0
    %v4297 = vadd.f32 %v4217, %v4296
    %v4298 = vpop.f32.mrf.mxu0
    %4299 = vdwg.mxu0
    %4300 = vmatprep.subr.mxu0 0.0
    %4301 = vmatpush1.msra.mxu0 0.0
    %4302 = vmatprep.subr.mxu0 0.0
    %4303 = vmatpush1.msra.mxu0 0.0
    %4304 = vmatprep.subr.mxu0 0.0
    %4305 = vmatpush1.msra.mxu0 0.0
    %4306 = vmatprep.subr.mxu0 0.0
    %4307 = vmatpush1.msra.mxu0 0.0
    %4308 = vmatprep.subr.mxu0 0.0
    %4309 = vmatpush1.msra.mxu0 0.0
    %4310 = vmatprep.subr.mxu0 0.0
    %4311 = vmatpush1.msra.mxu0 0.0
    %4312 = vmatprep.subr.mxu0 0.0
    %4313 = vmatpush1.msra.mxu0 0.0
    %4314 = vmatprep.subr.mxu0 0.0
    %4315 = vmatpush1.msra.mxu0 0.0
    %4316 = vmatprep.subr.mxu0 0.0
    %4317 = vmatpush1.msra.mxu0 0.0
    %4318 = vmatprep.subr.mxu0 0.0
    %4319 = vmatpush1.msra.mxu0 0.0
    %4320 = vmatprep.subr.mxu0 0.0
    %4321 = vmatpush1.msra.mxu0 0.0
    %4322 = vmatprep.subr.mxu0 0.0
    %4323 = vmatpush1.msra.mxu0 0.0
    %4324 = vmatprep.subr.mxu0 0.0
    %v4325 = vand.u32 %v950, 4294901760
    %4326 = vmatpush1.msra.mxu0 %v4325
    %4327 = vmatprep.subr.mxu0 0.0
    %v4328 = vand.u32 %v949, 4294901760
    %4329 = vmatpush1.msra.mxu0 %v4328
    %4330 = vmatprep.subr.mxu0 0.0
    %v4331 = vand.u32 %v948, 4294901760
    %4332 = vmatpush1.msra.mxu0 %v4331
    %4333 = vmatprep.subr.mxu0 0.0
    %v4334 = vand.u32 %v947, 4294901760
    %4335 = vmatpush1.msra.mxu0 %v4334
    %4336 = vmatprep.subr.mxu0 0.0
    %4337 = vmatpush2.msra.mxu0 0.0
    %4338 = vmatprep.subr.mxu0 0.0
    %4339 = vmatpush2.msra.mxu0 0.0
    %4340 = vmatprep.subr.mxu0 0.0
    %4341 = vmatpush2.msra.mxu0 0.0
    %4342 = vmatprep.subr.mxu0 0.0
    %4343 = vmatpush2.msra.mxu0 0.0
    %4344 = vmatprep.subr.mxu0 0.0
    %4345 = vmatpush2.msra.mxu0 0.0
    %4346 = vmatprep.subr.mxu0 0.0
    %4347 = vmatpush2.msra.mxu0 0.0
    %4348 = vmatprep.subr.mxu0 0.0
    %4349 = vmatpush2.msra.mxu0 0.0
    %4350 = vmatprep.subr.mxu0 0.0
    %4351 = vmatpush2.msra.mxu0 0.0
    %4352 = vmatprep.subr.mxu0 0.0
    %4353 = vmatpush2.msra.mxu0 0.0
    %4354 = vmatprep.subr.mxu0 0.0
    %4355 = vmatpush2.msra.mxu0 0.0
    %4356 = vmatprep.subr.mxu0 0.0
    %4357 = vmatpush2.msra.mxu0 0.0
    %4358 = vmatprep.subr.mxu0 0.0
    %4359 = vmatpush2.msra.mxu0 0.0
    %4360 = vmatprep.subr.mxu0 0.0
    %4361 = vmatpush2.msra.mxu0 0.0
    %4362 = vmatprep.subr.mxu0 0.0
    %4363 = vmatpush2.msra.mxu0 0.0
    %4364 = vmatprep.subr.mxu0 0.0
    %4365 = vmatpush2.msra.mxu0 0.0
    %4366 = vmatprep.subr.mxu0 0.0
    %4367 = vmatpush2.msra.mxu0 0.0
    %4368 = vmatprep.mubr.f32.mxu0 0.0
    %v4369 = vand.u32 %v4048, 4294901760
    %v4370 = vsub.f32 %v4048, %v4369
    %v4371 = vand.u32 %v4370, 4294901760
    %4372 = vmatmul.mubr.f32.gmra.mxu0 %v4371
    %v4373 = vpop.f32.mrf.mxu0
    %v4374 = vadd.f32 %v4297, %v4373
    %v4375 = vpop.f32.mrf.mxu0
    %4376 = vdwg.mxu0
    %4377 = vmatprep.subr.mxu0 0.0
    %4378 = vmatpush1.msra.mxu0 0.0
    %4379 = vmatprep.subr.mxu0 0.0
    %4380 = vmatpush1.msra.mxu0 0.0
    %4381 = vmatprep.subr.mxu0 0.0
    %4382 = vmatpush1.msra.mxu0 0.0
    %4383 = vmatprep.subr.mxu0 0.0
    %4384 = vmatpush1.msra.mxu0 0.0
    %4385 = vmatprep.subr.mxu0 0.0
    %4386 = vmatpush1.msra.mxu0 0.0
    %4387 = vmatprep.subr.mxu0 0.0
    %4388 = vmatpush1.msra.mxu0 0.0
    %4389 = vmatprep.subr.mxu0 0.0
    %4390 = vmatpush1.msra.mxu0 0.0
    %4391 = vmatprep.subr.mxu0 0.0
    %4392 = vmatpush1.msra.mxu0 0.0
    %4393 = vmatprep.subr.mxu0 0.0
    %4394 = vmatpush1.msra.mxu0 0.0
    %4395 = vmatprep.subr.mxu0 0.0
    %4396 = vmatpush1.msra.mxu0 0.0
    %4397 = vmatprep.subr.mxu0 0.0
    %4398 = vmatpush1.msra.mxu0 0.0
    %4399 = vmatprep.subr.mxu0 0.0
    %4400 = vmatpush1.msra.mxu0 0.0
    %4401 = vmatprep.subr.mxu0 0.0
    %v4402 = vand.u32 %v950, 4294901760
    %v4403 = vsub.f32 %v950, %v4402
    %v4404 = vand.u32 %v4403, 4294901760
    %4405 = vmatpush1.msra.mxu0 %v4404
    %4406 = vmatprep.subr.mxu0 0.0
    %v4407 = vand.u32 %v949, 4294901760
    %v4408 = vsub.f32 %v949, %v4407
    %v4409 = vand.u32 %v4408, 4294901760
    %4410 = vmatpush1.msra.mxu0 %v4409
    %4411 = vmatprep.subr.mxu0 0.0
    %v4412 = vand.u32 %v948, 4294901760
    %v4413 = vsub.f32 %v948, %v4412
    %v4414 = vand.u32 %v4413, 4294901760
    %4415 = vmatpush1.msra.mxu0 %v4414
    %4416 = vmatprep.subr.mxu0 0.0
    %v4417 = vand.u32 %v947, 4294901760
    %v4418 = vsub.f32 %v947, %v4417
    %v4419 = vand.u32 %v4418, 4294901760
    %4420 = vmatpush1.msra.mxu0 %v4419
    %4421 = vmatprep.subr.mxu0 0.0
    %4422 = vmatpush2.msra.mxu0 0.0
    %4423 = vmatprep.subr.mxu0 0.0
    %4424 = vmatpush2.msra.mxu0 0.0
    %4425 = vmatprep.subr.mxu0 0.0
    %4426 = vmatpush2.msra.mxu0 0.0
    %4427 = vmatprep.subr.mxu0 0.0
    %4428 = vmatpush2.msra.mxu0 0.0
    %4429 = vmatprep.subr.mxu0 0.0
    %4430 = vmatpush2.msra.mxu0 0.0
    %4431 = vmatprep.subr.mxu0 0.0
    %4432 = vmatpush2.msra.mxu0 0.0
    %4433 = vmatprep.subr.mxu0 0.0
    %4434 = vmatpush2.msra.mxu0 0.0
    %4435 = vmatprep.subr.mxu0 0.0
    %4436 = vmatpush2.msra.mxu0 0.0
    %4437 = vmatprep.subr.mxu0 0.0
    %4438 = vmatpush2.msra.mxu0 0.0
    %4439 = vmatprep.subr.mxu0 0.0
    %4440 = vmatpush2.msra.mxu0 0.0
    %4441 = vmatprep.subr.mxu0 0.0
    %4442 = vmatpush2.msra.mxu0 0.0
    %4443 = vmatprep.subr.mxu0 0.0
    %4444 = vmatpush2.msra.mxu0 0.0
    %4445 = vmatprep.subr.mxu0 0.0
    %4446 = vmatpush2.msra.mxu0 0.0
    %4447 = vmatprep.subr.mxu0 0.0
    %4448 = vmatpush2.msra.mxu0 0.0
    %4449 = vmatprep.subr.mxu0 0.0
    %4450 = vmatpush2.msra.mxu0 0.0
    %4451 = vmatprep.subr.mxu0 0.0
    %4452 = vmatpush2.msra.mxu0 0.0
    %4453 = vmatprep.mubr.f32.mxu0 0.0
    %v4454 = vand.u32 %v4048, 4294901760
    %4455 = vmatmul.mubr.f32.gmra.mxu0 %v4454
    %v4456 = vpop.f32.mrf.mxu0
    %v4457 = vadd.f32 %v4374, %v4456
    %v4458 = vpop.f32.mrf.mxu0
    %4459 = vdwg.mxu0
    %4460 = vmatprep.subr.mxu0 0.0
    %4461 = vmatpush1.msra.mxu0 0.0
    %4462 = vmatprep.subr.mxu0 0.0
    %4463 = vmatpush1.msra.mxu0 0.0
    %4464 = vmatprep.subr.mxu0 0.0
    %4465 = vmatpush1.msra.mxu0 0.0
    %4466 = vmatprep.subr.mxu0 0.0
    %4467 = vmatpush1.msra.mxu0 0.0
    %4468 = vmatprep.subr.mxu0 0.0
    %4469 = vmatpush1.msra.mxu0 0.0
    %4470 = vmatprep.subr.mxu0 0.0
    %4471 = vmatpush1.msra.mxu0 0.0
    %4472 = vmatprep.subr.mxu0 0.0
    %4473 = vmatpush1.msra.mxu0 0.0
    %4474 = vmatprep.subr.mxu0 0.0
    %4475 = vmatpush1.msra.mxu0 0.0
    %4476 = vmatprep.subr.mxu0 0.0
    %4477 = vmatpush1.msra.mxu0 0.0
    %4478 = vmatprep.subr.mxu0 0.0
    %4479 = vmatpush1.msra.mxu0 0.0
    %4480 = vmatprep.subr.mxu0 0.0
    %4481 = vmatpush1.msra.mxu0 0.0
    %4482 = vmatprep.subr.mxu0 0.0
    %4483 = vmatpush1.msra.mxu0 0.0
    %4484 = vmatprep.subr.mxu0 0.0
    %v4485 = vand.u32 %v950, 4294901760
    %4486 = vmatpush1.msra.mxu0 %v4485
    %4487 = vmatprep.subr.mxu0 0.0
    %v4488 = vand.u32 %v949, 4294901760
    %4489 = vmatpush1.msra.mxu0 %v4488
    %4490 = vmatprep.subr.mxu0 0.0
    %v4491 = vand.u32 %v948, 4294901760
    %4492 = vmatpush1.msra.mxu0 %v4491
    %4493 = vmatprep.subr.mxu0 0.0
    %v4494 = vand.u32 %v947, 4294901760
    %4495 = vmatpush1.msra.mxu0 %v4494
    %4496 = vmatprep.subr.mxu0 0.0
    %4497 = vmatpush2.msra.mxu0 0.0
    %4498 = vmatprep.subr.mxu0 0.0
    %4499 = vmatpush2.msra.mxu0 0.0
    %4500 = vmatprep.subr.mxu0 0.0
    %4501 = vmatpush2.msra.mxu0 0.0
    %4502 = vmatprep.subr.mxu0 0.0
    %4503 = vmatpush2.msra.mxu0 0.0
    %4504 = vmatprep.subr.mxu0 0.0
    %4505 = vmatpush2.msra.mxu0 0.0
    %4506 = vmatprep.subr.mxu0 0.0
    %4507 = vmatpush2.msra.mxu0 0.0
    %4508 = vmatprep.subr.mxu0 0.0
    %4509 = vmatpush2.msra.mxu0 0.0
    %4510 = vmatprep.subr.mxu0 0.0
    %4511 = vmatpush2.msra.mxu0 0.0
    %4512 = vmatprep.subr.mxu0 0.0
    %4513 = vmatpush2.msra.mxu0 0.0
    %4514 = vmatprep.subr.mxu0 0.0
    %4515 = vmatpush2.msra.mxu0 0.0
    %4516 = vmatprep.subr.mxu0 0.0
    %4517 = vmatpush2.msra.mxu0 0.0
    %4518 = vmatprep.subr.mxu0 0.0
    %4519 = vmatpush2.msra.mxu0 0.0
    %4520 = vmatprep.subr.mxu0 0.0
    %4521 = vmatpush2.msra.mxu0 0.0
    %4522 = vmatprep.subr.mxu0 0.0
    %4523 = vmatpush2.msra.mxu0 0.0
    %4524 = vmatprep.subr.mxu0 0.0
    %4525 = vmatpush2.msra.mxu0 0.0
    %4526 = vmatprep.subr.mxu0 0.0
    %4527 = vmatpush2.msra.mxu0 0.0
    %4528 = vmatprep.mubr.f32.mxu0 0.0
    %v4529 = vand.u32 %v4048, 4294901760
    %4530 = vmatmul.mubr.f32.gmra.mxu0 %v4529
    %v4531 = vpop.f32.mrf.mxu0
    %v4532 = vadd.f32 %v4457, %v4531
    %v4533 = vpop.f32.mrf.mxu0
    %4534 = vdwg.mxu0
    %v4535 = vadd.f32 %v938, %v4532
    %v4536 = vxor.u32 %v4535, 2147483648
    %v4537 = vmul.f32 %v4536, 1.442695
    %v4538 = vpow.pop %v4537
    %v4539 = vadd.f32 %v4538, 1.0
    %v4540 = vrcp.pop %v4539
    %v4541 = vmul.f32 1.0, %v4540
    %v4542 = vtanh.pop %v4535
    %v4543 = vmul.f32 %v4541, %v4038
    %4545 = vrot.lane.b32.xlu0 %v4542, 64
    %v4546 = vpop.permute.xlu0 %4545
    %v4548 = vmul.f32 %v4541, %v4546
    %4550 = vrot.lane.b32.xlu0 %v4548, 32
    %v4551 = vpop.permute.xlu0 %4550
    %v4553 = vadd.f32 %v4543, %v4551
    %v4554 = vtanh.pop %v4553
    %4556 = vrot.lane.b32.xlu0 %v4554, 64
    %v4557 = vpop.permute.xlu0 %4556
    %v4559 = vmul.f32 %v4541, %v4557
    %4561 = vrot.lane.b32.xlu0 %v4559, 32
    %v4562 = vpop.permute.xlu0 %4561
    %v4563 = vsel %vm136, %v4562, 0
    %4565 = vmatprep.subr.mxu0 0.0
    %4566 = vmatpush1.msra.mxu0 0.0
    %4567 = vmatprep.subr.mxu0 0.0
    %4568 = vmatpush1.msra.mxu0 0.0
    %4569 = vmatprep.subr.mxu0 0.0
    %4570 = vmatpush1.msra.mxu0 0.0
    %4571 = vmatprep.subr.mxu0 0.0
    %4572 = vmatpush1.msra.mxu0 0.0
    %4573 = vmatprep.subr.mxu0 0.0
    %4574 = vmatpush1.msra.mxu0 0.0
    %4575 = vmatprep.subr.mxu0 0.0
    %4576 = vmatpush1.msra.mxu0 0.0
    %4577 = vmatprep.subr.mxu0 0.0
    %4578 = vmatpush1.msra.mxu0 0.0
    %4579 = vmatprep.subr.mxu0 0.0
    %4580 = vmatpush1.msra.mxu0 0.0
    %4581 = vmatprep.subr.mxu0 0.0
    %4582 = vmatpush1.msra.mxu0 0.0
    %4583 = vmatprep.subr.mxu0 0.0
    %4584 = vmatpush1.msra.mxu0 0.0
    %4585 = vmatprep.subr.mxu0 0.0
    %4586 = vmatpush1.msra.mxu0 0.0
    %4587 = vmatprep.subr.mxu0 0.0
    %4588 = vmatpush1.msra.mxu0 0.0
    %4589 = vmatprep.subr.mxu0 0.0
    %v4590 = vand.u32 %v950, 4294901760
    %4591 = vmatpush1.msra.mxu0 %v4590
    %4592 = vmatprep.subr.mxu0 0.0
    %v4593 = vand.u32 %v949, 4294901760
    %4594 = vmatpush1.msra.mxu0 %v4593
    %4595 = vmatprep.subr.mxu0 0.0
    %v4596 = vand.u32 %v948, 4294901760
    %4597 = vmatpush1.msra.mxu0 %v4596
    %4598 = vmatprep.subr.mxu0 0.0
    %v4599 = vand.u32 %v947, 4294901760
    %4600 = vmatpush1.msra.mxu0 %v4599
    %4601 = vmatprep.subr.mxu0 0.0
    %4602 = vmatpush2.msra.mxu0 0.0
    %4603 = vmatprep.subr.mxu0 0.0
    %4604 = vmatpush2.msra.mxu0 0.0
    %4605 = vmatprep.subr.mxu0 0.0
    %4606 = vmatpush2.msra.mxu0 0.0
    %4607 = vmatprep.subr.mxu0 0.0
    %4608 = vmatpush2.msra.mxu0 0.0
    %4609 = vmatprep.subr.mxu0 0.0
    %4610 = vmatpush2.msra.mxu0 0.0
    %4611 = vmatprep.subr.mxu0 0.0
    %4612 = vmatpush2.msra.mxu0 0.0
    %4613 = vmatprep.subr.mxu0 0.0
    %4614 = vmatpush2.msra.mxu0 0.0
    %4615 = vmatprep.subr.mxu0 0.0
    %4616 = vmatpush2.msra.mxu0 0.0
    %4617 = vmatprep.subr.mxu0 0.0
    %4618 = vmatpush2.msra.mxu0 0.0
    %4619 = vmatprep.subr.mxu0 0.0
    %4620 = vmatpush2.msra.mxu0 0.0
    %4621 = vmatprep.subr.mxu0 0.0
    %4622 = vmatpush2.msra.mxu0 0.0
    %4623 = vmatprep.subr.mxu0 0.0
    %4624 = vmatpush2.msra.mxu0 0.0
    %4625 = vmatprep.subr.mxu0 0.0
    %4626 = vmatpush2.msra.mxu0 0.0
    %4627 = vmatprep.subr.mxu0 0.0
    %4628 = vmatpush2.msra.mxu0 0.0
    %4629 = vmatprep.subr.mxu0 0.0
    %4630 = vmatpush2.msra.mxu0 0.0
    %4631 = vmatprep.subr.mxu0 0.0
    %4632 = vmatpush2.msra.mxu0 0.0
    %4633 = vmatprep.mubr.f32.mxu0 0.0
    %v4634 = vand.u32 %v4563, 4294901760
    %v4635 = vsub.f32 %v4563, %v4634
    %v4636 = vand.u32 %v4635, 4294901760
    %v4637 = vsub.f32 %v4635, %v4636
    %v4638 = vand.u32 %v4637, 4294901760
    %4639 = vmatmul.mubr.f32.gmra.mxu0 %v4638
    %v4640 = vpop.f32.mrf.mxu0
    %v4641 = vadd.f32 0.0, %v4640
    %v4642 = vpop.f32.mrf.mxu0
    %4643 = vdwg.mxu0
    %4644 = vmatprep.subr.mxu0 0.0
    %4645 = vmatpush1.msra.mxu0 0.0
    %4646 = vmatprep.subr.mxu0 0.0
    %4647 = vmatpush1.msra.mxu0 0.0
    %4648 = vmatprep.subr.mxu0 0.0
    %4649 = vmatpush1.msra.mxu0 0.0
    %4650 = vmatprep.subr.mxu0 0.0
    %4651 = vmatpush1.msra.mxu0 0.0
    %4652 = vmatprep.subr.mxu0 0.0
    %4653 = vmatpush1.msra.mxu0 0.0
    %4654 = vmatprep.subr.mxu0 0.0
    %4655 = vmatpush1.msra.mxu0 0.0
    %4656 = vmatprep.subr.mxu0 0.0
    %4657 = vmatpush1.msra.mxu0 0.0
    %4658 = vmatprep.subr.mxu0 0.0
    %4659 = vmatpush1.msra.mxu0 0.0
    %4660 = vmatprep.subr.mxu0 0.0
    %4661 = vmatpush1.msra.mxu0 0.0
    %4662 = vmatprep.subr.mxu0 0.0
    %4663 = vmatpush1.msra.mxu0 0.0
    %4664 = vmatprep.subr.mxu0 0.0
    %4665 = vmatpush1.msra.mxu0 0.0
    %4666 = vmatprep.subr.mxu0 0.0
    %4667 = vmatpush1.msra.mxu0 0.0
    %4668 = vmatprep.subr.mxu0 0.0
    %v4669 = vand.u32 %v950, 4294901760
    %v4670 = vsub.f32 %v950, %v4669
    %v4671 = vand.u32 %v4670, 4294901760
    %v4672 = vsub.f32 %v4670, %v4671
    %v4673 = vand.u32 %v4672, 4294901760
    %4674 = vmatpush1.msra.mxu0 %v4673
    %4675 = vmatprep.subr.mxu0 0.0
    %v4676 = vand.u32 %v949, 4294901760
    %v4677 = vsub.f32 %v949, %v4676
    %v4678 = vand.u32 %v4677, 4294901760
    %v4679 = vsub.f32 %v4677, %v4678
    %v4680 = vand.u32 %v4679, 4294901760
    %4681 = vmatpush1.msra.mxu0 %v4680
    %4682 = vmatprep.subr.mxu0 0.0
    %v4683 = vand.u32 %v948, 4294901760
    %v4684 = vsub.f32 %v948, %v4683
    %v4685 = vand.u32 %v4684, 4294901760
    %v4686 = vsub.f32 %v4684, %v4685
    %v4687 = vand.u32 %v4686, 4294901760
    %4688 = vmatpush1.msra.mxu0 %v4687
    %4689 = vmatprep.subr.mxu0 0.0
    %v4690 = vand.u32 %v947, 4294901760
    %v4691 = vsub.f32 %v947, %v4690
    %v4692 = vand.u32 %v4691, 4294901760
    %v4693 = vsub.f32 %v4691, %v4692
    %v4694 = vand.u32 %v4693, 4294901760
    %4695 = vmatpush1.msra.mxu0 %v4694
    %4696 = vmatprep.subr.mxu0 0.0
    %4697 = vmatpush2.msra.mxu0 0.0
    %4698 = vmatprep.subr.mxu0 0.0
    %4699 = vmatpush2.msra.mxu0 0.0
    %4700 = vmatprep.subr.mxu0 0.0
    %4701 = vmatpush2.msra.mxu0 0.0
    %4702 = vmatprep.subr.mxu0 0.0
    %4703 = vmatpush2.msra.mxu0 0.0
    %4704 = vmatprep.subr.mxu0 0.0
    %4705 = vmatpush2.msra.mxu0 0.0
    %4706 = vmatprep.subr.mxu0 0.0
    %4707 = vmatpush2.msra.mxu0 0.0
    %4708 = vmatprep.subr.mxu0 0.0
    %4709 = vmatpush2.msra.mxu0 0.0
    %4710 = vmatprep.subr.mxu0 0.0
    %4711 = vmatpush2.msra.mxu0 0.0
    %4712 = vmatprep.subr.mxu0 0.0
    %4713 = vmatpush2.msra.mxu0 0.0
    %4714 = vmatprep.subr.mxu0 0.0
    %4715 = vmatpush2.msra.mxu0 0.0
    %4716 = vmatprep.subr.mxu0 0.0
    %4717 = vmatpush2.msra.mxu0 0.0
    %4718 = vmatprep.subr.mxu0 0.0
    %4719 = vmatpush2.msra.mxu0 0.0
    %4720 = vmatprep.subr.mxu0 0.0
    %4721 = vmatpush2.msra.mxu0 0.0
    %4722 = vmatprep.subr.mxu0 0.0
    %4723 = vmatpush2.msra.mxu0 0.0
    %4724 = vmatprep.subr.mxu0 0.0
    %4725 = vmatpush2.msra.mxu0 0.0
    %4726 = vmatprep.subr.mxu0 0.0
    %4727 = vmatpush2.msra.mxu0 0.0
    %4728 = vmatprep.mubr.f32.mxu0 0.0
    %v4729 = vand.u32 %v4563, 4294901760
    %4730 = vmatmul.mubr.f32.gmra.mxu0 %v4729
    %v4731 = vpop.f32.mrf.mxu0
    %v4732 = vadd.f32 %v4641, %v4731
    %v4733 = vpop.f32.mrf.mxu0
    %4734 = vdwg.mxu0
    %4735 = vmatprep.subr.mxu0 0.0
    %4736 = vmatpush1.msra.mxu0 0.0
    %4737 = vmatprep.subr.mxu0 0.0
    %4738 = vmatpush1.msra.mxu0 0.0
    %4739 = vmatprep.subr.mxu0 0.0
    %4740 = vmatpush1.msra.mxu0 0.0
    %4741 = vmatprep.subr.mxu0 0.0
    %4742 = vmatpush1.msra.mxu0 0.0
    %4743 = vmatprep.subr.mxu0 0.0
    %4744 = vmatpush1.msra.mxu0 0.0
    %4745 = vmatprep.subr.mxu0 0.0
    %4746 = vmatpush1.msra.mxu0 0.0
    %4747 = vmatprep.subr.mxu0 0.0
    %4748 = vmatpush1.msra.mxu0 0.0
    %4749 = vmatprep.subr.mxu0 0.0
    %4750 = vmatpush1.msra.mxu0 0.0
    %4751 = vmatprep.subr.mxu0 0.0
    %4752 = vmatpush1.msra.mxu0 0.0
    %4753 = vmatprep.subr.mxu0 0.0
    %4754 = vmatpush1.msra.mxu0 0.0
    %4755 = vmatprep.subr.mxu0 0.0
    %4756 = vmatpush1.msra.mxu0 0.0
    %4757 = vmatprep.subr.mxu0 0.0
    %4758 = vmatpush1.msra.mxu0 0.0
    %4759 = vmatprep.subr.mxu0 0.0
    %v4760 = vand.u32 %v950, 4294901760
    %v4761 = vsub.f32 %v950, %v4760
    %4762 = vmatpush1.msra.mxu0 %v4761
    %4763 = vmatprep.subr.mxu0 0.0
    %v4764 = vand.u32 %v949, 4294901760
    %v4765 = vsub.f32 %v949, %v4764
    %4766 = vmatpush1.msra.mxu0 %v4765
    %4767 = vmatprep.subr.mxu0 0.0
    %v4768 = vand.u32 %v948, 4294901760
    %v4769 = vsub.f32 %v948, %v4768
    %4770 = vmatpush1.msra.mxu0 %v4769
    %4771 = vmatprep.subr.mxu0 0.0
    %v4772 = vand.u32 %v947, 4294901760
    %v4773 = vsub.f32 %v947, %v4772
    %4774 = vmatpush1.msra.mxu0 %v4773
    %4775 = vmatprep.subr.mxu0 0.0
    %4776 = vmatpush2.msra.mxu0 0.0
    %4777 = vmatprep.subr.mxu0 0.0
    %4778 = vmatpush2.msra.mxu0 0.0
    %4779 = vmatprep.subr.mxu0 0.0
    %4780 = vmatpush2.msra.mxu0 0.0
    %4781 = vmatprep.subr.mxu0 0.0
    %4782 = vmatpush2.msra.mxu0 0.0
    %4783 = vmatprep.subr.mxu0 0.0
    %4784 = vmatpush2.msra.mxu0 0.0
    %4785 = vmatprep.subr.mxu0 0.0
    %4786 = vmatpush2.msra.mxu0 0.0
    %4787 = vmatprep.subr.mxu0 0.0
    %4788 = vmatpush2.msra.mxu0 0.0
    %4789 = vmatprep.subr.mxu0 0.0
    %4790 = vmatpush2.msra.mxu0 0.0
    %4791 = vmatprep.subr.mxu0 0.0
    %4792 = vmatpush2.msra.mxu0 0.0
    %4793 = vmatprep.subr.mxu0 0.0
    %4794 = vmatpush2.msra.mxu0 0.0
    %4795 = vmatprep.subr.mxu0 0.0
    %4796 = vmatpush2.msra.mxu0 0.0
    %4797 = vmatprep.subr.mxu0 0.0
    %4798 = vmatpush2.msra.mxu0 0.0
    %4799 = vmatprep.subr.mxu0 0.0
    %4800 = vmatpush2.msra.mxu0 0.0
    %4801 = vmatprep.subr.mxu0 0.0
    %4802 = vmatpush2.msra.mxu0 0.0
    %4803 = vmatprep.subr.mxu0 0.0
    %4804 = vmatpush2.msra.mxu0 0.0
    %4805 = vmatprep.subr.mxu0 0.0
    %4806 = vmatpush2.msra.mxu0 0.0
    %4807 = vmatprep.mubr.f32.mxu0 0.0
    %v4808 = vand.u32 %v4563, 4294901760
    %v4809 = vsub.f32 %v4563, %v4808
    %4810 = vmatmul.mubr.f32.gmra.mxu0 %v4809
    %v4811 = vpop.f32.mrf.mxu0
    %v4812 = vadd.f32 %v4732, %v4811
    %v4813 = vpop.f32.mrf.mxu0
    %4814 = vdwg.mxu0
    %4815 = vmatprep.subr.mxu0 0.0
    %4816 = vmatpush1.msra.mxu0 0.0
    %4817 = vmatprep.subr.mxu0 0.0
    %4818 = vmatpush1.msra.mxu0 0.0
    %4819 = vmatprep.subr.mxu0 0.0
    %4820 = vmatpush1.msra.mxu0 0.0
    %4821 = vmatprep.subr.mxu0 0.0
    %4822 = vmatpush1.msra.mxu0 0.0
    %4823 = vmatprep.subr.mxu0 0.0
    %4824 = vmatpush1.msra.mxu0 0.0
    %4825 = vmatprep.subr.mxu0 0.0
    %4826 = vmatpush1.msra.mxu0 0.0
    %4827 = vmatprep.subr.mxu0 0.0
    %4828 = vmatpush1.msra.mxu0 0.0
    %4829 = vmatprep.subr.mxu0 0.0
    %4830 = vmatpush1.msra.mxu0 0.0
    %4831 = vmatprep.subr.mxu0 0.0
    %4832 = vmatpush1.msra.mxu0 0.0
    %4833 = vmatprep.subr.mxu0 0.0
    %4834 = vmatpush1.msra.mxu0 0.0
    %4835 = vmatprep.subr.mxu0 0.0
    %4836 = vmatpush1.msra.mxu0 0.0
    %4837 = vmatprep.subr.mxu0 0.0
    %4838 = vmatpush1.msra.mxu0 0.0
    %4839 = vmatprep.subr.mxu0 0.0
    %v4840 = vand.u32 %v950, 4294901760
    %4841 = vmatpush1.msra.mxu0 %v4840
    %4842 = vmatprep.subr.mxu0 0.0
    %v4843 = vand.u32 %v949, 4294901760
    %4844 = vmatpush1.msra.mxu0 %v4843
    %4845 = vmatprep.subr.mxu0 0.0
    %v4846 = vand.u32 %v948, 4294901760
    %4847 = vmatpush1.msra.mxu0 %v4846
    %4848 = vmatprep.subr.mxu0 0.0
    %v4849 = vand.u32 %v947, 4294901760
    %4850 = vmatpush1.msra.mxu0 %v4849
    %4851 = vmatprep.subr.mxu0 0.0
    %4852 = vmatpush2.msra.mxu0 0.0
    %4853 = vmatprep.subr.mxu0 0.0
    %4854 = vmatpush2.msra.mxu0 0.0
    %4855 = vmatprep.subr.mxu0 0.0
    %4856 = vmatpush2.msra.mxu0 0.0
    %4857 = vmatprep.subr.mxu0 0.0
    %4858 = vmatpush2.msra.mxu0 0.0
    %4859 = vmatprep.subr.mxu0 0.0
    %4860 = vmatpush2.msra.mxu0 0.0
    %4861 = vmatprep.subr.mxu0 0.0
    %4862 = vmatpush2.msra.mxu0 0.0
    %4863 = vmatprep.subr.mxu0 0.0
    %4864 = vmatpush2.msra.mxu0 0.0
    %4865 = vmatprep.subr.mxu0 0.0
    %4866 = vmatpush2.msra.mxu0 0.0
    %4867 = vmatprep.subr.mxu0 0.0
    %4868 = vmatpush2.msra.mxu0 0.0
    %4869 = vmatprep.subr.mxu0 0.0
    %4870 = vmatpush2.msra.mxu0 0.0
    %4871 = vmatprep.subr.mxu0 0.0
    %4872 = vmatpush2.msra.mxu0 0.0
    %4873 = vmatprep.subr.mxu0 0.0
    %4874 = vmatpush2.msra.mxu0 0.0
    %4875 = vmatprep.subr.mxu0 0.0
    %4876 = vmatpush2.msra.mxu0 0.0
    %4877 = vmatprep.subr.mxu0 0.0
    %4878 = vmatpush2.msra.mxu0 0.0
    %4879 = vmatprep.subr.mxu0 0.0
    %4880 = vmatpush2.msra.mxu0 0.0
    %4881 = vmatprep.subr.mxu0 0.0
    %4882 = vmatpush2.msra.mxu0 0.0
    %4883 = vmatprep.mubr.f32.mxu0 0.0
    %v4884 = vand.u32 %v4563, 4294901760
    %v4885 = vsub.f32 %v4563, %v4884
    %v4886 = vand.u32 %v4885, 4294901760
    %4887 = vmatmul.mubr.f32.gmra.mxu0 %v4886
    %v4888 = vpop.f32.mrf.mxu0
    %v4889 = vadd.f32 %v4812, %v4888
    %v4890 = vpop.f32.mrf.mxu0
    %4891 = vdwg.mxu0
    %4892 = vmatprep.subr.mxu0 0.0
    %4893 = vmatpush1.msra.mxu0 0.0
    %4894 = vmatprep.subr.mxu0 0.0
    %4895 = vmatpush1.msra.mxu0 0.0
    %4896 = vmatprep.subr.mxu0 0.0
    %4897 = vmatpush1.msra.mxu0 0.0
    %4898 = vmatprep.subr.mxu0 0.0
    %4899 = vmatpush1.msra.mxu0 0.0
    %4900 = vmatprep.subr.mxu0 0.0
    %4901 = vmatpush1.msra.mxu0 0.0
    %4902 = vmatprep.subr.mxu0 0.0
    %4903 = vmatpush1.msra.mxu0 0.0
    %4904 = vmatprep.subr.mxu0 0.0
    %4905 = vmatpush1.msra.mxu0 0.0
    %4906 = vmatprep.subr.mxu0 0.0
    %4907 = vmatpush1.msra.mxu0 0.0
    %4908 = vmatprep.subr.mxu0 0.0
    %4909 = vmatpush1.msra.mxu0 0.0
    %4910 = vmatprep.subr.mxu0 0.0
    %4911 = vmatpush1.msra.mxu0 0.0
    %4912 = vmatprep.subr.mxu0 0.0
    %4913 = vmatpush1.msra.mxu0 0.0
    %4914 = vmatprep.subr.mxu0 0.0
    %4915 = vmatpush1.msra.mxu0 0.0
    %4916 = vmatprep.subr.mxu0 0.0
    %v4917 = vand.u32 %v950, 4294901760
    %v4918 = vsub.f32 %v950, %v4917
    %v4919 = vand.u32 %v4918, 4294901760
    %4920 = vmatpush1.msra.mxu0 %v4919
    %4921 = vmatprep.subr.mxu0 0.0
    %v4922 = vand.u32 %v949, 4294901760
    %v4923 = vsub.f32 %v949, %v4922
    %v4924 = vand.u32 %v4923, 4294901760
    %4925 = vmatpush1.msra.mxu0 %v4924
    %4926 = vmatprep.subr.mxu0 0.0
    %v4927 = vand.u32 %v948, 4294901760
    %v4928 = vsub.f32 %v948, %v4927
    %v4929 = vand.u32 %v4928, 4294901760
    %4930 = vmatpush1.msra.mxu0 %v4929
    %4931 = vmatprep.subr.mxu0 0.0
    %v4932 = vand.u32 %v947, 4294901760
    %v4933 = vsub.f32 %v947, %v4932
    %v4934 = vand.u32 %v4933, 4294901760
    %4935 = vmatpush1.msra.mxu0 %v4934
    %4936 = vmatprep.subr.mxu0 0.0
    %4937 = vmatpush2.msra.mxu0 0.0
    %4938 = vmatprep.subr.mxu0 0.0
    %4939 = vmatpush2.msra.mxu0 0.0
    %4940 = vmatprep.subr.mxu0 0.0
    %4941 = vmatpush2.msra.mxu0 0.0
    %4942 = vmatprep.subr.mxu0 0.0
    %4943 = vmatpush2.msra.mxu0 0.0
    %4944 = vmatprep.subr.mxu0 0.0
    %4945 = vmatpush2.msra.mxu0 0.0
    %4946 = vmatprep.subr.mxu0 0.0
    %4947 = vmatpush2.msra.mxu0 0.0
    %4948 = vmatprep.subr.mxu0 0.0
    %4949 = vmatpush2.msra.mxu0 0.0
    %4950 = vmatprep.subr.mxu0 0.0
    %4951 = vmatpush2.msra.mxu0 0.0
    %4952 = vmatprep.subr.mxu0 0.0
    %4953 = vmatpush2.msra.mxu0 0.0
    %4954 = vmatprep.subr.mxu0 0.0
    %4955 = vmatpush2.msra.mxu0 0.0
    %4956 = vmatprep.subr.mxu0 0.0
    %4957 = vmatpush2.msra.mxu0 0.0
    %4958 = vmatprep.subr.mxu0 0.0
    %4959 = vmatpush2.msra.mxu0 0.0
    %4960 = vmatprep.subr.mxu0 0.0
    %4961 = vmatpush2.msra.mxu0 0.0
    %4962 = vmatprep.subr.mxu0 0.0
    %4963 = vmatpush2.msra.mxu0 0.0
    %4964 = vmatprep.subr.mxu0 0.0
    %4965 = vmatpush2.msra.mxu0 0.0
    %4966 = vmatprep.subr.mxu0 0.0
    %4967 = vmatpush2.msra.mxu0 0.0
    %4968 = vmatprep.mubr.f32.mxu0 0.0
    %v4969 = vand.u32 %v4563, 4294901760
    %4970 = vmatmul.mubr.f32.gmra.mxu0 %v4969
    %v4971 = vpop.f32.mrf.mxu0
    %v4972 = vadd.f32 %v4889, %v4971
    %v4973 = vpop.f32.mrf.mxu0
    %4974 = vdwg.mxu0
    %4975 = vmatprep.subr.mxu0 0.0
    %4976 = vmatpush1.msra.mxu0 0.0
    %4977 = vmatprep.subr.mxu0 0.0
    %4978 = vmatpush1.msra.mxu0 0.0
    %4979 = vmatprep.subr.mxu0 0.0
    %4980 = vmatpush1.msra.mxu0 0.0
    %4981 = vmatprep.subr.mxu0 0.0
    %4982 = vmatpush1.msra.mxu0 0.0
    %4983 = vmatprep.subr.mxu0 0.0
    %4984 = vmatpush1.msra.mxu0 0.0
    %4985 = vmatprep.subr.mxu0 0.0
    %4986 = vmatpush1.msra.mxu0 0.0
    %4987 = vmatprep.subr.mxu0 0.0
    %4988 = vmatpush1.msra.mxu0 0.0
    %4989 = vmatprep.subr.mxu0 0.0
    %4990 = vmatpush1.msra.mxu0 0.0
    %4991 = vmatprep.subr.mxu0 0.0
    %4992 = vmatpush1.msra.mxu0 0.0
    %4993 = vmatprep.subr.mxu0 0.0
    %4994 = vmatpush1.msra.mxu0 0.0
    %4995 = vmatprep.subr.mxu0 0.0
    %4996 = vmatpush1.msra.mxu0 0.0
    %4997 = vmatprep.subr.mxu0 0.0
    %4998 = vmatpush1.msra.mxu0 0.0
    %4999 = vmatprep.subr.mxu0 0.0
    %v5000 = vand.u32 %v950, 4294901760
    %5001 = vmatpush1.msra.mxu0 %v5000
    %5002 = vmatprep.subr.mxu0 0.0
    %v5003 = vand.u32 %v949, 4294901760
    %5004 = vmatpush1.msra.mxu0 %v5003
    %5005 = vmatprep.subr.mxu0 0.0
    %v5006 = vand.u32 %v948, 4294901760
    %5007 = vmatpush1.msra.mxu0 %v5006
    %5008 = vmatprep.subr.mxu0 0.0
    %v5009 = vand.u32 %v947, 4294901760
    %5010 = vmatpush1.msra.mxu0 %v5009
    %5011 = vmatprep.subr.mxu0 0.0
    %5012 = vmatpush2.msra.mxu0 0.0
    %5013 = vmatprep.subr.mxu0 0.0
    %5014 = vmatpush2.msra.mxu0 0.0
    %5015 = vmatprep.subr.mxu0 0.0
    %5016 = vmatpush2.msra.mxu0 0.0
    %5017 = vmatprep.subr.mxu0 0.0
    %5018 = vmatpush2.msra.mxu0 0.0
    %5019 = vmatprep.subr.mxu0 0.0
    %5020 = vmatpush2.msra.mxu0 0.0
    %5021 = vmatprep.subr.mxu0 0.0
    %5022 = vmatpush2.msra.mxu0 0.0
    %5023 = vmatprep.subr.mxu0 0.0
    %5024 = vmatpush2.msra.mxu0 0.0
    %5025 = vmatprep.subr.mxu0 0.0
    %5026 = vmatpush2.msra.mxu0 0.0
    %5027 = vmatprep.subr.mxu0 0.0
    %5028 = vmatpush2.msra.mxu0 0.0
    %5029 = vmatprep.subr.mxu0 0.0
    %5030 = vmatpush2.msra.mxu0 0.0
    %5031 = vmatprep.subr.mxu0 0.0
    %5032 = vmatpush2.msra.mxu0 0.0
    %5033 = vmatprep.subr.mxu0 0.0
    %5034 = vmatpush2.msra.mxu0 0.0
    %5035 = vmatprep.subr.mxu0 0.0
    %5036 = vmatpush2.msra.mxu0 0.0
    %5037 = vmatprep.subr.mxu0 0.0
    %5038 = vmatpush2.msra.mxu0 0.0
    %5039 = vmatprep.subr.mxu0 0.0
    %5040 = vmatpush2.msra.mxu0 0.0
    %5041 = vmatprep.subr.mxu0 0.0
    %5042 = vmatpush2.msra.mxu0 0.0
    %5043 = vmatprep.mubr.f32.mxu0 0.0
    %v5044 = vand.u32 %v4563, 4294901760
    %5045 = vmatmul.mubr.f32.gmra.mxu0 %v5044
    %v5046 = vpop.f32.mrf.mxu0
    %v5047 = vadd.f32 %v4972, %v5046
    %v5048 = vpop.f32.mrf.mxu0
    %5049 = vdwg.mxu0
    %v5050 = vadd.f32 %v944, %v5047
    %v5051 = vxor.u32 %v5050, 2147483648
    %v5052 = vmul.f32 %v5051, 1.442695
    %v5053 = vpow.pop %v5052
    %v5054 = vadd.f32 %v5053, 1.0
    %v5055 = vrcp.pop %v5054
    %v5056 = vmul.f32 1.0, %v5055
    %v5057 = vtanh.pop %v5050
    %v5058 = vmul.f32 %v5056, %v4553
    %5060 = vrot.lane.b32.xlu0 %v5057, 64
    %v5061 = vpop.permute.xlu0 %5060
    %v5063 = vmul.f32 %v5056, %v5061
    %5065 = vrot.lane.b32.xlu0 %v5063, 32
    %v5066 = vpop.permute.xlu0 %5065
    %v5068 = vadd.f32 %v5058, %v5066
    %v5069 = vtanh.pop %v5068
    %5071 = vrot.lane.b32.xlu0 %v5069, 64
    %v5072 = vpop.permute.xlu0 %5071
    %v5074 = vmul.f32 %v5056, %v5072
    %5076 = vrot.lane.b32.xlu0 %v5074, 32
    %v5077 = vpop.permute.xlu0 %5076
    %5079 = vst.msk [vmem:[#allocation2] sm:$0xff] %vm136, %v5077
    %5081 = vrot.lane.b32.xlu0 %v5068, 96
    %v5082 = vpop.permute.xlu0 %5081
    %5084 = vst.msk [vmem:[#allocation3] sm:$0xff] %vm136, %v5082
    // Predicated region
    $region34: #{tpu_custom_call.1} parent=1 // pred_check
      %p5085 = pneg %p60
    $region35: #{tpu_custom_call.1} parent=1 // pred_check_branch
      %5087 = sbr.rel (%p5085) target = $region37
    $region36: #{tpu_custom_call.1} parent=1 // pred_region
      %v5088 = vld [vmem:[#allocation4] sm:$0xff]
      %v5089 = vld [vmem:[#allocation4 + $0x8] sm:$0xff]
      %v5090 = vld [vmem:[#allocation4 + $0x10] sm:$0xff]
      %v5091 = vld [vmem:[#allocation4 + $0x18] sm:$0xff]
      %v5092 = vld [vmem:[%s5] sm:$0x1]
      %v5094 = vlaneseq
      %v5095 = vshrl.u32 %v5094, 7
      %v5096 = vsub.s32 0, %v5095
      %v5097 = vrot.slane %v5092, %v5096
      %v5099 = vsel %vm136, %v5077, 0
      %5101 = vmatprep.subr.mxu0 0.0
      %5102 = vmatpush1.msra.mxu0 0.0
      %5103 = vmatprep.subr.mxu0 0.0
      %5104 = vmatpush1.msra.mxu0 0.0
      %5105 = vmatprep.subr.mxu0 0.0
      %5106 = vmatpush1.msra.mxu0 0.0
      %5107 = vmatprep.subr.mxu0 0.0
      %5108 = vmatpush1.msra.mxu0 0.0
      %5109 = vmatprep.subr.mxu0 0.0
      %5110 = vmatpush1.msra.mxu0 0.0
      %5111 = vmatprep.subr.mxu0 0.0
      %5112 = vmatpush1.msra.mxu0 0.0
      %5113 = vmatprep.subr.mxu0 0.0
      %5114 = vmatpush1.msra.mxu0 0.0
      %5115 = vmatprep.subr.mxu0 0.0
      %5116 = vmatpush1.msra.mxu0 0.0
      %5117 = vmatprep.subr.mxu0 0.0
      %5118 = vmatpush1.msra.mxu0 0.0
      %5119 = vmatprep.subr.mxu0 0.0
      %5120 = vmatpush1.msra.mxu0 0.0
      %5121 = vmatprep.subr.mxu0 0.0
      %5122 = vmatpush1.msra.mxu0 0.0
      %5123 = vmatprep.subr.mxu0 0.0
      %5124 = vmatpush1.msra.mxu0 0.0
      %5125 = vmatprep.subr.mxu0 0.0
      %v5126 = vand.u32 %v5091, 4294901760
      %5127 = vmatpush1.msra.mxu0 %v5126
      %5128 = vmatprep.subr.mxu0 0.0
      %v5129 = vand.u32 %v5090, 4294901760
      %5130 = vmatpush1.msra.mxu0 %v5129
      %5131 = vmatprep.subr.mxu0 0.0
      %v5132 = vand.u32 %v5089, 4294901760
      %5133 = vmatpush1.msra.mxu0 %v5132
      %5134 = vmatprep.subr.mxu0 0.0
      %v5135 = vand.u32 %v5088, 4294901760
      %5136 = vmatpush1.msra.mxu0 %v5135
      %5137 = vmatprep.subr.mxu0 0.0
      %5138 = vmatpush2.msra.mxu0 0.0
      %5139 = vmatprep.subr.mxu0 0.0
      %5140 = vmatpush2.msra.mxu0 0.0
      %5141 = vmatprep.subr.mxu0 0.0
      %5142 = vmatpush2.msra.mxu0 0.0
      %5143 = vmatprep.subr.mxu0 0.0
      %5144 = vmatpush2.msra.mxu0 0.0
      %5145 = vmatprep.subr.mxu0 0.0
      %5146 = vmatpush2.msra.mxu0 0.0
      %5147 = vmatprep.subr.mxu0 0.0
      %5148 = vmatpush2.msra.mxu0 0.0
      %5149 = vmatprep.subr.mxu0 0.0
      %5150 = vmatpush2.msra.mxu0 0.0
      %5151 = vmatprep.subr.mxu0 0.0
      %5152 = vmatpush2.msra.mxu0 0.0
      %5153 = vmatprep.subr.mxu0 0.0
      %5154 = vmatpush2.msra.mxu0 0.0
      %5155 = vmatprep.subr.mxu0 0.0
      %5156 = vmatpush2.msra.mxu0 0.0
      %5157 = vmatprep.subr.mxu0 0.0
      %5158 = vmatpush2.msra.mxu0 0.0
      %5159 = vmatprep.subr.mxu0 0.0
      %5160 = vmatpush2.msra.mxu0 0.0
      %5161 = vmatprep.subr.mxu0 0.0
      %5162 = vmatpush2.msra.mxu0 0.0
      %5163 = vmatprep.subr.mxu0 0.0
      %5164 = vmatpush2.msra.mxu0 0.0
      %5165 = vmatprep.subr.mxu0 0.0
      %5166 = vmatpush2.msra.mxu0 0.0
      %5167 = vmatprep.subr.mxu0 0.0
      %5168 = vmatpush2.msra.mxu0 0.0
      %5169 = vmatprep.mubr.f32.mxu0 0.0
      %v5170 = vand.u32 %v5099, 4294901760
      %v5171 = vsub.f32 %v5099, %v5170
      %v5172 = vand.u32 %v5171, 4294901760
      %v5173 = vsub.f32 %v5171, %v5172
      %v5174 = vand.u32 %v5173, 4294901760
      %5175 = vmatmul.mubr.f32.gmra.mxu0 %v5174
      %v5176 = vpop.f32.mrf.mxu0
      %v5177 = vadd.f32 %v5097, %v5176
      %v5178 = vpop.f32.mrf.mxu0
      %5179 = vdwg.mxu0
      %5180 = vmatprep.subr.mxu0 0.0
      %5181 = vmatpush1.msra.mxu0 0.0
      %5182 = vmatprep.subr.mxu0 0.0
      %5183 = vmatpush1.msra.mxu0 0.0
      %5184 = vmatprep.subr.mxu0 0.0
      %5185 = vmatpush1.msra.mxu0 0.0
      %5186 = vmatprep.subr.mxu0 0.0
      %5187 = vmatpush1.msra.mxu0 0.0
      %5188 = vmatprep.subr.mxu0 0.0
      %5189 = vmatpush1.msra.mxu0 0.0
      %5190 = vmatprep.subr.mxu0 0.0
      %5191 = vmatpush1.msra.mxu0 0.0
      %5192 = vmatprep.subr.mxu0 0.0
      %5193 = vmatpush1.msra.mxu0 0.0
      %5194 = vmatprep.subr.mxu0 0.0
      %5195 = vmatpush1.msra.mxu0 0.0
      %5196 = vmatprep.subr.mxu0 0.0
      %5197 = vmatpush1.msra.mxu0 0.0
      %5198 = vmatprep.subr.mxu0 0.0
      %5199 = vmatpush1.msra.mxu0 0.0
      %5200 = vmatprep.subr.mxu0 0.0
      %5201 = vmatpush1.msra.mxu0 0.0
      %5202 = vmatprep.subr.mxu0 0.0
      %5203 = vmatpush1.msra.mxu0 0.0
      %5204 = vmatprep.subr.mxu0 0.0
      %v5205 = vand.u32 %v5091, 4294901760
      %v5206 = vsub.f32 %v5091, %v5205
      %v5207 = vand.u32 %v5206, 4294901760
      %v5208 = vsub.f32 %v5206, %v5207
      %v5209 = vand.u32 %v5208, 4294901760
      %5210 = vmatpush1.msra.mxu0 %v5209
      %5211 = vmatprep.subr.mxu0 0.0
      %v5212 = vand.u32 %v5090, 4294901760
      %v5213 = vsub.f32 %v5090, %v5212
      %v5214 = vand.u32 %v5213, 4294901760
      %v5215 = vsub.f32 %v5213, %v5214
      %v5216 = vand.u32 %v5215, 4294901760
      %5217 = vmatpush1.msra.mxu0 %v5216
      %5218 = vmatprep.subr.mxu0 0.0
      %v5219 = vand.u32 %v5089, 4294901760
      %v5220 = vsub.f32 %v5089, %v5219
      %v5221 = vand.u32 %v5220, 4294901760
      %v5222 = vsub.f32 %v5220, %v5221
      %v5223 = vand.u32 %v5222, 4294901760
      %5224 = vmatpush1.msra.mxu0 %v5223
      %5225 = vmatprep.subr.mxu0 0.0
      %v5226 = vand.u32 %v5088, 4294901760
      %v5227 = vsub.f32 %v5088, %v5226
      %v5228 = vand.u32 %v5227, 4294901760
      %v5229 = vsub.f32 %v5227, %v5228
      %v5230 = vand.u32 %v5229, 4294901760
      %5231 = vmatpush1.msra.mxu0 %v5230
      %5232 = vmatprep.subr.mxu0 0.0
      %5233 = vmatpush2.msra.mxu0 0.0
      %5234 = vmatprep.subr.mxu0 0.0
      %5235 = vmatpush2.msra.mxu0 0.0
      %5236 = vmatprep.subr.mxu0 0.0
      %5237 = vmatpush2.msra.mxu0 0.0
      %5238 = vmatprep.subr.mxu0 0.0
      %5239 = vmatpush2.msra.mxu0 0.0
      %5240 = vmatprep.subr.mxu0 0.0
      %5241 = vmatpush2.msra.mxu0 0.0
      %5242 = vmatprep.subr.mxu0 0.0
      %5243 = vmatpush2.msra.mxu0 0.0
      %5244 = vmatprep.subr.mxu0 0.0
      %5245 = vmatpush2.msra.mxu0 0.0
      %5246 = vmatprep.subr.mxu0 0.0
      %5247 = vmatpush2.msra.mxu0 0.0
      %5248 = vmatprep.subr.mxu0 0.0
      %5249 = vmatpush2.msra.mxu0 0.0
      %5250 = vmatprep.subr.mxu0 0.0
      %5251 = vmatpush2.msra.mxu0 0.0
      %5252 = vmatprep.subr.mxu0 0.0
      %5253 = vmatpush2.msra.mxu0 0.0
      %5254 = vmatprep.subr.mxu0 0.0
      %5255 = vmatpush2.msra.mxu0 0.0
      %5256 = vmatprep.subr.mxu0 0.0
      %5257 = vmatpush2.msra.mxu0 0.0
      %5258 = vmatprep.subr.mxu0 0.0
      %5259 = vmatpush2.msra.mxu0 0.0
      %5260 = vmatprep.subr.mxu0 0.0
      %5261 = vmatpush2.msra.mxu0 0.0
      %5262 = vmatprep.subr.mxu0 0.0
      %5263 = vmatpush2.msra.mxu0 0.0
      %5264 = vmatprep.mubr.f32.mxu0 0.0
      %v5265 = vand.u32 %v5099, 4294901760
      %5266 = vmatmul.mubr.f32.gmra.mxu0 %v5265
      %v5267 = vpop.f32.mrf.mxu0
      %v5268 = vadd.f32 %v5177, %v5267
      %v5269 = vpop.f32.mrf.mxu0
      %5270 = vdwg.mxu0
      %5271 = vmatprep.subr.mxu0 0.0
      %5272 = vmatpush1.msra.mxu0 0.0
      %5273 = vmatprep.subr.mxu0 0.0
      %5274 = vmatpush1.msra.mxu0 0.0
      %5275 = vmatprep.subr.mxu0 0.0
      %5276 = vmatpush1.msra.mxu0 0.0
      %5277 = vmatprep.subr.mxu0 0.0
      %5278 = vmatpush1.msra.mxu0 0.0
      %5279 = vmatprep.subr.mxu0 0.0
      %5280 = vmatpush1.msra.mxu0 0.0
      %5281 = vmatprep.subr.mxu0 0.0
      %5282 = vmatpush1.msra.mxu0 0.0
      %5283 = vmatprep.subr.mxu0 0.0
      %5284 = vmatpush1.msra.mxu0 0.0
      %5285 = vmatprep.subr.mxu0 0.0
      %5286 = vmatpush1.msra.mxu0 0.0
      %5287 = vmatprep.subr.mxu0 0.0
      %5288 = vmatpush1.msra.mxu0 0.0
      %5289 = vmatprep.subr.mxu0 0.0
      %5290 = vmatpush1.msra.mxu0 0.0
      %5291 = vmatprep.subr.mxu0 0.0
      %5292 = vmatpush1.msra.mxu0 0.0
      %5293 = vmatprep.subr.mxu0 0.0
      %5294 = vmatpush1.msra.mxu0 0.0
      %5295 = vmatprep.subr.mxu0 0.0
      %v5296 = vand.u32 %v5091, 4294901760
      %v5297 = vsub.f32 %v5091, %v5296
      %5298 = vmatpush1.msra.mxu0 %v5297
      %5299 = vmatprep.subr.mxu0 0.0
      %v5300 = vand.u32 %v5090, 4294901760
      %v5301 = vsub.f32 %v5090, %v5300
      %5302 = vmatpush1.msra.mxu0 %v5301
      %5303 = vmatprep.subr.mxu0 0.0
      %v5304 = vand.u32 %v5089, 4294901760
      %v5305 = vsub.f32 %v5089, %v5304
      %5306 = vmatpush1.msra.mxu0 %v5305
      %5307 = vmatprep.subr.mxu0 0.0
      %v5308 = vand.u32 %v5088, 4294901760
      %v5309 = vsub.f32 %v5088, %v5308
      %5310 = vmatpush1.msra.mxu0 %v5309
      %5311 = vmatprep.subr.mxu0 0.0
      %5312 = vmatpush2.msra.mxu0 0.0
      %5313 = vmatprep.subr.mxu0 0.0
      %5314 = vmatpush2.msra.mxu0 0.0
      %5315 = vmatprep.subr.mxu0 0.0
      %5316 = vmatpush2.msra.mxu0 0.0
      %5317 = vmatprep.subr.mxu0 0.0
      %5318 = vmatpush2.msra.mxu0 0.0
      %5319 = vmatprep.subr.mxu0 0.0
      %5320 = vmatpush2.msra.mxu0 0.0
      %5321 = vmatprep.subr.mxu0 0.0
      %5322 = vmatpush2.msra.mxu0 0.0
      %5323 = vmatprep.subr.mxu0 0.0
      %5324 = vmatpush2.msra.mxu0 0.0
      %5325 = vmatprep.subr.mxu0 0.0
      %5326 = vmatpush2.msra.mxu0 0.0
      %5327 = vmatprep.subr.mxu0 0.0
      %5328 = vmatpush2.msra.mxu0 0.0
      %5329 = vmatprep.subr.mxu0 0.0
      %5330 = vmatpush2.msra.mxu0 0.0
      %5331 = vmatprep.subr.mxu0 0.0
      %5332 = vmatpush2.msra.mxu0 0.0
      %5333 = vmatprep.subr.mxu0 0.0
      %5334 = vmatpush2.msra.mxu0 0.0
      %5335 = vmatprep.subr.mxu0 0.0
      %5336 = vmatpush2.msra.mxu0 0.0
      %5337 = vmatprep.subr.mxu0 0.0
      %5338 = vmatpush2.msra.mxu0 0.0
      %5339 = vmatprep.subr.mxu0 0.0
      %5340 = vmatpush2.msra.mxu0 0.0
      %5341 = vmatprep.subr.mxu0 0.0
      %5342 = vmatpush2.msra.mxu0 0.0
      %5343 = vmatprep.mubr.f32.mxu0 0.0
      %v5344 = vand.u32 %v5099, 4294901760
      %v5345 = vsub.f32 %v5099, %v5344
      %5346 = vmatmul.mubr.f32.gmra.mxu0 %v5345
      %v5347 = vpop.f32.mrf.mxu0
      %v5348 = vadd.f32 %v5268, %v5347
      %v5349 = vpop.f32.mrf.mxu0
      %5350 = vdwg.mxu0
      %5351 = vmatprep.subr.mxu0 0.0
      %5352 = vmatpush1.msra.mxu0 0.0
      %5353 = vmatprep.subr.mxu0 0.0
      %5354 = vmatpush1.msra.mxu0 0.0
      %5355 = vmatprep.subr.mxu0 0.0
      %5356 = vmatpush1.msra.mxu0 0.0
      %5357 = vmatprep.subr.mxu0 0.0
      %5358 = vmatpush1.msra.mxu0 0.0
      %5359 = vmatprep.subr.mxu0 0.0
      %5360 = vmatpush1.msra.mxu0 0.0
      %5361 = vmatprep.subr.mxu0 0.0
      %5362 = vmatpush1.msra.mxu0 0.0
      %5363 = vmatprep.subr.mxu0 0.0
      %5364 = vmatpush1.msra.mxu0 0.0
      %5365 = vmatprep.subr.mxu0 0.0
      %5366 = vmatpush1.msra.mxu0 0.0
      %5367 = vmatprep.subr.mxu0 0.0
      %5368 = vmatpush1.msra.mxu0 0.0
      %5369 = vmatprep.subr.mxu0 0.0
      %5370 = vmatpush1.msra.mxu0 0.0
      %5371 = vmatprep.subr.mxu0 0.0
      %5372 = vmatpush1.msra.mxu0 0.0
      %5373 = vmatprep.subr.mxu0 0.0
      %5374 = vmatpush1.msra.mxu0 0.0
      %5375 = vmatprep.subr.mxu0 0.0
      %v5376 = vand.u32 %v5091, 4294901760
      %5377 = vmatpush1.msra.mxu0 %v5376
      %5378 = vmatprep.subr.mxu0 0.0
      %v5379 = vand.u32 %v5090, 4294901760
      %5380 = vmatpush1.msra.mxu0 %v5379
      %5381 = vmatprep.subr.mxu0 0.0
      %v5382 = vand.u32 %v5089, 4294901760
      %5383 = vmatpush1.msra.mxu0 %v5382
      %5384 = vmatprep.subr.mxu0 0.0
      %v5385 = vand.u32 %v5088, 4294901760
      %5386 = vmatpush1.msra.mxu0 %v5385
      %5387 = vmatprep.subr.mxu0 0.0
      %5388 = vmatpush2.msra.mxu0 0.0
      %5389 = vmatprep.subr.mxu0 0.0
      %5390 = vmatpush2.msra.mxu0 0.0
      %5391 = vmatprep.subr.mxu0 0.0
      %5392 = vmatpush2.msra.mxu0 0.0
      %5393 = vmatprep.subr.mxu0 0.0
      %5394 = vmatpush2.msra.mxu0 0.0
      %5395 = vmatprep.subr.mxu0 0.0
      %5396 = vmatpush2.msra.mxu0 0.0
      %5397 = vmatprep.subr.mxu0 0.0
      %5398 = vmatpush2.msra.mxu0 0.0
      %5399 = vmatprep.subr.mxu0 0.0
      %5400 = vmatpush2.msra.mxu0 0.0
      %5401 = vmatprep.subr.mxu0 0.0
      %5402 = vmatpush2.msra.mxu0 0.0
      %5403 = vmatprep.subr.mxu0 0.0
      %5404 = vmatpush2.msra.mxu0 0.0
      %5405 = vmatprep.subr.mxu0 0.0
      %5406 = vmatpush2.msra.mxu0 0.0
      %5407 = vmatprep.subr.mxu0 0.0
      %5408 = vmatpush2.msra.mxu0 0.0
      %5409 = vmatprep.subr.mxu0 0.0
      %5410 = vmatpush2.msra.mxu0 0.0
      %5411 = vmatprep.subr.mxu0 0.0
      %5412 = vmatpush2.msra.mxu0 0.0
      %5413 = vmatprep.subr.mxu0 0.0
      %5414 = vmatpush2.msra.mxu0 0.0
      %5415 = vmatprep.subr.mxu0 0.0
      %5416 = vmatpush2.msra.mxu0 0.0
      %5417 = vmatprep.subr.mxu0 0.0
      %5418 = vmatpush2.msra.mxu0 0.0
      %5419 = vmatprep.mubr.f32.mxu0 0.0
      %v5420 = vand.u32 %v5099, 4294901760
      %v5421 = vsub.f32 %v5099, %v5420
      %v5422 = vand.u32 %v5421, 4294901760
      %5423 = vmatmul.mubr.f32.gmra.mxu0 %v5422
      %v5424 = vpop.f32.mrf.mxu0
      %v5425 = vadd.f32 %v5348, %v5424
      %v5426 = vpop.f32.mrf.mxu0
      %5427 = vdwg.mxu0
      %5428 = vmatprep.subr.mxu0 0.0
      %5429 = vmatpush1.msra.mxu0 0.0
      %5430 = vmatprep.subr.mxu0 0.0
      %5431 = vmatpush1.msra.mxu0 0.0
      %5432 = vmatprep.subr.mxu0 0.0
      %5433 = vmatpush1.msra.mxu0 0.0
      %5434 = vmatprep.subr.mxu0 0.0
      %5435 = vmatpush1.msra.mxu0 0.0
      %5436 = vmatprep.subr.mxu0 0.0
      %5437 = vmatpush1.msra.mxu0 0.0
      %5438 = vmatprep.subr.mxu0 0.0
      %5439 = vmatpush1.msra.mxu0 0.0
      %5440 = vmatprep.subr.mxu0 0.0
      %5441 = vmatpush1.msra.mxu0 0.0
      %5442 = vmatprep.subr.mxu0 0.0
      %5443 = vmatpush1.msra.mxu0 0.0
      %5444 = vmatprep.subr.mxu0 0.0
      %5445 = vmatpush1.msra.mxu0 0.0
      %5446 = vmatprep.subr.mxu0 0.0
      %5447 = vmatpush1.msra.mxu0 0.0
      %5448 = vmatprep.subr.mxu0 0.0
      %5449 = vmatpush1.msra.mxu0 0.0
      %5450 = vmatprep.subr.mxu0 0.0
      %5451 = vmatpush1.msra.mxu0 0.0
      %5452 = vmatprep.subr.mxu0 0.0
      %v5453 = vand.u32 %v5091, 4294901760
      %v5454 = vsub.f32 %v5091, %v5453
      %v5455 = vand.u32 %v5454, 4294901760
      %5456 = vmatpush1.msra.mxu0 %v5455
      %5457 = vmatprep.subr.mxu0 0.0
      %v5458 = vand.u32 %v5090, 4294901760
      %v5459 = vsub.f32 %v5090, %v5458
      %v5460 = vand.u32 %v5459, 4294901760
      %5461 = vmatpush1.msra.mxu0 %v5460
      %5462 = vmatprep.subr.mxu0 0.0
      %v5463 = vand.u32 %v5089, 4294901760
      %v5464 = vsub.f32 %v5089, %v5463
      %v5465 = vand.u32 %v5464, 4294901760
      %5466 = vmatpush1.msra.mxu0 %v5465
      %5467 = vmatprep.subr.mxu0 0.0
      %v5468 = vand.u32 %v5088, 4294901760
      %v5469 = vsub.f32 %v5088, %v5468
      %v5470 = vand.u32 %v5469, 4294901760
      %5471 = vmatpush1.msra.mxu0 %v5470
      %5472 = vmatprep.subr.mxu0 0.0
      %5473 = vmatpush2.msra.mxu0 0.0
      %5474 = vmatprep.subr.mxu0 0.0
      %5475 = vmatpush2.msra.mxu0 0.0
      %5476 = vmatprep.subr.mxu0 0.0
      %5477 = vmatpush2.msra.mxu0 0.0
      %5478 = vmatprep.subr.mxu0 0.0
      %5479 = vmatpush2.msra.mxu0 0.0
      %5480 = vmatprep.subr.mxu0 0.0
      %5481 = vmatpush2.msra.mxu0 0.0
      %5482 = vmatprep.subr.mxu0 0.0
      %5483 = vmatpush2.msra.mxu0 0.0
      %5484 = vmatprep.subr.mxu0 0.0
      %5485 = vmatpush2.msra.mxu0 0.0
      %5486 = vmatprep.subr.mxu0 0.0
      %5487 = vmatpush2.msra.mxu0 0.0
      %5488 = vmatprep.subr.mxu0 0.0
      %5489 = vmatpush2.msra.mxu0 0.0
      %5490 = vmatprep.subr.mxu0 0.0
      %5491 = vmatpush2.msra.mxu0 0.0
      %5492 = vmatprep.subr.mxu0 0.0
      %5493 = vmatpush2.msra.mxu0 0.0
      %5494 = vmatprep.subr.mxu0 0.0
      %5495 = vmatpush2.msra.mxu0 0.0
      %5496 = vmatprep.subr.mxu0 0.0
      %5497 = vmatpush2.msra.mxu0 0.0
      %5498 = vmatprep.subr.mxu0 0.0
      %5499 = vmatpush2.msra.mxu0 0.0
      %5500 = vmatprep.subr.mxu0 0.0
      %5501 = vmatpush2.msra.mxu0 0.0
      %5502 = vmatprep.subr.mxu0 0.0
      %5503 = vmatpush2.msra.mxu0 0.0
      %5504 = vmatprep.mubr.f32.mxu0 0.0
      %v5505 = vand.u32 %v5099, 4294901760
      %5506 = vmatmul.mubr.f32.gmra.mxu0 %v5505
      %v5507 = vpop.f32.mrf.mxu0
      %v5508 = vadd.f32 %v5425, %v5507
      %v5509 = vpop.f32.mrf.mxu0
      %5510 = vdwg.mxu0
      %5511 = vmatprep.subr.mxu0 0.0
      %5512 = vmatpush1.msra.mxu0 0.0
      %5513 = vmatprep.subr.mxu0 0.0
      %5514 = vmatpush1.msra.mxu0 0.0
      %5515 = vmatprep.subr.mxu0 0.0
      %5516 = vmatpush1.msra.mxu0 0.0
      %5517 = vmatprep.subr.mxu0 0.0
      %5518 = vmatpush1.msra.mxu0 0.0
      %5519 = vmatprep.subr.mxu0 0.0
      %5520 = vmatpush1.msra.mxu0 0.0
      %5521 = vmatprep.subr.mxu0 0.0
      %5522 = vmatpush1.msra.mxu0 0.0
      %5523 = vmatprep.subr.mxu0 0.0
      %5524 = vmatpush1.msra.mxu0 0.0
      %5525 = vmatprep.subr.mxu0 0.0
      %5526 = vmatpush1.msra.mxu0 0.0
      %5527 = vmatprep.subr.mxu0 0.0
      %5528 = vmatpush1.msra.mxu0 0.0
      %5529 = vmatprep.subr.mxu0 0.0
      %5530 = vmatpush1.msra.mxu0 0.0
      %5531 = vmatprep.subr.mxu0 0.0
      %5532 = vmatpush1.msra.mxu0 0.0
      %5533 = vmatprep.subr.mxu0 0.0
      %5534 = vmatpush1.msra.mxu0 0.0
      %5535 = vmatprep.subr.mxu0 0.0
      %v5536 = vand.u32 %v5091, 4294901760
      %5537 = vmatpush1.msra.mxu0 %v5536
      %5538 = vmatprep.subr.mxu0 0.0
      %v5539 = vand.u32 %v5090, 4294901760
      %5540 = vmatpush1.msra.mxu0 %v5539
      %5541 = vmatprep.subr.mxu0 0.0
      %v5542 = vand.u32 %v5089, 4294901760
      %5543 = vmatpush1.msra.mxu0 %v5542
      %5544 = vmatprep.subr.mxu0 0.0
      %v5545 = vand.u32 %v5088, 4294901760
      %5546 = vmatpush1.msra.mxu0 %v5545
      %5547 = vmatprep.subr.mxu0 0.0
      %5548 = vmatpush2.msra.mxu0 0.0
      %5549 = vmatprep.subr.mxu0 0.0
      %5550 = vmatpush2.msra.mxu0 0.0
      %5551 = vmatprep.subr.mxu0 0.0
      %5552 = vmatpush2.msra.mxu0 0.0
      %5553 = vmatprep.subr.mxu0 0.0
      %5554 = vmatpush2.msra.mxu0 0.0
      %5555 = vmatprep.subr.mxu0 0.0
      %5556 = vmatpush2.msra.mxu0 0.0
      %5557 = vmatprep.subr.mxu0 0.0
      %5558 = vmatpush2.msra.mxu0 0.0
      %5559 = vmatprep.subr.mxu0 0.0
      %5560 = vmatpush2.msra.mxu0 0.0
      %5561 = vmatprep.subr.mxu0 0.0
      %5562 = vmatpush2.msra.mxu0 0.0
      %5563 = vmatprep.subr.mxu0 0.0
      %5564 = vmatpush2.msra.mxu0 0.0
      %5565 = vmatprep.subr.mxu0 0.0
      %5566 = vmatpush2.msra.mxu0 0.0
      %5567 = vmatprep.subr.mxu0 0.0
      %5568 = vmatpush2.msra.mxu0 0.0
      %5569 = vmatprep.subr.mxu0 0.0
      %5570 = vmatpush2.msra.mxu0 0.0
      %5571 = vmatprep.subr.mxu0 0.0
      %5572 = vmatpush2.msra.mxu0 0.0
      %5573 = vmatprep.subr.mxu0 0.0
      %5574 = vmatpush2.msra.mxu0 0.0
      %5575 = vmatprep.subr.mxu0 0.0
      %5576 = vmatpush2.msra.mxu0 0.0
      %5577 = vmatprep.subr.mxu0 0.0
      %5578 = vmatpush2.msra.mxu0 0.0
      %5579 = vmatprep.mubr.f32.mxu0 0.0
      %v5580 = vand.u32 %v5099, 4294901760
      %5581 = vmatmul.mubr.f32.gmra.mxu0 %v5580
      %v5582 = vpop.f32.mrf.mxu0
      %v5583 = vadd.f32 %v5508, %v5582
      %v5584 = vpop.f32.mrf.mxu0
      %5585 = vdwg.mxu0
      %5586 = vst.msk [vmem:[#allocation7] sm:$0xff] %vm136, %v5583
    $region37: #{tpu_custom_call.1} parent=1 // pred_fallthru
      _
    // Predicated region
    $region38: #{tpu_custom_call.1} parent=1 // pred_check
      _
    $region39: #{tpu_custom_call.1} parent=1 // pred_check_branch
      %5588 = sbr.rel (0) target = $region41
    $region40: #{tpu_custom_call.1} parent=1 // pred_region
      %s5590 = ssub.s32 128, 128
      %5591 = vsyncadd [#allocation6], %s5590
      %s5593 = sshll.u32 [#allocation7], 4
      %s5594 = int_to_ptr.vmem [resolvable:$true] %s5593
      %5596 = dma.vmem_to_hbm [thread:$0]  %s5594, 128, %s6, [#allocation6]
    $region41: #{tpu_custom_call.1} parent=1 // pred_fallthru
      _
    // Predicated region
    $region42: #{tpu_custom_call.1} parent=1 // pred_check
      _
    $region43: #{tpu_custom_call.1} parent=1 // pred_check_branch
      %5598 = sbr.rel (0) target = $region45
    $region44: #{tpu_custom_call.1} parent=1 // pred_region
      %5599 = dma.done [#allocation6], 128
    $region45: #{tpu_custom_call.1} parent=1 // pred_fallthru
      _
    %5600 = vsyncpa [#allocation5], 1
    %5601 = vsyncpa [#allocation6], 1

// kernel: tpu_custom_call.1
$region0: #{tpu_custom_call.1}
  #allocation0 [shape = 'u32[]', space=smem, size = 0x4, offset = 0x4, fixed_abs, tag = 'smem constant byte address 0x4 - core index']
  #allocation1 [shape = 'u32[144,128]{1,0:T(1,128)}', space=vmem, size = 0x12000, scoped, tag = 'internal scratch']
  #allocation2 [shape = 'f32[8,32]{1,0:T(8,128)}', space=vmem, size = 0x1000, scoped, tag = 'scratch operand']
  #allocation3 [shape = 'f32[8,32]{1,0:T(8,128)}', space=vmem, size = 0x1000, scoped, tag = 'scratch operand']
  %s0 = inlined_call_operand.vmem [shape: s32[64,1], index: 0, kind: input, shape index: {}]
  %s1 = inlined_call_operand.vmem [shape: f32[32,128], index: 1, kind: input, shape index: {}]
  %s2 = inlined_call_operand.vmem [shape: f32[32,128], index: 2, kind: input, shape index: {}]
  %s3 = inlined_call_operand.vmem [shape: f32[1,128], index: 3, kind: input, shape index: {}]
  %s4 = inlined_call_operand.hbm [shape: f32[32,32], index: 4, kind: input, shape index: {}]
  %s5 = inlined_call_operand.vmem [shape: f32[1,32], index: 5, kind: input, shape index: {}]
  %s6 = inlined_call_operand.hbm [shape: f32[8,32], index: 6, kind: output, shape index: {}]
  %s7 = sld [smem:[#allocation0]]
  $region46: #{tpu_custom_call.1} parent=0
    _
  %s9 = ssub.s32 1, %s7
  %s10 = scalar_select 0, %s9, %s7
  $region1: #{tpu_custom_call.1} parent=0
    #allocation4 [shape = 'u8[16384]{0}', space=vmem, size = 0x4000, scoped, tag = 'input window, operand 4, single buffered']
    #allocation5 [shape = 's32[1]{0}', space=sflag, size = 0x4, scoped, tag = 'scoped memory for tpu_custom_call.1']
    #allocation6 [shape = 's32[1]{0}', space=sflag, size = 0x4, scoped, tag = 'scoped memory for tpu_custom_call.1']
    #allocation7 [shape = 'u8[4096]{0}', space=vmem, size = 0x1000, scoped, tag = 'output window, operand 0, single buffered']
    %11 = vsyncpa [#allocation5], 0
    %12 = vsyncpa [#allocation6], 0
    // Predicated region
    $region2: #{tpu_custom_call.1} parent=1 // pred_check
      _
    $region3: #{tpu_custom_call.1} parent=1 // pred_check_branch
      %14 = sbr.rel (0) target = $region5
    $region4: #{tpu_custom_call.1} parent=1 // pred_region
      %s15 = sadd.s32 0, 0
      %s16 = smul.u32 8, %s15
      %p17 = scmp.lt.s32.totalorder %s16, 7
      %s18 = scalar_select %p17, %s16, 7
      %s19 = smul.addr %s18, 8
      %s20 = scalar_lea.vmem %s0, %s19
      %s21 = sadd.s32 0, 0
      %s22 = smul.u32 8, %s21
    $region5: #{tpu_custom_call.1} parent=1 // pred_fallthru
      _
    // Predicated region
    $region6: #{tpu_custom_call.1} parent=1 // pred_check
      _
    $region7: #{tpu_custom_call.1} parent=1 // pred_check_branch
      %24 = sbr.rel (0) target = $region9
    $region8: #{tpu_custom_call.1} parent=1 // pred_region
      _
    $region9: #{tpu_custom_call.1} parent=1 // pred_fallthru
      _
    // Predicated region
    $region10: #{tpu_custom_call.1} parent=1 // pred_check
      _
    $region11: #{tpu_custom_call.1} parent=1 // pred_check_branch
      %26 = sbr.rel (0) target = $region13
    $region12: #{tpu_custom_call.1} parent=1 // pred_region
      _
    $region13: #{tpu_custom_call.1} parent=1 // pred_fallthru
      _
    // Predicated region
    $region14: #{tpu_custom_call.1} parent=1 // pred_check
      _
    $region15: #{tpu_custom_call.1} parent=1 // pred_check_branch
      %28 = sbr.rel (0) target = $region17
    $region16: #{tpu_custom_call.1} parent=1 // pred_region
      _
    $region17: #{tpu_custom_call.1} parent=1 // pred_fallthru
      _
    // Predicated region
    $region18: #{tpu_custom_call.1} parent=1 // pred_check
      _
    $region19: #{tpu_custom_call.1} parent=1 // pred_check_branch
      %30 = sbr.rel (0) target = $region21
    $region20: #{tpu_custom_call.1} parent=1 // pred_region
      %s32 = ssub.s32 512, 512
      %33 = vsyncadd [#allocation5], %s32
      %s34 = sshll.u32 [#allocation4], 4
      %s35 = int_to_ptr.vmem [resolvable:$true] %s34
      %40 = dma.hbm_to_vmem [thread:$0]  %s4, 512, %s35, [#allocation5], 128, 128, 8
    $region21: #{tpu_custom_call.1} parent=1 // pred_fallthru
      _
    // Predicated region
    $region22: #{tpu_custom_call.1} parent=1 // pred_check
      _
    $region23: #{tpu_custom_call.1} parent=1 // pred_check_branch
      %42 = sbr.rel (0) target = $region25
    $region24: #{tpu_custom_call.1} parent=1 // pred_region
      _
    $region25: #{tpu_custom_call.1} parent=1 // pred_fallthru
      _
    // Predicated region
    $region26: #{tpu_custom_call.1} parent=1 // pred_check
      _
    $region27: #{tpu_custom_call.1} parent=1 // pred_check_branch
      %44 = sbr.rel (0) target = $region29
    $region28: #{tpu_custom_call.1} parent=1 // pred_region
      %45 = dma.done [#allocation5], 512
    $region29: #{tpu_custom_call.1} parent=1 // pred_fallthru
      _
    %s46 = sadd.s32 0, 0
    %s47 = smul.u32 8, %s46
    %p48 = scmp.lt.s32.totalorder %s47, 7
    %s49 = scalar_select %p48, %s47, 7
    %s50 = smul.addr %s49, 8
    %s51 = scalar_lea.vmem %s0, %s50
    %s52 = sadd.s32 0, 0
    %s53 = smul.u32 8, %s52
    %p54 = scmp.lt.s32.totalorder %s53, 7
    %s55 = scalar_select %p54, %s53, 7
    %s56 = smul.addr %s55, 8
    %s57 = scalar_lea.vmem %s0, %s56
    %s58 = sadd.s32 0, 0
    %s59 = smul.u32 8, %s58
    %p60 = scmp.eq.s32.totalorder 0, 0
    // Predicated region
    $region30: #{tpu_custom_call.1} parent=1 // pred_check
      %p61 = pneg %p60
    $region31: #{tpu_custom_call.1} parent=1 // pred_check_branch
      %63 = sbr.rel (%p61) target = $region33
    $region32: #{tpu_custom_call.1} parent=1 // pred_region
      %vm64 = vcmask 261120
      %65 = vst.msk [vmem:[#allocation2] sm:$0xff] %vm64, 0.0
      %66 = vst.msk [vmem:[#allocation3] sm:$0xff] %vm64, 0.0
    $region33: #{tpu_custom_call.1} parent=1 // pred_fallthru
      _
    %v67 = vld [vmem:[%s57] sm:$0xff]
    %v68 = vld [vmem:[%s57 + $0x8] sm:$0xff]
    %v69 = vld [vmem:[%s57 + $0x10] sm:$0xff]
    %v70 = vld [vmem:[%s57 + $0x18] sm:$0xff]
    %v71 = vld [vmem:[%s57 + $0x20] sm:$0xff]
    %v72 = vld [vmem:[%s57 + $0x28] sm:$0xff]
    %v73 = vld [vmem:[%s57 + $0x30] sm:$0xff]
    %v74 = vld [vmem:[%s57 + $0x38] sm:$0xff]
    %v75 = vlaneseq
    %v76 = vand.u32 %v75, 127
    %77 = vset.pattern.permute.xlu0 0
    %78 = vperm.xlu0 %77, %v67
    %v79 = vpop.permute.xlu0 %78
    %80 = vset.pattern.permute.xlu0 0
    %81 = vperm.xlu0 %80, %v68
    %v82 = vpop.permute.xlu0 %81
    %83 = vset.pattern.permute.xlu0 0
    %84 = vperm.xlu0 %83, %v69
    %v85 = vpop.permute.xlu0 %84
    %86 = vset.pattern.permute.xlu0 0
    %87 = vperm.xlu0 %86, %v70
    %v88 = vpop.permute.xlu0 %87
    %89 = vset.pattern.permute.xlu0 0
    %90 = vperm.xlu0 %89, %v71
    %v91 = vpop.permute.xlu0 %90
    %92 = vset.pattern.permute.xlu0 0
    %93 = vperm.xlu0 %92, %v72
    %v94 = vpop.permute.xlu0 %93
    %95 = vset.pattern.permute.xlu0 0
    %96 = vperm.xlu0 %95, %v73
    %v97 = vpop.permute.xlu0 %96
    %98 = vset.pattern.permute.xlu0 0
    %99 = vperm.xlu0 %98, %v74
    %v100 = vpop.permute.xlu0 %99
    %vm101 = vcmp.eq.s32.totalorder %v76, %v79
    %vm102 = vcmp.eq.s32.totalorder %v76, %v82
    %vm103 = vcmp.eq.s32.totalorder %v76, %v85
    %vm104 = vcmp.eq.s32.totalorder %v76, %v88
    %vm105 = vcmp.eq.s32.totalorder %v76, %v91
    %vm106 = vcmp.eq.s32.totalorder %v76, %v94
    %vm107 = vcmp.eq.s32.totalorder %v76, %v97
    %vm108 = vcmp.eq.s32.totalorder %v76, %v100
    %v109 = vsel %vm101, 1, 0
    %v110 = vsel %vm102, 1, 0
    %v111 = vsel %vm103, 1, 0
    %v112 = vsel %vm104, 1, 0
    %v113 = vsel %vm105, 1, 0
    %v114 = vsel %vm106, 1, 0
    %v115 = vsel %vm107, 1, 0
    %v116 = vsel %vm108, 1, 0
    %v117 = vcvt.s32.f32 %v109
    %v118 = vcvt.s32.f32 %v110
    %v119 = vcvt.s32.f32 %v111
    %v120 = vcvt.s32.f32 %v112
    %v121 = vcvt.s32.f32 %v113
    %v122 = vcvt.s32.f32 %v114
    %v123 = vcvt.s32.f32 %v115
    %v124 = vcvt.s32.f32 %v116
    %v125 = vld [vmem:[%s1] sm:$0xff]
    %v126 = vld [vmem:[%s1 + $0x8] sm:$0xff]
    %v127 = vld [vmem:[%s1 + $0x10] sm:$0xff]
    %v128 = vld [vmem:[%s1 + $0x18] sm:$0xff]
    %v129 = vld [vmem:[%s3] sm:$0x1]
    %v131 = vlaneseq
    %v132 = vshrl.u32 %v131, 7
    %v133 = vsub.s32 0, %v132
    %v134 = vrot.slane %v129, %v133
    %vm136 = vcmask 261120
    %v138 = vsel %vm136, %v117, 0
    %v141 = vsel %vm136, %v118, 0
    %v144 = vsel %vm136, %v119, 0
    %v147 = vsel %vm136, %v120, 0
    %v150 = vsel %vm136, %v121, 0
    %v153 = vsel %vm136, %v122, 0
    %v156 = vsel %vm136, %v123, 0
    %v159 = vsel %vm136, %v124, 0
    %161 = vmatprep.subr.mxu0 0.0
    %162 = vmatpush1.msra.mxu0 0.0
    %163 = vmatprep.subr.mxu0 0.0
    %164 = vmatpush1.msra.mxu0 0.0
    %165 = vmatprep.subr.mxu0 0.0
    %166 = vmatpush1.msra.mxu0 0.0
    %167 = vmatprep.subr.mxu0 0.0
    %168 = vmatpush1.msra.mxu0 0.0
    %169 = vmatprep.subr.mxu0 0.0
    %170 = vmatpush1.msra.mxu0 0.0
    %171 = vmatprep.subr.mxu0 0.0
    %172 = vmatpush1.msra.mxu0 0.0
    %173 = vmatprep.subr.mxu0 0.0
    %174 = vmatpush1.msra.mxu0 0.0
    %175 = vmatprep.subr.mxu0 0.0
    %176 = vmatpush1.msra.mxu0 0.0
    %177 = vmatprep.subr.mxu0 0.0
    %178 = vmatpush1.msra.mxu0 0.0
    %179 = vmatprep.subr.mxu0 0.0
    %180 = vmatpush1.msra.mxu0 0.0
    %181 = vmatprep.subr.mxu0 0.0
    %182 = vmatpush1.msra.mxu0 0.0
    %183 = vmatprep.subr.mxu0 0.0
    %184 = vmatpush1.msra.mxu0 0.0
    %185 = vmatprep.subr.mxu0 0.0
    %v186 = vand.u32 %v128, 4294901760
    %187 = vmatpush1.msra.mxu0 %v186
    %188 = vmatprep.subr.mxu0 0.0
    %v189 = vand.u32 %v127, 4294901760
    %190 = vmatpush1.msra.mxu0 %v189
    %191 = vmatprep.subr.mxu0 0.0
    %v192 = vand.u32 %v126, 4294901760
    %193 = vmatpush1.msra.mxu0 %v192
    %194 = vmatprep.subr.mxu0 0.0
    %v195 = vand.u32 %v125, 4294901760
    %196 = vmatpush1.msra.mxu0 %v195
    %197 = vmatprep.subr.mxu0 0.0
    %198 = vmatpush2.msra.mxu0 0.0
    %199 = vmatprep.subr.mxu0 0.0
    %200 = vmatpush2.msra.mxu0 0.0
    %201 = vmatprep.subr.mxu0 0.0
    %202 = vmatpush2.msra.mxu0 0.0
    %203 = vmatprep.subr.mxu0 0.0
    %204 = vmatpush2.msra.mxu0 0.0
    %205 = vmatprep.subr.mxu0 0.0
    %206 = vmatpush2.msra.mxu0 0.0
    %207 = vmatprep.subr.mxu0 0.0
    %208 = vmatpush2.msra.mxu0 0.0
    %209 = vmatprep.subr.mxu0 0.0
    %210 = vmatpush2.msra.mxu0 0.0
    %211 = vmatprep.subr.mxu0 0.0
    %212 = vmatpush2.msra.mxu0 0.0
    %213 = vmatprep.subr.mxu0 0.0
    %214 = vmatpush2.msra.mxu0 0.0
    %215 = vmatprep.subr.mxu0 0.0
    %216 = vmatpush2.msra.mxu0 0.0
    %217 = vmatprep.subr.mxu0 0.0
    %218 = vmatpush2.msra.mxu0 0.0
    %219 = vmatprep.subr.mxu0 0.0
    %220 = vmatpush2.msra.mxu0 0.0
    %221 = vmatprep.subr.mxu0 0.0
    %222 = vmatpush2.msra.mxu0 0.0
    %223 = vmatprep.subr.mxu0 0.0
    %224 = vmatpush2.msra.mxu0 0.0
    %225 = vmatprep.subr.mxu0 0.0
    %226 = vmatpush2.msra.mxu0 0.0
    %227 = vmatprep.subr.mxu0 0.0
    %228 = vmatpush2.msra.mxu0 0.0
    %229 = vmatprep.mubr.f32.mxu0 0.0
    %v230 = vand.u32 %v138, 4294901760
    %v231 = vsub.f32 %v138, %v230
    %v232 = vand.u32 %v231, 4294901760
    %v233 = vsub.f32 %v231, %v232
    %v234 = vand.u32 %v233, 4294901760
    %235 = vmatmul.mubr.f32.gmra.mxu0 %v234
    %v236 = vpop.f32.mrf.mxu0
    %v237 = vadd.f32 %v134, %v236
    %v238 = vpop.f32.mrf.mxu0
    %239 = vmatprep.mubr.f32.mxu0 0.0
    %v240 = vand.u32 %v141, 4294901760
    %v241 = vsub.f32 %v141, %v240
    %v242 = vand.u32 %v241, 4294901760
    %v243 = vsub.f32 %v241, %v242
    %v244 = vand.u32 %v243, 4294901760
    %245 = vmatmul.mubr.f32.gmra.mxu0 %v244
    %v246 = vpop.f32.mrf.mxu0
    %v247 = vadd.f32 %v134, %v246
    %v248 = vpop.f32.mrf.mxu0
    %249 = vmatprep.mubr.f32.mxu0 0.0
    %v250 = vand.u32 %v144, 4294901760
    %v251 = vsub.f32 %v144, %v250
    %v252 = vand.u32 %v251, 4294901760
    %v253 = vsub.f32 %v251, %v252
    %v254 = vand.u32 %v253, 4294901760
    %255 = vmatmul.mubr.f32.gmra.mxu0 %v254
    %v256 = vpop.f32.mrf.mxu0
    %v257 = vadd.f32 %v134, %v256
    %v258 = vpop.f32.mrf.mxu0
    %259 = vmatprep.mubr.f32.mxu0 0.0
    %v260 = vand.u32 %v147, 4294901760
    %v261 = vsub.f32 %v147, %v260
    %v262 = vand.u32 %v261, 4294901760
    %v263 = vsub.f32 %v261, %v262
    %v264 = vand.u32 %v263, 4294901760
    %265 = vmatmul.mubr.f32.gmra.mxu0 %v264
    %v266 = vpop.f32.mrf.mxu0
    %v267 = vadd.f32 %v134, %v266
    %v268 = vpop.f32.mrf.mxu0
    %269 = vmatprep.mubr.f32.mxu0 0.0
    %v270 = vand.u32 %v150, 4294901760
    %v271 = vsub.f32 %v150, %v270
    %v272 = vand.u32 %v271, 4294901760
    %v273 = vsub.f32 %v271, %v272
    %v274 = vand.u32 %v273, 4294901760
    %275 = vmatmul.mubr.f32.gmra.mxu0 %v274
    %v276 = vpop.f32.mrf.mxu0
    %v277 = vadd.f32 %v134, %v276
    %v278 = vpop.f32.mrf.mxu0
    %279 = vmatprep.mubr.f32.mxu0 0.0
    %v280 = vand.u32 %v153, 4294901760
    %v281 = vsub.f32 %v153, %v280
    %v282 = vand.u32 %v281, 4294901760
    %v283 = vsub.f32 %v281, %v282
    %v284 = vand.u32 %v283, 4294901760
    %285 = vmatmul.mubr.f32.gmra.mxu0 %v284
    %v286 = vpop.f32.mrf.mxu0
    %v287 = vadd.f32 %v134, %v286
    %v288 = vpop.f32.mrf.mxu0
    %289 = vmatprep.mubr.f32.mxu0 0.0
    %v290 = vand.u32 %v156, 4294901760
    %v291 = vsub.f32 %v156, %v290
    %v292 = vand.u32 %v291, 4294901760
    %v293 = vsub.f32 %v291, %v292
    %v294 = vand.u32 %v293, 4294901760
    %295 = vmatmul.mubr.f32.gmra.mxu0 %v294
    %v296 = vpop.f32.mrf.mxu0
    %v297 = vadd.f32 %v134, %v296
    %v298 = vpop.f32.mrf.mxu0
    %299 = vmatprep.mubr.f32.mxu0 0.0
    %v300 = vand.u32 %v159, 4294901760
    %v301 = vsub.f32 %v159, %v300
    %v302 = vand.u32 %v301, 4294901760
    %v303 = vsub.f32 %v301, %v302
    %v304 = vand.u32 %v303, 4294901760
    %305 = vmatmul.mubr.f32.gmra.mxu0 %v304
    %v306 = vpop.f32.mrf.mxu0
    %v307 = vadd.f32 %v134, %v306
    %v308 = vpop.f32.mrf.mxu0
    %309 = vdwg.mxu0
    %310 = vmatprep.subr.mxu0 0.0
    %311 = vmatpush1.msra.mxu0 0.0
    %312 = vmatprep.subr.mxu0 0.0
    %313 = vmatpush1.msra.mxu0 0.0
    %314 = vmatprep.subr.mxu0 0.0
    %315 = vmatpush1.msra.mxu0 0.0
    %316 = vmatprep.subr.mxu0 0.0
    %317 = vmatpush1.msra.mxu0 0.0
    %318 = vmatprep.subr.mxu0 0.0
    %319 = vmatpush1.msra.mxu0 0.0
    %320 = vmatprep.subr.mxu0 0.0
    %321 = vmatpush1.msra.mxu0 0.0
    %322 = vmatprep.subr.mxu0 0.0
    %323 = vmatpush1.msra.mxu0 0.0
    %324 = vmatprep.subr.mxu0 0.0
    %325 = vmatpush1.msra.mxu0 0.0
    %326 = vmatprep.subr.mxu0 0.0
    %327 = vmatpush1.msra.mxu0 0.0
    %328 = vmatprep.subr.mxu0 0.0
    %329 = vmatpush1.msra.mxu0 0.0
    %330 = vmatprep.subr.mxu0 0.0
    %331 = vmatpush1.msra.mxu0 0.0
    %332 = vmatprep.subr.mxu0 0.0
    %333 = vmatpush1.msra.mxu0 0.0
    %334 = vmatprep.subr.mxu0 0.0
    %v335 = vand.u32 %v128, 4294901760
    %v336 = vsub.f32 %v128, %v335
    %v337 = vand.u32 %v336, 4294901760
    %v338 = vsub.f32 %v336, %v337
    %v339 = vand.u32 %v338, 4294901760
    %340 = vmatpush1.msra.mxu0 %v339
    %341 = vmatprep.subr.mxu0 0.0
    %v342 = vand.u32 %v127, 4294901760
    %v343 = vsub.f32 %v127, %v342
    %v344 = vand.u32 %v343, 4294901760
    %v345 = vsub.f32 %v343, %v344
    %v346 = vand.u32 %v345, 4294901760
    %347 = vmatpush1.msra.mxu0 %v346
    %348 = vmatprep.subr.mxu0 0.0
    %v349 = vand.u32 %v126, 4294901760
    %v350 = vsub.f32 %v126, %v349
    %v351 = vand.u32 %v350, 4294901760
    %v352 = vsub.f32 %v350, %v351
    %v353 = vand.u32 %v352, 4294901760
    %354 = vmatpush1.msra.mxu0 %v353
    %355 = vmatprep.subr.mxu0 0.0
    %v356 = vand.u32 %v125, 4294901760
    %v357 = vsub.f32 %v125, %v356
    %v358 = vand.u32 %v357, 4294901760
    %v359 = vsub.f32 %v357, %v358
    %v360 = vand.u32 %v359, 4294901760
    %361 = vmatpush1.msra.mxu0 %v360
    %362 = vmatprep.subr.mxu0 0.0
    %363 = vmatpush2.msra.mxu0 0.0
    %364 = vmatprep.subr.mxu0 0.0
    %365 = vmatpush2.msra.mxu0 0.0
    %366 = vmatprep.subr.mxu0 0.0
    %367 = vmatpush2.msra.mxu0 0.0
    %368 = vmatprep.subr.mxu0 0.0
    %369 = vmatpush2.msra.mxu0 0.0
    %370 = vmatprep.subr.mxu0 0.0
    %371 = vmatpush2.msra.mxu0 0.0
    %372 = vmatprep.subr.mxu0 0.0
    %373 = vmatpush2.msra.mxu0 0.0
    %374 = vmatprep.subr.mxu0 0.0
    %375 = vmatpush2.msra.mxu0 0.0
    %376 = vmatprep.subr.mxu0 0.0
    %377 = vmatpush2.msra.mxu0 0.0
    %378 = vmatprep.subr.mxu0 0.0
    %379 = vmatpush2.msra.mxu0 0.0
    %380 = vmatprep.subr.mxu0 0.0
    %381 = vmatpush2.msra.mxu0 0.0
    %382 = vmatprep.subr.mxu0 0.0
    %383 = vmatpush2.msra.mxu0 0.0
    %384 = vmatprep.subr.mxu0 0.0
    %385 = vmatpush2.msra.mxu0 0.0
    %386 = vmatprep.subr.mxu0 0.0
    %387 = vmatpush2.msra.mxu0 0.0
    %388 = vmatprep.subr.mxu0 0.0
    %389 = vmatpush2.msra.mxu0 0.0
    %390 = vmatprep.subr.mxu0 0.0
    %391 = vmatpush2.msra.mxu0 0.0
    %392 = vmatprep.subr.mxu0 0.0
    %393 = vmatpush2.msra.mxu0 0.0
    %394 = vmatprep.mubr.f32.mxu0 0.0
    %v395 = vand.u32 %v138, 4294901760
    %396 = vmatmul.mubr.f32.gmra.mxu0 %v395
    %v397 = vpop.f32.mrf.mxu0
    %v398 = vadd.f32 %v237, %v397
    %v399 = vpop.f32.mrf.mxu0
    %400 = vmatprep.mubr.f32.mxu0 0.0
    %v401 = vand.u32 %v141, 4294901760
    %402 = vmatmul.mubr.f32.gmra.mxu0 %v401
    %v403 = vpop.f32.mrf.mxu0
    %v404 = vadd.f32 %v247, %v403
    %v405 = vpop.f32.mrf.mxu0
    %406 = vmatprep.mubr.f32.mxu0 0.0
    %v407 = vand.u32 %v144, 4294901760
    %408 = vmatmul.mubr.f32.gmra.mxu0 %v407
    %v409 = vpop.f32.mrf.mxu0
    %v410 = vadd.f32 %v257, %v409
    %v411 = vpop.f32.mrf.mxu0
    %412 = vmatprep.mubr.f32.mxu0 0.0
    %v413 = vand.u32 %v147, 4294901760
    %414 = vmatmul.mubr.f32.gmra.mxu0 %v413
    %v415 = vpop.f32.mrf.mxu0
    %v416 = vadd.f32 %v267, %v415
    %v417 = vpop.f32.mrf.mxu0
    %418 = vmatprep.mubr.f32.mxu0 0.0
    %v419 = vand.u32 %v150, 4294901760
    %420 = vmatmul.mubr.f32.gmra.mxu0 %v419
    %v421 = vpop.f32.mrf.mxu0
    %v422 = vadd.f32 %v277, %v421
    %v423 = vpop.f32.mrf.mxu0
    %424 = vmatprep.mubr.f32.mxu0 0.0
    %v425 = vand.u32 %v153, 4294901760
    %426 = vmatmul.mubr.f32.gmra.mxu0 %v425
    %v427 = vpop.f32.mrf.mxu0
    %v428 = vadd.f32 %v287, %v427
    %v429 = vpop.f32.mrf.mxu0
    %430 = vmatprep.mubr.f32.mxu0 0.0
    %v431 = vand.u32 %v156, 4294901760
    %432 = vmatmul.mubr.f32.gmra.mxu0 %v431
    %v433 = vpop.f32.mrf.mxu0
    %v434 = vadd.f32 %v297, %v433
    %v435 = vpop.f32.mrf.mxu0
    %436 = vmatprep.mubr.f32.mxu0 0.0
    %v437 = vand.u32 %v159, 4294901760
    %438 = vmatmul.mubr.f32.gmra.mxu0 %v437
    %v439 = vpop.f32.mrf.mxu0
    %v440 = vadd.f32 %v307, %v439
    %v441 = vpop.f32.mrf.mxu0
    %442 = vdwg.mxu0
    %443 = vmatprep.subr.mxu0 0.0
    %444 = vmatpush1.msra.mxu0 0.0
    %445 = vmatprep.subr.mxu0 0.0
    %446 = vmatpush1.msra.mxu0 0.0
    %447 = vmatprep.subr.mxu0 0.0
    %448 = vmatpush1.msra.mxu0 0.0
    %449 = vmatprep.subr.mxu0 0.0
    %450 = vmatpush1.msra.mxu0 0.0
    %451 = vmatprep.subr.mxu0 0.0
    %452 = vmatpush1.msra.mxu0 0.0
    %453 = vmatprep.subr.mxu0 0.0
    %454 = vmatpush1.msra.mxu0 0.0
    %455 = vmatprep.subr.mxu0 0.0
    %456 = vmatpush1.msra.mxu0 0.0
    %457 = vmatprep.subr.mxu0 0.0
    %458 = vmatpush1.msra.mxu0 0.0
    %459 = vmatprep.subr.mxu0 0.0
    %460 = vmatpush1.msra.mxu0 0.0
    %461 = vmatprep.subr.mxu0 0.0
    %462 = vmatpush1.msra.mxu0 0.0
    %463 = vmatprep.subr.mxu0 0.0
    %464 = vmatpush1.msra.mxu0 0.0
    %465 = vmatprep.subr.mxu0 0.0
    %466 = vmatpush1.msra.mxu0 0.0
    %467 = vmatprep.subr.mxu0 0.0
    %v468 = vand.u32 %v128, 4294901760
    %v469 = vsub.f32 %v128, %v468
    %470 = vmatpush1.msra.mxu0 %v469
    %471 = vmatprep.subr.mxu0 0.0
    %v472 = vand.u32 %v127, 4294901760
    %v473 = vsub.f32 %v127, %v472
    %474 = vmatpush1.msra.mxu0 %v473
    %475 = vmatprep.subr.mxu0 0.0
    %v476 = vand.u32 %v126, 4294901760
    %v477 = vsub.f32 %v126, %v476
    %478 = vmatpush1.msra.mxu0 %v477
    %479 = vmatprep.subr.mxu0 0.0
    %v480 = vand.u32 %v125, 4294901760
    %v481 = vsub.f32 %v125, %v480
    %482 = vmatpush1.msra.mxu0 %v481
    %483 = vmatprep.subr.mxu0 0.0
    %484 = vmatpush2.msra.mxu0 0.0
    %485 = vmatprep.subr.mxu0 0.0
    %486 = vmatpush2.msra.mxu0 0.0
    %487 = vmatprep.subr.mxu0 0.0
    %488 = vmatpush2.msra.mxu0 0.0
    %489 = vmatprep.subr.mxu0 0.0
    %490 = vmatpush2.msra.mxu0 0.0
    %491 = vmatprep.subr.mxu0 0.0
    %492 = vmatpush2.msra.mxu0 0.0
    %493 = vmatprep.subr.mxu0 0.0
    %494 = vmatpush2.msra.mxu0 0.0
    %495 = vmatprep.subr.mxu0 0.0
    %496 = vmatpush2.msra.mxu0 0.0
    %497 = vmatprep.subr.mxu0 0.0
    %498 = vmatpush2.msra.mxu0 0.0
    %499 = vmatprep.subr.mxu0 0.0
    %500 = vmatpush2.msra.mxu0 0.0
    %501 = vmatprep.subr.mxu0 0.0
    %502 = vmatpush2.msra.mxu0 0.0
    %503 = vmatprep.subr.mxu0 0.0
    %504 = vmatpush2.msra.mxu0 0.0
    %505 = vmatprep.subr.mxu0 0.0
    %506 = vmatpush2.msra.mxu0 0.0
    %507 = vmatprep.subr.mxu0 0.0
    %508 = vmatpush2.msra.mxu0 0.0
    %509 = vmatprep.subr.mxu0 0.0
    %510 = vmatpush2.msra.mxu0 0.0
    %511 = vmatprep.subr.mxu0 0.0
    %512 = vmatpush2.msra.mxu0 0.0
    %513 = vmatprep.subr.mxu0 0.0
    %514 = vmatpush2.msra.mxu0 0.0
    %515 = vmatprep.mubr.f32.mxu0 0.0
    %v516 = vand.u32 %v138, 4294901760
    %v517 = vsub.f32 %v138, %v516
    %518 = vmatmul.mubr.f32.gmra.mxu0 %v517
    %v519 = vpop.f32.mrf.mxu0
    %v520 = vadd.f32 %v398, %v519
    %v521 = vpop.f32.mrf.mxu0
    %522 = vmatprep.mubr.f32.mxu0 0.0
    %v523 = vand.u32 %v141, 4294901760
    %v524 = vsub.f32 %v141, %v523
    %525 = vmatmul.mubr.f32.gmra.mxu0 %v524
    %v526 = vpop.f32.mrf.mxu0
    %v527 = vadd.f32 %v404, %v526
    %v528 = vpop.f32.mrf.mxu0
    %529 = vmatprep.mubr.f32.mxu0 0.0
    %v530 = vand.u32 %v144, 4294901760
    %v531 = vsub.f32 %v144, %v530
    %532 = vmatmul.mubr.f32.gmra.mxu0 %v531
    %v533 = vpop.f32.mrf.mxu0
    %v534 = vadd.f32 %v410, %v533
    %v535 = vpop.f32.mrf.mxu0
    %536 = vmatprep.mubr.f32.mxu0 0.0
    %v537 = vand.u32 %v147, 4294901760
    %v538 = vsub.f32 %v147, %v537
    %539 = vmatmul.mubr.f32.gmra.mxu0 %v538
    %v540 = vpop.f32.mrf.mxu0
    %v541 = vadd.f32 %v416, %v540
    %v542 = vpop.f32.mrf.mxu0
    %543 = vmatprep.mubr.f32.mxu0 0.0
    %v544 = vand.u32 %v150, 4294901760
    %v545 = vsub.f32 %v150, %v544
    %546 = vmatmul.mubr.f32.gmra.mxu0 %v545
    %v547 = vpop.f32.mrf.mxu0
    %v548 = vadd.f32 %v422, %v547
    %v549 = vpop.f32.mrf.mxu0
    %550 = vmatprep.mubr.f32.mxu0 0.0
    %v551 = vand.u32 %v153, 4294901760
    %v552 = vsub.f32 %v153, %v551
    %553 = vmatmul.mubr.f32.gmra.mxu0 %v552
    %v554 = vpop.f32.mrf.mxu0
    %v555 = vadd.f32 %v428, %v554
    %v556 = vpop.f32.mrf.mxu0
    %557 = vmatprep.mubr.f32.mxu0 0.0
    %v558 = vand.u32 %v156, 4294901760
    %v559 = vsub.f32 %v156, %v558
    %560 = vmatmul.mubr.f32.gmra.mxu0 %v559
    %v561 = vpop.f32.mrf.mxu0
    %v562 = vadd.f32 %v434, %v561
    %v563 = vpop.f32.mrf.mxu0
    %564 = vmatprep.mubr.f32.mxu0 0.0
    %v565 = vand.u32 %v159, 4294901760
    %v566 = vsub.f32 %v159, %v565
    %567 = vmatmul.mubr.f32.gmra.mxu0 %v566
    %v568 = vpop.f32.mrf.mxu0
    %v569 = vadd.f32 %v440, %v568
    %v570 = vpop.f32.mrf.mxu0
    %571 = vdwg.mxu0
    %572 = vmatprep.subr.mxu0 0.0
    %573 = vmatpush1.msra.mxu0 0.0
    %574 = vmatprep.subr.mxu0 0.0
    %575 = vmatpush1.msra.mxu0 0.0
    %576 = vmatprep.subr.mxu0 0.0
    %577 = vmatpush1.msra.mxu0 0.0
    %578 = vmatprep.subr.mxu0 0.0
    %579 = vmatpush1.msra.mxu0 0.0
    %580 = vmatprep.subr.mxu0 0.0
    %581 = vmatpush1.msra.mxu0 0.0
    %582 = vmatprep.subr.mxu0 0.0
    %583 = vmatpush1.msra.mxu0 0.0
    %584 = vmatprep.subr.mxu0 0.0
    %585 = vmatpush1.msra.mxu0 0.0
    %586 = vmatprep.subr.mxu0 0.0
    %587 = vmatpush1.msra.mxu0 0.0
    %588 = vmatprep.subr.mxu0 0.0
    %589 = vmatpush1.msra.mxu0 0.0
    %590 = vmatprep.subr.mxu0 0.0
    %591 = vmatpush1.msra.mxu0 0.0
    %592 = vmatprep.subr.mxu0 0.0
    %593 = vmatpush1.msra.mxu0 0.0
    %594 = vmatprep.subr.mxu0 0.0
    %595 = vmatpush1.msra.mxu0 0.0
    %596 = vmatprep.subr.mxu0 0.0
    %v597 = vand.u32 %v128, 4294901760
    %598 = vmatpush1.msra.mxu0 %v597
    %599 = vmatprep.subr.mxu0 0.0
    %v600 = vand.u32 %v127, 4294901760
    %601 = vmatpush1.msra.mxu0 %v600
    %602 = vmatprep.subr.mxu0 0.0
    %v603 = vand.u32 %v126, 4294901760
    %604 = vmatpush1.msra.mxu0 %v603
    %605 = vmatprep.subr.mxu0 0.0
    %v606 = vand.u32 %v125, 4294901760
    %607 = vmatpush1.msra.mxu0 %v606
    %608 = vmatprep.subr.mxu0 0.0
    %609 = vmatpush2.msra.mxu0 0.0
    %610 = vmatprep.subr.mxu0 0.0
    %611 = vmatpush2.msra.mxu0 0.0
    %612 = vmatprep.subr.mxu0 0.0
    %613 = vmatpush2.msra.mxu0 0.0
    %614 = vmatprep.subr.mxu0 0.0
    %615 = vmatpush2.msra.mxu0 0.0
    %616 = vmatprep.subr.mxu0 0.0
    %617 = vmatpush2.msra.mxu0 0.0
    %618 = vmatprep.subr.mxu0 0.0
    %619 = vmatpush2.msra.mxu0 0.0
    %620 = vmatprep.subr.mxu0 0.0
    %621 = vmatpush2.msra.mxu0 0.0
    %622 = vmatprep.subr.mxu0 0.0
    %623 = vmatpush2.msra.mxu0 0.0
    %624 = vmatprep.subr.mxu0 0.0
    %625 = vmatpush2.msra.mxu0 0.0
    %626 = vmatprep.subr.mxu0 0.0
    %627 = vmatpush2.msra.mxu0 0.0
    %628 = vmatprep.subr.mxu0 0.0
    %629 = vmatpush2.msra.mxu0 0.0
    %630 = vmatprep.subr.mxu0 0.0
    %631 = vmatpush2.msra.mxu0 0.0
    %632 = vmatprep.subr.mxu0 0.0
    %633 = vmatpush2.msra.mxu0 0.0
    %634 = vmatprep.subr.mxu0 0.0
    %635 = vmatpush2.msra.mxu0 0.0
    %636 = vmatprep.subr.mxu0 0.0
    %637 = vmatpush2.msra.mxu0 0.0
    %638 = vmatprep.subr.mxu0 0.0
    %639 = vmatpush2.msra.mxu0 0.0
    %640 = vmatprep.mubr.f32.mxu0 0.0
    %v641 = vand.u32 %v138, 4294901760
    %v642 = vsub.f32 %v138, %v641
    %v643 = vand.u32 %v642, 4294901760
    %644 = vmatmul.mubr.f32.gmra.mxu0 %v643
    %v645 = vpop.f32.mrf.mxu0
    %v646 = vadd.f32 %v520, %v645
    %v647 = vpop.f32.mrf.mxu0
    %648 = vmatprep.mubr.f32.mxu0 0.0
    %v649 = vand.u32 %v141, 4294901760
    %v650 = vsub.f32 %v141, %v649
    %v651 = vand.u32 %v650, 4294901760
    %652 = vmatmul.mubr.f32.gmra.mxu0 %v651
    %v653 = vpop.f32.mrf.mxu0
    %v654 = vadd.f32 %v527, %v653
    %v655 = vpop.f32.mrf.mxu0
    %656 = vmatprep.mubr.f32.mxu0 0.0
    %v657 = vand.u32 %v144, 4294901760
    %v658 = vsub.f32 %v144, %v657
    %v659 = vand.u32 %v658, 4294901760
    %660 = vmatmul.mubr.f32.gmra.mxu0 %v659
    %v661 = vpop.f32.mrf.mxu0
    %v662 = vadd.f32 %v534, %v661
    %v663 = vpop.f32.mrf.mxu0
    %664 = vmatprep.mubr.f32.mxu0 0.0
    %v665 = vand.u32 %v147, 4294901760
    %v666 = vsub.f32 %v147, %v665
    %v667 = vand.u32 %v666, 4294901760
    %668 = vmatmul.mubr.f32.gmra.mxu0 %v667
    %v669 = vpop.f32.mrf.mxu0
    %v670 = vadd.f32 %v541, %v669
    %v671 = vpop.f32.mrf.mxu0
    %672 = vmatprep.mubr.f32.mxu0 0.0
    %v673 = vand.u32 %v150, 4294901760
    %v674 = vsub.f32 %v150, %v673
    %v675 = vand.u32 %v674, 4294901760
    %676 = vmatmul.mubr.f32.gmra.mxu0 %v675
    %v677 = vpop.f32.mrf.mxu0
    %v678 = vadd.f32 %v548, %v677
    %v679 = vpop.f32.mrf.mxu0
    %680 = vmatprep.mubr.f32.mxu0 0.0
    %v681 = vand.u32 %v153, 4294901760
    %v682 = vsub.f32 %v153, %v681
    %v683 = vand.u32 %v682, 4294901760
    %684 = vmatmul.mubr.f32.gmra.mxu0 %v683
    %v685 = vpop.f32.mrf.mxu0
    %v686 = vadd.f32 %v555, %v685
    %v687 = vpop.f32.mrf.mxu0
    %688 = vmatprep.mubr.f32.mxu0 0.0
    %v689 = vand.u32 %v156, 4294901760
    %v690 = vsub.f32 %v156, %v689
    %v691 = vand.u32 %v690, 4294901760
    %692 = vmatmul.mubr.f32.gmra.mxu0 %v691
    %v693 = vpop.f32.mrf.mxu0
    %v694 = vadd.f32 %v562, %v693
    %v695 = vpop.f32.mrf.mxu0
    %696 = vmatprep.mubr.f32.mxu0 0.0
    %v697 = vand.u32 %v159, 4294901760
    %v698 = vsub.f32 %v159, %v697
    %v699 = vand.u32 %v698, 4294901760
    %700 = vmatmul.mubr.f32.gmra.mxu0 %v699
    %v701 = vpop.f32.mrf.mxu0
    %v702 = vadd.f32 %v569, %v701
    %v703 = vpop.f32.mrf.mxu0
    %704 = vdwg.mxu0
    %705 = vmatprep.subr.mxu0 0.0
    %706 = vmatpush1.msra.mxu0 0.0
    %707 = vmatprep.subr.mxu0 0.0
    %708 = vmatpush1.msra.mxu0 0.0
    %709 = vmatprep.subr.mxu0 0.0
    %710 = vmatpush1.msra.mxu0 0.0
    %711 = vmatprep.subr.mxu0 0.0
    %712 = vmatpush1.msra.mxu0 0.0
    %713 = vmatprep.subr.mxu0 0.0
    %714 = vmatpush1.msra.mxu0 0.0
    %715 = vmatprep.subr.mxu0 0.0
    %716 = vmatpush1.msra.mxu0 0.0
    %717 = vmatprep.subr.mxu0 0.0
    %718 = vmatpush1.msra.mxu0 0.0
    %719 = vmatprep.subr.mxu0 0.0
    %720 = vmatpush1.msra.mxu0 0.0
    %721 = vmatprep.subr.mxu0 0.0
    %722 = vmatpush1.msra.mxu0 0.0
    %723 = vmatprep.subr.mxu0 0.0
    %724 = vmatpush1.msra.mxu0 0.0
    %725 = vmatprep.subr.mxu0 0.0
    %726 = vmatpush1.msra.mxu0 0.0
    %727 = vmatprep.subr.mxu0 0.0
    %728 = vmatpush1.msra.mxu0 0.0
    %729 = vmatprep.subr.mxu0 0.0
    %v730 = vand.u32 %v128, 4294901760
    %v731 = vsub.f32 %v128, %v730
    %v732 = vand.u32 %v731, 4294901760
    %733 = vmatpush1.msra.mxu0 %v732
    %734 = vmatprep.subr.mxu0 0.0
    %v735 = vand.u32 %v127, 4294901760
    %v736 = vsub.f32 %v127, %v735
    %v737 = vand.u32 %v736, 4294901760
    %738 = vmatpush1.msra.mxu0 %v737
    %739 = vmatprep.subr.mxu0 0.0
    %v740 = vand.u32 %v126, 4294901760
    %v741 = vsub.f32 %v126, %v740
    %v742 = vand.u32 %v741, 4294901760
    %743 = vmatpush1.msra.mxu0 %v742
    %744 = vmatprep.subr.mxu0 0.0
    %v745 = vand.u32 %v125, 4294901760
    %v746 = vsub.f32 %v125, %v745
    %v747 = vand.u32 %v746, 4294901760
    %748 = vmatpush1.msra.mxu0 %v747
    %749 = vmatprep.subr.mxu0 0.0
    %750 = vmatpush2.msra.mxu0 0.0
    %751 = vmatprep.subr.mxu0 0.0
    %752 = vmatpush2.msra.mxu0 0.0
    %753 = vmatprep.subr.mxu0 0.0
    %754 = vmatpush2.msra.mxu0 0.0
    %755 = vmatprep.subr.mxu0 0.0
    %756 = vmatpush2.msra.mxu0 0.0
    %757 = vmatprep.subr.mxu0 0.0
    %758 = vmatpush2.msra.mxu0 0.0
    %759 = vmatprep.subr.mxu0 0.0
    %760 = vmatpush2.msra.mxu0 0.0
    %761 = vmatprep.subr.mxu0 0.0
    %762 = vmatpush2.msra.mxu0 0.0
    %763 = vmatprep.subr.mxu0 0.0
    %764 = vmatpush2.msra.mxu0 0.0
    %765 = vmatprep.subr.mxu0 0.0
    %766 = vmatpush2.msra.mxu0 0.0
    %767 = vmatprep.subr.mxu0 0.0
    %768 = vmatpush2.msra.mxu0 0.0
    %769 = vmatprep.subr.mxu0 0.0
    %770 = vmatpush2.msra.mxu0 0.0
    %771 = vmatprep.subr.mxu0 0.0
    %772 = vmatpush2.msra.mxu0 0.0
    %773 = vmatprep.subr.mxu0 0.0
    %774 = vmatpush2.msra.mxu0 0.0
    %775 = vmatprep.subr.mxu0 0.0
    %776 = vmatpush2.msra.mxu0 0.0
    %777 = vmatprep.subr.mxu0 0.0
    %778 = vmatpush2.msra.mxu0 0.0
    %779 = vmatprep.subr.mxu0 0.0
    %780 = vmatpush2.msra.mxu0 0.0
    %781 = vmatprep.mubr.f32.mxu0 0.0
    %v782 = vand.u32 %v138, 4294901760
    %783 = vmatmul.mubr.f32.gmra.mxu0 %v782
    %v784 = vpop.f32.mrf.mxu0
    %v785 = vadd.f32 %v646, %v784
    %v786 = vpop.f32.mrf.mxu0
    %787 = vmatprep.mubr.f32.mxu0 0.0
    %v788 = vand.u32 %v141, 4294901760
    %789 = vmatmul.mubr.f32.gmra.mxu0 %v788
    %v790 = vpop.f32.mrf.mxu0
    %v791 = vadd.f32 %v654, %v790
    %v792 = vpop.f32.mrf.mxu0
    %793 = vmatprep.mubr.f32.mxu0 0.0
    %v794 = vand.u32 %v144, 4294901760
    %795 = vmatmul.mubr.f32.gmra.mxu0 %v794
    %v796 = vpop.f32.mrf.mxu0
    %v797 = vadd.f32 %v662, %v796
    %v798 = vpop.f32.mrf.mxu0
    %799 = vmatprep.mubr.f32.mxu0 0.0
    %v800 = vand.u32 %v147, 4294901760
    %801 = vmatmul.mubr.f32.gmra.mxu0 %v800
    %v802 = vpop.f32.mrf.mxu0
    %v803 = vadd.f32 %v670, %v802
    %v804 = vpop.f32.mrf.mxu0
    %805 = vmatprep.mubr.f32.mxu0 0.0
    %v806 = vand.u32 %v150, 4294901760
    %807 = vmatmul.mubr.f32.gmra.mxu0 %v806
    %v808 = vpop.f32.mrf.mxu0
    %v809 = vadd.f32 %v678, %v808
    %v810 = vpop.f32.mrf.mxu0
    %811 = vmatprep.mubr.f32.mxu0 0.0
    %v812 = vand.u32 %v153, 4294901760
    %813 = vmatmul.mubr.f32.gmra.mxu0 %v812
    %v814 = vpop.f32.mrf.mxu0
    %v815 = vadd.f32 %v686, %v814
    %v816 = vpop.f32.mrf.mxu0
    %817 = vmatprep.mubr.f32.mxu0 0.0
    %v818 = vand.u32 %v156, 4294901760
    %819 = vmatmul.mubr.f32.gmra.mxu0 %v818
    %v820 = vpop.f32.mrf.mxu0
    %v821 = vadd.f32 %v694, %v820
    %v822 = vpop.f32.mrf.mxu0
    %823 = vmatprep.mubr.f32.mxu0 0.0
    %v824 = vand.u32 %v159, 4294901760
    %825 = vmatmul.mubr.f32.gmra.mxu0 %v824
    %v826 = vpop.f32.mrf.mxu0
    %v827 = vadd.f32 %v702, %v826
    %v828 = vpop.f32.mrf.mxu0
    %829 = vdwg.mxu0
    %830 = vmatprep.subr.mxu0 0.0
    %831 = vmatpush1.msra.mxu0 0.0
    %832 = vmatprep.subr.mxu0 0.0
    %833 = vmatpush1.msra.mxu0 0.0
    %834 = vmatprep.subr.mxu0 0.0
    %835 = vmatpush1.msra.mxu0 0.0
    %836 = vmatprep.subr.mxu0 0.0
    %837 = vmatpush1.msra.mxu0 0.0
    %838 = vmatprep.subr.mxu0 0.0
    %839 = vmatpush1.msra.mxu0 0.0
    %840 = vmatprep.subr.mxu0 0.0
    %841 = vmatpush1.msra.mxu0 0.0
    %842 = vmatprep.subr.mxu0 0.0
    %843 = vmatpush1.msra.mxu0 0.0
    %844 = vmatprep.subr.mxu0 0.0
    %845 = vmatpush1.msra.mxu0 0.0
    %846 = vmatprep.subr.mxu0 0.0
    %847 = vmatpush1.msra.mxu0 0.0
    %848 = vmatprep.subr.mxu0 0.0
    %849 = vmatpush1.msra.mxu0 0.0
    %850 = vmatprep.subr.mxu0 0.0
    %851 = vmatpush1.msra.mxu0 0.0
    %852 = vmatprep.subr.mxu0 0.0
    %853 = vmatpush1.msra.mxu0 0.0
    %854 = vmatprep.subr.mxu0 0.0
    %v855 = vand.u32 %v128, 4294901760
    %856 = vmatpush1.msra.mxu0 %v855
    %857 = vmatprep.subr.mxu0 0.0
    %v858 = vand.u32 %v127, 4294901760
    %859 = vmatpush1.msra.mxu0 %v858
    %860 = vmatprep.subr.mxu0 0.0
    %v861 = vand.u32 %v126, 4294901760
    %862 = vmatpush1.msra.mxu0 %v861
    %863 = vmatprep.subr.mxu0 0.0
    %v864 = vand.u32 %v125, 4294901760
    %865 = vmatpush1.msra.mxu0 %v864
    %866 = vmatprep.subr.mxu0 0.0
    %867 = vmatpush2.msra.mxu0 0.0
    %868 = vmatprep.subr.mxu0 0.0
    %869 = vmatpush2.msra.mxu0 0.0
    %870 = vmatprep.subr.mxu0 0.0
    %871 = vmatpush2.msra.mxu0 0.0
    %872 = vmatprep.subr.mxu0 0.0
    %873 = vmatpush2.msra.mxu0 0.0
    %874 = vmatprep.subr.mxu0 0.0
    %875 = vmatpush2.msra.mxu0 0.0
    %876 = vmatprep.subr.mxu0 0.0
    %877 = vmatpush2.msra.mxu0 0.0
    %878 = vmatprep.subr.mxu0 0.0
    %879 = vmatpush2.msra.mxu0 0.0
    %880 = vmatprep.subr.mxu0 0.0
    %881 = vmatpush2.msra.mxu0 0.0
    %882 = vmatprep.subr.mxu0 0.0
    %883 = vmatpush2.msra.mxu0 0.0
    %884 = vmatprep.subr.mxu0 0.0
    %885 = vmatpush2.msra.mxu0 0.0
    %886 = vmatprep.subr.mxu0 0.0
    %887 = vmatpush2.msra.mxu0 0.0
    %888 = vmatprep.subr.mxu0 0.0
    %889 = vmatpush2.msra.mxu0 0.0
    %890 = vmatprep.subr.mxu0 0.0
    %891 = vmatpush2.msra.mxu0 0.0
    %892 = vmatprep.subr.mxu0 0.0
    %893 = vmatpush2.msra.mxu0 0.0
    %894 = vmatprep.subr.mxu0 0.0
    %895 = vmatpush2.msra.mxu0 0.0
    %896 = vmatprep.subr.mxu0 0.0
    %897 = vmatpush2.msra.mxu0 0.0
    %898 = vmatprep.mubr.f32.mxu0 0.0
    %v899 = vand.u32 %v138, 4294901760
    %900 = vmatmul.mubr.f32.gmra.mxu0 %v899
    %v901 = vpop.f32.mrf.mxu0
    %v902 = vadd.f32 %v785, %v901
    %v903 = vpop.f32.mrf.mxu0
    %904 = vmatprep.mubr.f32.mxu0 0.0
    %v905 = vand.u32 %v141, 4294901760
    %906 = vmatmul.mubr.f32.gmra.mxu0 %v905
    %v907 = vpop.f32.mrf.mxu0
    %v908 = vadd.f32 %v791, %v907
    %v909 = vpop.f32.mrf.mxu0
    %910 = vmatprep.mubr.f32.mxu0 0.0
    %v911 = vand.u32 %v144, 4294901760
    %912 = vmatmul.mubr.f32.gmra.mxu0 %v911
    %v913 = vpop.f32.mrf.mxu0
    %v914 = vadd.f32 %v797, %v913
    %v915 = vpop.f32.mrf.mxu0
    %916 = vmatprep.mubr.f32.mxu0 0.0
    %v917 = vand.u32 %v147, 4294901760
    %918 = vmatmul.mubr.f32.gmra.mxu0 %v917
    %v919 = vpop.f32.mrf.mxu0
    %v920 = vadd.f32 %v803, %v919
    %v921 = vpop.f32.mrf.mxu0
    %922 = vmatprep.mubr.f32.mxu0 0.0
    %v923 = vand.u32 %v150, 4294901760
    %924 = vmatmul.mubr.f32.gmra.mxu0 %v923
    %v925 = vpop.f32.mrf.mxu0
    %v926 = vadd.f32 %v809, %v925
    %v927 = vpop.f32.mrf.mxu0
    %928 = vmatprep.mubr.f32.mxu0 0.0
    %v929 = vand.u32 %v153, 4294901760
    %930 = vmatmul.mubr.f32.gmra.mxu0 %v929
    %v931 = vpop.f32.mrf.mxu0
    %v932 = vadd.f32 %v815, %v931
    %v933 = vpop.f32.mrf.mxu0
    %934 = vmatprep.mubr.f32.mxu0 0.0
    %v935 = vand.u32 %v156, 4294901760
    %936 = vmatmul.mubr.f32.gmra.mxu0 %v935
    %v937 = vpop.f32.mrf.mxu0
    %v938 = vadd.f32 %v821, %v937
    %v939 = vpop.f32.mrf.mxu0
    %940 = vmatprep.mubr.f32.mxu0 0.0
    %v941 = vand.u32 %v159, 4294901760
    %942 = vmatmul.mubr.f32.gmra.mxu0 %v941
    %v943 = vpop.f32.mrf.mxu0
    %v944 = vadd.f32 %v827, %v943
    %v945 = vpop.f32.mrf.mxu0
    %946 = vdwg.mxu0
    %v947 = vld [vmem:[%s2] sm:$0xff]
    %v948 = vld [vmem:[%s2 + $0x8] sm:$0xff]
    %v949 = vld [vmem:[%s2 + $0x10] sm:$0xff]
    %v950 = vld [vmem:[%s2 + $0x18] sm:$0xff]
    %v951 = vld [vmem:[#allocation2] sm:$0xff]
    %v952 = vld [vmem:[#allocation3] sm:$0xff]
    %v954 = vsel %vm136, %v951, 0
    %956 = vmatprep.subr.mxu0 0.0
    %957 = vmatpush1.msra.mxu0 0.0
    %958 = vmatprep.subr.mxu0 0.0
    %959 = vmatpush1.msra.mxu0 0.0
    %960 = vmatprep.subr.mxu0 0.0
    %961 = vmatpush1.msra.mxu0 0.0
    %962 = vmatprep.subr.mxu0 0.0
    %963 = vmatpush1.msra.mxu0 0.0
    %964 = vmatprep.subr.mxu0 0.0
    %965 = vmatpush1.msra.mxu0 0.0
    %966 = vmatprep.subr.mxu0 0.0
    %967 = vmatpush1.msra.mxu0 0.0
    %968 = vmatprep.subr.mxu0 0.0
    %969 = vmatpush1.msra.mxu0 0.0
    %970 = vmatprep.subr.mxu0 0.0
    %971 = vmatpush1.msra.mxu0 0.0
    %972 = vmatprep.subr.mxu0 0.0
    %973 = vmatpush1.msra.mxu0 0.0
    %974 = vmatprep.subr.mxu0 0.0
    %975 = vmatpush1.msra.mxu0 0.0
    %976 = vmatprep.subr.mxu0 0.0
    %977 = vmatpush1.msra.mxu0 0.0
    %978 = vmatprep.subr.mxu0 0.0
    %979 = vmatpush1.msra.mxu0 0.0
    %980 = vmatprep.subr.mxu0 0.0
    %v981 = vand.u32 %v950, 4294901760
    %982 = vmatpush1.msra.mxu0 %v981
    %983 = vmatprep.subr.mxu0 0.0
    %v984 = vand.u32 %v949, 4294901760
    %985 = vmatpush1.msra.mxu0 %v984
    %986 = vmatprep.subr.mxu0 0.0
    %v987 = vand.u32 %v948, 4294901760
    %988 = vmatpush1.msra.mxu0 %v987
    %989 = vmatprep.subr.mxu0 0.0
    %v990 = vand.u32 %v947, 4294901760
    %991 = vmatpush1.msra.mxu0 %v990
    %992 = vmatprep.subr.mxu0 0.0
    %993 = vmatpush2.msra.mxu0 0.0
    %994 = vmatprep.subr.mxu0 0.0
    %995 = vmatpush2.msra.mxu0 0.0
    %996 = vmatprep.subr.mxu0 0.0
    %997 = vmatpush2.msra.mxu0 0.0
    %998 = vmatprep.subr.mxu0 0.0
    %999 = vmatpush2.msra.mxu0 0.0
    %1000 = vmatprep.subr.mxu0 0.0
    %1001 = vmatpush2.msra.mxu0 0.0
    %1002 = vmatprep.subr.mxu0 0.0
    %1003 = vmatpush2.msra.mxu0 0.0
    %1004 = vmatprep.subr.mxu0 0.0
    %1005 = vmatpush2.msra.mxu0 0.0
    %1006 = vmatprep.subr.mxu0 0.0
    %1007 = vmatpush2.msra.mxu0 0.0
    %1008 = vmatprep.subr.mxu0 0.0
    %1009 = vmatpush2.msra.mxu0 0.0
    %1010 = vmatprep.subr.mxu0 0.0
    %1011 = vmatpush2.msra.mxu0 0.0
    %1012 = vmatprep.subr.mxu0 0.0
    %1013 = vmatpush2.msra.mxu0 0.0
    %1014 = vmatprep.subr.mxu0 0.0
    %1015 = vmatpush2.msra.mxu0 0.0
    %1016 = vmatprep.subr.mxu0 0.0
    %1017 = vmatpush2.msra.mxu0 0.0
    %1018 = vmatprep.subr.mxu0 0.0
    %1019 = vmatpush2.msra.mxu0 0.0
    %1020 = vmatprep.subr.mxu0 0.0
    %1021 = vmatpush2.msra.mxu0 0.0
    %1022 = vmatprep.subr.mxu0 0.0
    %1023 = vmatpush2.msra.mxu0 0.0
    %1024 = vmatprep.mubr.f32.mxu0 0.0
    %v1025 = vand.u32 %v954, 4294901760
    %v1026 = vsub.f32 %v954, %v1025
    %v1027 = vand.u32 %v1026, 4294901760
    %v1028 = vsub.f32 %v1026, %v1027
    %v1029 = vand.u32 %v1028, 4294901760
    %1030 = vmatmul.mubr.f32.gmra.mxu0 %v1029
    %v1031 = vpop.f32.mrf.mxu0
    %v1032 = vadd.f32 0.0, %v1031
    %v1033 = vpop.f32.mrf.mxu0
    %1034 = vdwg.mxu0
    %1035 = vmatprep.subr.mxu0 0.0
    %1036 = vmatpush1.msra.mxu0 0.0
    %1037 = vmatprep.subr.mxu0 0.0
    %1038 = vmatpush1.msra.mxu0 0.0
    %1039 = vmatprep.subr.mxu0 0.0
    %1040 = vmatpush1.msra.mxu0 0.0
    %1041 = vmatprep.subr.mxu0 0.0
    %1042 = vmatpush1.msra.mxu0 0.0
    %1043 = vmatprep.subr.mxu0 0.0
    %1044 = vmatpush1.msra.mxu0 0.0
    %1045 = vmatprep.subr.mxu0 0.0
    %1046 = vmatpush1.msra.mxu0 0.0
    %1047 = vmatprep.subr.mxu0 0.0
    %1048 = vmatpush1.msra.mxu0 0.0
    %1049 = vmatprep.subr.mxu0 0.0
    %1050 = vmatpush1.msra.mxu0 0.0
    %1051 = vmatprep.subr.mxu0 0.0
    %1052 = vmatpush1.msra.mxu0 0.0
    %1053 = vmatprep.subr.mxu0 0.0
    %1054 = vmatpush1.msra.mxu0 0.0
    %1055 = vmatprep.subr.mxu0 0.0
    %1056 = vmatpush1.msra.mxu0 0.0
    %1057 = vmatprep.subr.mxu0 0.0
    %1058 = vmatpush1.msra.mxu0 0.0
    %1059 = vmatprep.subr.mxu0 0.0
    %v1060 = vand.u32 %v950, 4294901760
    %v1061 = vsub.f32 %v950, %v1060
    %v1062 = vand.u32 %v1061, 4294901760
    %v1063 = vsub.f32 %v1061, %v1062
    %v1064 = vand.u32 %v1063, 4294901760
    %1065 = vmatpush1.msra.mxu0 %v1064
    %1066 = vmatprep.subr.mxu0 0.0
    %v1067 = vand.u32 %v949, 4294901760
    %v1068 = vsub.f32 %v949, %v1067
    %v1069 = vand.u32 %v1068, 4294901760
    %v1070 = vsub.f32 %v1068, %v1069
    %v1071 = vand.u32 %v1070, 4294901760
    %1072 = vmatpush1.msra.mxu0 %v1071
    %1073 = vmatprep.subr.mxu0 0.0
    %v1074 = vand.u32 %v948, 4294901760
    %v1075 = vsub.f32 %v948, %v1074
    %v1076 = vand.u32 %v1075, 4294901760
    %v1077 = vsub.f32 %v1075, %v1076
    %v1078 = vand.u32 %v1077, 4294901760
    %1079 = vmatpush1.msra.mxu0 %v1078
    %1080 = vmatprep.subr.mxu0 0.0
    %v1081 = vand.u32 %v947, 4294901760
    %v1082 = vsub.f32 %v947, %v1081
    %v1083 = vand.u32 %v1082, 4294901760
    %v1084 = vsub.f32 %v1082, %v1083
    %v1085 = vand.u32 %v1084, 4294901760
    %1086 = vmatpush1.msra.mxu0 %v1085
    %1087 = vmatprep.subr.mxu0 0.0
    %1088 = vmatpush2.msra.mxu0 0.0
    %1089 = vmatprep.subr.mxu0 0.0
    %1090 = vmatpush2.msra.mxu0 0.0
    %1091 = vmatprep.subr.mxu0 0.0
    %1092 = vmatpush2.msra.mxu0 0.0
    %1093 = vmatprep.subr.mxu0 0.0
    %1094 = vmatpush2.msra.mxu0 0.0
    %1095 = vmatprep.subr.mxu0 0.0
    %1096 = vmatpush2.msra.mxu0 0.0
    %1097 = vmatprep.subr.mxu0 0.0
    %1098 = vmatpush2.msra.mxu0 0.0
    %1099 = vmatprep.subr.mxu0 0.0
    %1100 = vmatpush2.msra.mxu0 0.0
    %1101 = vmatprep.subr.mxu0 0.0
    %1102 = vmatpush2.msra.mxu0 0.0
    %1103 = vmatprep.subr.mxu0 0.0
    %1104 = vmatpush2.msra.mxu0 0.0
    %1105 = vmatprep.subr.mxu0 0.0
    %1106 = vmatpush2.msra.mxu0 0.0
    %1107 = vmatprep.subr.mxu0 0.0
    %1108 = vmatpush2.msra.mxu0 0.0
    %1109 = vmatprep.subr.mxu0 0.0
    %1110 = vmatpush2.msra.mxu0 0.0
    %1111 = vmatprep.subr.mxu0 0.0
    %1112 = vmatpush2.msra.mxu0 0.0
    %1113 = vmatprep.subr.mxu0 0.0
    %1114 = vmatpush2.msra.mxu0 0.0
    %1115 = vmatprep.subr.mxu0 0.0
    %1116 = vmatpush2.msra.mxu0 0.0
    %1117 = vmatprep.subr.mxu0 0.0
    %1118 = vmatpush2.msra.mxu0 0.0
    %1119 = vmatprep.mubr.f32.mxu0 0.0
    %v1120 = vand.u32 %v954, 4294901760
    %1121 = vmatmul.mubr.f32.gmra.mxu0 %v1120
    %v1122 = vpop.f32.mrf.mxu0
    %v1123 = vadd.f32 %v1032, %v1122
    %v1124 = vpop.f32.mrf.mxu0
    %1125 = vdwg.mxu0
    %1126 = vmatprep.subr.mxu0 0.0
    %1127 = vmatpush1.msra.mxu0 0.0
    %1128 = vmatprep.subr.mxu0 0.0
    %1129 = vmatpush1.msra.mxu0 0.0
    %1130 = vmatprep.subr.mxu0 0.0
    %1131 = vmatpush1.msra.mxu0 0.0
    %1132 = vmatprep.subr.mxu0 0.0
    %1133 = vmatpush1.msra.mxu0 0.0
    %1134 = vmatprep.subr.mxu0 0.0
    %1135 = vmatpush1.msra.mxu0 0.0
    %1136 = vmatprep.subr.mxu0 0.0
    %1137 = vmatpush1.msra.mxu0 0.0
    %1138 = vmatprep.subr.mxu0 0.0
    %1139 = vmatpush1.msra.mxu0 0.0
    %1140 = vmatprep.subr.mxu0 0.0
    %1141 = vmatpush1.msra.mxu0 0.0
    %1142 = vmatprep.subr.mxu0 0.0
    %1143 = vmatpush1.msra.mxu0 0.0
    %1144 = vmatprep.subr.mxu0 0.0
    %1145 = vmatpush1.msra.mxu0 0.0
    %1146 = vmatprep.subr.mxu0 0.0
    %1147 = vmatpush1.msra.mxu0 0.0
    %1148 = vmatprep.subr.mxu0 0.0
    %1149 = vmatpush1.msra.mxu0 0.0
    %1150 = vmatprep.subr.mxu0 0.0
    %v1151 = vand.u32 %v950, 4294901760
    %v1152 = vsub.f32 %v950, %v1151
    %1153 = vmatpush1.msra.mxu0 %v1152
    %1154 = vmatprep.subr.mxu0 0.0
    %v1155 = vand.u32 %v949, 4294901760
    %v1156 = vsub.f32 %v949, %v1155
    %1157 = vmatpush1.msra.mxu0 %v1156
    %1158 = vmatprep.subr.mxu0 0.0
    %v1159 = vand.u32 %v948, 4294901760
    %v1160 = vsub.f32 %v948, %v1159
    %1161 = vmatpush1.msra.mxu0 %v1160
    %1162 = vmatprep.subr.mxu0 0.0
    %v1163 = vand.u32 %v947, 4294901760
    %v1164 = vsub.f32 %v947, %v1163
    %1165 = vmatpush1.msra.mxu0 %v1164
    %1166 = vmatprep.subr.mxu0 0.0
    %1167 = vmatpush2.msra.mxu0 0.0
    %1168 = vmatprep.subr.mxu0 0.0
    %1169 = vmatpush2.msra.mxu0 0.0
    %1170 = vmatprep.subr.mxu0 0.0
    %1171 = vmatpush2.msra.mxu0 0.0
    %1172 = vmatprep.subr.mxu0 0.0
    %1173 = vmatpush2.msra.mxu0 0.0
    %1174 = vmatprep.subr.mxu0 0.0
    %1175 = vmatpush2.msra.mxu0 0.0
    %1176 = vmatprep.subr.mxu0 0.0
    %1177 = vmatpush2.msra.mxu0 0.0
    %1178 = vmatprep.subr.mxu0 0.0
    %1179 = vmatpush2.msra.mxu0 0.0
    %1180 = vmatprep.subr.mxu0 0.0
    %1181 = vmatpush2.msra.mxu0 0.0
    %1182 = vmatprep.subr.mxu0 0.0
    %1183 = vmatpush2.msra.mxu0 0.0
    %1184 = vmatprep.subr.mxu0 0.0
    %1185 = vmatpush2.msra.mxu0 0.0
    %1186 = vmatprep.subr.mxu0 0.0
    %1187 = vmatpush2.msra.mxu0 0.0
    %1188 = vmatprep.subr.mxu0 0.0
    %1189 = vmatpush2.msra.mxu0 0.0
    %1190 = vmatprep.subr.mxu0 0.0
    %1191 = vmatpush2.msra.mxu0 0.0
    %1192 = vmatprep.subr.mxu0 0.0
    %1193 = vmatpush2.msra.mxu0 0.0
    %1194 = vmatprep.subr.mxu0 0.0
    %1195 = vmatpush2.msra.mxu0 0.0
    %1196 = vmatprep.subr.mxu0 0.0
    %1197 = vmatpush2.msra.mxu0 0.0
    %1198 = vmatprep.mubr.f32.mxu0 0.0
    %v1199 = vand.u32 %v954, 4294901760
    %v1200 = vsub.f32 %v954, %v1199
    %1201 = vmatmul.mubr.f32.gmra.mxu0 %v1200
    %v1202 = vpop.f32.mrf.mxu0
    %v1203 = vadd.f32 %v1123, %v1202
    %v1204 = vpop.f32.mrf.mxu0
    %1205 = vdwg.mxu0
    %1206 = vmatprep.subr.mxu0 0.0
    %1207 = vmatpush1.msra.mxu0 0.0
    %1208 = vmatprep.subr.mxu0 0.0
    %1209 = vmatpush1.msra.mxu0 0.0
    %1210 = vmatprep.subr.mxu0 0.0
    %1211 = vmatpush1.msra.mxu0 0.0
    %1212 = vmatprep.subr.mxu0 0.0
    %1213 = vmatpush1.msra.mxu0 0.0
    %1214 = vmatprep.subr.mxu0 0.0
    %1215 = vmatpush1.msra.mxu0 0.0
    %1216 = vmatprep.subr.mxu0 0.0
    %1217 = vmatpush1.msra.mxu0 0.0
    %1218 = vmatprep.subr.mxu0 0.0
    %1219 = vmatpush1.msra.mxu0 0.0
    %1220 = vmatprep.subr.mxu0 0.0
    %1221 = vmatpush1.msra.mxu0 0.0
    %1222 = vmatprep.subr.mxu0 0.0
    %1223 = vmatpush1.msra.mxu0 0.0
    %1224 = vmatprep.subr.mxu0 0.0
    %1225 = vmatpush1.msra.mxu0 0.0
    %1226 = vmatprep.subr.mxu0 0.0
    %1227 = vmatpush1.msra.mxu0 0.0
    %1228 = vmatprep.subr.mxu0 0.0
    %1229 = vmatpush1.msra.mxu0 0.0
    %1230 = vmatprep.subr.mxu0 0.0
    %v1231 = vand.u32 %v950, 4294901760
    %1232 = vmatpush1.msra.mxu0 %v1231
    %1233 = vmatprep.subr.mxu0 0.0
    %v1234 = vand.u32 %v949, 4294901760
    %1235 = vmatpush1.msra.mxu0 %v1234
    %1236 = vmatprep.subr.mxu0 0.0
    %v1237 = vand.u32 %v948, 4294901760
    %1238 = vmatpush1.msra.mxu0 %v1237
    %1239 = vmatprep.subr.mxu0 0.0
    %v1240 = vand.u32 %v947, 4294901760
    %1241 = vmatpush1.msra.mxu0 %v1240
    %1242 = vmatprep.subr.mxu0 0.0
    %1243 = vmatpush2.msra.mxu0 0.0
    %1244 = vmatprep.subr.mxu0 0.0
    %1245 = vmatpush2.msra.mxu0 0.0
    %1246 = vmatprep.subr.mxu0 0.0
    %1247 = vmatpush2.msra.mxu0 0.0
    %1248 = vmatprep.subr.mxu0 0.0
    %1249 = vmatpush2.msra.mxu0 0.0
    %1250 = vmatprep.subr.mxu0 0.0
    %1251 = vmatpush2.msra.mxu0 0.0
    %1252 = vmatprep.subr.mxu0 0.0
    %1253 = vmatpush2.msra.mxu0 0.0
    %1254 = vmatprep.subr.mxu0 0.0
    %1255 = vmatpush2.msra.mxu0 0.0
    %1256 = vmatprep.subr.mxu0 0.0
    %1257 = vmatpush2.msra.mxu0 0.0
    %1258 = vmatprep.subr.mxu0 0.0
    %1259 = vmatpush2.msra.mxu0 0.0
    %1260 = vmatprep.subr.mxu0 0.0
    %1261 = vmatpush2.msra.mxu0 0.0
    %1262 = vmatprep.subr.mxu0 0.0
    %1263 = vmatpush2.msra.mxu0 0.0
    %1264 = vmatprep.subr.mxu0 0.0
    %1265 = vmatpush2.msra.mxu0 0.0
    %1266 = vmatprep.subr.mxu0 0.0
    %1267 = vmatpush2.msra.mxu0 0.0
    %1268 = vmatprep.subr.mxu0 0.0
    %1269 = vmatpush2.msra.mxu0 0.0
    %1270 = vmatprep.subr.mxu0 0.0
    %1271 = vmatpush2.msra.mxu0 0.0
    %1272 = vmatprep.subr.mxu0 0.0
    %1273 = vmatpush2.msra.mxu0 0.0
    %1274 = vmatprep.mubr.f32.mxu0 0.0
    %v1275 = vand.u32 %v954, 4294901760
    %v1276 = vsub.f32 %v954, %v1275
    %v1277 = vand.u32 %v1276, 4294901760
    %1278 = vmatmul.mubr.f32.gmra.mxu0 %v1277
    %v1279 = vpop.f32.mrf.mxu0
    %v1280 = vadd.f32 %v1203, %v1279
    %v1281 = vpop.f32.mrf.mxu0
    %1282 = vdwg.mxu0
    %1283 = vmatprep.subr.mxu0 0.0
    %1284 = vmatpush1.msra.mxu0 0.0
    %1285 = vmatprep.subr.mxu0 0.0
    %1286 = vmatpush1.msra.mxu0 0.0
    %1287 = vmatprep.subr.mxu0 0.0
    %1288 = vmatpush1.msra.mxu0 0.0
    %1289 = vmatprep.subr.mxu0 0.0
    %1290 = vmatpush1.msra.mxu0 0.0
    %1291 = vmatprep.subr.mxu0 0.0
    %1292 = vmatpush1.msra.mxu0 0.0
    %1293 = vmatprep.subr.mxu0 0.0
    %1294 = vmatpush1.msra.mxu0 0.0
    %1295 = vmatprep.subr.mxu0 0.0
    %1296 = vmatpush1.msra.mxu0 0.0
    %1297 = vmatprep.subr.mxu0 0.0
    %1298 = vmatpush1.msra.mxu0 0.0
    %1299 = vmatprep.subr.mxu0 0.0
    %1300 = vmatpush1.msra.mxu0 0.0
    %1301 = vmatprep.subr.mxu0 0.0
    %1302 = vmatpush1.msra.mxu0 0.0
    %1303 = vmatprep.subr.mxu0 0.0
    %1304 = vmatpush1.msra.mxu0 0.0
    %1305 = vmatprep.subr.mxu0 0.0
    %1306 = vmatpush1.msra.mxu0 0.0
    %1307 = vmatprep.subr.mxu0 0.0
    %v1308 = vand.u32 %v950, 4294901760
    %v1309 = vsub.f32 %v950, %v1308
    %v1310 = vand.u32 %v1309, 4294901760
    %1311 = vmatpush1.msra.mxu0 %v1310
    %1312 = vmatprep.subr.mxu0 0.0
    %v1313 = vand.u32 %v949, 4294901760
    %v1314 = vsub.f32 %v949, %v1313
    %v1315 = vand.u32 %v1314, 4294901760
    %1316 = vmatpush1.msra.mxu0 %v1315
    %1317 = vmatprep.subr.mxu0 0.0
    %v1318 = vand.u32 %v948, 4294901760
    %v1319 = vsub.f32 %v948, %v1318
    %v1320 = vand.u32 %v1319, 4294901760
    %1321 = vmatpush1.msra.mxu0 %v1320
    %1322 = vmatprep.subr.mxu0 0.0
    %v1323 = vand.u32 %v947, 4294901760
    %v1324 = vsub.f32 %v947, %v1323
    %v1325 = vand.u32 %v1324, 4294901760
    %1326 = vmatpush1.msra.mxu0 %v1325
    %1327 = vmatprep.subr.mxu0 0.0
    %1328 = vmatpush2.msra.mxu0 0.0
    %1329 = vmatprep.subr.mxu0 0.0
    %1330 = vmatpush2.msra.mxu0 0.0
    %1331 = vmatprep.subr.mxu0 0.0
    %1332 = vmatpush2.msra.mxu0 0.0
    %1333 = vmatprep.subr.mxu0 0.0
    %1334 = vmatpush2.msra.mxu0 0.0
    %1335 = vmatprep.subr.mxu0 0.0
    %1336 = vmatpush2.msra.mxu0 0.0
    %1337 = vmatprep.subr.mxu0 0.0
    %1338 = vmatpush2.msra.mxu0 0.0
    %1339 = vmatprep.subr.mxu0 0.0
    %1340 = vmatpush2.msra.mxu0 0.0
    %1341 = vmatprep.subr.mxu0 0.0
    %1342 = vmatpush2.msra.mxu0 0.0
    %1343 = vmatprep.subr.mxu0 0.0
    %1344 = vmatpush2.msra.mxu0 0.0
    %1345 = vmatprep.subr.mxu0 0.0
    %1346 = vmatpush2.msra.mxu0 0.0
    %1347 = vmatprep.subr.mxu0 0.0
    %1348 = vmatpush2.msra.mxu0 0.0
    %1349 = vmatprep.subr.mxu0 0.0
    %1350 = vmatpush2.msra.mxu0 0.0
    %1351 = vmatprep.subr.mxu0 0.0
    %1352 = vmatpush2.msra.mxu0 0.0
    %1353 = vmatprep.subr.mxu0 0.0
    %1354 = vmatpush2.msra.mxu0 0.0
    %1355 = vmatprep.subr.mxu0 0.0
    %1356 = vmatpush2.msra.mxu0 0.0
    %1357 = vmatprep.subr.mxu0 0.0
    %1358 = vmatpush2.msra.mxu0 0.0
    %1359 = vmatprep.mubr.f32.mxu0 0.0
    %v1360 = vand.u32 %v954, 4294901760
    %1361 = vmatmul.mubr.f32.gmra.mxu0 %v1360
    %v1362 = vpop.f32.mrf.mxu0
    %v1363 = vadd.f32 %v1280, %v1362
    %v1364 = vpop.f32.mrf.mxu0
    %1365 = vdwg.mxu0
    %1366 = vmatprep.subr.mxu0 0.0
    %1367 = vmatpush1.msra.mxu0 0.0
    %1368 = vmatprep.subr.mxu0 0.0
    %1369 = vmatpush1.msra.mxu0 0.0
    %1370 = vmatprep.subr.mxu0 0.0
    %1371 = vmatpush1.msra.mxu0 0.0
    %1372 = vmatprep.subr.mxu0 0.0
    %1373 = vmatpush1.msra.mxu0 0.0
    %1374 = vmatprep.subr.mxu0 0.0
    %1375 = vmatpush1.msra.mxu0 0.0
    %1376 = vmatprep.subr.mxu0 0.0
    %1377 = vmatpush1.msra.mxu0 0.0
    %1378 = vmatprep.subr.mxu0 0.0
    %1379 = vmatpush1.msra.mxu0 0.0
    %1380 = vmatprep.subr.mxu0 0.0
    %1381 = vmatpush1.msra.mxu0 0.0
    %1382 = vmatprep.subr.mxu0 0.0
    %1383 = vmatpush1.msra.mxu0 0.0
    %1384 = vmatprep.subr.mxu0 0.0
    %1385 = vmatpush1.msra.mxu0 0.0
    %1386 = vmatprep.subr.mxu0 0.0
    %1387 = vmatpush1.msra.mxu0 0.0
    %1388 = vmatprep.subr.mxu0 0.0
    %1389 = vmatpush1.msra.mxu0 0.0
    %1390 = vmatprep.subr.mxu0 0.0
    %v1391 = vand.u32 %v950, 4294901760
    %1392 = vmatpush1.msra.mxu0 %v1391
    %1393 = vmatprep.subr.mxu0 0.0
    %v1394 = vand.u32 %v949, 4294901760
    %1395 = vmatpush1.msra.mxu0 %v1394
    %1396 = vmatprep.subr.mxu0 0.0
    %v1397 = vand.u32 %v948, 4294901760
    %1398 = vmatpush1.msra.mxu0 %v1397
    %1399 = vmatprep.subr.mxu0 0.0
    %v1400 = vand.u32 %v947, 4294901760
    %1401 = vmatpush1.msra.mxu0 %v1400
    %1402 = vmatprep.subr.mxu0 0.0
    %1403 = vmatpush2.msra.mxu0 0.0
    %1404 = vmatprep.subr.mxu0 0.0
    %1405 = vmatpush2.msra.mxu0 0.0
    %1406 = vmatprep.subr.mxu0 0.0
    %1407 = vmatpush2.msra.mxu0 0.0
    %1408 = vmatprep.subr.mxu0 0.0
    %1409 = vmatpush2.msra.mxu0 0.0
    %1410 = vmatprep.subr.mxu0 0.0
    %1411 = vmatpush2.msra.mxu0 0.0
    %1412 = vmatprep.subr.mxu0 0.0
    %1413 = vmatpush2.msra.mxu0 0.0
    %1414 = vmatprep.subr.mxu0 0.0
    %1415 = vmatpush2.msra.mxu0 0.0
    %1416 = vmatprep.subr.mxu0 0.0
    %1417 = vmatpush2.msra.mxu0 0.0
    %1418 = vmatprep.subr.mxu0 0.0
    %1419 = vmatpush2.msra.mxu0 0.0
    %1420 = vmatprep.subr.mxu0 0.0
    %1421 = vmatpush2.msra.mxu0 0.0
    %1422 = vmatprep.subr.mxu0 0.0
    %1423 = vmatpush2.msra.mxu0 0.0
    %1424 = vmatprep.subr.mxu0 0.0
    %1425 = vmatpush2.msra.mxu0 0.0
    %1426 = vmatprep.subr.mxu0 0.0
    %1427 = vmatpush2.msra.mxu0 0.0
    %1428 = vmatprep.subr.mxu0 0.0
    %1429 = vmatpush2.msra.mxu0 0.0
    %1430 = vmatprep.subr.mxu0 0.0
    %1431 = vmatpush2.msra.mxu0 0.0
    %1432 = vmatprep.subr.mxu0 0.0
    %1433 = vmatpush2.msra.mxu0 0.0
    %1434 = vmatprep.mubr.f32.mxu0 0.0
    %v1435 = vand.u32 %v954, 4294901760
    %1436 = vmatmul.mubr.f32.gmra.mxu0 %v1435
    %v1437 = vpop.f32.mrf.mxu0
    %v1438 = vadd.f32 %v1363, %v1437
    %v1439 = vpop.f32.mrf.mxu0
    %1440 = vdwg.mxu0
    %v1441 = vadd.f32 %v902, %v1438
    %v1442 = vxor.u32 %v1441, 2147483648
    %v1443 = vmul.f32 %v1442, 1.442695
    %v1444 = vpow.pop %v1443
    %v1445 = vadd.f32 %v1444, 1.0
    %v1446 = vrcp.pop %v1445
    %v1447 = vmul.f32 1.0, %v1446
    %v1448 = vtanh.pop %v1441
    %1450 = vrot.lane.b32.xlu0 %v952, 32
    %v1451 = vpop.permute.xlu0 %1450
    %v1453 = vmul.f32 %v1447, %v1451
    %1455 = vrot.lane.b32.xlu0 %v1448, 64
    %v1456 = vpop.permute.xlu0 %1455
    %v1458 = vmul.f32 %v1447, %v1456
    %1460 = vrot.lane.b32.xlu0 %v1458, 32
    %v1461 = vpop.permute.xlu0 %1460
    %v1463 = vadd.f32 %v1453, %v1461
    %v1464 = vtanh.pop %v1463
    %1466 = vrot.lane.b32.xlu0 %v1464, 64
    %v1467 = vpop.permute.xlu0 %1466
    %v1469 = vmul.f32 %v1447, %v1467
    %1471 = vrot.lane.b32.xlu0 %v1469, 32
    %v1472 = vpop.permute.xlu0 %1471
    %v1473 = vsel %vm136, %v1472, 0
    %1475 = vmatprep.subr.mxu0 0.0
    %1476 = vmatpush1.msra.mxu0 0.0
    %1477 = vmatprep.subr.mxu0 0.0
    %1478 = vmatpush1.msra.mxu0 0.0
    %1479 = vmatprep.subr.mxu0 0.0
    %1480 = vmatpush1.msra.mxu0 0.0
    %1481 = vmatprep.subr.mxu0 0.0
    %1482 = vmatpush1.msra.mxu0 0.0
    %1483 = vmatprep.subr.mxu0 0.0
    %1484 = vmatpush1.msra.mxu0 0.0
    %1485 = vmatprep.subr.mxu0 0.0
    %1486 = vmatpush1.msra.mxu0 0.0
    %1487 = vmatprep.subr.mxu0 0.0
    %1488 = vmatpush1.msra.mxu0 0.0
    %1489 = vmatprep.subr.mxu0 0.0
    %1490 = vmatpush1.msra.mxu0 0.0
    %1491 = vmatprep.subr.mxu0 0.0
    %1492 = vmatpush1.msra.mxu0 0.0
    %1493 = vmatprep.subr.mxu0 0.0
    %1494 = vmatpush1.msra.mxu0 0.0
    %1495 = vmatprep.subr.mxu0 0.0
    %1496 = vmatpush1.msra.mxu0 0.0
    %1497 = vmatprep.subr.mxu0 0.0
    %1498 = vmatpush1.msra.mxu0 0.0
    %1499 = vmatprep.subr.mxu0 0.0
    %v1500 = vand.u32 %v950, 4294901760
    %1501 = vmatpush1.msra.mxu0 %v1500
    %1502 = vmatprep.subr.mxu0 0.0
    %v1503 = vand.u32 %v949, 4294901760
    %1504 = vmatpush1.msra.mxu0 %v1503
    %1505 = vmatprep.subr.mxu0 0.0
    %v1506 = vand.u32 %v948, 4294901760
    %1507 = vmatpush1.msra.mxu0 %v1506
    %1508 = vmatprep.subr.mxu0 0.0
    %v1509 = vand.u32 %v947, 4294901760
    %1510 = vmatpush1.msra.mxu0 %v1509
    %1511 = vmatprep.subr.mxu0 0.0
    %1512 = vmatpush2.msra.mxu0 0.0
    %1513 = vmatprep.subr.mxu0 0.0
    %1514 = vmatpush2.msra.mxu0 0.0
    %1515 = vmatprep.subr.mxu0 0.0
    %1516 = vmatpush2.msra.mxu0 0.0
    %1517 = vmatprep.subr.mxu0 0.0
    %1518 = vmatpush2.msra.mxu0 0.0
    %1519 = vmatprep.subr.mxu0 0.0
    %1520 = vmatpush2.msra.mxu0 0.0
    %1521 = vmatprep.subr.mxu0 0.0
    %1522 = vmatpush2.msra.mxu0 0.0
    %1523 = vmatprep.subr.mxu0 0.0
    %1524 = vmatpush2.msra.mxu0 0.0
    %1525 = vmatprep.subr.mxu0 0.0
    %1526 = vmatpush2.msra.mxu0 0.0
    %1527 = vmatprep.subr.mxu0 0.0
    %1528 = vmatpush2.msra.mxu0 0.0
    %1529 = vmatprep.subr.mxu0 0.0
    %1530 = vmatpush2.msra.mxu0 0.0
    %1531 = vmatprep.subr.mxu0 0.0
    %1532 = vmatpush2.msra.mxu0 0.0
    %1533 = vmatprep.subr.mxu0 0.0
    %1534 = vmatpush2.msra.mxu0 0.0
    %1535 = vmatprep.subr.mxu0 0.0
    %1536 = vmatpush2.msra.mxu0 0.0
    %1537 = vmatprep.subr.mxu0 0.0
    %1538 = vmatpush2.msra.mxu0 0.0
    %1539 = vmatprep.subr.mxu0 0.0
    %1540 = vmatpush2.msra.mxu0 0.0
    %1541 = vmatprep.subr.mxu0 0.0
    %1542 = vmatpush2.msra.mxu0 0.0
    %1543 = vmatprep.mubr.f32.mxu0 0.0
    %v1544 = vand.u32 %v1473, 4294901760
    %v1545 = vsub.f32 %v1473, %v1544
    %v1546 = vand.u32 %v1545, 4294901760
    %v1547 = vsub.f32 %v1545, %v1546
    %v1548 = vand.u32 %v1547, 4294901760
    %1549 = vmatmul.mubr.f32.gmra.mxu0 %v1548
    %v1550 = vpop.f32.mrf.mxu0
    %v1551 = vadd.f32 0.0, %v1550
    %v1552 = vpop.f32.mrf.mxu0
    %1553 = vdwg.mxu0
    %1554 = vmatprep.subr.mxu0 0.0
    %1555 = vmatpush1.msra.mxu0 0.0
    %1556 = vmatprep.subr.mxu0 0.0
    %1557 = vmatpush1.msra.mxu0 0.0
    %1558 = vmatprep.subr.mxu0 0.0
    %1559 = vmatpush1.msra.mxu0 0.0
    %1560 = vmatprep.subr.mxu0 0.0
    %1561 = vmatpush1.msra.mxu0 0.0
    %1562 = vmatprep.subr.mxu0 0.0
    %1563 = vmatpush1.msra.mxu0 0.0
    %1564 = vmatprep.subr.mxu0 0.0
    %1565 = vmatpush1.msra.mxu0 0.0
    %1566 = vmatprep.subr.mxu0 0.0
    %1567 = vmatpush1.msra.mxu0 0.0
    %1568 = vmatprep.subr.mxu0 0.0
    %1569 = vmatpush1.msra.mxu0 0.0
    %1570 = vmatprep.subr.mxu0 0.0
    %1571 = vmatpush1.msra.mxu0 0.0
    %1572 = vmatprep.subr.mxu0 0.0
    %1573 = vmatpush1.msra.mxu0 0.0
    %1574 = vmatprep.subr.mxu0 0.0
    %1575 = vmatpush1.msra.mxu0 0.0
    %1576 = vmatprep.subr.mxu0 0.0
    %1577 = vmatpush1.msra.mxu0 0.0
    %1578 = vmatprep.subr.mxu0 0.0
    %v1579 = vand.u32 %v950, 4294901760
    %v1580 = vsub.f32 %v950, %v1579
    %v1581 = vand.u32 %v1580, 4294901760
    %v1582 = vsub.f32 %v1580, %v1581
    %v1583 = vand.u32 %v1582, 4294901760
    %1584 = vmatpush1.msra.mxu0 %v1583
    %1585 = vmatprep.subr.mxu0 0.0
    %v1586 = vand.u32 %v949, 4294901760
    %v1587 = vsub.f32 %v949, %v1586
    %v1588 = vand.u32 %v1587, 4294901760
    %v1589 = vsub.f32 %v1587, %v1588
    %v1590 = vand.u32 %v1589, 4294901760
    %1591 = vmatpush1.msra.mxu0 %v1590
    %1592 = vmatprep.subr.mxu0 0.0
    %v1593 = vand.u32 %v948, 4294901760
    %v1594 = vsub.f32 %v948, %v1593
    %v1595 = vand.u32 %v1594, 4294901760
    %v1596 = vsub.f32 %v1594, %v1595
    %v1597 = vand.u32 %v1596, 4294901760
    %1598 = vmatpush1.msra.mxu0 %v1597
    %1599 = vmatprep.subr.mxu0 0.0
    %v1600 = vand.u32 %v947, 4294901760
    %v1601 = vsub.f32 %v947, %v1600
    %v1602 = vand.u32 %v1601, 4294901760
    %v1603 = vsub.f32 %v1601, %v1602
    %v1604 = vand.u32 %v1603, 4294901760
    %1605 = vmatpush1.msra.mxu0 %v1604
    %1606 = vmatprep.subr.mxu0 0.0
    %1607 = vmatpush2.msra.mxu0 0.0
    %1608 = vmatprep.subr.mxu0 0.0
    %1609 = vmatpush2.msra.mxu0 0.0
    %1610 = vmatprep.subr.mxu0 0.0
    %1611 = vmatpush2.msra.mxu0 0.0
    %1612 = vmatprep.subr.mxu0 0.0
    %1613 = vmatpush2.msra.mxu0 0.0
    %1614 = vmatprep.subr.mxu0 0.0
    %1615 = vmatpush2.msra.mxu0 0.0
    %1616 = vmatprep.subr.mxu0 0.0
    %1617 = vmatpush2.msra.mxu0 0.0
    %1618 = vmatprep.subr.mxu0 0.0
    %1619 = vmatpush2.msra.mxu0 0.0
    %1620 = vmatprep.subr.mxu0 0.0
    %1621 = vmatpush2.msra.mxu0 0.0
    %1622 = vmatprep.subr.mxu0 0.0
    %1623 = vmatpush2.msra.mxu0 0.0
    %1624 = vmatprep.subr.mxu0 0.0
    %1625 = vmatpush2.msra.mxu0 0.0
    %1626 = vmatprep.subr.mxu0 0.0
    %1627 = vmatpush2.msra.mxu0 0.0
    %1628 = vmatprep.subr.mxu0 0.0
    %1629 = vmatpush2.msra.mxu0 0.0
    %1630 = vmatprep.subr.mxu0 0.0
    %1631 = vmatpush2.msra.mxu0 0.0
    %1632 = vmatprep.subr.mxu0 0.0
    %1633 = vmatpush2.msra.mxu0 0.0
    %1634 = vmatprep.subr.mxu0 0.0
    %1635 = vmatpush2.msra.mxu0 0.0
    %1636 = vmatprep.subr.mxu0 0.0
    %1637 = vmatpush2.msra.mxu0 0.0
    %1638 = vmatprep.mubr.f32.mxu0 0.0
    %v1639 = vand.u32 %v1473, 4294901760
    %1640 = vmatmul.mubr.f32.gmra.mxu0 %v1639
    %v1641 = vpop.f32.mrf.mxu0
    %v1642 = vadd.f32 %v1551, %v1641
    %v1643 = vpop.f32.mrf.mxu0
    %1644 = vdwg.mxu0
    %1645 = vmatprep.subr.mxu0 0.0
    %1646 = vmatpush1.msra.mxu0 0.0
    %1647 = vmatprep.subr.mxu0 0.0
    %1648 = vmatpush1.msra.mxu0 0.0
    %1649 = vmatprep.subr.mxu0 0.0
    %1650 = vmatpush1.msra.mxu0 0.0
    %1651 = vmatprep.subr.mxu0 0.0
    %1652 = vmatpush1.msra.mxu0 0.0
    %1653 = vmatprep.subr.mxu0 0.0
    %1654 = vmatpush1.msra.mxu0 0.0
    %1655 = vmatprep.subr.mxu0 0.0
    %1656 = vmatpush1.msra.mxu0 0.0
    %1657 = vmatprep.subr.mxu0 0.0
    %1658 = vmatpush1.msra.mxu0 0.0
    %1659 = vmatprep.subr.mxu0 0.0
    %1660 = vmatpush1.msra.mxu0 0.0
    %1661 = vmatprep.subr.mxu0 0.0
    %1662 = vmatpush1.msra.mxu0 0.0
    %1663 = vmatprep.subr.mxu0 0.0
    %1664 = vmatpush1.msra.mxu0 0.0
    %1665 = vmatprep.subr.mxu0 0.0
    %1666 = vmatpush1.msra.mxu0 0.0
    %1667 = vmatprep.subr.mxu0 0.0
    %1668 = vmatpush1.msra.mxu0 0.0
    %1669 = vmatprep.subr.mxu0 0.0
    %v1670 = vand.u32 %v950, 4294901760
    %v1671 = vsub.f32 %v950, %v1670
    %1672 = vmatpush1.msra.mxu0 %v1671
    %1673 = vmatprep.subr.mxu0 0.0
    %v1674 = vand.u32 %v949, 4294901760
    %v1675 = vsub.f32 %v949, %v1674
    %1676 = vmatpush1.msra.mxu0 %v1675
    %1677 = vmatprep.subr.mxu0 0.0
    %v1678 = vand.u32 %v948, 4294901760
    %v1679 = vsub.f32 %v948, %v1678
    %1680 = vmatpush1.msra.mxu0 %v1679
    %1681 = vmatprep.subr.mxu0 0.0
    %v1682 = vand.u32 %v947, 4294901760
    %v1683 = vsub.f32 %v947, %v1682
    %1684 = vmatpush1.msra.mxu0 %v1683
    %1685 = vmatprep.subr.mxu0 0.0
    %1686 = vmatpush2.msra.mxu0 0.0
    %1687 = vmatprep.subr.mxu0 0.0
    %1688 = vmatpush2.msra.mxu0 0.0
    %1689 = vmatprep.subr.mxu0 0.0
    %1690 = vmatpush2.msra.mxu0 0.0
    %1691 = vmatprep.subr.mxu0 0.0
    %1692 = vmatpush2.msra.mxu0 0.0
    %1693 = vmatprep.subr.mxu0 0.0
    %1694 = vmatpush2.msra.mxu0 0.0
    %1695 = vmatprep.subr.mxu0 0.0
    %1696 = vmatpush2.msra.mxu0 0.0
    %1697 = vmatprep.subr.mxu0 0.0
    %1698 = vmatpush2.msra.mxu0 0.0
    %1699 = vmatprep.subr.mxu0 0.0
    %1700 = vmatpush2.msra.mxu0 0.0
    %1701 = vmatprep.subr.mxu0 0.0
    %1702 = vmatpush2.msra.mxu0 0.0
    %1703 = vmatprep.subr.mxu0 0.0
    %1704 = vmatpush2.msra.mxu0 0.0
    %1705 = vmatprep.subr.mxu0 0.0
    %1706 = vmatpush2.msra.mxu0 0.0
    %1707 = vmatprep.subr.mxu0 0.0
    %1708 = vmatpush2.msra.mxu0 0.0
    %1709 = vmatprep.subr.mxu0 0.0
    %1710 = vmatpush2.msra.mxu0 0.0
    %1711 = vmatprep.subr.mxu0 0.0
    %1712 = vmatpush2.msra.mxu0 0.0
    %1713 = vmatprep.subr.mxu0 0.0
    %1714 = vmatpush2.msra.mxu0 0.0
    %1715 = vmatprep.subr.mxu0 0.0
    %1716 = vmatpush2.msra.mxu0 0.0
    %1717 = vmatprep.mubr.f32.mxu0 0.0
    %v1718 = vand.u32 %v1473, 4294901760
    %v1719 = vsub.f32 %v1473, %v1718
    %1720 = vmatmul.mubr.f32.gmra.mxu0 %v1719
    %v1721 = vpop.f32.mrf.mxu0
    %v1722 = vadd.f32 %v1642, %v1721
    %v1723 = vpop.f32.mrf.mxu0
    %1724 = vdwg.mxu0
    %1725 = vmatprep.subr.mxu0 0.0
    %1726 = vmatpush1.msra.mxu0 0.0
    %1727 = vmatprep.subr.mxu0 0.0
    %1728 = vmatpush1.msra.mxu0 0.0
    %1729 = vmatprep.subr.mxu0 0.0
    %1730 = vmatpush1.msra.mxu0 0.0
    %1731 = vmatprep.subr.mxu0 0.0
    %1732 = vmatpush1.msra.mxu0 0.0
    %1733 = vmatprep.subr.mxu0 0.0
    %1734 = vmatpush1.msra.mxu0 0.0
    %1735 = vmatprep.subr.mxu0 0.0
    %1736 = vmatpush1.msra.mxu0 0.0
    %1737 = vmatprep.subr.mxu0 0.0
    %1738 = vmatpush1.msra.mxu0 0.0
    %1739 = vmatprep.subr.mxu0 0.0
    %1740 = vmatpush1.msra.mxu0 0.0
    %1741 = vmatprep.subr.mxu0 0.0
    %1742 = vmatpush1.msra.mxu0 0.0
    %1743 = vmatprep.subr.mxu0 0.0
    %1744 = vmatpush1.msra.mxu0 0.0
    %1745 = vmatprep.subr.mxu0 0.0
    %1746 = vmatpush1.msra.mxu0 0.0
    %1747 = vmatprep.subr.mxu0 0.0
    %1748 = vmatpush1.msra.mxu0 0.0
    %1749 = vmatprep.subr.mxu0 0.0
    %v1750 = vand.u32 %v950, 4294901760
    %1751 = vmatpush1.msra.mxu0 %v1750
    %1752 = vmatprep.subr.mxu0 0.0
    %v1753 = vand.u32 %v949, 4294901760
    %1754 = vmatpush1.msra.mxu0 %v1753
    %1755 = vmatprep.subr.mxu0 0.0
    %v1756 = vand.u32 %v948, 4294901760
    %1757 = vmatpush1.msra.mxu0 %v1756
    %1758 = vmatprep.subr.mxu0 0.0
    %v1759 = vand.u32 %v947, 4294901760
    %1760 = vmatpush1.msra.mxu0 %v1759
    %1761 = vmatprep.subr.mxu0 0.0
    %1762 = vmatpush2.msra.mxu0 0.0
    %1763 = vmatprep.subr.mxu0 0.0
    %1764 = vmatpush2.msra.mxu0 0.0
    %1765 = vmatprep.subr.mxu0 0.0
    %1766 = vmatpush2.msra.mxu0 0.0
    %1767 = vmatprep.subr.mxu0 0.0
    %1768 = vmatpush2.msra.mxu0 0.0
    %1769 = vmatprep.subr.mxu0 0.0
    %1770 = vmatpush2.msra.mxu0 0.0
    %1771 = vmatprep.subr.mxu0 0.0
    %1772 = vmatpush2.msra.mxu0 0.0
    %1773 = vmatprep.subr.mxu0 0.0
    %1774 = vmatpush2.msra.mxu0 0.0
    %1775 = vmatprep.subr.mxu0 0.0
    %1776 = vmatpush2.msra.mxu0 0.0
    %1777 = vmatprep.subr.mxu0 0.0
    %1778 = vmatpush2.msra.mxu0 0.0
    %1779 = vmatprep.subr.mxu0 0.0
    %1780 = vmatpush2.msra.mxu0 0.0
    %1781 = vmatprep.subr.mxu0 0.0
    %1782 = vmatpush2.msra.mxu0 0.0
    %1783 = vmatprep.subr.mxu0 0.0
    %1784 = vmatpush2.msra.mxu0 0.0
    %1785 = vmatprep.subr.mxu0 0.0
    %1786 = vmatpush2.msra.mxu0 0.0
    %1787 = vmatprep.subr.mxu0 0.0
    %1788 = vmatpush2.msra.mxu0 0.0
    %1789 = vmatprep.subr.mxu0 0.0
    %1790 = vmatpush2.msra.mxu0 0.0
    %1791 = vmatprep.subr.mxu0 0.0
    %1792 = vmatpush2.msra.mxu0 0.0
    %1793 = vmatprep.mubr.f32.mxu0 0.0
    %v1794 = vand.u32 %v1473, 4294901760
    %v1795 = vsub.f32 %v1473, %v1794
    %v1796 = vand.u32 %v1795, 4294901760
    %1797 = vmatmul.mubr.f32.gmra.mxu0 %v1796
    %v1798 = vpop.f32.mrf.mxu0
    %v1799 = vadd.f32 %v1722, %v1798
    %v1800 = vpop.f32.mrf.mxu0
    %1801 = vdwg.mxu0
    %1802 = vmatprep.subr.mxu0 0.0
    %1803 = vmatpush1.msra.mxu0 0.0
    %1804 = vmatprep.subr.mxu0 0.0
    %1805 = vmatpush1.msra.mxu0 0.0
    %1806 = vmatprep.subr.mxu0 0.0
    %1807 = vmatpush1.msra.mxu0 0.0
    %1808 = vmatprep.subr.mxu0 0.0
    %1809 = vmatpush1.msra.mxu0 0.0
    %1810 = vmatprep.subr.mxu0 0.0
    %1811 = vmatpush1.msra.mxu0 0.0
    %1812 = vmatprep.subr.mxu0 0.0
    %1813 = vmatpush1.msra.mxu0 0.0
    %1814 = vmatprep.subr.mxu0 0.0
    %1815 = vmatpush1.msra.mxu0 0.0
    %1816 = vmatprep.subr.mxu0 0.0
    %1817 = vmatpush1.msra.mxu0 0.0
    %1818 = vmatprep.subr.mxu0 0.0
    %1819 = vmatpush1.msra.mxu0 0.0
    %1820 = vmatprep.subr.mxu0 0.0
    %1821 = vmatpush1.msra.mxu0 0.0
    %1822 = vmatprep.subr.mxu0 0.0
    %1823 = vmatpush1.msra.mxu0 0.0
    %1824 = vmatprep.subr.mxu0 0.0
    %1825 = vmatpush1.msra.mxu0 0.0
    %1826 = vmatprep.subr.mxu0 0.0
    %v1827 = vand.u32 %v950, 4294901760
    %v1828 = vsub.f32 %v950, %v1827
    %v1829 = vand.u32 %v1828, 4294901760
    %1830 = vmatpush1.msra.mxu0 %v1829
    %1831 = vmatprep.subr.mxu0 0.0
    %v1832 = vand.u32 %v949, 4294901760
    %v1833 = vsub.f32 %v949, %v1832
    %v1834 = vand.u32 %v1833, 4294901760
    %1835 = vmatpush1.msra.mxu0 %v1834
    %1836 = vmatprep.subr.mxu0 0.0
    %v1837 = vand.u32 %v948, 4294901760
    %v1838 = vsub.f32 %v948, %v1837
    %v1839 = vand.u32 %v1838, 4294901760
    %1840 = vmatpush1.msra.mxu0 %v1839
    %1841 = vmatprep.subr.mxu0 0.0
    %v1842 = vand.u32 %v947, 4294901760
    %v1843 = vsub.f32 %v947, %v1842
    %v1844 = vand.u32 %v1843, 4294901760
    %1845 = vmatpush1.msra.mxu0 %v1844
    %1846 = vmatprep.subr.mxu0 0.0
    %1847 = vmatpush2.msra.mxu0 0.0
    %1848 = vmatprep.subr.mxu0 0.0
    %1849 = vmatpush2.msra.mxu0 0.0
    %1850 = vmatprep.subr.mxu0 0.0
    %1851 = vmatpush2.msra.mxu0 0.0
    %1852 = vmatprep.subr.mxu0 0.0
    %1853 = vmatpush2.msra.mxu0 0.0
    %1854 = vmatprep.subr.mxu0 0.0
    %1855 = vmatpush2.msra.mxu0 0.0
    %1856 = vmatprep.subr.mxu0 0.0
    %1857 = vmatpush2.msra.mxu0 0.0
    %1858 = vmatprep.subr.mxu0 0.0
    %1859 = vmatpush2.msra.mxu0 0.0
    %1860 = vmatprep.subr.mxu0 0.0
    %1861 = vmatpush2.msra.mxu0 0.0
    %1862 = vmatprep.subr.mxu0 0.0
    %1863 = vmatpush2.msra.mxu0 0.0
    %1864 = vmatprep.subr.mxu0 0.0
    %1865 = vmatpush2.msra.mxu0 0.0
    %1866 = vmatprep.subr.mxu0 0.0
    %1867 = vmatpush2.msra.mxu0 0.0
    %1868 = vmatprep.subr.mxu0 0.0
    %1869 = vmatpush2.msra.mxu0 0.0
    %1870 = vmatprep.subr.mxu0 0.0
    %1871 = vmatpush2.msra.mxu0 0.0
    %1872 = vmatprep.subr.mxu0 0.0
    %1873 = vmatpush2.msra.mxu0 0.0
    %1874 = vmatprep.subr.mxu0 0.0
    %1875 = vmatpush2.msra.mxu0 0.0
    %1876 = vmatprep.subr.mxu0 0.0
    %1877 = vmatpush2.msra.mxu0 0.0
    %1878 = vmatprep.mubr.f32.mxu0 0.0
    %v1879 = vand.u32 %v1473, 4294901760
    %1880 = vmatmul.mubr.f32.gmra.mxu0 %v1879
    %v1881 = vpop.f32.mrf.mxu0
    %v1882 = vadd.f32 %v1799, %v1881
    %v1883 = vpop.f32.mrf.mxu0
    %1884 = vdwg.mxu0
    %1885 = vmatprep.subr.mxu0 0.0
    %1886 = vmatpush1.msra.mxu0 0.0
    %1887 = vmatprep.subr.mxu0 0.0
    %1888 = vmatpush1.msra.mxu0 0.0
    %1889 = vmatprep.subr.mxu0 0.0
    %1890 = vmatpush1.msra.mxu0 0.0
    %1891 = vmatprep.subr.mxu0 0.0
    %1892 = vmatpush1.msra.mxu0 0.0
    %1893 = vmatprep.subr.mxu0 0.0
    %1894 = vmatpush1.msra.mxu0 0.0
    %1895 = vmatprep.subr.mxu0 0.0
    %1896 = vmatpush1.msra.mxu0 0.0
    %1897 = vmatprep.subr.mxu0 0.0
    %1898 = vmatpush1.msra.mxu0 0.0
    %1899 = vmatprep.subr.mxu0 0.0
    %1900 = vmatpush1.msra.mxu0 0.0
    %1901 = vmatprep.subr.mxu0 0.0
    %1902 = vmatpush1.msra.mxu0 0.0
    %1903 = vmatprep.subr.mxu0 0.0
    %1904 = vmatpush1.msra.mxu0 0.0
    %1905 = vmatprep.subr.mxu0 0.0
    %1906 = vmatpush1.msra.mxu0 0.0
    %1907 = vmatprep.subr.mxu0 0.0
    %1908 = vmatpush1.msra.mxu0 0.0
    %1909 = vmatprep.subr.mxu0 0.0
    %v1910 = vand.u32 %v950, 4294901760
    %1911 = vmatpush1.msra.mxu0 %v1910
    %1912 = vmatprep.subr.mxu0 0.0
    %v1913 = vand.u32 %v949, 4294901760
    %1914 = vmatpush1.msra.mxu0 %v1913
    %1915 = vmatprep.subr.mxu0 0.0
    %v1916 = vand.u32 %v948, 4294901760
    %1917 = vmatpush1.msra.mxu0 %v1916
    %1918 = vmatprep.subr.mxu0 0.0
    %v1919 = vand.u32 %v947, 4294901760
    %1920 = vmatpush1.msra.mxu0 %v1919
    %1921 = vmatprep.subr.mxu0 0.0
    %1922 = vmatpush2.msra.mxu0 0.0
    %1923 = vmatprep.subr.mxu0 0.0
    %1924 = vmatpush2.msra.mxu0 0.0
    %1925 = vmatprep.subr.mxu0 0.0
    %1926 = vmatpush2.msra.mxu0 0.0
    %1927 = vmatprep.subr.mxu0 0.0
    %1928 = vmatpush2.msra.mxu0 0.0
    %1929 = vmatprep.subr.mxu0 0.0
    %1930 = vmatpush2.msra.mxu0 0.0
    %1931 = vmatprep.subr.mxu0 0.0
    %1932 = vmatpush2.msra.mxu0 0.0
    %1933 = vmatprep.subr.mxu0 0.0
    %1934 = vmatpush2.msra.mxu0 0.0
    %1935 = vmatprep.subr.mxu0 0.0
    %1936 = vmatpush2.msra.mxu0 0.0
    %1937 = vmatprep.subr.mxu0 0.0
    %1938 = vmatpush2.msra.mxu0 0.0
    %1939 = vmatprep.subr.mxu0 0.0
    %1940 = vmatpush2.msra.mxu0 0.0
    %1941 = vmatprep.subr.mxu0 0.0
    %1942 = vmatpush2.msra.mxu0 0.0
    %1943 = vmatprep.subr.mxu0 0.0
    %1944 = vmatpush2.msra.mxu0 0.0
    %1945 = vmatprep.subr.mxu0 0.0
    %1946 = vmatpush2.msra.mxu0 0.0
    %1947 = vmatprep.subr.mxu0 0.0
    %1948 = vmatpush2.msra.mxu0 0.0
    %1949 = vmatprep.subr.mxu0 0.0
    %1950 = vmatpush2.msra.mxu0 0.0
    %1951 = vmatprep.subr.mxu0 0.0
    %1952 = vmatpush2.msra.mxu0 0.0
    %1953 = vmatprep.mubr.f32.mxu0 0.0
    %v1954 = vand.u32 %v1473, 4294901760
    %1955 = vmatmul.mubr.f32.gmra.mxu0 %v1954
    %v1956 = vpop.f32.mrf.mxu0
    %v1957 = vadd.f32 %v1882, %v1956
    %v1958 = vpop.f32.mrf.mxu0
    %1959 = vdwg.mxu0
    %v1960 = vadd.f32 %v908, %v1957
    %v1961 = vxor.u32 %v1960, 2147483648
    %v1962 = vmul.f32 %v1961, 1.442695
    %v1963 = vpow.pop %v1962
    %v1964 = vadd.f32 %v1963, 1.0
    %v1965 = vrcp.pop %v1964
    %v1966 = vmul.f32 1.0, %v1965
    %v1967 = vtanh.pop %v1960
    %v1968 = vmul.f32 %v1966, %v1463
    %1970 = vrot.lane.b32.xlu0 %v1967, 64
    %v1971 = vpop.permute.xlu0 %1970
    %v1973 = vmul.f32 %v1966, %v1971
    %1975 = vrot.lane.b32.xlu0 %v1973, 32
    %v1976 = vpop.permute.xlu0 %1975
    %v1978 = vadd.f32 %v1968, %v1976
    %v1979 = vtanh.pop %v1978
    %1981 = vrot.lane.b32.xlu0 %v1979, 64
    %v1982 = vpop.permute.xlu0 %1981
    %v1984 = vmul.f32 %v1966, %v1982
    %1986 = vrot.lane.b32.xlu0 %v1984, 32
    %v1987 = vpop.permute.xlu0 %1986
    %v1988 = vsel %vm136, %v1987, 0
    %1990 = vmatprep.subr.mxu0 0.0
    %1991 = vmatpush1.msra.mxu0 0.0
    %1992 = vmatprep.subr.mxu0 0.0
    %1993 = vmatpush1.msra.mxu0 0.0
    %1994 = vmatprep.subr.mxu0 0.0
    %1995 = vmatpush1.msra.mxu0 0.0
    %1996 = vmatprep.subr.mxu0 0.0
    %1997 = vmatpush1.msra.mxu0 0.0
    %1998 = vmatprep.subr.mxu0 0.0
    %1999 = vmatpush1.msra.mxu0 0.0
    %2000 = vmatprep.subr.mxu0 0.0
    %2001 = vmatpush1.msra.mxu0 0.0
    %2002 = vmatprep.subr.mxu0 0.0
    %2003 = vmatpush1.msra.mxu0 0.0
    %2004 = vmatprep.subr.mxu0 0.0
    %2005 = vmatpush1.msra.mxu0 0.0
    %2006 = vmatprep.subr.mxu0 0.0
    %2007 = vmatpush1.msra.mxu0 0.0
    %2008 = vmatprep.subr.mxu0 0.0
    %2009 = vmatpush1.msra.mxu0 0.0
    %2010 = vmatprep.subr.mxu0 0.0
    %2011 = vmatpush1.msra.mxu0 0.0
    %2012 = vmatprep.subr.mxu0 0.0
    %2013 = vmatpush1.msra.mxu0 0.0
    %2014 = vmatprep.subr.mxu0 0.0
    %v2015 = vand.u32 %v950, 4294901760
    %2016 = vmatpush1.msra.mxu0 %v2015
    %2017 = vmatprep.subr.mxu0 0.0
    %v2018 = vand.u32 %v949, 4294901760
    %2019 = vmatpush1.msra.mxu0 %v2018
    %2020 = vmatprep.subr.mxu0 0.0
    %v2021 = vand.u32 %v948, 4294901760
    %2022 = vmatpush1.msra.mxu0 %v2021
    %2023 = vmatprep.subr.mxu0 0.0
    %v2024 = vand.u32 %v947, 4294901760
    %2025 = vmatpush1.msra.mxu0 %v2024
    %2026 = vmatprep.subr.mxu0 0.0
    %2027 = vmatpush2.msra.mxu0 0.0
    %2028 = vmatprep.subr.mxu0 0.0
    %2029 = vmatpush2.msra.mxu0 0.0
    %2030 = vmatprep.subr.mxu0 0.0
    %2031 = vmatpush2.msra.mxu0 0.0
    %2032 = vmatprep.subr.mxu0 0.0
    %2033 = vmatpush2.msra.mxu0 0.0
    %2034 = vmatprep.subr.mxu0 0.0
    %2035 = vmatpush2.msra.mxu0 0.0
    %2036 = vmatprep.subr.mxu0 0.0
    %2037 = vmatpush2.msra.mxu0 0.0
    %2038 = vmatprep.subr.mxu0 0.0
    %2039 = vmatpush2.msra.mxu0 0.0
    %2040 = vmatprep.subr.mxu0 0.0
    %2041 = vmatpush2.msra.mxu0 0.0
    %2042 = vmatprep.subr.mxu0 0.0
    %2043 = vmatpush2.msra.mxu0 0.0
    %2044 = vmatprep.subr.mxu0 0.0
    %2045 = vmatpush2.msra.mxu0 0.0
    %2046 = vmatprep.subr.mxu0 0.0
    %2047 = vmatpush2.msra.mxu0 0.0
    %2048 = vmatprep.subr.mxu0 0.0
    %2049 = vmatpush2.msra.mxu0 0.0
    %2050 = vmatprep.subr.mxu0 0.0
    %2051 = vmatpush2.msra.mxu0 0.0
    %2052 = vmatprep.subr.mxu0 0.0
    %2053 = vmatpush2.msra.mxu0 0.0
    %2054 = vmatprep.subr.mxu0 0.0
    %2055 = vmatpush2.msra.mxu0 0.0
    %2056 = vmatprep.subr.mxu0 0.0
    %2057 = vmatpush2.msra.mxu0 0.0
    %2058 = vmatprep.mubr.f32.mxu0 0.0
    %v2059 = vand.u32 %v1988, 4294901760
    %v2060 = vsub.f32 %v1988, %v2059
    %v2061 = vand.u32 %v2060, 4294901760
    %v2062 = vsub.f32 %v2060, %v2061
    %v2063 = vand.u32 %v2062, 4294901760
    %2064 = vmatmul.mubr.f32.gmra.mxu0 %v2063
    %v2065 = vpop.f32.mrf.mxu0
    %v2066 = vadd.f32 0.0, %v2065
    %v2067 = vpop.f32.mrf.mxu0
    %2068 = vdwg.mxu0
    %2069 = vmatprep.subr.mxu0 0.0
    %2070 = vmatpush1.msra.mxu0 0.0
    %2071 = vmatprep.subr.mxu0 0.0
    %2072 = vmatpush1.msra.mxu0 0.0
    %2073 = vmatprep.subr.mxu0 0.0
    %2074 = vmatpush1.msra.mxu0 0.0
    %2075 = vmatprep.subr.mxu0 0.0
    %2076 = vmatpush1.msra.mxu0 0.0
    %2077 = vmatprep.subr.mxu0 0.0
    %2078 = vmatpush1.msra.mxu0 0.0
    %2079 = vmatprep.subr.mxu0 0.0
    %2080 = vmatpush1.msra.mxu0 0.0
    %2081 = vmatprep.subr.mxu0 0.0
    %2082 = vmatpush1.msra.mxu0 0.0
    %2083 = vmatprep.subr.mxu0 0.0
    %2084 = vmatpush1.msra.mxu0 0.0
    %2085 = vmatprep.subr.mxu0 0.0
    %2086 = vmatpush1.msra.mxu0 0.0
    %2087 = vmatprep.subr.mxu0 0.0
    %2088 = vmatpush1.msra.mxu0 0.0
    %2089 = vmatprep.subr.mxu0 0.0
    %2090 = vmatpush1.msra.mxu0 0.0
    %2091 = vmatprep.subr.mxu0 0.0
    %2092 = vmatpush1.msra.mxu0 0.0
    %2093 = vmatprep.subr.mxu0 0.0
    %v2094 = vand.u32 %v950, 4294901760
    %v2095 = vsub.f32 %v950, %v2094
    %v2096 = vand.u32 %v2095, 4294901760
    %v2097 = vsub.f32 %v2095, %v2096
    %v2098 = vand.u32 %v2097, 4294901760
    %2099 = vmatpush1.msra.mxu0 %v2098
    %2100 = vmatprep.subr.mxu0 0.0
    %v2101 = vand.u32 %v949, 4294901760
    %v2102 = vsub.f32 %v949, %v2101
    %v2103 = vand.u32 %v2102, 4294901760
    %v2104 = vsub.f32 %v2102, %v2103
    %v2105 = vand.u32 %v2104, 4294901760
    %2106 = vmatpush1.msra.mxu0 %v2105
    %2107 = vmatprep.subr.mxu0 0.0
    %v2108 = vand.u32 %v948, 4294901760
    %v2109 = vsub.f32 %v948, %v2108
    %v2110 = vand.u32 %v2109, 4294901760
    %v2111 = vsub.f32 %v2109, %v2110
    %v2112 = vand.u32 %v2111, 4294901760
    %2113 = vmatpush1.msra.mxu0 %v2112
    %2114 = vmatprep.subr.mxu0 0.0
    %v2115 = vand.u32 %v947, 4294901760
    %v2116 = vsub.f32 %v947, %v2115
    %v2117 = vand.u32 %v2116, 4294901760
    %v2118 = vsub.f32 %v2116, %v2117
    %v2119 = vand.u32 %v2118, 4294901760
    %2120 = vmatpush1.msra.mxu0 %v2119
    %2121 = vmatprep.subr.mxu0 0.0
    %2122 = vmatpush2.msra.mxu0 0.0
    %2123 = vmatprep.subr.mxu0 0.0
    %2124 = vmatpush2.msra.mxu0 0.0
    %2125 = vmatprep.subr.mxu0 0.0
    %2126 = vmatpush2.msra.mxu0 0.0
    %2127 = vmatprep.subr.mxu0 0.0
    %2128 = vmatpush2.msra.mxu0 0.0
    %2129 = vmatprep.subr.mxu0 0.0
    %2130 = vmatpush2.msra.mxu0 0.0
    %2131 = vmatprep.subr.mxu0 0.0
    %2132 = vmatpush2.msra.mxu0 0.0
    %2133 = vmatprep.subr.mxu0 0.0
    %2134 = vmatpush2.msra.mxu0 0.0
    %2135 = vmatprep.subr.mxu0 0.0
    %2136 = vmatpush2.msra.mxu0 0.0
    %2137 = vmatprep.subr.mxu0 0.0
    %2138 = vmatpush2.msra.mxu0 0.0
    %2139 = vmatprep.subr.mxu0 0.0
    %2140 = vmatpush2.msra.mxu0 0.0
    %2141 = vmatprep.subr.mxu0 0.0
    %2142 = vmatpush2.msra.mxu0 0.0
    %2143 = vmatprep.subr.mxu0 0.0
    %2144 = vmatpush2.msra.mxu0 0.0
    %2145 = vmatprep.subr.mxu0 0.0
    %2146 = vmatpush2.msra.mxu0 0.0
    %2147 = vmatprep.subr.mxu0 0.0
    %2148 = vmatpush2.msra.mxu0 0.0
    %2149 = vmatprep.subr.mxu0 0.0
    %2150 = vmatpush2.msra.mxu0 0.0
    %2151 = vmatprep.subr.mxu0 0.0
    %2152 = vmatpush2.msra.mxu0 0.0
    %2153 = vmatprep.mubr.f32.mxu0 0.0
    %v2154 = vand.u32 %v1988, 4294901760
    %2155 = vmatmul.mubr.f32.gmra.mxu0 %v2154
    %v2156 = vpop.f32.mrf.mxu0
    %v2157 = vadd.f32 %v2066, %v2156
    %v2158 = vpop.f32.mrf.mxu0
    %2159 = vdwg.mxu0
    %2160 = vmatprep.subr.mxu0 0.0
    %2161 = vmatpush1.msra.mxu0 0.0
    %2162 = vmatprep.subr.mxu0 0.0
    %2163 = vmatpush1.msra.mxu0 0.0
    %2164 = vmatprep.subr.mxu0 0.0
    %2165 = vmatpush1.msra.mxu0 0.0
    %2166 = vmatprep.subr.mxu0 0.0
    %2167 = vmatpush1.msra.mxu0 0.0
    %2168 = vmatprep.subr.mxu0 0.0
    %2169 = vmatpush1.msra.mxu0 0.0
    %2170 = vmatprep.subr.mxu0 0.0
    %2171 = vmatpush1.msra.mxu0 0.0
    %2172 = vmatprep.subr.mxu0 0.0
    %2173 = vmatpush1.msra.mxu0 0.0
    %2174 = vmatprep.subr.mxu0 0.0
    %2175 = vmatpush1.msra.mxu0 0.0
    %2176 = vmatprep.subr.mxu0 0.0
    %2177 = vmatpush1.msra.mxu0 0.0
    %2178 = vmatprep.subr.mxu0 0.0
    %2179 = vmatpush1.msra.mxu0 0.0
    %2180 = vmatprep.subr.mxu0 0.0
    %2181 = vmatpush1.msra.mxu0 0.0
    %2182 = vmatprep.subr.mxu0 0.0
    %2183 = vmatpush1.msra.mxu0 0.0
    %2184 = vmatprep.subr.mxu0 0.0
    %v2185 = vand.u32 %v950, 4294901760
    %v2186 = vsub.f32 %v950, %v2185
    %2187 = vmatpush1.msra.mxu0 %v2186
    %2188 = vmatprep.subr.mxu0 0.0
    %v2189 = vand.u32 %v949, 4294901760
    %v2190 = vsub.f32 %v949, %v2189
    %2191 = vmatpush1.msra.mxu0 %v2190
    %2192 = vmatprep.subr.mxu0 0.0
    %v2193 = vand.u32 %v948, 4294901760
    %v2194 = vsub.f32 %v948, %v2193
    %2195 = vmatpush1.msra.mxu0 %v2194
    %2196 = vmatprep.subr.mxu0 0.0
    %v2197 = vand.u32 %v947, 4294901760
    %v2198 = vsub.f32 %v947, %v2197
    %2199 = vmatpush1.msra.mxu0 %v2198
    %2200 = vmatprep.subr.mxu0 0.0
    %2201 = vmatpush2.msra.mxu0 0.0
    %2202 = vmatprep.subr.mxu0 0.0
    %2203 = vmatpush2.msra.mxu0 0.0
    %2204 = vmatprep.subr.mxu0 0.0
    %2205 = vmatpush2.msra.mxu0 0.0
    %2206 = vmatprep.subr.mxu0 0.0
    %2207 = vmatpush2.msra.mxu0 0.0
    %2208 = vmatprep.subr.mxu0 0.0
    %2209 = vmatpush2.msra.mxu0 0.0
    %2210 = vmatprep.subr.mxu0 0.0
    %2211 = vmatpush2.msra.mxu0 0.0
    %2212 = vmatprep.subr.mxu0 0.0
    %2213 = vmatpush2.msra.mxu0 0.0
    %2214 = vmatprep.subr.mxu0 0.0
    %2215 = vmatpush2.msra.mxu0 0.0
    %2216 = vmatprep.subr.mxu0 0.0
    %2217 = vmatpush2.msra.mxu0 0.0
    %2218 = vmatprep.subr.mxu0 0.0
    %2219 = vmatpush2.msra.mxu0 0.0
    %2220 = vmatprep.subr.mxu0 0.0
    %2221 = vmatpush2.msra.mxu0 0.0
    %2222 = vmatprep.subr.mxu0 0.0
    %2223 = vmatpush2.msra.mxu0 0.0
    %2224 = vmatprep.subr.mxu0 0.0
    %2225 = vmatpush2.msra.mxu0 0.0
    %2226 = vmatprep.subr.mxu0 0.0
    %2227 = vmatpush2.msra.mxu0 0.0
    %2228 = vmatprep.subr.mxu0 0.0
    %2229 = vmatpush2.msra.mxu0 0.0
    %2230 = vmatprep.subr.mxu0 0.0
    %2231 = vmatpush2.msra.mxu0 0.0
    %2232 = vmatprep.mubr.f32.mxu0 0.0
    %v2233 = vand.u32 %v1988, 4294901760
    %v2234 = vsub.f32 %v1988, %v2233
    %2235 = vmatmul.mubr.f32.gmra.mxu0 %v2234
    %v2236 = vpop.f32.mrf.mxu0
    %v2237 = vadd.f32 %v2157, %v2236
    %v2238 = vpop.f32.mrf.mxu0
    %2239 = vdwg.mxu0
    %2240 = vmatprep.subr.mxu0 0.0
    %2241 = vmatpush1.msra.mxu0 0.0
    %2242 = vmatprep.subr.mxu0 0.0
    %2243 = vmatpush1.msra.mxu0 0.0
    %2244 = vmatprep.subr.mxu0 0.0
    %2245 = vmatpush1.msra.mxu0 0.0
    %2246 = vmatprep.subr.mxu0 0.0
    %2247 = vmatpush1.msra.mxu0 0.0
    %2248 = vmatprep.subr.mxu0 0.0
    %2249 = vmatpush1.msra.mxu0 0.0
    %2250 = vmatprep.subr.mxu0 0.0
    %2251 = vmatpush1.msra.mxu0 0.0
    %2252 = vmatprep.subr.mxu0 0.0
    %2253 = vmatpush1.msra.mxu0 0.0
    %2254 = vmatprep.subr.mxu0 0.0
    %2255 = vmatpush1.msra.mxu0 0.0
    %2256 = vmatprep.subr.mxu0 0.0
    %2257 = vmatpush1.msra.mxu0 0.0
    %2258 = vmatprep.subr.mxu0 0.0
    %2259 = vmatpush1.msra.mxu0 0.0
    %2260 = vmatprep.subr.mxu0 0.0
    %2261 = vmatpush1.msra.mxu0 0.0
    %2262 = vmatprep.subr.mxu0 0.0
    %2263 = vmatpush1.msra.mxu0 0.0
    %2264 = vmatprep.subr.mxu0 0.0
    %v2265 = vand.u32 %v950, 4294901760
    %2266 = vmatpush1.msra.mxu0 %v2265
    %2267 = vmatprep.subr.mxu0 0.0
    %v2268 = vand.u32 %v949, 4294901760
    %2269 = vmatpush1.msra.mxu0 %v2268
    %2270 = vmatprep.subr.mxu0 0.0
    %v2271 = vand.u32 %v948, 4294901760
    %2272 = vmatpush1.msra.mxu0 %v2271
    %2273 = vmatprep.subr.mxu0 0.0
    %v2274 = vand.u32 %v947, 4294901760
    %2275 = vmatpush1.msra.mxu0 %v2274
    %2276 = vmatprep.subr.mxu0 0.0
    %2277 = vmatpush2.msra.mxu0 0.0
    %2278 = vmatprep.subr.mxu0 0.0
    %2279 = vmatpush2.msra.mxu0 0.0
    %2280 = vmatprep.subr.mxu0 0.0
    %2281 = vmatpush2.msra.mxu0 0.0
    %2282 = vmatprep.subr.mxu0 0.0
    %2283 = vmatpush2.msra.mxu0 0.0
    %2284 = vmatprep.subr.mxu0 0.0
    %2285 = vmatpush2.msra.mxu0 0.0
    %2286 = vmatprep.subr.mxu0 0.0
    %2287 = vmatpush2.msra.mxu0 0.0
    %2288 = vmatprep.subr.mxu0 0.0
    %2289 = vmatpush2.msra.mxu0 0.0
    %2290 = vmatprep.subr.mxu0 0.0
    %2291 = vmatpush2.msra.mxu0 0.0
    %2292 = vmatprep.subr.mxu0 0.0
    %2293 = vmatpush2.msra.mxu0 0.0
    %2294 = vmatprep.subr.mxu0 0.0
    %2295 = vmatpush2.msra.mxu0 0.0
    %2296 = vmatprep.subr.mxu0 0.0
    %2297 = vmatpush2.msra.mxu0 0.0
    %2298 = vmatprep.subr.mxu0 0.0
    %2299 = vmatpush2.msra.mxu0 0.0
    %2300 = vmatprep.subr.mxu0 0.0
    %2301 = vmatpush2.msra.mxu0 0.0
    %2302 = vmatprep.subr.mxu0 0.0
    %2303 = vmatpush2.msra.mxu0 0.0
    %2304 = vmatprep.subr.mxu0 0.0
    %2305 = vmatpush2.msra.mxu0 0.0
    %2306 = vmatprep.subr.mxu0 0.0
    %2307 = vmatpush2.msra.mxu0 0.0
    %2308 = vmatprep.mubr.f32.mxu0 0.0
    %v2309 = vand.u32 %v1988, 4294901760
    %v2310 = vsub.f32 %v1988, %v2309
    %v2311 = vand.u32 %v2310, 4294901760
    %2312 = vmatmul.mubr.f32.gmra.mxu0 %v2311
    %v2313 = vpop.f32.mrf.mxu0
    %v2314 = vadd.f32 %v2237, %v2313
    %v2315 = vpop.f32.mrf.mxu0
    %2316 = vdwg.mxu0
    %2317 = vmatprep.subr.mxu0 0.0
    %2318 = vmatpush1.msra.mxu0 0.0
    %2319 = vmatprep.subr.mxu0 0.0
    %2320 = vmatpush1.msra.mxu0 0.0
    %2321 = vmatprep.subr.mxu0 0.0
    %2322 = vmatpush1.msra.mxu0 0.0
    %2323 = vmatprep.subr.mxu0 0.0
    %2324 = vmatpush1.msra.mxu0 0.0
    %2325 = vmatprep.subr.mxu0 0.0
    %2326 = vmatpush1.msra.mxu0 0.0
    %2327 = vmatprep.subr.mxu0 0.0
    %2328 = vmatpush1.msra.mxu0 0.0
    %2329 = vmatprep.subr.mxu0 0.0
    %2330 = vmatpush1.msra.mxu0 0.0
    %2331 = vmatprep.subr.mxu0 0.0
    %2332 = vmatpush1.msra.mxu0 0.0
    %2333 = vmatprep.subr.mxu0 0.0
    %2334 = vmatpush1.msra.mxu0 0.0
    %2335 = vmatprep.subr.mxu0 0.0
    %2336 = vmatpush1.msra.mxu0 0.0
    %2337 = vmatprep.subr.mxu0 0.0
    %2338 = vmatpush1.msra.mxu0 0.0
    %2339 = vmatprep.subr.mxu0 0.0
    %2340 = vmatpush1.msra.mxu0 0.0
    %2341 = vmatprep.subr.mxu0 0.0
    %v2342 = vand.u32 %v950, 4294901760
    %v2343 = vsub.f32 %v950, %v2342
    %v2344 = vand.u32 %v2343, 4294901760
    %2345 = vmatpush1.msra.mxu0 %v2344
    %2346 = vmatprep.subr.mxu0 0.0
    %v2347 = vand.u32 %v949, 4294901760
    %v2348 = vsub.f32 %v949, %v2347
    %v2349 = vand.u32 %v2348, 4294901760
    %2350 = vmatpush1.msra.mxu0 %v2349
    %2351 = vmatprep.subr.mxu0 0.0
    %v2352 = vand.u32 %v948, 4294901760
    %v2353 = vsub.f32 %v948, %v2352
    %v2354 = vand.u32 %v2353, 4294901760
    %2355 = vmatpush1.msra.mxu0 %v2354
    %2356 = vmatprep.subr.mxu0 0.0
    %v2357 = vand.u32 %v947, 4294901760
    %v2358 = vsub.f32 %v947, %v2357
    %v2359 = vand.u32 %v2358, 4294901760
    %2360 = vmatpush1.msra.mxu0 %v2359
    %2361 = vmatprep.subr.mxu0 0.0
    %2362 = vmatpush2.msra.mxu0 0.0
    %2363 = vmatprep.subr.mxu0 0.0
    %2364 = vmatpush2.msra.mxu0 0.0
    %2365 = vmatprep.subr.mxu0 0.0
    %2366 = vmatpush2.msra.mxu0 0.0
    %2367 = vmatprep.subr.mxu0 0.0
    %2368 = vmatpush2.msra.mxu0 0.0
    %2369 = vmatprep.subr.mxu0 0.0
    %2370 = vmatpush2.msra.mxu0 0.0
    %2371 = vmatprep.subr.mxu0 0.0
    %2372 = vmatpush2.msra.mxu0 0.0
    %2373 = vmatprep.subr.mxu0 0.0
    %2374 = vmatpush2.msra.mxu0 0.0
    %2375 = vmatprep.subr.mxu0 0.0
    %2376 = vmatpush2.msra.mxu0 0.0
    %2377 = vmatprep.subr.mxu0 0.0
    %2378 = vmatpush2.msra.mxu0 0.0
    %2379 = vmatprep.subr.mxu0 0.0
    %2380 = vmatpush2.msra.mxu0 0.0
    %2381 = vmatprep.subr.mxu0 0.0
    %2382 = vmatpush2.msra.mxu0 0.0
    %2383 = vmatprep.subr.mxu0 0.0
    %2384 = vmatpush2.msra.mxu0 0.0
    %2385 = vmatprep.subr.mxu0 0.0
    %2386 = vmatpush2.msra.mxu0 0.0
    %2387 = vmatprep.subr.mxu0 0.0
    %2388 = vmatpush2.msra.mxu0 0.0
    %2389 = vmatprep.subr.mxu0 0.0
    %2390 = vmatpush2.msra.mxu0 0.0
    %2391 = vmatprep.subr.mxu0 0.0
    %2392 = vmatpush2.msra.mxu0 0.0
    %2393 = vmatprep.mubr.f32.mxu0 0.0
    %v2394 = vand.u32 %v1988, 4294901760
    %2395 = vmatmul.mubr.f32.gmra.mxu0 %v2394
    %v2396 = vpop.f32.mrf.mxu0
    %v2397 = vadd.f32 %v2314, %v2396
    %v2398 = vpop.f32.mrf.mxu0
    %2399 = vdwg.mxu0
    %2400 = vmatprep.subr.mxu0 0.0
    %2401 = vmatpush1.msra.mxu0 0.0
    %2402 = vmatprep.subr.mxu0 0.0
    %2403 = vmatpush1.msra.mxu0 0.0
    %2404 = vmatprep.subr.mxu0 0.0
    %2405 = vmatpush1.msra.mxu0 0.0
    %2406 = vmatprep.subr.mxu0 0.0
    %2407 = vmatpush1.msra.mxu0 0.0
    %2408 = vmatprep.subr.mxu0 0.0
    %2409 = vmatpush1.msra.mxu0 0.0
    %2410 = vmatprep.subr.mxu0 0.0
    %2411 = vmatpush1.msra.mxu0 0.0
    %2412 = vmatprep.subr.mxu0 0.0
    %2413 = vmatpush1.msra.mxu0 0.0
    %2414 = vmatprep.subr.mxu0 0.0
    %2415 = vmatpush1.msra.mxu0 0.0
    %2416 = vmatprep.subr.mxu0 0.0
    %2417 = vmatpush1.msra.mxu0 0.0
    %2418 = vmatprep.subr.mxu0 0.0
    %2419 = vmatpush1.msra.mxu0 0.0
    %2420 = vmatprep.subr.mxu0 0.0
    %2421 = vmatpush1.msra.mxu0 0.0
    %2422 = vmatprep.subr.mxu0 0.0
    %2423 = vmatpush1.msra.mxu0 0.0
    %2424 = vmatprep.subr.mxu0 0.0
    %v2425 = vand.u32 %v950, 4294901760
    %2426 = vmatpush1.msra.mxu0 %v2425
    %2427 = vmatprep.subr.mxu0 0.0
    %v2428 = vand.u32 %v949, 4294901760
    %2429 = vmatpush1.msra.mxu0 %v2428
    %2430 = vmatprep.subr.mxu0 0.0
    %v2431 = vand.u32 %v948, 4294901760
    %2432 = vmatpush1.msra.mxu0 %v2431
    %2433 = vmatprep.subr.mxu0 0.0
    %v2434 = vand.u32 %v947, 4294901760
    %2435 = vmatpush1.msra.mxu0 %v2434
    %2436 = vmatprep.subr.mxu0 0.0
    %2437 = vmatpush2.msra.mxu0 0.0
    %2438 = vmatprep.subr.mxu0 0.0
    %2439 = vmatpush2.msra.mxu0 0.0
    %2440 = vmatprep.subr.mxu0 0.0
    %2441 = vmatpush2.msra.mxu0 0.0
    %2442 = vmatprep.subr.mxu0 0.0
    %2443 = vmatpush2.msra.mxu0 0.0
    %2444 = vmatprep.subr.mxu0 0.0
    %2445 = vmatpush2.msra.mxu0 0.0
    %2446 = vmatprep.subr.mxu0 0.0
    %2447 = vmatpush2.msra.mxu0 0.0
    %2448 = vmatprep.subr.mxu0 0.0
    %2449 = vmatpush2.msra.mxu0 0.0
    %2450 = vmatprep.subr.mxu0 0.0
    %2451 = vmatpush2.msra.mxu0 0.0
    %2452 = vmatprep.subr.mxu0 0.0
    %2453 = vmatpush2.msra.mxu0 0.0
    %2454 = vmatprep.subr.mxu0 0.0
    %2455 = vmatpush2.msra.mxu0 0.0
    %2456 = vmatprep.subr.mxu0 0.0
    %2457 = vmatpush2.msra.mxu0 0.0
    %2458 = vmatprep.subr.mxu0 0.0
    %2459 = vmatpush2.msra.mxu0 0.0
    %2460 = vmatprep.subr.mxu0 0.0
    %2461 = vmatpush2.msra.mxu0 0.0
    %2462 = vmatprep.subr.mxu0 0.0
    %2463 = vmatpush2.msra.mxu0 0.0
    %2464 = vmatprep.subr.mxu0 0.0
    %2465 = vmatpush2.msra.mxu0 0.0
    %2466 = vmatprep.subr.mxu0 0.0
    %2467 = vmatpush2.msra.mxu0 0.0
    %2468 = vmatprep.mubr.f32.mxu0 0.0
    %v2469 = vand.u32 %v1988, 4294901760
    %2470 = vmatmul.mubr.f32.gmra.mxu0 %v2469
    %v2471 = vpop.f32.mrf.mxu0
    %v2472 = vadd.f32 %v2397, %v2471
    %v2473 = vpop.f32.mrf.mxu0
    %2474 = vdwg.mxu0
    %v2475 = vadd.f32 %v914, %v2472
    %v2476 = vxor.u32 %v2475, 2147483648
    %v2477 = vmul.f32 %v2476, 1.442695
    %v2478 = vpow.pop %v2477
    %v2479 = vadd.f32 %v2478, 1.0
    %v2480 = vrcp.pop %v2479
    %v2481 = vmul.f32 1.0, %v2480
    %v2482 = vtanh.pop %v2475
    %v2483 = vmul.f32 %v2481, %v1978
    %2485 = vrot.lane.b32.xlu0 %v2482, 64
    %v2486 = vpop.permute.xlu0 %2485
    %v2488 = vmul.f32 %v2481, %v2486
    %2490 = vrot.lane.b32.xlu0 %v2488, 32
    %v2491 = vpop.permute.xlu0 %2490
    %v2493 = vadd.f32 %v2483, %v2491
    %v2494 = vtanh.pop %v2493
    %2496 = vrot.lane.b32.xlu0 %v2494, 64
    %v2497 = vpop.permute.xlu0 %2496
    %v2499 = vmul.f32 %v2481, %v2497
    %2501 = vrot.lane.b32.xlu0 %v2499, 32
    %v2502 = vpop.permute.xlu0 %2501
    %v2503 = vsel %vm136, %v2502, 0
    %2505 = vmatprep.subr.mxu0 0.0
    %2506 = vmatpush1.msra.mxu0 0.0
    %2507 = vmatprep.subr.mxu0 0.0
    %2508 = vmatpush1.msra.mxu0 0.0
    %2509 = vmatprep.subr.mxu0 0.0
    %2510 = vmatpush1.msra.mxu0 0.0
    %2511 = vmatprep.subr.mxu0 0.0
    %2512 = vmatpush1.msra.mxu0 0.0
    %2513 = vmatprep.subr.mxu0 0.0
    %2514 = vmatpush1.msra.mxu0 0.0
    %2515 = vmatprep.subr.mxu0 0.0
    %2516 = vmatpush1.msra.mxu0 0.0
    %2517 = vmatprep.subr.mxu0 0.0
    %2518 = vmatpush1.msra.mxu0 0.0
    %2519 = vmatprep.subr.mxu0 0.0
    %2520 = vmatpush1.msra.mxu0 0.0
    %2521 = vmatprep.subr.mxu0 0.0
    %2522 = vmatpush1.msra.mxu0 0.0
    %2523 = vmatprep.subr.mxu0 0.0
    %2524 = vmatpush1.msra.mxu0 0.0
    %2525 = vmatprep.subr.mxu0 0.0
    %2526 = vmatpush1.msra.mxu0 0.0
    %2527 = vmatprep.subr.mxu0 0.0
    %2528 = vmatpush1.msra.mxu0 0.0
    %2529 = vmatprep.subr.mxu0 0.0
    %v2530 = vand.u32 %v950, 4294901760
    %2531 = vmatpush1.msra.mxu0 %v2530
    %2532 = vmatprep.subr.mxu0 0.0
    %v2533 = vand.u32 %v949, 4294901760
    %2534 = vmatpush1.msra.mxu0 %v2533
    %2535 = vmatprep.subr.mxu0 0.0
    %v2536 = vand.u32 %v948, 4294901760
    %2537 = vmatpush1.msra.mxu0 %v2536
    %2538 = vmatprep.subr.mxu0 0.0
    %v2539 = vand.u32 %v947, 4294901760
    %2540 = vmatpush1.msra.mxu0 %v2539
    %2541 = vmatprep.subr.mxu0 0.0
    %2542 = vmatpush2.msra.mxu0 0.0
    %2543 = vmatprep.subr.mxu0 0.0
    %2544 = vmatpush2.msra.mxu0 0.0
    %2545 = vmatprep.subr.mxu0 0.0
    %2546 = vmatpush2.msra.mxu0 0.0
    %2547 = vmatprep.subr.mxu0 0.0
    %2548 = vmatpush2.msra.mxu0 0.0
    %2549 = vmatprep.subr.mxu0 0.0
    %2550 = vmatpush2.msra.mxu0 0.0
    %2551 = vmatprep.subr.mxu0 0.0
    %2552 = vmatpush2.msra.mxu0 0.0
    %2553 = vmatprep.subr.mxu0 0.0
    %2554 = vmatpush2.msra.mxu0 0.0
    %2555 = vmatprep.subr.mxu0 0.0
    %2556 = vmatpush2.msra.mxu0 0.0
    %2557 = vmatprep.subr.mxu0 0.0
    %2558 = vmatpush2.msra.mxu0 0.0
    %2559 = vmatprep.subr.mxu0 0.0
    %2560 = vmatpush2.msra.mxu0 0.0
    %2561 = vmatprep.subr.mxu0 0.0
    %2562 = vmatpush2.msra.mxu0 0.0
    %2563 = vmatprep.subr.mxu0 0.0
    %2564 = vmatpush2.msra.mxu0 0.0
    %2565 = vmatprep.subr.mxu0 0.0
    %2566 = vmatpush2.msra.mxu0 0.0
    %2567 = vmatprep.subr.mxu0 0.0
    %2568 = vmatpush2.msra.mxu0 0.0
    %2569 = vmatprep.subr.mxu0 0.0
    %2570 = vmatpush2.msra.mxu0 0.0
    %2571 = vmatprep.subr.mxu0 0.0
    %2572 = vmatpush2.msra.mxu0 0.0
    %2573 = vmatprep.mubr.f32.mxu0 0.0
    %v2574 = vand.u32 %v2503, 4294901760
    %v2575 = vsub.f32 %v2503, %v2574
    %v2576 = vand.u32 %v2575, 4294901760
    %v2577 = vsub.f32 %v2575, %v2576
    %v2578 = vand.u32 %v2577, 4294901760
    %2579 = vmatmul.mubr.f32.gmra.mxu0 %v2578
    %v2580 = vpop.f32.mrf.mxu0
    %v2581 = vadd.f32 0.0, %v2580
    %v2582 = vpop.f32.mrf.mxu0
    %2583 = vdwg.mxu0
    %2584 = vmatprep.subr.mxu0 0.0
    %2585 = vmatpush1.msra.mxu0 0.0
    %2586 = vmatprep.subr.mxu0 0.0
    %2587 = vmatpush1.msra.mxu0 0.0
    %2588 = vmatprep.subr.mxu0 0.0
    %2589 = vmatpush1.msra.mxu0 0.0
    %2590 = vmatprep.subr.mxu0 0.0
    %2591 = vmatpush1.msra.mxu0 0.0
    %2592 = vmatprep.subr.mxu0 0.0
    %2593 = vmatpush1.msra.mxu0 0.0
    %2594 = vmatprep.subr.mxu0 0.0
    %2595 = vmatpush1.msra.mxu0 0.0
    %2596 = vmatprep.subr.mxu0 0.0
    %2597 = vmatpush1.msra.mxu0 0.0
    %2598 = vmatprep.subr.mxu0 0.0
    %2599 = vmatpush1.msra.mxu0 0.0
    %2600 = vmatprep.subr.mxu0 0.0
    %2601 = vmatpush1.msra.mxu0 0.0
    %2602 = vmatprep.subr.mxu0 0.0
    %2603 = vmatpush1.msra.mxu0 0.0
    %2604 = vmatprep.subr.mxu0 0.0
    %2605 = vmatpush1.msra.mxu0 0.0
    %2606 = vmatprep.subr.mxu0 0.0
    %2607 = vmatpush1.msra.mxu0 0.0
    %2608 = vmatprep.subr.mxu0 0.0
    %v2609 = vand.u32 %v950, 4294901760
    %v2610 = vsub.f32 %v950, %v2609
    %v2611 = vand.u32 %v2610, 4294901760
    %v2612 = vsub.f32 %v2610, %v2611
    %v2613 = vand.u32 %v2612, 4294901760
    %2614 = vmatpush1.msra.mxu0 %v2613
    %2615 = vmatprep.subr.mxu0 0.0
    %v2616 = vand.u32 %v949, 4294901760
    %v2617 = vsub.f32 %v949, %v2616
    %v2618 = vand.u32 %v2617, 4294901760
    %v2619 = vsub.f32 %v2617, %v2618
    %v2620 = vand.u32 %v2619, 4294901760
    %2621 = vmatpush1.msra.mxu0 %v2620
    %2622 = vmatprep.subr.mxu0 0.0
    %v2623 = vand.u32 %v948, 4294901760
    %v2624 = vsub.f32 %v948, %v2623
    %v2625 = vand.u32 %v2624, 4294901760
    %v2626 = vsub.f32 %v2624, %v2625
    %v2627 = vand.u32 %v2626, 4294901760
    %2628 = vmatpush1.msra.mxu0 %v2627
    %2629 = vmatprep.subr.mxu0 0.0
    %v2630 = vand.u32 %v947, 4294901760
    %v2631 = vsub.f32 %v947, %v2630
    %v2632 = vand.u32 %v2631, 4294901760
    %v2633 = vsub.f32 %v2631, %v2632
    %v2634 = vand.u32 %v2633, 4294901760
    %2635 = vmatpush1.msra.mxu0 %v2634
    %2636 = vmatprep.subr.mxu0 0.0
    %2637 = vmatpush2.msra.mxu0 0.0
    %2638 = vmatprep.subr.mxu0 0.0
    %2639 = vmatpush2.msra.mxu0 0.0
    %2640 = vmatprep.subr.mxu0 0.0
    %2641 = vmatpush2.msra.mxu0 0.0
    %2642 = vmatprep.subr.mxu0 0.0
    %2643 = vmatpush2.msra.mxu0 0.0
    %2644 = vmatprep.subr.mxu0 0.0
    %2645 = vmatpush2.msra.mxu0 0.0
    %2646 = vmatprep.subr.mxu0 0.0
    %2647 = vmatpush2.msra.mxu0 0.0
    %2648 = vmatprep.subr.mxu0 0.0
    %2649 = vmatpush2.msra.mxu0 0.0
    %2650 = vmatprep.subr.mxu0 0.0
    %2651 = vmatpush2.msra.mxu0 0.0
    %2652 = vmatprep.subr.mxu0 0.0
    %2653 = vmatpush2.msra.mxu0 0.0
    %2654 = vmatprep.subr.mxu0 0.0
    %2655 = vmatpush2.msra.mxu0 0.0
    %2656 = vmatprep.subr.mxu0 0.0
    %2657 = vmatpush2.msra.mxu0 0.0
    %2658 = vmatprep.subr.mxu0 0.0
    %2659 = vmatpush2.msra.mxu0 0.0
    %2660 = vmatprep.subr.mxu0 0.0
    %2661 = vmatpush2.msra.mxu0 0.0
    %2662 = vmatprep.subr.mxu0 0.0
    %2663 = vmatpush2.msra.mxu0 0.0
    %2664 = vmatprep.subr.mxu0 0.0
    %2665 = vmatpush2.msra.mxu0 0.0
    %2666 = vmatprep.subr.mxu0 0.0
    %2667 = vmatpush2.msra.mxu0 0.0
    %2668 = vmatprep.mubr.f32.mxu0 0.0
    %v2669 = vand.u32 %v2503, 4294901760
    %2670 = vmatmul.mubr.f32.gmra.mxu0 %v2669
    %v2671 = vpop.f32.mrf.mxu0
    %v2672 = vadd.f32 %v2581, %v2671
    %v2673 = vpop.f32.mrf.mxu0
    %2674 = vdwg.mxu0
    %2675 = vmatprep.subr.mxu0 0.0
    %2676 = vmatpush1.msra.mxu0 0.0
    %2677 = vmatprep.subr.mxu0 0.0
    %2678 = vmatpush1.msra.mxu0 0.0
    %2679 = vmatprep.subr.mxu0 0.0
    %2680 = vmatpush1.msra.mxu0 0.0
    %2681 = vmatprep.subr.mxu0 0.0
    %2682 = vmatpush1.msra.mxu0 0.0
    %2683 = vmatprep.subr.mxu0 0.0
    %2684 = vmatpush1.msra.mxu0 0.0
    %2685 = vmatprep.subr.mxu0 0.0
    %2686 = vmatpush1.msra.mxu0 0.0
    %2687 = vmatprep.subr.mxu0 0.0
    %2688 = vmatpush1.msra.mxu0 0.0
    %2689 = vmatprep.subr.mxu0 0.0
    %2690 = vmatpush1.msra.mxu0 0.0
    %2691 = vmatprep.subr.mxu0 0.0
    %2692 = vmatpush1.msra.mxu0 0.0
    %2693 = vmatprep.subr.mxu0 0.0
    %2694 = vmatpush1.msra.mxu0 0.0
    %2695 = vmatprep.subr.mxu0 0.0
    %2696 = vmatpush1.msra.mxu0 0.0
    %2697 = vmatprep.subr.mxu0 0.0
    %2698 = vmatpush1.msra.mxu0 0.0
    %2699 = vmatprep.subr.mxu0 0.0
    %v2700 = vand.u32 %v950, 4294901760
    %v2701 = vsub.f32 %v950, %v2700
    %2702 = vmatpush1.msra.mxu0 %v2701
    %2703 = vmatprep.subr.mxu0 0.0
    %v2704 = vand.u32 %v949, 4294901760
    %v2705 = vsub.f32 %v949, %v2704
    %2706 = vmatpush1.msra.mxu0 %v2705
    %2707 = vmatprep.subr.mxu0 0.0
    %v2708 = vand.u32 %v948, 4294901760
    %v2709 = vsub.f32 %v948, %v2708
    %2710 = vmatpush1.msra.mxu0 %v2709
    %2711 = vmatprep.subr.mxu0 0.0
    %v2712 = vand.u32 %v947, 4294901760
    %v2713 = vsub.f32 %v947, %v2712
    %2714 = vmatpush1.msra.mxu0 %v2713
    %2715 = vmatprep.subr.mxu0 0.0
    %2716 = vmatpush2.msra.mxu0 0.0
    %2717 = vmatprep.subr.mxu0 0.0
    %2718 = vmatpush2.msra.mxu0 0.0
    %2719 = vmatprep.subr.mxu0 0.0
    %2720 = vmatpush2.msra.mxu0 0.0
    %2721 = vmatprep.subr.mxu0 0.0
    %2722 = vmatpush2.msra.mxu0 0.0
    %2723 = vmatprep.subr.mxu0 0.0
    %2724 = vmatpush2.msra.mxu0 0.0
    %2725 = vmatprep.subr.mxu0 0.0
    %2726 = vmatpush2.msra.mxu0 0.0
    %2727 = vmatprep.subr.mxu0 0.0
    %2728 = vmatpush2.msra.mxu0 0.0
    %2729 = vmatprep.subr.mxu0 0.0
    %2730 = vmatpush2.msra.mxu0 0.0
    %2731 = vmatprep.subr.mxu0 0.0
    %2732 = vmatpush2.msra.mxu0 0.0
    %2733 = vmatprep.subr.mxu0 0.0
    %2734 = vmatpush2.msra.mxu0 0.0
    %2735 = vmatprep.subr.mxu0 0.0
    %2736 = vmatpush2.msra.mxu0 0.0
    %2737 = vmatprep.subr.mxu0 0.0
    %2738 = vmatpush2.msra.mxu0 0.0
    %2739 = vmatprep.subr.mxu0 0.0
    %2740 = vmatpush2.msra.mxu0 0.0
    %2741 = vmatprep.subr.mxu0 0.0
    %2742 = vmatpush2.msra.mxu0 0.0
    %2743 = vmatprep.subr.mxu0 0.0
    %2744 = vmatpush2.msra.mxu0 0.0
    %2745 = vmatprep.subr.mxu0 0.0
    %2746 = vmatpush2.msra.mxu0 0.0
    %2747 = vmatprep.mubr.f32.mxu0 0.0
    %v2748 = vand.u32 %v2503, 4294901760
    %v2749 = vsub.f32 %v2503, %v2748
    %2750 = vmatmul.mubr.f32.gmra.mxu0 %v2749
    %v2751 = vpop.f32.mrf.mxu0
    %v2752 = vadd.f32 %v2672, %v2751
    %v2753 = vpop.f32.mrf.mxu0
    %2754 = vdwg.mxu0
    %2755 = vmatprep.subr.mxu0 0.0
    %2756 = vmatpush1.msra.mxu0 0.0
    %2757 = vmatprep.subr.mxu0 0.0
    %2758 = vmatpush1.msra.mxu0 0.0
    %2759 = vmatprep.subr.mxu0 0.0
    %2760 = vmatpush1.msra.mxu0 0.0
    %2761 = vmatprep.subr.mxu0 0.0
    %2762 = vmatpush1.msra.mxu0 0.0
    %2763 = vmatprep.subr.mxu0 0.0
    %2764 = vmatpush1.msra.mxu0 0.0
    %2765 = vmatprep.subr.mxu0 0.0
    %2766 = vmatpush1.msra.mxu0 0.0
    %2767 = vmatprep.subr.mxu0 0.0
    %2768 = vmatpush1.msra.mxu0 0.0
    %2769 = vmatprep.subr.mxu0 0.0
    %2770 = vmatpush1.msra.mxu0 0.0
    %2771 = vmatprep.subr.mxu0 0.0
    %2772 = vmatpush1.msra.mxu0 0.0
    %2773 = vmatprep.subr.mxu0 0.0
    %2774 = vmatpush1.msra.mxu0 0.0
    %2775 = vmatprep.subr.mxu0 0.0
    %2776 = vmatpush1.msra.mxu0 0.0
    %2777 = vmatprep.subr.mxu0 0.0
    %2778 = vmatpush1.msra.mxu0 0.0
    %2779 = vmatprep.subr.mxu0 0.0
    %v2780 = vand.u32 %v950, 4294901760
    %2781 = vmatpush1.msra.mxu0 %v2780
    %2782 = vmatprep.subr.mxu0 0.0
    %v2783 = vand.u32 %v949, 4294901760
    %2784 = vmatpush1.msra.mxu0 %v2783
    %2785 = vmatprep.subr.mxu0 0.0
    %v2786 = vand.u32 %v948, 4294901760
    %2787 = vmatpush1.msra.mxu0 %v2786
    %2788 = vmatprep.subr.mxu0 0.0
    %v2789 = vand.u32 %v947, 4294901760
    %2790 = vmatpush1.msra.mxu0 %v2789
    %2791 = vmatprep.subr.mxu0 0.0
    %2792 = vmatpush2.msra.mxu0 0.0
    %2793 = vmatprep.subr.mxu0 0.0
    %2794 = vmatpush2.msra.mxu0 0.0
    %2795 = vmatprep.subr.mxu0 0.0
    %2796 = vmatpush2.msra.mxu0 0.0
    %2797 = vmatprep.subr.mxu0 0.0
    %2798 = vmatpush2.msra.mxu0 0.0
    %2799 = vmatprep.subr.mxu0 0.0
    %2800 = vmatpush2.msra.mxu0 0.0
    %2801 = vmatprep.subr.mxu0 0.0
    %2802 = vmatpush2.msra.mxu0 0.0
    %2803 = vmatprep.subr.mxu0 0.0
    %2804 = vmatpush2.msra.mxu0 0.0
    %2805 = vmatprep.subr.mxu0 0.0
    %2806 = vmatpush2.msra.mxu0 0.0
    %2807 = vmatprep.subr.mxu0 0.0
    %2808 = vmatpush2.msra.mxu0 0.0
    %2809 = vmatprep.subr.mxu0 0.0
    %2810 = vmatpush2.msra.mxu0 0.0
    %2811 = vmatprep.subr.mxu0 0.0
    %2812 = vmatpush2.msra.mxu0 0.0
    %2813 = vmatprep.subr.mxu0 0.0
    %2814 = vmatpush2.msra.mxu0 0.0
    %2815 = vmatprep.subr.mxu0 0.0
    %2816 = vmatpush2.msra.mxu0 0.0
    %2817 = vmatprep.subr.mxu0 0.0
    %2818 = vmatpush2.msra.mxu0 0.0
    %2819 = vmatprep.subr.mxu0 0.0
    %2820 = vmatpush2.msra.mxu0 0.0
    %2821 = vmatprep.subr.mxu0 0.0
    %2822 = vmatpush2.msra.mxu0 0.0
    %2823 = vmatprep.mubr.f32.mxu0 0.0
    %v2824 = vand.u32 %v2503, 4294901760
    %v2825 = vsub.f32 %v2503, %v2824
    %v2826 = vand.u32 %v2825, 4294901760
    %2827 = vmatmul.mubr.f32.gmra.mxu0 %v2826
    %v2828 = vpop.f32.mrf.mxu0
    %v2829 = vadd.f32 %v2752, %v2828
    %v2830 = vpop.f32.mrf.mxu0
    %2831 = vdwg.mxu0
    %2832 = vmatprep.subr.mxu0 0.0
    %2833 = vmatpush1.msra.mxu0 0.0
    %2834 = vmatprep.subr.mxu0 0.0
    %2835 = vmatpush1.msra.mxu0 0.0
    %2836 = vmatprep.subr.mxu0 0.0
    %2837 = vmatpush1.msra.mxu0 0.0
    %2838 = vmatprep.subr.mxu0 0.0
    %2839 = vmatpush1.msra.mxu0 0.0
    %2840 = vmatprep.subr.mxu0 0.0
    %2841 = vmatpush1.msra.mxu0 0.0
    %2842 = vmatprep.subr.mxu0 0.0
    %2843 = vmatpush1.msra.mxu0 0.0
    %2844 = vmatprep.subr.mxu0 0.0
    %2845 = vmatpush1.msra.mxu0 0.0
    %2846 = vmatprep.subr.mxu0 0.0
    %2847 = vmatpush1.msra.mxu0 0.0
    %2848 = vmatprep.subr.mxu0 0.0
    %2849 = vmatpush1.msra.mxu0 0.0
    %2850 = vmatprep.subr.mxu0 0.0
    %2851 = vmatpush1.msra.mxu0 0.0
    %2852 = vmatprep.subr.mxu0 0.0
    %2853 = vmatpush1.msra.mxu0 0.0
    %2854 = vmatprep.subr.mxu0 0.0
    %2855 = vmatpush1.msra.mxu0 0.0
    %2856 = vmatprep.subr.mxu0 0.0
    %v2857 = vand.u32 %v950, 4294901760
    %v2858 = vsub.f32 %v950, %v2857
    %v2859 = vand.u32 %v2858, 4294901760
    %2860 = vmatpush1.msra.mxu0 %v2859
    %2861 = vmatprep.subr.mxu0 0.0
    %v2862 = vand.u32 %v949, 4294901760
    %v2863 = vsub.f32 %v949, %v2862
    %v2864 = vand.u32 %v2863, 4294901760
    %2865 = vmatpush1.msra.mxu0 %v2864
    %2866 = vmatprep.subr.mxu0 0.0
    %v2867 = vand.u32 %v948, 4294901760
    %v2868 = vsub.f32 %v948, %v2867
    %v2869 = vand.u32 %v2868, 4294901760
    %2870 = vmatpush1.msra.mxu0 %v2869
    %2871 = vmatprep.subr.mxu0 0.0
    %v2872 = vand.u32 %v947, 4294901760
    %v2873 = vsub.f32 %v947, %v2872
    %v2874 = vand.u32 %v2873, 4294901760
    %2875 = vmatpush1.msra.mxu0 %v2874
    %2876 = vmatprep.subr.mxu0 0.0
    %2877 = vmatpush2.msra.mxu0 0.0
    %2878 = vmatprep.subr.mxu0 0.0
    %2879 = vmatpush2.msra.mxu0 0.0
    %2880 = vmatprep.subr.mxu0 0.0
    %2881 = vmatpush2.msra.mxu0 0.0
    %2882 = vmatprep.subr.mxu0 0.0
    %2883 = vmatpush2.msra.mxu0 0.0
    %2884 = vmatprep.subr.mxu0 0.0
    %2885 = vmatpush2.msra.mxu0 0.0
    %2886 = vmatprep.subr.mxu0 0.0
    %2887 = vmatpush2.msra.mxu0 0.0
    %2888 = vmatprep.subr.mxu0 0.0
    %2889 = vmatpush2.msra.mxu0 0.0
    %2890 = vmatprep.subr.mxu0 0.0
    %2891 = vmatpush2.msra.mxu0 0.0
    %2892 = vmatprep.subr.mxu0 0.0
    %2893 = vmatpush2.msra.mxu0 0.0
    %2894 = vmatprep.subr.mxu0 0.0
    %2895 = vmatpush2.msra.mxu0 0.0
    %2896 = vmatprep.subr.mxu0 0.0
    %2897 = vmatpush2.msra.mxu0 0.0
    %2898 = vmatprep.subr.mxu0 0.0
    %2899 = vmatpush2.msra.mxu0 0.0
    %2900 = vmatprep.subr.mxu0 0.0
    %2901 = vmatpush2.msra.mxu0 0.0
    %2902 = vmatprep.subr.mxu0 0.0
    %2903 = vmatpush2.msra.mxu0 0.0
    %2904 = vmatprep.subr.mxu0 0.0
    %2905 = vmatpush2.msra.mxu0 0.0
    %2906 = vmatprep.subr.mxu0 0.0
    %2907 = vmatpush2.msra.mxu0 0.0
    %2908 = vmatprep.mubr.f32.mxu0 0.0
    %v2909 = vand.u32 %v2503, 4294901760
    %2910 = vmatmul.mubr.f32.gmra.mxu0 %v2909
    %v2911 = vpop.f32.mrf.mxu0
    %v2912 = vadd.f32 %v2829, %v2911
    %v2913 = vpop.f32.mrf.mxu0
    %2914 = vdwg.mxu0
    %2915 = vmatprep.subr.mxu0 0.0
    %2916 = vmatpush1.msra.mxu0 0.0
    %2917 = vmatprep.subr.mxu0 0.0
    %2918 = vmatpush1.msra.mxu0 0.0
    %2919 = vmatprep.subr.mxu0 0.0
    %2920 = vmatpush1.msra.mxu0 0.0
    %2921 = vmatprep.subr.mxu0 0.0
    %2922 = vmatpush1.msra.mxu0 0.0
    %2923 = vmatprep.subr.mxu0 0.0
    %2924 = vmatpush1.msra.mxu0 0.0
    %2925 = vmatprep.subr.mxu0 0.0
    %2926 = vmatpush1.msra.mxu0 0.0
    %2927 = vmatprep.subr.mxu0 0.0
    %2928 = vmatpush1.msra.mxu0 0.0
    %2929 = vmatprep.subr.mxu0 0.0
    %2930 = vmatpush1.msra.mxu0 0.0
    %2931 = vmatprep.subr.mxu0 0.0
    %2932 = vmatpush1.msra.mxu0 0.0
    %2933 = vmatprep.subr.mxu0 0.0
    %2934 = vmatpush1.msra.mxu0 0.0
    %2935 = vmatprep.subr.mxu0 0.0
    %2936 = vmatpush1.msra.mxu0 0.0
    %2937 = vmatprep.subr.mxu0 0.0
    %2938 = vmatpush1.msra.mxu0 0.0
    %2939 = vmatprep.subr.mxu0 0.0
    %v2940 = vand.u32 %v950, 4294901760
    %2941 = vmatpush1.msra.mxu0 %v2940
    %2942 = vmatprep.subr.mxu0 0.0
    %v2943 = vand.u32 %v949, 4294901760
    %2944 = vmatpush1.msra.mxu0 %v2943
    %2945 = vmatprep.subr.mxu0 0.0
    %v2946 = vand.u32 %v948, 4294901760
    %2947 = vmatpush1.msra.mxu0 %v2946
    %2948 = vmatprep.subr.mxu0 0.0
    %v2949 = vand.u32 %v947, 4294901760
    %2950 = vmatpush1.msra.mxu0 %v2949
    %2951 = vmatprep.subr.mxu0 0.0
    %2952 = vmatpush2.msra.mxu0 0.0
    %2953 = vmatprep.subr.mxu0 0.0
    %2954 = vmatpush2.msra.mxu0 0.0
    %2955 = vmatprep.subr.mxu0 0.0
    %2956 = vmatpush2.msra.mxu0 0.0
    %2957 = vmatprep.subr.mxu0 0.0
    %2958 = vmatpush2.msra.mxu0 0.0
    %2959 = vmatprep.subr.mxu0 0.0
    %2960 = vmatpush2.msra.mxu0 0.0
    %2961 = vmatprep.subr.mxu0 0.0
    %2962 = vmatpush2.msra.mxu0 0.0
    %2963 = vmatprep.subr.mxu0 0.0
    %2964 = vmatpush2.msra.mxu0 0.0
    %2965 = vmatprep.subr.mxu0 0.0
    %2966 = vmatpush2.msra.mxu0 0.0
    %2967 = vmatprep.subr.mxu0 0.0
    %2968 = vmatpush2.msra.mxu0 0.0
    %2969 = vmatprep.subr.mxu0 0.0
    %2970 = vmatpush2.msra.mxu0 0.0
    %2971 = vmatprep.subr.mxu0 0.0
    %2972 = vmatpush2.msra.mxu0 0.0
    %2973 = vmatprep.subr.mxu0 0.0
    %2974 = vmatpush2.msra.mxu0 0.0
    %2975 = vmatprep.subr.mxu0 0.0
    %2976 = vmatpush2.msra.mxu0 0.0
    %2977 = vmatprep.subr.mxu0 0.0
    %2978 = vmatpush2.msra.mxu0 0.0
    %2979 = vmatprep.subr.mxu0 0.0
    %2980 = vmatpush2.msra.mxu0 0.0
    %2981 = vmatprep.subr.mxu0 0.0
    %2982 = vmatpush2.msra.mxu0 0.0
    %2983 = vmatprep.mubr.f32.mxu0 0.0
    %v2984 = vand.u32 %v2503, 4294901760
    %2985 = vmatmul.mubr.f32.gmra.mxu0 %v2984
    %v2986 = vpop.f32.mrf.mxu0
    %v2987 = vadd.f32 %v2912, %v2986
    %v2988 = vpop.f32.mrf.mxu0
    %2989 = vdwg.mxu0
    %v2990 = vadd.f32 %v920, %v2987
    %v2991 = vxor.u32 %v2990, 2147483648
    %v2992 = vmul.f32 %v2991, 1.442695
    %v2993 = vpow.pop %v2992
    %v2994 = vadd.f32 %v2993, 1.0
    %v2995 = vrcp.pop %v2994
    %v2996 = vmul.f32 1.0, %v2995
    %v2997 = vtanh.pop %v2990
    %v2998 = vmul.f32 %v2996, %v2493
    %3000 = vrot.lane.b32.xlu0 %v2997, 64
    %v3001 = vpop.permute.xlu0 %3000
    %v3003 = vmul.f32 %v2996, %v3001
    %3005 = vrot.lane.b32.xlu0 %v3003, 32
    %v3006 = vpop.permute.xlu0 %3005
    %v3008 = vadd.f32 %v2998, %v3006
    %v3009 = vtanh.pop %v3008
    %3011 = vrot.lane.b32.xlu0 %v3009, 64
    %v3012 = vpop.permute.xlu0 %3011
    %v3014 = vmul.f32 %v2996, %v3012
    %3016 = vrot.lane.b32.xlu0 %v3014, 32
    %v3017 = vpop.permute.xlu0 %3016
    %v3018 = vsel %vm136, %v3017, 0
    %3020 = vmatprep.subr.mxu0 0.0
    %3021 = vmatpush1.msra.mxu0 0.0
    %3022 = vmatprep.subr.mxu0 0.0
    %3023 = vmatpush1.msra.mxu0 0.0
    %3024 = vmatprep.subr.mxu0 0.0
    %3025 = vmatpush1.msra.mxu0 0.0
    %3026 = vmatprep.subr.mxu0 0.0
    %3027 = vmatpush1.msra.mxu0 0.0
    %3028 = vmatprep.subr.mxu0 0.0
    %3029 = vmatpush1.msra.mxu0 0.0
    %3030 = vmatprep.subr.mxu0 0.0
    %3031 = vmatpush1.msra.mxu0 0.0
    %3032 = vmatprep.subr.mxu0 0.0
    %3033 = vmatpush1.msra.mxu0 0.0
    %3034 = vmatprep.subr.mxu0 0.0
    %3035 = vmatpush1.msra.mxu0 0.0
    %3036 = vmatprep.subr.mxu0 0.0
    %3037 = vmatpush1.msra.mxu0 0.0
    %3038 = vmatprep.subr.mxu0 0.0
    %3039 = vmatpush1.msra.mxu0 0.0
    %3040 = vmatprep.subr.mxu0 0.0
    %3041 = vmatpush1.msra.mxu0 0.0
    %3042 = vmatprep.subr.mxu0 0.0
    %3043 = vmatpush1.msra.mxu0 0.0
    %3044 = vmatprep.subr.mxu0 0.0
    %v3045 = vand.u32 %v950, 4294901760
    %3046 = vmatpush1.msra.mxu0 %v3045
    %3047 = vmatprep.subr.mxu0 0.0
    %v3048 = vand.u32 %v949, 4294901760
    %3049 = vmatpush1.msra.mxu0 %v3048
    %3050 = vmatprep.subr.mxu0 0.0
    %v3051 = vand.u32 %v948, 4294901760
    %3052 = vmatpush1.msra.mxu0 %v3051
    %3053 = vmatprep.subr.mxu0 0.0
    %v3054 = vand.u32 %v947, 4294901760
    %3055 = vmatpush1.msra.mxu0 %v3054
    %3056 = vmatprep.subr.mxu0 0.0
    %3057 = vmatpush2.msra.mxu0 0.0
    %3058 = vmatprep.subr.mxu0 0.0
    %3059 = vmatpush2.msra.mxu0 0.0
    %3060 = vmatprep.subr.mxu0 0.0
    %3061 = vmatpush2.msra.mxu0 0.0
    %3062 = vmatprep.subr.mxu0 0.0
    %3063 = vmatpush2.msra.mxu0 0.0
    %3064 = vmatprep.subr.mxu0 0.0
    %3065 = vmatpush2.msra.mxu0 0.0
    %3066 = vmatprep.subr.mxu0 0.0
    %3067 = vmatpush2.msra.mxu0 0.0
    %3068 = vmatprep.subr.mxu0 0.0
    %3069 = vmatpush2.msra.mxu0 0.0
    %3070 = vmatprep.subr.mxu0 0.0
    %3071 = vmatpush2.msra.mxu0 0.0
    %3072 = vmatprep.subr.mxu0 0.0
    %3073 = vmatpush2.msra.mxu0 0.0
    %3074 = vmatprep.subr.mxu0 0.0
    %3075 = vmatpush2.msra.mxu0 0.0
    %3076 = vmatprep.subr.mxu0 0.0
    %3077 = vmatpush2.msra.mxu0 0.0
    %3078 = vmatprep.subr.mxu0 0.0
    %3079 = vmatpush2.msra.mxu0 0.0
    %3080 = vmatprep.subr.mxu0 0.0
    %3081 = vmatpush2.msra.mxu0 0.0
    %3082 = vmatprep.subr.mxu0 0.0
    %3083 = vmatpush2.msra.mxu0 0.0
    %3084 = vmatprep.subr.mxu0 0.0
    %3085 = vmatpush2.msra.mxu0 0.0
    %3086 = vmatprep.subr.mxu0 0.0
    %3087 = vmatpush2.msra.mxu0 0.0
    %3088 = vmatprep.mubr.f32.mxu0 0.0
    %v3089 = vand.u32 %v3018, 4294901760
    %v3090 = vsub.f32 %v3018, %v3089
    %v3091 = vand.u32 %v3090, 4294901760
    %v3092 = vsub.f32 %v3090, %v3091
    %v3093 = vand.u32 %v3092, 4294901760
    %3094 = vmatmul.mubr.f32.gmra.mxu0 %v3093
    %v3095 = vpop.f32.mrf.mxu0
    %v3096 = vadd.f32 0.0, %v3095
    %v3097 = vpop.f32.mrf.mxu0
    %3098 = vdwg.mxu0
    %3099 = vmatprep.subr.mxu0 0.0
    %3100 = vmatpush1.msra.mxu0 0.0
    %3101 = vmatprep.subr.mxu0 0.0
    %3102 = vmatpush1.msra.mxu0 0.0
    %3103 = vmatprep.subr.mxu0 0.0
    %3104 = vmatpush1.msra.mxu0 0.0
    %3105 = vmatprep.subr.mxu0 0.0
    %3106 = vmatpush1.msra.mxu0 0.0
    %3107 = vmatprep.subr.mxu0 0.0
    %3108 = vmatpush1.msra.mxu0 0.0
    %3109 = vmatprep.subr.mxu0 0.0
    %3110 = vmatpush1.msra.mxu0 0.0
    %3111 = vmatprep.subr.mxu0 0.0
    %3112 = vmatpush1.msra.mxu0 0.0
    %3113 = vmatprep.subr.mxu0 0.0
    %3114 = vmatpush1.msra.mxu0 0.0
    %3115 = vmatprep.subr.mxu0 0.0
    %3116 = vmatpush1.msra.mxu0 0.0
    %3117 = vmatprep.subr.mxu0 0.0
    %3118 = vmatpush1.msra.mxu0 0.0
    %3119 = vmatprep.subr.mxu0 0.0
    %3120 = vmatpush1.msra.mxu0 0.0
    %3121 = vmatprep.subr.mxu0 0.0
    %3122 = vmatpush1.msra.mxu0 0.0
    %3123 = vmatprep.subr.mxu0 0.0
    %v3124 = vand.u32 %v950, 4294901760
    %v3125 = vsub.f32 %v950, %v3124
    %v3126 = vand.u32 %v3125, 4294901760
    %v3127 = vsub.f32 %v3125, %v3126
    %v3128 = vand.u32 %v3127, 4294901760
    %3129 = vmatpush1.msra.mxu0 %v3128
    %3130 = vmatprep.subr.mxu0 0.0
    %v3131 = vand.u32 %v949, 4294901760
    %v3132 = vsub.f32 %v949, %v3131
    %v3133 = vand.u32 %v3132, 4294901760
    %v3134 = vsub.f32 %v3132, %v3133
    %v3135 = vand.u32 %v3134, 4294901760
    %3136 = vmatpush1.msra.mxu0 %v3135
    %3137 = vmatprep.subr.mxu0 0.0
    %v3138 = vand.u32 %v948, 4294901760
    %v3139 = vsub.f32 %v948, %v3138
    %v3140 = vand.u32 %v3139, 4294901760
    %v3141 = vsub.f32 %v3139, %v3140
    %v3142 = vand.u32 %v3141, 4294901760
    %3143 = vmatpush1.msra.mxu0 %v3142
    %3144 = vmatprep.subr.mxu0 0.0
    %v3145 = vand.u32 %v947, 4294901760
    %v3146 = vsub.f32 %v947, %v3145
    %v3147 = vand.u32 %v3146, 4294901760
    %v3148 = vsub.f32 %v3146, %v3147
    %v3149 = vand.u32 %v3148, 4294901760
    %3150 = vmatpush1.msra.mxu0 %v3149
    %3151 = vmatprep.subr.mxu0 0.0
    %3152 = vmatpush2.msra.mxu0 0.0
    %3153 = vmatprep.subr.mxu0 0.0
    %3154 = vmatpush2.msra.mxu0 0.0
    %3155 = vmatprep.subr.mxu0 0.0
    %3156 = vmatpush2.msra.mxu0 0.0
    %3157 = vmatprep.subr.mxu0 0.0
    %3158 = vmatpush2.msra.mxu0 0.0
    %3159 = vmatprep.subr.mxu0 0.0
    %3160 = vmatpush2.msra.mxu0 0.0
    %3161 = vmatprep.subr.mxu0 0.0
    %3162 = vmatpush2.msra.mxu0 0.0
    %3163 = vmatprep.subr.mxu0 0.0
    %3164 = vmatpush2.msra.mxu0 0.0
    %3165 = vmatprep.subr.mxu0 0.0
    %3166 = vmatpush2.msra.mxu0 0.0
    %3167 = vmatprep.subr.mxu0 0.0
    %3168 = vmatpush2.msra.mxu0 0.0
    %3169 = vmatprep.subr.mxu0 0.0
    %3170 = vmatpush2.msra.mxu0 0.0
    %3171 = vmatprep.subr.mxu0 0.0
    %3172 = vmatpush2.msra.mxu0 0.0
    %3173 = vmatprep.subr.mxu0 0.0
    %3174 = vmatpush2.msra.mxu0 0.0
    %3175 = vmatprep.subr.mxu0 0.0
    %3176 = vmatpush2.msra.mxu0 0.0
    %3177 = vmatprep.subr.mxu0 0.0
    %3178 = vmatpush2.msra.mxu0 0.0
    %3179 = vmatprep.subr.mxu0 0.0
    %3180 = vmatpush2.msra.mxu0 0.0
    %3181 = vmatprep.subr.mxu0 0.0
    %3182 = vmatpush2.msra.mxu0 0.0
    %3183 = vmatprep.mubr.f32.mxu0 0.0
    %v3184 = vand.u32 %v3018, 4294901760
    %3185 = vmatmul.mubr.f32.gmra.mxu0 %v3184
    %v3186 = vpop.f32.mrf.mxu0
    %v3187 = vadd.f32 %v3096, %v3186
    %v3188 = vpop.f32.mrf.mxu0
    %3189 = vdwg.mxu0
    %3190 = vmatprep.subr.mxu0 0.0
    %3191 = vmatpush1.msra.mxu0 0.0
    %3192 = vmatprep.subr.mxu0 0.0
    %3193 = vmatpush1.msra.mxu0 0.0
    %3194 = vmatprep.subr.mxu0 0.0
    %3195 = vmatpush1.msra.mxu0 0.0
    %3196 = vmatprep.subr.mxu0 0.0
    %3197 = vmatpush1.msra.mxu0 0.0
    %3198 = vmatprep.subr.mxu0 0.0
    %3199 = vmatpush1.msra.mxu0 0.0
    %3200 = vmatprep.subr.mxu0 0.0
    %3201 = vmatpush1.msra.mxu0 0.0
    %3202 = vmatprep.subr.mxu0 0.0
    %3203 = vmatpush1.msra.mxu0 0.0
    %3204 = vmatprep.subr.mxu0 0.0
    %3205 = vmatpush1.msra.mxu0 0.0
    %3206 = vmatprep.subr.mxu0 0.0
    %3207 = vmatpush1.msra.mxu0 0.0
    %3208 = vmatprep.subr.mxu0 0.0
    %3209 = vmatpush1.msra.mxu0 0.0
    %3210 = vmatprep.subr.mxu0 0.0
    %3211 = vmatpush1.msra.mxu0 0.0
    %3212 = vmatprep.subr.mxu0 0.0
    %3213 = vmatpush1.msra.mxu0 0.0
    %3214 = vmatprep.subr.mxu0 0.0
    %v3215 = vand.u32 %v950, 4294901760
    %v3216 = vsub.f32 %v950, %v3215
    %3217 = vmatpush1.msra.mxu0 %v3216
    %3218 = vmatprep.subr.mxu0 0.0
    %v3219 = vand.u32 %v949, 4294901760
    %v3220 = vsub.f32 %v949, %v3219
    %3221 = vmatpush1.msra.mxu0 %v3220
    %3222 = vmatprep.subr.mxu0 0.0
    %v3223 = vand.u32 %v948, 4294901760
    %v3224 = vsub.f32 %v948, %v3223
    %3225 = vmatpush1.msra.mxu0 %v3224
    %3226 = vmatprep.subr.mxu0 0.0
    %v3227 = vand.u32 %v947, 4294901760
    %v3228 = vsub.f32 %v947, %v3227
    %3229 = vmatpush1.msra.mxu0 %v3228
    %3230 = vmatprep.subr.mxu0 0.0
    %3231 = vmatpush2.msra.mxu0 0.0
    %3232 = vmatprep.subr.mxu0 0.0
    %3233 = vmatpush2.msra.mxu0 0.0
    %3234 = vmatprep.subr.mxu0 0.0
    %3235 = vmatpush2.msra.mxu0 0.0
    %3236 = vmatprep.subr.mxu0 0.0
    %3237 = vmatpush2.msra.mxu0 0.0
    %3238 = vmatprep.subr.mxu0 0.0
    %3239 = vmatpush2.msra.mxu0 0.0
    %3240 = vmatprep.subr.mxu0 0.0
    %3241 = vmatpush2.msra.mxu0 0.0
    %3242 = vmatprep.subr.mxu0 0.0
    %3243 = vmatpush2.msra.mxu0 0.0
    %3244 = vmatprep.subr.mxu0 0.0
    %3245 = vmatpush2.msra.mxu0 0.0
    %3246 = vmatprep.subr.mxu0 0.0
    %3247 = vmatpush2.msra.mxu0 0.0
    %3248 = vmatprep.subr.mxu0 0.0
    %3249 = vmatpush2.msra.mxu0 0.0
    %3250 = vmatprep.subr.mxu0 0.0
    %3251 = vmatpush2.msra.mxu0 0.0
    %3252 = vmatprep.subr.mxu0 0.0
    %3253 = vmatpush2.msra.mxu0 0.0
    %3254 = vmatprep.subr.mxu0 0.0
    %3255 = vmatpush2.msra.mxu0 0.0
    %3256 = vmatprep.subr.mxu0 0.0
    %3257 = vmatpush2.msra.mxu0 0.0
    %3258 = vmatprep.subr.mxu0 0.0
    %3259 = vmatpush2.msra.mxu0 0.0
    %3260 = vmatprep.subr.mxu0 0.0
    %3261 = vmatpush2.msra.mxu0 0.0
    %3262 = vmatprep.mubr.f32.mxu0 0.0
    %v3263 = vand.u32 %v3018, 4294901760
    %v3264 = vsub.f32 %v3018, %v3263
    %3265 = vmatmul.mubr.f32.gmra.mxu0 %v3264
    %v3266 = vpop.f32.mrf.mxu0
    %v3267 = vadd.f32 %v3187, %v3266
    %v3268 = vpop.f32.mrf.mxu0
    %3269 = vdwg.mxu0
    %3270 = vmatprep.subr.mxu0 0.0
    %3271 = vmatpush1.msra.mxu0 0.0
    %3272 = vmatprep.subr.mxu0 0.0
    %3273 = vmatpush1.msra.mxu0 0.0
    %3274 = vmatprep.subr.mxu0 0.0
    %3275 = vmatpush1.msra.mxu0 0.0
    %3276 = vmatprep.subr.mxu0 0.0
    %3277 = vmatpush1.msra.mxu0 0.0
    %3278 = vmatprep.subr.mxu0 0.0
    %3279 = vmatpush1.msra.mxu0 0.0
    %3280 = vmatprep.subr.mxu0 0.0
    %3281 = vmatpush1.msra.mxu0 0.0
    %3282 = vmatprep.subr.mxu0 0.0
    %3283 = vmatpush1.msra.mxu0 0.0
    %3284 = vmatprep.subr.mxu0 0.0
    %3285 = vmatpush1.msra.mxu0 0.0
    %3286 = vmatprep.subr.mxu0 0.0
    %3287 = vmatpush1.msra.mxu0 0.0
    %3288 = vmatprep.subr.mxu0 0.0
    %3289 = vmatpush1.msra.mxu0 0.0
    %3290 = vmatprep.subr.mxu0 0.0
    %3291 = vmatpush1.msra.mxu0 0.0
    %3292 = vmatprep.subr.mxu0 0.0
    %3293 = vmatpush1.msra.mxu0 0.0
    %3294 = vmatprep.subr.mxu0 0.0
    %v3295 = vand.u32 %v950, 4294901760
    %3296 = vmatpush1.msra.mxu0 %v3295
    %3297 = vmatprep.subr.mxu0 0.0
    %v3298 = vand.u32 %v949, 4294901760
    %3299 = vmatpush1.msra.mxu0 %v3298
    %3300 = vmatprep.subr.mxu0 0.0
    %v3301 = vand.u32 %v948, 4294901760
    %3302 = vmatpush1.msra.mxu0 %v3301
    %3303 = vmatprep.subr.mxu0 0.0
    %v3304 = vand.u32 %v947, 4294901760
    %3305 = vmatpush1.msra.mxu0 %v3304
    %3306 = vmatprep.subr.mxu0 0.0
    %3307 = vmatpush2.msra.mxu0 0.0
    %3308 = vmatprep.subr.mxu0 0.0
    %3309 = vmatpush2.msra.mxu0 0.0
    %3310 = vmatprep.subr.mxu0 0.0
    %3311 = vmatpush2.msra.mxu0 0.0
    %3312 = vmatprep.subr.mxu0 0.0
    %3313 = vmatpush2.msra.mxu0 0.0
    %3314 = vmatprep.subr.mxu0 0.0
    %3315 = vmatpush2.msra.mxu0 0.0
    %3316 = vmatprep.subr.mxu0 0.0
    %3317 = vmatpush2.msra.mxu0 0.0
    %3318 = vmatprep.subr.mxu0 0.0
    %3319 = vmatpush2.msra.mxu0 0.0
    %3320 = vmatprep.subr.mxu0 0.0
    %3321 = vmatpush2.msra.mxu0 0.0
    %3322 = vmatprep.subr.mxu0 0.0
    %3323 = vmatpush2.msra.mxu0 0.0
    %3324 = vmatprep.subr.mxu0 0.0
    %3325 = vmatpush2.msra.mxu0 0.0
    %3326 = vmatprep.subr.mxu0 0.0
    %3327 = vmatpush2.msra.mxu0 0.0
    %3328 = vmatprep.subr.mxu0 0.0
    %3329 = vmatpush2.msra.mxu0 0.0
    %3330 = vmatprep.subr.mxu0 0.0
    %3331 = vmatpush2.msra.mxu0 0.0
    %3332 = vmatprep.subr.mxu0 0.0
    %3333 = vmatpush2.msra.mxu0 0.0
    %3334 = vmatprep.subr.mxu0 0.0
    %3335 = vmatpush2.msra.mxu0 0.0
    %3336 = vmatprep.subr.mxu0 0.0
    %3337 = vmatpush2.msra.mxu0 0.0
    %3338 = vmatprep.mubr.f32.mxu0 0.0
    %v3339 = vand.u32 %v3018, 4294901760
    %v3340 = vsub.f32 %v3018, %v3339
    %v3341 = vand.u32 %v3340, 4294901760
    %3342 = vmatmul.mubr.f32.gmra.mxu0 %v3341
    %v3343 = vpop.f32.mrf.mxu0
    %v3344 = vadd.f32 %v3267, %v3343
    %v3345 = vpop.f32.mrf.mxu0
    %3346 = vdwg.mxu0
    %3347 = vmatprep.subr.mxu0 0.0
    %3348 = vmatpush1.msra.mxu0 0.0
    %3349 = vmatprep.subr.mxu0 0.0
    %3350 = vmatpush1.msra.mxu0 0.0
    %3351 = vmatprep.subr.mxu0 0.0
    %3352 = vmatpush1.msra.mxu0 0.0
    %3353 = vmatprep.subr.mxu0 0.0
    %3354 = vmatpush1.msra.mxu0 0.0
    %3355 = vmatprep.subr.mxu0 0.0
    %3356 = vmatpush1.msra.mxu0 0.0
    %3357 = vmatprep.subr.mxu0 0.0
    %3358 = vmatpush1.msra.mxu0 0.0
    %3359 = vmatprep.subr.mxu0 0.0
    %3360 = vmatpush1.msra.mxu0 0.0
    %3361 = vmatprep.subr.mxu0 0.0
    %3362 = vmatpush1.msra.mxu0 0.0
    %3363 = vmatprep.subr.mxu0 0.0
    %3364 = vmatpush1.msra.mxu0 0.0
    %3365 = vmatprep.subr.mxu0 0.0
    %3366 = vmatpush1.msra.mxu0 0.0
    %3367 = vmatprep.subr.mxu0 0.0
    %3368 = vmatpush1.msra.mxu0 0.0
    %3369 = vmatprep.subr.mxu0 0.0
    %3370 = vmatpush1.msra.mxu0 0.0
    %3371 = vmatprep.subr.mxu0 0.0
    %v3372 = vand.u32 %v950, 4294901760
    %v3373 = vsub.f32 %v950, %v3372
    %v3374 = vand.u32 %v3373, 4294901760
    %3375 = vmatpush1.msra.mxu0 %v3374
    %3376 = vmatprep.subr.mxu0 0.0
    %v3377 = vand.u32 %v949, 4294901760
    %v3378 = vsub.f32 %v949, %v3377
    %v3379 = vand.u32 %v3378, 4294901760
    %3380 = vmatpush1.msra.mxu0 %v3379
    %3381 = vmatprep.subr.mxu0 0.0
    %v3382 = vand.u32 %v948, 4294901760
    %v3383 = vsub.f32 %v948, %v3382
    %v3384 = vand.u32 %v3383, 4294901760
    %3385 = vmatpush1.msra.mxu0 %v3384
    %3386 = vmatprep.subr.mxu0 0.0
    %v3387 = vand.u32 %v947, 4294901760
    %v3388 = vsub.f32 %v947, %v3387
    %v3389 = vand.u32 %v3388, 4294901760
    %3390 = vmatpush1.msra.mxu0 %v3389
    %3391 = vmatprep.subr.mxu0 0.0
    %3392 = vmatpush2.msra.mxu0 0.0
    %3393 = vmatprep.subr.mxu0 0.0
    %3394 = vmatpush2.msra.mxu0 0.0
    %3395 = vmatprep.subr.mxu0 0.0
    %3396 = vmatpush2.msra.mxu0 0.0
    %3397 = vmatprep.subr.mxu0 0.0
    %3398 = vmatpush2.msra.mxu0 0.0
    %3399 = vmatprep.subr.mxu0 0.0
    %3400 = vmatpush2.msra.mxu0 0.0
    %3401 = vmatprep.subr.mxu0 0.0
    %3402 = vmatpush2.msra.mxu0 0.0
    %3403 = vmatprep.subr.mxu0 0.0
    %3404 = vmatpush2.msra.mxu0 0.0
    %3405 = vmatprep.subr.mxu0 0.0
    %3406 = vmatpush2.msra.mxu0 0.0
    %3407 = vmatprep.subr.mxu0 0.0
    %3408 = vmatpush2.msra.mxu0 0.0
    %3409 = vmatprep.subr.mxu0 0.0
    %3410 = vmatpush2.msra.mxu0 0.0
    %3411 = vmatprep.subr.mxu0 0.0
    %3412 = vmatpush2.msra.mxu0 0.0
    %3413 = vmatprep.subr.mxu0 0.0
    %3414 = vmatpush2.msra.mxu0 0.0
    %3415 = vmatprep.subr.mxu0 0.0
    %3416 = vmatpush2.msra.mxu0 0.0
    %3417 = vmatprep.subr.mxu0 0.0
    %3418 = vmatpush2.msra.mxu0 0.0
    %3419 = vmatprep.subr.mxu0 0.0
    %3420 = vmatpush2.msra.mxu0 0.0
    %3421 = vmatprep.subr.mxu0 0.0
    %3422 = vmatpush2.msra.mxu0 0.0
    %3423 = vmatprep.mubr.f32.mxu0 0.0
    %v3424 = vand.u32 %v3018, 4294901760
    %3425 = vmatmul.mubr.f32.gmra.mxu0 %v3424
    %v3426 = vpop.f32.mrf.mxu0
    %v3427 = vadd.f32 %v3344, %v3426
    %v3428 = vpop.f32.mrf.mxu0
    %3429 = vdwg.mxu0
    %3430 = vmatprep.subr.mxu0 0.0
    %3431 = vmatpush1.msra.mxu0 0.0
    %3432 = vmatprep.subr.mxu0 0.0
    %3433 = vmatpush1.msra.mxu0 0.0
    %3434 = vmatprep.subr.mxu0 0.0
    %3435 = vmatpush1.msra.mxu0 0.0
    %3436 = vmatprep.subr.mxu0 0.0
    %3437 = vmatpush1.msra.mxu0 0.0
    %3438 = vmatprep.subr.mxu0 0.0
    %3439 = vmatpush1.msra.mxu0 0.0
    %3440 = vmatprep.subr.mxu0 0.0
    %3441 = vmatpush1.msra.mxu0 0.0
    %3442 = vmatprep.subr.mxu0 0.0
    %3443 = vmatpush1.msra.mxu0 0.0
    %3444 = vmatprep.subr.mxu0 0.0
    %3445 = vmatpush1.msra.mxu0 0.0
    %3446 = vmatprep.subr.mxu0 0.0
    %3447 = vmatpush1.msra.mxu0 0.0
    %3448 = vmatprep.subr.mxu0 0.0
    %3449 = vmatpush1.msra.mxu0 0.0
    %3450 = vmatprep.subr.mxu0 0.0
    %3451 = vmatpush1.msra.mxu0 0.0
    %3452 = vmatprep.subr.mxu0 0.0
    %3453 = vmatpush1.msra.mxu0 0.0
    %3454 = vmatprep.subr.mxu0 0.0
    %v3455 = vand.u32 %v950, 4294901760
    %3456 = vmatpush1.msra.mxu0 %v3455
    %3457 = vmatprep.subr.mxu0 0.0
    %v3458 = vand.u32 %v949, 4294901760
    %3459 = vmatpush1.msra.mxu0 %v3458
    %3460 = vmatprep.subr.mxu0 0.0
    %v3461 = vand.u32 %v948, 4294901760
    %3462 = vmatpush1.msra.mxu0 %v3461
    %3463 = vmatprep.subr.mxu0 0.0
    %v3464 = vand.u32 %v947, 4294901760
    %3465 = vmatpush1.msra.mxu0 %v3464
    %3466 = vmatprep.subr.mxu0 0.0
    %3467 = vmatpush2.msra.mxu0 0.0
    %3468 = vmatprep.subr.mxu0 0.0
    %3469 = vmatpush2.msra.mxu0 0.0
    %3470 = vmatprep.subr.mxu0 0.0
    %3471 = vmatpush2.msra.mxu0 0.0
    %3472 = vmatprep.subr.mxu0 0.0
    %3473 = vmatpush2.msra.mxu0 0.0
    %3474 = vmatprep.subr.mxu0 0.0
    %3475 = vmatpush2.msra.mxu0 0.0
    %3476 = vmatprep.subr.mxu0 0.0
    %3477 = vmatpush2.msra.mxu0 0.0
    %3478 = vmatprep.subr.mxu0 0.0
    %3479 = vmatpush2.msra.mxu0 0.0
    %3480 = vmatprep.subr.mxu0 0.0
    %3481 = vmatpush2.msra.mxu0 0.0
    %3482 = vmatprep.subr.mxu0 0.0
    %3483 = vmatpush2.msra.mxu0 0.0
    %3484 = vmatprep.subr.mxu0 0.0
    %3485 = vmatpush2.msra.mxu0 0.0
    %3486 = vmatprep.subr.mxu0 0.0
    %3487 = vmatpush2.msra.mxu0 0.0
    %3488 = vmatprep.subr.mxu0 0.0
    %3489 = vmatpush2.msra.mxu0 0.0
    %3490 = vmatprep.subr.mxu0 0.0
    %3491 = vmatpush2.msra.mxu0 0.0
    %3492 = vmatprep.subr.mxu0 0.0
    %3493 = vmatpush2.msra.mxu0 0.0
    %3494 = vmatprep.subr.mxu0 0.0
    %3495 = vmatpush2.msra.mxu0 0.0
    %3496 = vmatprep.subr.mxu0 0.0
    %3497 = vmatpush2.msra.mxu0 0.0
    %3498 = vmatprep.mubr.f32.mxu0 0.0
    %v3499 = vand.u32 %v3018, 4294901760
    %3500 = vmatmul.mubr.f32.gmra.mxu0 %v3499
    %v3501 = vpop.f32.mrf.mxu0
    %v3502 = vadd.f32 %v3427, %v3501
    %v3503 = vpop.f32.mrf.mxu0
    %3504 = vdwg.mxu0
    %v3505 = vadd.f32 %v926, %v3502
    %v3506 = vxor.u32 %v3505, 2147483648
    %v3507 = vmul.f32 %v3506, 1.442695
    %v3508 = vpow.pop %v3507
    %v3509 = vadd.f32 %v3508, 1.0
    %v3510 = vrcp.pop %v3509
    %v3511 = vmul.f32 1.0, %v3510
    %v3512 = vtanh.pop %v3505
    %v3513 = vmul.f32 %v3511, %v3008
    %3515 = vrot.lane.b32.xlu0 %v3512, 64
    %v3516 = vpop.permute.xlu0 %3515
    %v3518 = vmul.f32 %v3511, %v3516
    %3520 = vrot.lane.b32.xlu0 %v3518, 32
    %v3521 = vpop.permute.xlu0 %3520
    %v3523 = vadd.f32 %v3513, %v3521
    %v3524 = vtanh.pop %v3523
    %3526 = vrot.lane.b32.xlu0 %v3524, 64
    %v3527 = vpop.permute.xlu0 %3526
    %v3529 = vmul.f32 %v3511, %v3527
    %3531 = vrot.lane.b32.xlu0 %v3529, 32
    %v3532 = vpop.permute.xlu0 %3531
    %v3533 = vsel %vm136, %v3532, 0
    %3535 = vmatprep.subr.mxu0 0.0
    %3536 = vmatpush1.msra.mxu0 0.0
    %3537 = vmatprep.subr.mxu0 0.0
    %3538 = vmatpush1.msra.mxu0 0.0
    %3539 = vmatprep.subr.mxu0 0.0
    %3540 = vmatpush1.msra.mxu0 0.0
    %3541 = vmatprep.subr.mxu0 0.0
    %3542 = vmatpush1.msra.mxu0 0.0
    %3543 = vmatprep.subr.mxu0 0.0
    %3544 = vmatpush1.msra.mxu0 0.0
    %3545 = vmatprep.subr.mxu0 0.0
    %3546 = vmatpush1.msra.mxu0 0.0
    %3547 = vmatprep.subr.mxu0 0.0
    %3548 = vmatpush1.msra.mxu0 0.0
    %3549 = vmatprep.subr.mxu0 0.0
    %3550 = vmatpush1.msra.mxu0 0.0
    %3551 = vmatprep.subr.mxu0 0.0
    %3552 = vmatpush1.msra.mxu0 0.0
    %3553 = vmatprep.subr.mxu0 0.0
    %3554 = vmatpush1.msra.mxu0 0.0
    %3555 = vmatprep.subr.mxu0 0.0
    %3556 = vmatpush1.msra.mxu0 0.0
    %3557 = vmatprep.subr.mxu0 0.0
    %3558 = vmatpush1.msra.mxu0 0.0
    %3559 = vmatprep.subr.mxu0 0.0
    %v3560 = vand.u32 %v950, 4294901760
    %3561 = vmatpush1.msra.mxu0 %v3560
    %3562 = vmatprep.subr.mxu0 0.0
    %v3563 = vand.u32 %v949, 4294901760
    %3564 = vmatpush1.msra.mxu0 %v3563
    %3565 = vmatprep.subr.mxu0 0.0
    %v3566 = vand.u32 %v948, 4294901760
    %3567 = vmatpush1.msra.mxu0 %v3566
    %3568 = vmatprep.subr.mxu0 0.0
    %v3569 = vand.u32 %v947, 4294901760
    %3570 = vmatpush1.msra.mxu0 %v3569
    %3571 = vmatprep.subr.mxu0 0.0
    %3572 = vmatpush2.msra.mxu0 0.0
    %3573 = vmatprep.subr.mxu0 0.0
    %3574 = vmatpush2.msra.mxu0 0.0
    %3575 = vmatprep.subr.mxu0 0.0
    %3576 = vmatpush2.msra.mxu0 0.0
    %3577 = vmatprep.subr.mxu0 0.0
    %3578 = vmatpush2.msra.mxu0 0.0
    %3579 = vmatprep.subr.mxu0 0.0
    %3580 = vmatpush2.msra.mxu0 0.0
    %3581 = vmatprep.subr.mxu0 0.0
    %3582 = vmatpush2.msra.mxu0 0.0
    %3583 = vmatprep.subr.mxu0 0.0
    %3584 = vmatpush2.msra.mxu0 0.0
    %3585 = vmatprep.subr.mxu0 0.0
    %3586 = vmatpush2.msra.mxu0 0.0
    %3587 = vmatprep.subr.mxu0 0.0
    %3588 = vmatpush2.msra.mxu0 0.0
    %3589 = vmatprep.subr.mxu0 0.0
    %3590 = vmatpush2.msra.mxu0 0.0
    %3591 = vmatprep.subr.mxu0 0.0
    %3592 = vmatpush2.msra.mxu0 0.0
    %3593 = vmatprep.subr.mxu0 0.0
    %3594 = vmatpush2.msra.mxu0 0.0
    %3595 = vmatprep.subr.mxu0 0.0
    %3596 = vmatpush2.msra.mxu0 0.0
    %3597 = vmatprep.subr.mxu0 0.0
    %3598 = vmatpush2.msra.mxu0 0.0
    %3599 = vmatprep.subr.mxu0 0.0
    %3600 = vmatpush2.msra.mxu0 0.0
    %3601 = vmatprep.subr.mxu0 0.0
    %3602 = vmatpush2.msra.mxu0 0.0
    %3603 = vmatprep.mubr.f32.mxu0 0.0
    %v3604 = vand.u32 %v3533, 4294901760
    %v3605 = vsub.f32 %v3533, %v3604
    %v3606 = vand.u32 %v3605, 4294901760
    %v3607 = vsub.f32 %v3605, %v3606
    %v3608 = vand.u32 %v3607, 4294901760
    %3609 = vmatmul.mubr.f32.gmra.mxu0 %v3608
    %v3610 = vpop.f32.mrf.mxu0
    %v3611 = vadd.f32 0.0, %v3610
    %v3612 = vpop.f32.mrf.mxu0
    %3613 = vdwg.mxu0
    %3614 = vmatprep.subr.mxu0 0.0
    %3615 = vmatpush1.msra.mxu0 0.0
    %3616 = vmatprep.subr.mxu0 0.0
    %3617 = vmatpush1.msra.mxu0 0.0
    %3618 = vmatprep.subr.mxu0 0.0
    %3619 = vmatpush1.msra.mxu0 0.0
    %3620 = vmatprep.subr.mxu0 0.0
    %3621 = vmatpush1.msra.mxu0 0.0
    %3622 = vmatprep.subr.mxu0 0.0
    %3623 = vmatpush1.msra.mxu0 0.0
    %3624 = vmatprep.subr.mxu0 0.0
    %3625 = vmatpush1.msra.mxu0 0.0
    %3626 = vmatprep.subr.mxu0 0.0
    %3627 = vmatpush1.msra.mxu0 0.0
    %3628 = vmatprep.subr.mxu0 0.0
    %3629 = vmatpush1.msra.mxu0 0.0
    %3630 = vmatprep.subr.mxu0 0.0
    %3631 = vmatpush1.msra.mxu0 0.0
    %3632 = vmatprep.subr.mxu0 0.0
    %3633 = vmatpush1.msra.mxu0 0.0
    %3634 = vmatprep.subr.mxu0 0.0
    %3635 = vmatpush1.msra.mxu0 0.0
    %3636 = vmatprep.subr.mxu0 0.0
    %3637 = vmatpush1.msra.mxu0 0.0
    %3638 = vmatprep.subr.mxu0 0.0
    %v3639 = vand.u32 %v950, 4294901760
    %v3640 = vsub.f32 %v950, %v3639
    %v3641 = vand.u32 %v3640, 4294901760
    %v3642 = vsub.f32 %v3640, %v3641
    %v3643 = vand.u32 %v3642, 4294901760
    %3644 = vmatpush1.msra.mxu0 %v3643
    %3645 = vmatprep.subr.mxu0 0.0
    %v3646 = vand.u32 %v949, 4294901760
    %v3647 = vsub.f32 %v949, %v3646
    %v3648 = vand.u32 %v3647, 4294901760
    %v3649 = vsub.f32 %v3647, %v3648
    %v3650 = vand.u32 %v3649, 4294901760
    %3651 = vmatpush1.msra.mxu0 %v3650
    %3652 = vmatprep.subr.mxu0 0.0
    %v3653 = vand.u32 %v948, 4294901760
    %v3654 = vsub.f32 %v948, %v3653
    %v3655 = vand.u32 %v3654, 4294901760
    %v3656 = vsub.f32 %v3654, %v3655
    %v3657 = vand.u32 %v3656, 4294901760
    %3658 = vmatpush1.msra.mxu0 %v3657
    %3659 = vmatprep.subr.mxu0 0.0
    %v3660 = vand.u32 %v947, 4294901760
    %v3661 = vsub.f32 %v947, %v3660
    %v3662 = vand.u32 %v3661, 4294901760
    %v3663 = vsub.f32 %v3661, %v3662
    %v3664 = vand.u32 %v3663, 4294901760
    %3665 = vmatpush1.msra.mxu0 %v3664
    %3666 = vmatprep.subr.mxu0 0.0
    %3667 = vmatpush2.msra.mxu0 0.0
    %3668 = vmatprep.subr.mxu0 0.0
    %3669 = vmatpush2.msra.mxu0 0.0
    %3670 = vmatprep.subr.mxu0 0.0
    %3671 = vmatpush2.msra.mxu0 0.0
    %3672 = vmatprep.subr.mxu0 0.0
    %3673 = vmatpush2.msra.mxu0 0.0
    %3674 = vmatprep.subr.mxu0 0.0
    %3675 = vmatpush2.msra.mxu0 0.0
    %3676 = vmatprep.subr.mxu0 0.0
    %3677 = vmatpush2.msra.mxu0 0.0
    %3678 = vmatprep.subr.mxu0 0.0
    %3679 = vmatpush2.msra.mxu0 0.0
    %3680 = vmatprep.subr.mxu0 0.0
    %3681 = vmatpush2.msra.mxu0 0.0
    %3682 = vmatprep.subr.mxu0 0.0
    %3683 = vmatpush2.msra.mxu0 0.0
    %3684 = vmatprep.subr.mxu0 0.0
    %3685 = vmatpush2.msra.mxu0 0.0
    %3686 = vmatprep.subr.mxu0 0.0
    %3687 = vmatpush2.msra.mxu0 0.0
    %3688 = vmatprep.subr.mxu0 0.0
    %3689 = vmatpush2.msra.mxu0 0.0
    %3690 = vmatprep.subr.mxu0 0.0
    %3691 = vmatpush2.msra.mxu0 0.0
    %3692 = vmatprep.subr.mxu0 0.0
    %3693 = vmatpush2.msra.mxu0 0.0
    %3694 = vmatprep.subr.mxu0 0.0
    %3695 = vmatpush2.msra.mxu0 0.0
    %3696 = vmatprep.subr.mxu0 0.0
    %3697 = vmatpush2.msra.mxu0 0.0
    %3698 = vmatprep.mubr.f32.mxu0 0.0
    %v3699 = vand.u32 %v3533, 4294901760
    %3700 = vmatmul.mubr.f32.gmra.mxu0 %v3699
    %v3701 = vpop.f32.mrf.mxu0
    %v3702 = vadd.f32 %v3611, %v3701
    %v3703 = vpop.f32.mrf.mxu0
    %3704 = vdwg.mxu0
    %3705 = vmatprep.subr.mxu0 0.0
    %3706 = vmatpush1.msra.mxu0 0.0
    %3707 = vmatprep.subr.mxu0 0.0
    %3708 = vmatpush1.msra.mxu0 0.0
    %3709 = vmatprep.subr.mxu0 0.0
    %3710 = vmatpush1.msra.mxu0 0.0
    %3711 = vmatprep.subr.mxu0 0.0
    %3712 = vmatpush1.msra.mxu0 0.0
    %3713 = vmatprep.subr.mxu0 0.0
    %3714 = vmatpush1.msra.mxu0 0.0
    %3715 = vmatprep.subr.mxu0 0.0
    %3716 = vmatpush1.msra.mxu0 0.0
    %3717 = vmatprep.subr.mxu0 0.0
    %3718 = vmatpush1.msra.mxu0 0.0
    %3719 = vmatprep.subr.mxu0 0.0
    %3720 = vmatpush1.msra.mxu0 0.0
    %3721 = vmatprep.subr.mxu0 0.0
    %3722 = vmatpush1.msra.mxu0 0.0
    %3723 = vmatprep.subr.mxu0 0.0
    %3724 = vmatpush1.msra.mxu0 0.0
    %3725 = vmatprep.subr.mxu0 0.0
    %3726 = vmatpush1.msra.mxu0 0.0
    %3727 = vmatprep.subr.mxu0 0.0
    %3728 = vmatpush1.msra.mxu0 0.0
    %3729 = vmatprep.subr.mxu0 0.0
    %v3730 = vand.u32 %v950, 4294901760
    %v3731 = vsub.f32 %v950, %v3730
    %3732 = vmatpush1.msra.mxu0 %v3731
    %3733 = vmatprep.subr.mxu0 0.0
    %v3734 = vand.u32 %v949, 4294901760
    %v3735 = vsub.f32 %v949, %v3734
    %3736 = vmatpush1.msra.mxu0 %v3735
    %3737 = vmatprep.subr.mxu0 0.0
    %v3738 = vand.u32 %v948, 4294901760
    %v3739 = vsub.f32 %v948, %v3738
    %3740 = vmatpush1.msra.mxu0 %v3739
    %3741 = vmatprep.subr.mxu0 0.0
    %v3742 = vand.u32 %v947, 4294901760
    %v3743 = vsub.f32 %v947, %v3742
    %3744 = vmatpush1.msra.mxu0 %v3743
    %3745 = vmatprep.subr.mxu0 0.0
    %3746 = vmatpush2.msra.mxu0 0.0
    %3747 = vmatprep.subr.mxu0 0.0
    %3748 = vmatpush2.msra.mxu0 0.0
    %3749 = vmatprep.subr.mxu0 0.0
    %3750 = vmatpush2.msra.mxu0 0.0
    %3751 = vmatprep.subr.mxu0 0.0
    %3752 = vmatpush2.msra.mxu0 0.0
    %3753 = vmatprep.subr.mxu0 0.0
    %3754 = vmatpush2.msra.mxu0 0.0
    %3755 = vmatprep.subr.mxu0 0.0
    %3756 = vmatpush2.msra.mxu0 0.0
    %3757 = vmatprep.subr.mxu0 0.0
    %3758 = vmatpush2.msra.mxu0 0.0
    %3759 = vmatprep.subr.mxu0 0.0
    %3760 = vmatpush2.msra.mxu0 0.0
    %3761 = vmatprep.subr.mxu0 0.0
    %3762 = vmatpush2.msra.mxu0 0.0
    %3763 = vmatprep.subr.mxu0 0.0
    %3764 = vmatpush2.msra.mxu0 0.0
    %3765 = vmatprep.subr.mxu0 0.0
    %3766 = vmatpush2.msra.mxu0 0.0
    %3767 = vmatprep.subr.mxu0 0.0
    %3768 = vmatpush2.msra.mxu0 0.0
    %3769 = vmatprep.subr.mxu0 0.0
    %3770 = vmatpush2.msra.mxu0 0.0
    %3771 = vmatprep.subr.mxu0 0.0
    %3772 = vmatpush2.msra.mxu0 0.0
    %3773 = vmatprep.subr.mxu0 0.0
    %3774 = vmatpush2.msra.mxu0 0.0
    %3775 = vmatprep.subr.mxu0 0.0
    %3776 = vmatpush2.msra.mxu0 0.0
    %3777 = vmatprep.mubr.f32.mxu0 0.0
    %v3778 = vand.u32 %v3533, 4294901760
    %v3779 = vsub.f32 %v3533, %v3778
    %3780 = vmatmul.mubr.f32.gmra.mxu0 %v3779
    %v3781 = vpop.f32.mrf.mxu0
    %v3782 = vadd.f32 %v3702, %v3781
    %v3783 = vpop.f32.mrf.mxu0
    %3784 = vdwg.mxu0
    %3785 = vmatprep.subr.mxu0 0.0
    %3786 = vmatpush1.msra.mxu0 0.0
    %3787 = vmatprep.subr.mxu0 0.0
    %3788 = vmatpush1.msra.mxu0 0.0
    %3789 = vmatprep.subr.mxu0 0.0
    %3790 = vmatpush1.msra.mxu0 0.0
    %3791 = vmatprep.subr.mxu0 0.0
    %3792 = vmatpush1.msra.mxu0 0.0
    %3793 = vmatprep.subr.mxu0 0.0
    %3794 = vmatpush1.msra.mxu0 0.0
    %3795 = vmatprep.subr.mxu0 0.0
    %3796 = vmatpush1.msra.mxu0 0.0
    %3797 = vmatprep.subr.mxu0 0.0
    %3798 = vmatpush1.msra.mxu0 0.0
    %3799 = vmatprep.subr.mxu0 0.0
    %3800 = vmatpush1.msra.mxu0 0.0
    %3801 = vmatprep.subr.mxu0 0.0
    %3802 = vmatpush1.msra.mxu0 0.0
    %3803 = vmatprep.subr.mxu0 0.0
    %3804 = vmatpush1.msra.mxu0 0.0
    %3805 = vmatprep.subr.mxu0 0.0
    %3806 = vmatpush1.msra.mxu0 0.0
    %3807 = vmatprep.subr.mxu0 0.0
    %3808 = vmatpush1.msra.mxu0 0.0
    %3809 = vmatprep.subr.mxu0 0.0
    %v3810 = vand.u32 %v950, 4294901760
    %3811 = vmatpush1.msra.mxu0 %v3810
    %3812 = vmatprep.subr.mxu0 0.0
    %v3813 = vand.u32 %v949, 4294901760
    %3814 = vmatpush1.msra.mxu0 %v3813
    %3815 = vmatprep.subr.mxu0 0.0
    %v3816 = vand.u32 %v948, 4294901760
    %3817 = vmatpush1.msra.mxu0 %v3816
    %3818 = vmatprep.subr.mxu0 0.0
    %v3819 = vand.u32 %v947, 4294901760
    %3820 = vmatpush1.msra.mxu0 %v3819
    %3821 = vmatprep.subr.mxu0 0.0
    %3822 = vmatpush2.msra.mxu0 0.0
    %3823 = vmatprep.subr.mxu0 0.0
    %3824 = vmatpush2.msra.mxu0 0.0
    %3825 = vmatprep.subr.mxu0 0.0
    %3826 = vmatpush2.msra.mxu0 0.0
    %3827 = vmatprep.subr.mxu0 0.0
    %3828 = vmatpush2.msra.mxu0 0.0
    %3829 = vmatprep.subr.mxu0 0.0
    %3830 = vmatpush2.msra.mxu0 0.0
    %3831 = vmatprep.subr.mxu0 0.0
    %3832 = vmatpush2.msra.mxu0 0.0
    %3833 = vmatprep.subr.mxu0 0.0
    %3834 = vmatpush2.msra.mxu0 0.0
    %3835 = vmatprep.subr.mxu0 0.0
    %3836 = vmatpush2.msra.mxu0 0.0
    %3837 = vmatprep.subr.mxu0 0.0
    %3838 = vmatpush2.msra.mxu0 0.0
    %3839 = vmatprep.subr.mxu0 0.0
    %3840 = vmatpush2.msra.mxu0 0.0
    %3841 = vmatprep.subr.mxu0 0.0
    %3842 = vmatpush2.msra.mxu0 0.0
    %3843 = vmatprep.subr.mxu0 0.0
    %3844 = vmatpush2.msra.mxu0 0.0
    %3845 = vmatprep.subr.mxu0 0.0
    %3846 = vmatpush2.msra.mxu0 0.0
    %3847 = vmatprep.subr.mxu0 0.0
    %3848 = vmatpush2.msra.mxu0 0.0
    %3849 = vmatprep.subr.mxu0 0.0
    %3850 = vmatpush2.msra.mxu0 0.0
    %3851 = vmatprep.subr.mxu0 0.0
    %3852 = vmatpush2.msra.mxu0 0.0
    %3853 = vmatprep.mubr.f32.mxu0 0.0
    %v3854 = vand.u32 %v3533, 4294901760
    %v3855 = vsub.f32 %v3533, %v3854
    %v3856 = vand.u32 %v3855, 4294901760
    %3857 = vmatmul.mubr.f32.gmra.mxu0 %v3856
    %v3858 = vpop.f32.mrf.mxu0
    %v3859 = vadd.f32 %v3782, %v3858
    %v3860 = vpop.f32.mrf.mxu0
    %3861 = vdwg.mxu0
    %3862 = vmatprep.subr.mxu0 0.0
    %3863 = vmatpush1.msra.mxu0 0.0
    %3864 = vmatprep.subr.mxu0 0.0
    %3865 = vmatpush1.msra.mxu0 0.0
    %3866 = vmatprep.subr.mxu0 0.0
    %3867 = vmatpush1.msra.mxu0 0.0
    %3868 = vmatprep.subr.mxu0 0.0
    %3869 = vmatpush1.msra.mxu0 0.0
    %3870 = vmatprep.subr.mxu0 0.0
    %3871 = vmatpush1.msra.mxu0 0.0
    %3872 = vmatprep.subr.mxu0 0.0
    %3873 = vmatpush1.msra.mxu0 0.0
    %3874 = vmatprep.subr.mxu0 0.0
    %3875 = vmatpush1.msra.mxu0 0.0
    %3876 = vmatprep.subr.mxu0 0.0
    %3877 = vmatpush1.msra.mxu0 0.0
    %3878 = vmatprep.subr.mxu0 0.0
    %3879 = vmatpush1.msra.mxu0 0.0
    %3880 = vmatprep.subr.mxu0 0.0
    %3881 = vmatpush1.msra.mxu0 0.0
    %3882 = vmatprep.subr.mxu0 0.0
    %3883 = vmatpush1.msra.mxu0 0.0
    %3884 = vmatprep.subr.mxu0 0.0
    %3885 = vmatpush1.msra.mxu0 0.0
    %3886 = vmatprep.subr.mxu0 0.0
    %v3887 = vand.u32 %v950, 4294901760
    %v3888 = vsub.f32 %v950, %v3887
    %v3889 = vand.u32 %v3888, 4294901760
    %3890 = vmatpush1.msra.mxu0 %v3889
    %3891 = vmatprep.subr.mxu0 0.0
    %v3892 = vand.u32 %v949, 4294901760
    %v3893 = vsub.f32 %v949, %v3892
    %v3894 = vand.u32 %v3893, 4294901760
    %3895 = vmatpush1.msra.mxu0 %v3894
    %3896 = vmatprep.subr.mxu0 0.0
    %v3897 = vand.u32 %v948, 4294901760
    %v3898 = vsub.f32 %v948, %v3897
    %v3899 = vand.u32 %v3898, 4294901760
    %3900 = vmatpush1.msra.mxu0 %v3899
    %3901 = vmatprep.subr.mxu0 0.0
    %v3902 = vand.u32 %v947, 4294901760
    %v3903 = vsub.f32 %v947, %v3902
    %v3904 = vand.u32 %v3903, 4294901760
    %3905 = vmatpush1.msra.mxu0 %v3904
    %3906 = vmatprep.subr.mxu0 0.0
    %3907 = vmatpush2.msra.mxu0 0.0
    %3908 = vmatprep.subr.mxu0 0.0
    %3909 = vmatpush2.msra.mxu0 0.0
    %3910 = vmatprep.subr.mxu0 0.0
    %3911 = vmatpush2.msra.mxu0 0.0
    %3912 = vmatprep.subr.mxu0 0.0
    %3913 = vmatpush2.msra.mxu0 0.0
    %3914 = vmatprep.subr.mxu0 0.0
    %3915 = vmatpush2.msra.mxu0 0.0
    %3916 = vmatprep.subr.mxu0 0.0
    %3917 = vmatpush2.msra.mxu0 0.0
    %3918 = vmatprep.subr.mxu0 0.0
    %3919 = vmatpush2.msra.mxu0 0.0
    %3920 = vmatprep.subr.mxu0 0.0
    %3921 = vmatpush2.msra.mxu0 0.0
    %3922 = vmatprep.subr.mxu0 0.0
    %3923 = vmatpush2.msra.mxu0 0.0
    %3924 = vmatprep.subr.mxu0 0.0
    %3925 = vmatpush2.msra.mxu0 0.0
    %3926 = vmatprep.subr.mxu0 0.0
    %3927 = vmatpush2.msra.mxu0 0.0
    %3928 = vmatprep.subr.mxu0 0.0
    %3929 = vmatpush2.msra.mxu0 0.0
    %3930 = vmatprep.subr.mxu0 0.0
    %3931 = vmatpush2.msra.mxu0 0.0
    %3932 = vmatprep.subr.mxu0 0.0
    %3933 = vmatpush2.msra.mxu0 0.0
    %3934 = vmatprep.subr.mxu0 0.0
    %3935 = vmatpush2.msra.mxu0 0.0
    %3936 = vmatprep.subr.mxu0 0.0
    %3937 = vmatpush2.msra.mxu0 0.0
    %3938 = vmatprep.mubr.f32.mxu0 0.0
    %v3939 = vand.u32 %v3533, 4294901760
    %3940 = vmatmul.mubr.f32.gmra.mxu0 %v3939
    %v3941 = vpop.f32.mrf.mxu0
    %v3942 = vadd.f32 %v3859, %v3941
    %v3943 = vpop.f32.mrf.mxu0
    %3944 = vdwg.mxu0
    %3945 = vmatprep.subr.mxu0 0.0
    %3946 = vmatpush1.msra.mxu0 0.0
    %3947 = vmatprep.subr.mxu0 0.0
    %3948 = vmatpush1.msra.mxu0 0.0
    %3949 = vmatprep.subr.mxu0 0.0
    %3950 = vmatpush1.msra.mxu0 0.0
    %3951 = vmatprep.subr.mxu0 0.0
    %3952 = vmatpush1.msra.mxu0 0.0
    %3953 = vmatprep.subr.mxu0 0.0
    %3954 = vmatpush1.msra.mxu0 0.0
    %3955 = vmatprep.subr.mxu0 0.0
    %3956 = vmatpush1.msra.mxu0 0.0
    %3957 = vmatprep.subr.mxu0 0.0
    %3958 = vmatpush1.msra.mxu0 0.0
    %3959 = vmatprep.subr.mxu0 0.0
    %3960 = vmatpush1.msra.mxu0 0.0
    %3961 = vmatprep.subr.mxu0 0.0
    %3962 = vmatpush1.msra.mxu0 0.0
    %3963 = vmatprep.subr.mxu0 0.0
    %3964 = vmatpush1.msra.mxu0 0.0
    %3965 = vmatprep.subr.mxu0 0.0
    %3966 = vmatpush1.msra.mxu0 0.0
    %3967 = vmatprep.subr.mxu0 0.0
    %3968 = vmatpush1.msra.mxu0 0.0
    %3969 = vmatprep.subr.mxu0 0.0
    %v3970 = vand.u32 %v950, 4294901760
    %3971 = vmatpush1.msra.mxu0 %v3970
    %3972 = vmatprep.subr.mxu0 0.0
    %v3973 = vand.u32 %v949, 4294901760
    %3974 = vmatpush1.msra.mxu0 %v3973
    %3975 = vmatprep.subr.mxu0 0.0
    %v3976 = vand.u32 %v948, 4294901760
    %3977 = vmatpush1.msra.mxu0 %v3976
    %3978 = vmatprep.subr.mxu0 0.0
    %v3979 = vand.u32 %v947, 4294901760
    %3980 = vmatpush1.msra.mxu0 %v3979
    %3981 = vmatprep.subr.mxu0 0.0
    %3982 = vmatpush2.msra.mxu0 0.0
    %3983 = vmatprep.subr.mxu0 0.0
    %3984 = vmatpush2.msra.mxu0 0.0
    %3985 = vmatprep.subr.mxu0 0.0
    %3986 = vmatpush2.msra.mxu0 0.0
    %3987 = vmatprep.subr.mxu0 0.0
    %3988 = vmatpush2.msra.mxu0 0.0
    %3989 = vmatprep.subr.mxu0 0.0
    %3990 = vmatpush2.msra.mxu0 0.0
    %3991 = vmatprep.subr.mxu0 0.0
    %3992 = vmatpush2.msra.mxu0 0.0
    %3993 = vmatprep.subr.mxu0 0.0
    %3994 = vmatpush2.msra.mxu0 0.0
    %3995 = vmatprep.subr.mxu0 0.0
    %3996 = vmatpush2.msra.mxu0 0.0
    %3997 = vmatprep.subr.mxu0 0.0
    %3998 = vmatpush2.msra.mxu0 0.0
    %3999 = vmatprep.subr.mxu0 0.0
    %4000 = vmatpush2.msra.mxu0 0.0
    %4001 = vmatprep.subr.mxu0 0.0
    %4002 = vmatpush2.msra.mxu0 0.0
    %4003 = vmatprep.subr.mxu0 0.0
    %4004 = vmatpush2.msra.mxu0 0.0
    %4005 = vmatprep.subr.mxu0 0.0
    %4006 = vmatpush2.msra.mxu0 0.0
    %4007 = vmatprep.subr.mxu0 0.0
    %4008 = vmatpush2.msra.mxu0 0.0
    %4009 = vmatprep.subr.mxu0 0.0
    %4010 = vmatpush2.msra.mxu0 0.0
    %4011 = vmatprep.subr.mxu0 0.0
    %4012 = vmatpush2.msra.mxu0 0.0
    %4013 = vmatprep.mubr.f32.mxu0 0.0
    %v4014 = vand.u32 %v3533, 4294901760
    %4015 = vmatmul.mubr.f32.gmra.mxu0 %v4014
    %v4016 = vpop.f32.mrf.mxu0
    %v4017 = vadd.f32 %v3942, %v4016
    %v4018 = vpop.f32.mrf.mxu0
    %4019 = vdwg.mxu0
    %v4020 = vadd.f32 %v932, %v4017
    %v4021 = vxor.u32 %v4020, 2147483648
    %v4022 = vmul.f32 %v4021, 1.442695
    %v4023 = vpow.pop %v4022
    %v4024 = vadd.f32 %v4023, 1.0
    %v4025 = vrcp.pop %v4024
    %v4026 = vmul.f32 1.0, %v4025
    %v4027 = vtanh.pop %v4020
    %v4028 = vmul.f32 %v4026, %v3523
    %4030 = vrot.lane.b32.xlu0 %v4027, 64
    %v4031 = vpop.permute.xlu0 %4030
    %v4033 = vmul.f32 %v4026, %v4031
    %4035 = vrot.lane.b32.xlu0 %v4033, 32
    %v4036 = vpop.permute.xlu0 %4035
    %v4038 = vadd.f32 %v4028, %v4036
    %v4039 = vtanh.pop %v4038
    %4041 = vrot.lane.b32.xlu0 %v4039, 64
    %v4042 = vpop.permute.xlu0 %4041
    %v4044 = vmul.f32 %v4026, %v4042
    %4046 = vrot.lane.b32.xlu0 %v4044, 32
    %v4047 = vpop.permute.xlu0 %4046
    %v4048 = vsel %vm136, %v4047, 0
    %4050 = vmatprep.subr.mxu0 0.0
    %4051 = vmatpush1.msra.mxu0 0.0
    %4052 = vmatprep.subr.mxu0 0.0
    %4053 = vmatpush1.msra.mxu0 0.0
    %4054 = vmatprep.subr.mxu0 0.0
    %4055 = vmatpush1.msra.mxu0 0.0
    %4056 = vmatprep.subr.mxu0 0.0
    %4057 = vmatpush1.msra.mxu0 0.0
    %4058 = vmatprep.subr.mxu0 0.0
    %4059 = vmatpush1.msra.mxu0 0.0
    %4060 = vmatprep.subr.mxu0 0.0
    %4061 = vmatpush1.msra.mxu0 0.0
    %4062 = vmatprep.subr.mxu0 0.0
    %4063 = vmatpush1.msra.mxu0 0.0
    %4064 = vmatprep.subr.mxu0 0.0
    %4065 = vmatpush1.msra.mxu0 0.0
    %4066 = vmatprep.subr.mxu0 0.0
    %4067 = vmatpush1.msra.mxu0 0.0
    %4068 = vmatprep.subr.mxu0 0.0
    %4069 = vmatpush1.msra.mxu0 0.0
    %4070 = vmatprep.subr.mxu0 0.0
    %4071 = vmatpush1.msra.mxu0 0.0
    %4072 = vmatprep.subr.mxu0 0.0
    %4073 = vmatpush1.msra.mxu0 0.0
    %4074 = vmatprep.subr.mxu0 0.0
    %v4075 = vand.u32 %v950, 4294901760
    %4076 = vmatpush1.msra.mxu0 %v4075
    %4077 = vmatprep.subr.mxu0 0.0
    %v4078 = vand.u32 %v949, 4294901760
    %4079 = vmatpush1.msra.mxu0 %v4078
    %4080 = vmatprep.subr.mxu0 0.0
    %v4081 = vand.u32 %v948, 4294901760
    %4082 = vmatpush1.msra.mxu0 %v4081
    %4083 = vmatprep.subr.mxu0 0.0
    %v4084 = vand.u32 %v947, 4294901760
    %4085 = vmatpush1.msra.mxu0 %v4084
    %4086 = vmatprep.subr.mxu0 0.0
    %4087 = vmatpush2.msra.mxu0 0.0
    %4088 = vmatprep.subr.mxu0 0.0
    %4089 = vmatpush2.msra.mxu0 0.0
    %4090 = vmatprep.subr.mxu0 0.0
    %4091 = vmatpush2.msra.mxu0 0.0
    %4092 = vmatprep.subr.mxu0 0.0
    %4093 = vmatpush2.msra.mxu0 0.0
    %4094 = vmatprep.subr.mxu0 0.0
    %4095 = vmatpush2.msra.mxu0 0.0
    %4096 = vmatprep.subr.mxu0 0.0
    %4097 = vmatpush2.msra.mxu0 0.0
    %4098 = vmatprep.subr.mxu0 0.0
    %4099 = vmatpush2.msra.mxu0 0.0
    %4100 = vmatprep.subr.mxu0 0.0
    %4101 = vmatpush2.msra.mxu0 0.0
    %4102 = vmatprep.subr.mxu0 0.0
    %4103 = vmatpush2.msra.mxu0 0.0
    %4104 = vmatprep.subr.mxu0 0.0
    %4105 = vmatpush2.msra.mxu0 0.0
    %4106 = vmatprep.subr.mxu0 0.0
    %4107 = vmatpush2.msra.mxu0 0.0
    %4108 = vmatprep.subr.mxu0 0.0
    %4109 = vmatpush2.msra.mxu0 0.0
    %4110 = vmatprep.subr.mxu0 0.0
    %4111 = vmatpush2.msra.mxu0 0.0
    %4112 = vmatprep.subr.mxu0 0.0
    %4113 = vmatpush2.msra.mxu0 0.0
    %4114 = vmatprep.subr.mxu0 0.0
    %4115 = vmatpush2.msra.mxu0 0.0
    %4116 = vmatprep.subr.mxu0 0.0
    %4117 = vmatpush2.msra.mxu0 0.0
    %4118 = vmatprep.mubr.f32.mxu0 0.0
    %v4119 = vand.u32 %v4048, 4294901760
    %v4120 = vsub.f32 %v4048, %v4119
    %v4121 = vand.u32 %v4120, 4294901760
    %v4122 = vsub.f32 %v4120, %v4121
    %v4123 = vand.u32 %v4122, 4294901760
    %4124 = vmatmul.mubr.f32.gmra.mxu0 %v4123
    %v4125 = vpop.f32.mrf.mxu0
    %v4126 = vadd.f32 0.0, %v4125
    %v4127 = vpop.f32.mrf.mxu0
    %4128 = vdwg.mxu0
    %4129 = vmatprep.subr.mxu0 0.0
    %4130 = vmatpush1.msra.mxu0 0.0
    %4131 = vmatprep.subr.mxu0 0.0
    %4132 = vmatpush1.msra.mxu0 0.0
    %4133 = vmatprep.subr.mxu0 0.0
    %4134 = vmatpush1.msra.mxu0 0.0
    %4135 = vmatprep.subr.mxu0 0.0
    %4136 = vmatpush1.msra.mxu0 0.0
    %4137 = vmatprep.subr.mxu0 0.0
    %4138 = vmatpush1.msra.mxu0 0.0
    %4139 = vmatprep.subr.mxu0 0.0
    %4140 = vmatpush1.msra.mxu0 0.0
    %4141 = vmatprep.subr.mxu0 0.0
    %4142 = vmatpush1.msra.mxu0 0.0
    %4143 = vmatprep.subr.mxu0 0.0
    %4144 = vmatpush1.msra.mxu0 0.0
    %4145 = vmatprep.subr.mxu0 0.0
    %4146 = vmatpush1.msra.mxu0 0.0
    %4147 = vmatprep.subr.mxu0 0.0
    %4148 = vmatpush1.msra.mxu0 0.0
    %4149 = vmatprep.subr.mxu0 0.0
    %4150 = vmatpush1.msra.mxu0 0.0
    %4151 = vmatprep.subr.mxu0 0.0
    %4152 = vmatpush1.msra.mxu0 0.0
    %4153 = vmatprep.subr.mxu0 0.0
    %v4154 = vand.u32 %v950, 4294901760
    %v4155 = vsub.f32 %v950, %v4154
    %v4156 = vand.u32 %v4155, 4294901760
    %v4157 = vsub.f32 %v4155, %v4156
    %v4158 = vand.u32 %v4157, 4294901760
    %4159 = vmatpush1.msra.mxu0 %v4158
    %4160 = vmatprep.subr.mxu0 0.0
    %v4161 = vand.u32 %v949, 4294901760
    %v4162 = vsub.f32 %v949, %v4161
    %v4163 = vand.u32 %v4162, 4294901760
    %v4164 = vsub.f32 %v4162, %v4163
    %v4165 = vand.u32 %v4164, 4294901760
    %4166 = vmatpush1.msra.mxu0 %v4165
    %4167 = vmatprep.subr.mxu0 0.0
    %v4168 = vand.u32 %v948, 4294901760
    %v4169 = vsub.f32 %v948, %v4168
    %v4170 = vand.u32 %v4169, 4294901760
    %v4171 = vsub.f32 %v4169, %v4170
    %v4172 = vand.u32 %v4171, 4294901760
    %4173 = vmatpush1.msra.mxu0 %v4172
    %4174 = vmatprep.subr.mxu0 0.0
    %v4175 = vand.u32 %v947, 4294901760
    %v4176 = vsub.f32 %v947, %v4175
    %v4177 = vand.u32 %v4176, 4294901760
    %v4178 = vsub.f32 %v4176, %v4177
    %v4179 = vand.u32 %v4178, 4294901760
    %4180 = vmatpush1.msra.mxu0 %v4179
    %4181 = vmatprep.subr.mxu0 0.0
    %4182 = vmatpush2.msra.mxu0 0.0
    %4183 = vmatprep.subr.mxu0 0.0
    %4184 = vmatpush2.msra.mxu0 0.0
    %4185 = vmatprep.subr.mxu0 0.0
    %4186 = vmatpush2.msra.mxu0 0.0
    %4187 = vmatprep.subr.mxu0 0.0
    %4188 = vmatpush2.msra.mxu0 0.0
    %4189 = vmatprep.subr.mxu0 0.0
    %4190 = vmatpush2.msra.mxu0 0.0
    %4191 = vmatprep.subr.mxu0 0.0
    %4192 = vmatpush2.msra.mxu0 0.0
    %4193 = vmatprep.subr.mxu0 0.0
    %4194 = vmatpush2.msra.mxu0 0.0
    %4195 = vmatprep.subr.mxu0 0.0
    %4196 = vmatpush2.msra.mxu0 0.0
    %4197 = vmatprep.subr.mxu0 0.0
    %4198 = vmatpush2.msra.mxu0 0.0
    %4199 = vmatprep.subr.mxu0 0.0
    %4200 = vmatpush2.msra.mxu0 0.0
    %4201 = vmatprep.subr.mxu0 0.0
    %4202 = vmatpush2.msra.mxu0 0.0
    %4203 = vmatprep.subr.mxu0 0.0
    %4204 = vmatpush2.msra.mxu0 0.0
    %4205 = vmatprep.subr.mxu0 0.0
    %4206 = vmatpush2.msra.mxu0 0.0
    %4207 = vmatprep.subr.mxu0 0.0
    %4208 = vmatpush2.msra.mxu0 0.0
    %4209 = vmatprep.subr.mxu0 0.0
    %4210 = vmatpush2.msra.mxu0 0.0
    %4211 = vmatprep.subr.mxu0 0.0
    %4212 = vmatpush2.msra.mxu0 0.0
    %4213 = vmatprep.mubr.f32.mxu0 0.0
    %v4214 = vand.u32 %v4048, 4294901760
    %4215 = vmatmul.mubr.f32.gmra.mxu0 %v4214
    %v4216 = vpop.f32.mrf.mxu0
    %v4217 = vadd.f32 %v4126, %v4216
    %v4218 = vpop.f32.mrf.mxu0
    %4219 = vdwg.mxu0
    %4220 = vmatprep.subr.mxu0 0.0
    %4221 = vmatpush1.msra.mxu0 0.0
    %4222 = vmatprep.subr.mxu0 0.0
    %4223 = vmatpush1.msra.mxu0 0.0
    %4224 = vmatprep.subr.mxu0 0.0
    %4225 = vmatpush1.msra.mxu0 0.0
    %4226 = vmatprep.subr.mxu0 0.0
    %4227 = vmatpush1.msra.mxu0 0.0
    %4228 = vmatprep.subr.mxu0 0.0
    %4229 = vmatpush1.msra.mxu0 0.0
    %4230 = vmatprep.subr.mxu0 0.0
    %4231 = vmatpush1.msra.mxu0 0.0
    %4232 = vmatprep.subr.mxu0 0.0
    %4233 = vmatpush1.msra.mxu0 0.0
    %4234 = vmatprep.subr.mxu0 0.0
    %4235 = vmatpush1.msra.mxu0 0.0
    %4236 = vmatprep.subr.mxu0 0.0
    %4237 = vmatpush1.msra.mxu0 0.0
    %4238 = vmatprep.subr.mxu0 0.0
    %4239 = vmatpush1.msra.mxu0 0.0
    %4240 = vmatprep.subr.mxu0 0.0
    %4241 = vmatpush1.msra.mxu0 0.0
    %4242 = vmatprep.subr.mxu0 0.0
    %4243 = vmatpush1.msra.mxu0 0.0
    %4244 = vmatprep.subr.mxu0 0.0
    %v4245 = vand.u32 %v950, 4294901760
    %v4246 = vsub.f32 %v950, %v4245
    %4247 = vmatpush1.msra.mxu0 %v4246
    %4248 = vmatprep.subr.mxu0 0.0
    %v4249 = vand.u32 %v949, 4294901760
    %v4250 = vsub.f32 %v949, %v4249
    %4251 = vmatpush1.msra.mxu0 %v4250
    %4252 = vmatprep.subr.mxu0 0.0
    %v4253 = vand.u32 %v948, 4294901760
    %v4254 = vsub.f32 %v948, %v4253
    %4255 = vmatpush1.msra.mxu0 %v4254
    %4256 = vmatprep.subr.mxu0 0.0
    %v4257 = vand.u32 %v947, 4294901760
    %v4258 = vsub.f32 %v947, %v4257
    %4259 = vmatpush1.msra.mxu0 %v4258
    %4260 = vmatprep.subr.mxu0 0.0
    %4261 = vmatpush2.msra.mxu0 0.0
    %4262 = vmatprep.subr.mxu0 0.0
    %4263 = vmatpush2.msra.mxu0 0.0
    %4264 = vmatprep.subr.mxu0 0.0
    %4265 = vmatpush2.msra.mxu0 0.0
    %4266 = vmatprep.subr.mxu0 0.0
    %4267 = vmatpush2.msra.mxu0 0.0
    %4268 = vmatprep.subr.mxu0 0.0
    %4269 = vmatpush2.msra.mxu0 0.0
    %4270 = vmatprep.subr.mxu0 0.0
    %4271 = vmatpush2.msra.mxu0 0.0
    %4272 = vmatprep.subr.mxu0 0.0
    %4273 = vmatpush2.msra.mxu0 0.0
    %4274 = vmatprep.subr.mxu0 0.0
    %4275 = vmatpush2.msra.mxu0 0.0
    %4276 = vmatprep.subr.mxu0 0.0
    %4277 = vmatpush2.msra.mxu0 0.0
    %4278 = vmatprep.subr.mxu0 0.0
    %4279 = vmatpush2.msra.mxu0 0.0
    %4280 = vmatprep.subr.mxu0 0.0
    %4281 = vmatpush2.msra.mxu0 0.0
    %4282 = vmatprep.subr.mxu0 0.0
    %4283 = vmatpush2.msra.mxu0 0.0
    %4284 = vmatprep.subr.mxu0 0.0
    %4285 = vmatpush2.msra.mxu0 0.0
    %4286 = vmatprep.subr.mxu0 0.0
    %4287 = vmatpush2.msra.mxu0 0.0
    %4288 = vmatprep.subr.mxu0 0.0
    %4289 = vmatpush2.msra.mxu0 0.0
    %4290 = vmatprep.subr.mxu0 0.0
    %4291 = vmatpush2.msra.mxu0 0.0
    %4292 = vmatprep.mubr.f32.mxu0 0.0
    %v4293 = vand.u32 %v4048, 4294901760
    %v4294 = vsub.f32 %v4048, %v4293
    %4295 = vmatmul.mubr.f32.gmra.mxu0 %v4294
    %v4296 = vpop.f32.mrf.mxu0
    %v4297 = vadd.f32 %v4217, %v4296
    %v4298 = vpop.f32.mrf.mxu0
    %4299 = vdwg.mxu0
    %4300 = vmatprep.subr.mxu0 0.0
    %4301 = vmatpush1.msra.mxu0 0.0
    %4302 = vmatprep.subr.mxu0 0.0
    %4303 = vmatpush1.msra.mxu0 0.0
    %4304 = vmatprep.subr.mxu0 0.0
    %4305 = vmatpush1.msra.mxu0 0.0
    %4306 = vmatprep.subr.mxu0 0.0
    %4307 = vmatpush1.msra.mxu0 0.0
    %4308 = vmatprep.subr.mxu0 0.0
    %4309 = vmatpush1.msra.mxu0 0.0
    %4310 = vmatprep.subr.mxu0 0.0
    %4311 = vmatpush1.msra.mxu0 0.0
    %4312 = vmatprep.subr.mxu0 0.0
    %4313 = vmatpush1.msra.mxu0 0.0
    %4314 = vmatprep.subr.mxu0 0.0
    %4315 = vmatpush1.msra.mxu0 0.0
    %4316 = vmatprep.subr.mxu0 0.0
    %4317 = vmatpush1.msra.mxu0 0.0
    %4318 = vmatprep.subr.mxu0 0.0
    %4319 = vmatpush1.msra.mxu0 0.0
    %4320 = vmatprep.subr.mxu0 0.0
    %4321 = vmatpush1.msra.mxu0 0.0
    %4322 = vmatprep.subr.mxu0 0.0
    %4323 = vmatpush1.msra.mxu0 0.0
    %4324 = vmatprep.subr.mxu0 0.0
    %v4325 = vand.u32 %v950, 4294901760
    %4326 = vmatpush1.msra.mxu0 %v4325
    %4327 = vmatprep.subr.mxu0 0.0
    %v4328 = vand.u32 %v949, 4294901760
    %4329 = vmatpush1.msra.mxu0 %v4328
    %4330 = vmatprep.subr.mxu0 0.0
    %v4331 = vand.u32 %v948, 4294901760
    %4332 = vmatpush1.msra.mxu0 %v4331
    %4333 = vmatprep.subr.mxu0 0.0
    %v4334 = vand.u32 %v947, 4294901760
    %4335 = vmatpush1.msra.mxu0 %v4334
    %4336 = vmatprep.subr.mxu0 0.0
    %4337 = vmatpush2.msra.mxu0 0.0
    %4338 = vmatprep.subr.mxu0 0.0
    %4339 = vmatpush2.msra.mxu0 0.0
    %4340 = vmatprep.subr.mxu0 0.0
    %4341 = vmatpush2.msra.mxu0 0.0
    %4342 = vmatprep.subr.mxu0 0.0
    %4343 = vmatpush2.msra.mxu0 0.0
    %4344 = vmatprep.subr.mxu0 0.0
    %4345 = vmatpush2.msra.mxu0 0.0
    %4346 = vmatprep.subr.mxu0 0.0
    %4347 = vmatpush2.msra.mxu0 0.0
    %4348 = vmatprep.subr.mxu0 0.0
    %4349 = vmatpush2.msra.mxu0 0.0
    %4350 = vmatprep.subr.mxu0 0.0
    %4351 = vmatpush2.msra.mxu0 0.0
    %4352 = vmatprep.subr.mxu0 0.0
    %4353 = vmatpush2.msra.mxu0 0.0
    %4354 = vmatprep.subr.mxu0 0.0
    %4355 = vmatpush2.msra.mxu0 0.0
    %4356 = vmatprep.subr.mxu0 0.0
    %4357 = vmatpush2.msra.mxu0 0.0
    %4358 = vmatprep.subr.mxu0 0.0
    %4359 = vmatpush2.msra.mxu0 0.0
    %4360 = vmatprep.subr.mxu0 0.0
    %4361 = vmatpush2.msra.mxu0 0.0
    %4362 = vmatprep.subr.mxu0 0.0
    %4363 = vmatpush2.msra.mxu0 0.0
    %4364 = vmatprep.subr.mxu0 0.0
    %4365 = vmatpush2.msra.mxu0 0.0
    %4366 = vmatprep.subr.mxu0 0.0
    %4367 = vmatpush2.msra.mxu0 0.0
    %4368 = vmatprep.mubr.f32.mxu0 0.0
    %v4369 = vand.u32 %v4048, 4294901760
    %v4370 = vsub.f32 %v4048, %v4369
    %v4371 = vand.u32 %v4370, 4294901760
    %4372 = vmatmul.mubr.f32.gmra.mxu0 %v4371
    %v4373 = vpop.f32.mrf.mxu0
    %v4374 = vadd.f32 %v4297, %v4373
    %v4375 = vpop.f32.mrf.mxu0
    %4376 = vdwg.mxu0
    %4377 = vmatprep.subr.mxu0 0.0
    %4378 = vmatpush1.msra.mxu0 0.0
    %4379 = vmatprep.subr.mxu0 0.0
    %4380 = vmatpush1.msra.mxu0 0.0
    %4381 = vmatprep.subr.mxu0 0.0
    %4382 = vmatpush1.msra.mxu0 0.0
    %4383 = vmatprep.subr.mxu0 0.0
    %4384 = vmatpush1.msra.mxu0 0.0
    %4385 = vmatprep.subr.mxu0 0.0
    %4386 = vmatpush1.msra.mxu0 0.0
    %4387 = vmatprep.subr.mxu0 0.0
    %4388 = vmatpush1.msra.mxu0 0.0
    %4389 = vmatprep.subr.mxu0 0.0
    %4390 = vmatpush1.msra.mxu0 0.0
    %4391 = vmatprep.subr.mxu0 0.0
    %4392 = vmatpush1.msra.mxu0 0.0
    %4393 = vmatprep.subr.mxu0 0.0
    %4394 = vmatpush1.msra.mxu0 0.0
    %4395 = vmatprep.subr.mxu0 0.0
    %4396 = vmatpush1.msra.mxu0 0.0
    %4397 = vmatprep.subr.mxu0 0.0
    %4398 = vmatpush1.msra.mxu0 0.0
    %4399 = vmatprep.subr.mxu0 0.0
    %4400 = vmatpush1.msra.mxu0 0.0
    %4401 = vmatprep.subr.mxu0 0.0
    %v4402 = vand.u32 %v950, 4294901760
    %v4403 = vsub.f32 %v950, %v4402
    %v4404 = vand.u32 %v4403, 4294901760
    %4405 = vmatpush1.msra.mxu0 %v4404
    %4406 = vmatprep.subr.mxu0 0.0
    %v4407 = vand.u32 %v949, 4294901760
    %v4408 = vsub.f32 %v949, %v4407
    %v4409 = vand.u32 %v4408, 4294901760
    %4410 = vmatpush1.msra.mxu0 %v4409
    %4411 = vmatprep.subr.mxu0 0.0
    %v4412 = vand.u32 %v948, 4294901760
    %v4413 = vsub.f32 %v948, %v4412
    %v4414 = vand.u32 %v4413, 4294901760
    %4415 = vmatpush1.msra.mxu0 %v4414
    %4416 = vmatprep.subr.mxu0 0.0
    %v4417 = vand.u32 %v947, 4294901760
    %v4418 = vsub.f32 %v947, %v4417
    %v4419 = vand.u32 %v4418, 4294901760
    %4420 = vmatpush1.msra.mxu0 %v4419
    %4421 = vmatprep.subr.mxu0 0.0
    %4422 = vmatpush2.msra.mxu0 0.0
    %4423 = vmatprep.subr.mxu0 0.0
    %4424 = vmatpush2.msra.mxu0 0.0
    %4425 = vmatprep.subr.mxu0 0.0
    %4426 = vmatpush2.msra.mxu0 0.0
    %4427 = vmatprep.subr.mxu0 0.0
    %4428 = vmatpush2.msra.mxu0 0.0
    %4429 = vmatprep.subr.mxu0 0.0
    %4430 = vmatpush2.msra.mxu0 0.0
    %4431 = vmatprep.subr.mxu0 0.0
    %4432 = vmatpush2.msra.mxu0 0.0
    %4433 = vmatprep.subr.mxu0 0.0
    %4434 = vmatpush2.msra.mxu0 0.0
    %4435 = vmatprep.subr.mxu0 0.0
    %4436 = vmatpush2.msra.mxu0 0.0
    %4437 = vmatprep.subr.mxu0 0.0
    %4438 = vmatpush2.msra.mxu0 0.0
    %4439 = vmatprep.subr.mxu0 0.0
    %4440 = vmatpush2.msra.mxu0 0.0
    %4441 = vmatprep.subr.mxu0 0.0
    %4442 = vmatpush2.msra.mxu0 0.0
    %4443 = vmatprep.subr.mxu0 0.0
    %4444 = vmatpush2.msra.mxu0 0.0
    %4445 = vmatprep.subr.mxu0 0.0
    %4446 = vmatpush2.msra.mxu0 0.0
    %4447 = vmatprep.subr.mxu0 0.0
    %4448 = vmatpush2.msra.mxu0 0.0
    %4449 = vmatprep.subr.mxu0 0.0
    %4450 = vmatpush2.msra.mxu0 0.0
    %4451 = vmatprep.subr.mxu0 0.0
    %4452 = vmatpush2.msra.mxu0 0.0
    %4453 = vmatprep.mubr.f32.mxu0 0.0
    %v4454 = vand.u32 %v4048, 4294901760
    %4455 = vmatmul.mubr.f32.gmra.mxu0 %v4454
    %v4456 = vpop.f32.mrf.mxu0
    %v4457 = vadd.f32 %v4374, %v4456
    %v4458 = vpop.f32.mrf.mxu0
    %4459 = vdwg.mxu0
    %4460 = vmatprep.subr.mxu0 0.0
    %4461 = vmatpush1.msra.mxu0 0.0
    %4462 = vmatprep.subr.mxu0 0.0
    %4463 = vmatpush1.msra.mxu0 0.0
    %4464 = vmatprep.subr.mxu0 0.0
    %4465 = vmatpush1.msra.mxu0 0.0
    %4466 = vmatprep.subr.mxu0 0.0
    %4467 = vmatpush1.msra.mxu0 0.0
    %4468 = vmatprep.subr.mxu0 0.0
    %4469 = vmatpush1.msra.mxu0 0.0
    %4470 = vmatprep.subr.mxu0 0.0
    %4471 = vmatpush1.msra.mxu0 0.0
    %4472 = vmatprep.subr.mxu0 0.0
    %4473 = vmatpush1.msra.mxu0 0.0
    %4474 = vmatprep.subr.mxu0 0.0
    %4475 = vmatpush1.msra.mxu0 0.0
    %4476 = vmatprep.subr.mxu0 0.0
    %4477 = vmatpush1.msra.mxu0 0.0
    %4478 = vmatprep.subr.mxu0 0.0
    %4479 = vmatpush1.msra.mxu0 0.0
    %4480 = vmatprep.subr.mxu0 0.0
    %4481 = vmatpush1.msra.mxu0 0.0
    %4482 = vmatprep.subr.mxu0 0.0
    %4483 = vmatpush1.msra.mxu0 0.0
    %4484 = vmatprep.subr.mxu0 0.0
    %v4485 = vand.u32 %v950, 4294901760
    %4486 = vmatpush1.msra.mxu0 %v4485
    %4487 = vmatprep.subr.mxu0 0.0
    %v4488 = vand.u32 %v949, 4294901760
    %4489 = vmatpush1.msra.mxu0 %v4488
    %4490 = vmatprep.subr.mxu0 0.0
    %v4491 = vand.u32 %v948, 4294901760
    %4492 = vmatpush1.msra.mxu0 %v4491
    %4493 = vmatprep.subr.mxu0 0.0
    %v4494 = vand.u32 %v947, 4294901760
    %4495 = vmatpush1.msra.mxu0 %v4494
    %4496 = vmatprep.subr.mxu0 0.0
    %4497 = vmatpush2.msra.mxu0 0.0
    %4498 = vmatprep.subr.mxu0 0.0
    %4499 = vmatpush2.msra.mxu0 0.0
    %4500 = vmatprep.subr.mxu0 0.0
    %4501 = vmatpush2.msra.mxu0 0.0
    %4502 = vmatprep.subr.mxu0 0.0
    %4503 = vmatpush2.msra.mxu0 0.0
    %4504 = vmatprep.subr.mxu0 0.0
    %4505 = vmatpush2.msra.mxu0 0.0
    %4506 = vmatprep.subr.mxu0 0.0
    %4507 = vmatpush2.msra.mxu0 0.0
    %4508 = vmatprep.subr.mxu0 0.0
    %4509 = vmatpush2.msra.mxu0 0.0
    %4510 = vmatprep.subr.mxu0 0.0
    %4511 = vmatpush2.msra.mxu0 0.0
    %4512 = vmatprep.subr.mxu0 0.0
    %4513 = vmatpush2.msra.mxu0 0.0
    %4514 = vmatprep.subr.mxu0 0.0
    %4515 = vmatpush2.msra.mxu0 0.0
    %4516 = vmatprep.subr.mxu0 0.0
    %4517 = vmatpush2.msra.mxu0 0.0
    %4518 = vmatprep.subr.mxu0 0.0
    %4519 = vmatpush2.msra.mxu0 0.0
    %4520 = vmatprep.subr.mxu0 0.0
    %4521 = vmatpush2.msra.mxu0 0.0
    %4522 = vmatprep.subr.mxu0 0.0
    %4523 = vmatpush2.msra.mxu0 0.0
    %4524 = vmatprep.subr.mxu0 0.0
    %4525 = vmatpush2.msra.mxu0 0.0
    %4526 = vmatprep.subr.mxu0 0.0
    %4527 = vmatpush2.msra.mxu0 0.0
    %4528 = vmatprep.mubr.f32.mxu0 0.0
    %v4529 = vand.u32 %v4048, 4294901760
    %4530 = vmatmul.mubr.f32.gmra.mxu0 %v4529
    %v4531 = vpop.f32.mrf.mxu0
    %v4532 = vadd.f32 %v4457, %v4531
    %v4533 = vpop.f32.mrf.mxu0
    %4534 = vdwg.mxu0
    %v4535 = vadd.f32 %v938, %v4532
    %v4536 = vxor.u32 %v4535, 2147483648
    %v4537 = vmul.f32 %v4536, 1.442695
    %v4538 = vpow.pop %v4537
    %v4539 = vadd.f32 %v4538, 1.0
    %v4540 = vrcp.pop %v4539
    %v4541 = vmul.f32 1.0, %v4540
    %v4542 = vtanh.pop %v4535
    %v4543 = vmul.f32 %v4541, %v4038
    %4545 = vrot.lane.b32.xlu0 %v4542, 64
    %v4546 = vpop.permute.xlu0 %4545
    %v4548 = vmul.f32 %v4541, %v4546
    %4550 = vrot.lane.b32.xlu0 %v4548, 32
    %v4551 = vpop.permute.xlu0 %4550
    %v4553 = vadd.f32 %v4543, %v4551
    %v4554 = vtanh.pop %v4553
    %4556 = vrot.lane.b32.xlu0 %v4554, 64
    %v4557 = vpop.permute.xlu0 %4556
    %v4559 = vmul.f32 %v4541, %v4557
    %4561 = vrot.lane.b32.xlu0 %v4559, 32
    %v4562 = vpop.permute.xlu0 %4561
    %v4563 = vsel %vm136, %v4562, 0
    %4565 = vmatprep.subr.mxu0 0.0
    %4566 = vmatpush1.msra.mxu0 0.0
    %4567 = vmatprep.subr.mxu0 0.0
    %4568 = vmatpush1.msra.mxu0 0.0
    %4569 = vmatprep.subr.mxu0 0.0
    %4570 = vmatpush1.msra.mxu0 0.0
    %4571 = vmatprep.subr.mxu0 0.0
    %4572 = vmatpush1.msra.mxu0 0.0
    %4573 = vmatprep.subr.mxu0 0.0
    %4574 = vmatpush1.msra.mxu0 0.0
    %4575 = vmatprep.subr.mxu0 0.0
    %4576 = vmatpush1.msra.mxu0 0.0
    %4577 = vmatprep.subr.mxu0 0.0
    %4578 = vmatpush1.msra.mxu0 0.0
    %4579 = vmatprep.subr.mxu0 0.0
    %4580 = vmatpush1.msra.mxu0 0.0
    %4581 = vmatprep.subr.mxu0 0.0
    %4582 = vmatpush1.msra.mxu0 0.0
    %4583 = vmatprep.subr.mxu0 0.0
    %4584 = vmatpush1.msra.mxu0 0.0
    %4585 = vmatprep.subr.mxu0 0.0
    %4586 = vmatpush1.msra.mxu0 0.0
    %4587 = vmatprep.subr.mxu0 0.0
    %4588 = vmatpush1.msra.mxu0 0.0
    %4589 = vmatprep.subr.mxu0 0.0
    %v4590 = vand.u32 %v950, 4294901760
    %4591 = vmatpush1.msra.mxu0 %v4590
    %4592 = vmatprep.subr.mxu0 0.0
    %v4593 = vand.u32 %v949, 4294901760
    %4594 = vmatpush1.msra.mxu0 %v4593
    %4595 = vmatprep.subr.mxu0 0.0
    %v4596 = vand.u32 %v948, 4294901760
    %4597 = vmatpush1.msra.mxu0 %v4596
    %4598 = vmatprep.subr.mxu0 0.0
    %v4599 = vand.u32 %v947, 4294901760
    %4600 = vmatpush1.msra.mxu0 %v4599
    %4601 = vmatprep.subr.mxu0 0.0
    %4602 = vmatpush2.msra.mxu0 0.0
    %4603 = vmatprep.subr.mxu0 0.0
    %4604 = vmatpush2.msra.mxu0 0.0
    %4605 = vmatprep.subr.mxu0 0.0
    %4606 = vmatpush2.msra.mxu0 0.0
    %4607 = vmatprep.subr.mxu0 0.0
    %4608 = vmatpush2.msra.mxu0 0.0
    %4609 = vmatprep.subr.mxu0 0.0
    %4610 = vmatpush2.msra.mxu0 0.0
    %4611 = vmatprep.subr.mxu0 0.0
    %4612 = vmatpush2.msra.mxu0 0.0
    %4613 = vmatprep.subr.mxu0 0.0
    %4614 = vmatpush2.msra.mxu0 0.0
    %4615 = vmatprep.subr.mxu0 0.0
    %4616 = vmatpush2.msra.mxu0 0.0
    %4617 = vmatprep.subr.mxu0 0.0
    %4618 = vmatpush2.msra.mxu0 0.0
    %4619 = vmatprep.subr.mxu0 0.0
    %4620 = vmatpush2.msra.mxu0 0.0
    %4621 = vmatprep.subr.mxu0 0.0
    %4622 = vmatpush2.msra.mxu0 0.0
    %4623 = vmatprep.subr.mxu0 0.0
    %4624 = vmatpush2.msra.mxu0 0.0
    %4625 = vmatprep.subr.mxu0 0.0
    %4626 = vmatpush2.msra.mxu0 0.0
    %4627 = vmatprep.subr.mxu0 0.0
    %4628 = vmatpush2.msra.mxu0 0.0
    %4629 = vmatprep.subr.mxu0 0.0
    %4630 = vmatpush2.msra.mxu0 0.0
    %4631 = vmatprep.subr.mxu0 0.0
    %4632 = vmatpush2.msra.mxu0 0.0
    %4633 = vmatprep.mubr.f32.mxu0 0.0
    %v4634 = vand.u32 %v4563, 4294901760
    %v4635 = vsub.f32 %v4563, %v4634
    %v4636 = vand.u32 %v4635, 4294901760
    %v4637 = vsub.f32 %v4635, %v4636
    %v4638 = vand.u32 %v4637, 4294901760
    %4639 = vmatmul.mubr.f32.gmra.mxu0 %v4638
    %v4640 = vpop.f32.mrf.mxu0
    %v4641 = vadd.f32 0.0, %v4640
    %v4642 = vpop.f32.mrf.mxu0
    %4643 = vdwg.mxu0
    %4644 = vmatprep.subr.mxu0 0.0
    %4645 = vmatpush1.msra.mxu0 0.0
    %4646 = vmatprep.subr.mxu0 0.0
    %4647 = vmatpush1.msra.mxu0 0.0
    %4648 = vmatprep.subr.mxu0 0.0
    %4649 = vmatpush1.msra.mxu0 0.0
    %4650 = vmatprep.subr.mxu0 0.0
    %4651 = vmatpush1.msra.mxu0 0.0
    %4652 = vmatprep.subr.mxu0 0.0
    %4653 = vmatpush1.msra.mxu0 0.0
    %4654 = vmatprep.subr.mxu0 0.0
    %4655 = vmatpush1.msra.mxu0 0.0
    %4656 = vmatprep.subr.mxu0 0.0
    %4657 = vmatpush1.msra.mxu0 0.0
    %4658 = vmatprep.subr.mxu0 0.0
    %4659 = vmatpush1.msra.mxu0 0.0
    %4660 = vmatprep.subr.mxu0 0.0
    %4661 = vmatpush1.msra.mxu0 0.0
    %4662 = vmatprep.subr.mxu0 0.0
    %4663 = vmatpush1.msra.mxu0 0.0
    %4664 = vmatprep.subr.mxu0 0.0
    %4665 = vmatpush1.msra.mxu0 0.0
    %4666 = vmatprep.subr.mxu0 0.0
    %4667 = vmatpush1.msra.mxu0 0.0
    %4668 = vmatprep.subr.mxu0 0.0
    %v4669 = vand.u32 %v950, 4294901760
    %v4670 = vsub.f32 %v950, %v4669
    %v4671 = vand.u32 %v4670, 4294901760
    %v4672 = vsub.f32 %v4670, %v4671
    %v4673 = vand.u32 %v4672, 4294901760
    %4674 = vmatpush1.msra.mxu0 %v4673
    %4675 = vmatprep.subr.mxu0 0.0
    %v4676 = vand.u32 %v949, 4294901760
    %v4677 = vsub.f32 %v949, %v4676
    %v4678 = vand.u32 %v4677, 4294901760
    %v4679 = vsub.f32 %v4677, %v4678
    %v4680 = vand.u32 %v4679, 4294901760
    %4681 = vmatpush1.msra.mxu0 %v4680
    %4682 = vmatprep.subr.mxu0 0.0
    %v4683 = vand.u32 %v948, 4294901760
    %v4684 = vsub.f32 %v948, %v4683
    %v4685 = vand.u32 %v4684, 4294901760
    %v4686 = vsub.f32 %v4684, %v4685
    %v4687 = vand.u32 %v4686, 4294901760
    %4688 = vmatpush1.msra.mxu0 %v4687
    %4689 = vmatprep.subr.mxu0 0.0
    %v4690 = vand.u32 %v947, 4294901760
    %v4691 = vsub.f32 %v947, %v4690
    %v4692 = vand.u32 %v4691, 4294901760
    %v4693 = vsub.f32 %v4691, %v4692
    %v4694 = vand.u32 %v4693, 4294901760
    %4695 = vmatpush1.msra.mxu0 %v4694
    %4696 = vmatprep.subr.mxu0 0.0
    %4697 = vmatpush2.msra.mxu0 0.0
    %4698 = vmatprep.subr.mxu0 0.0
    %4699 = vmatpush2.msra.mxu0 0.0
    %4700 = vmatprep.subr.mxu0 0.0
    %4701 = vmatpush2.msra.mxu0 0.0
    %4702 = vmatprep.subr.mxu0 0.0
    %4703 = vmatpush2.msra.mxu0 0.0
    %4704 = vmatprep.subr.mxu0 0.0
    %4705 = vmatpush2.msra.mxu0 0.0
    %4706 = vmatprep.subr.mxu0 0.0
    %4707 = vmatpush2.msra.mxu0 0.0
    %4708 = vmatprep.subr.mxu0 0.0
    %4709 = vmatpush2.msra.mxu0 0.0
    %4710 = vmatprep.subr.mxu0 0.0
    %4711 = vmatpush2.msra.mxu0 0.0
    %4712 = vmatprep.subr.mxu0 0.0
    %4713 = vmatpush2.msra.mxu0 0.0
    %4714 = vmatprep.subr.mxu0 0.0
    %4715 = vmatpush2.msra.mxu0 0.0
    %4716 = vmatprep.subr.mxu0 0.0
    %4717 = vmatpush2.msra.mxu0 0.0
    %4718 = vmatprep.subr.mxu0 0.0
    %4719 = vmatpush2.msra.mxu0 0.0
    %4720 = vmatprep.subr.mxu0 0.0
    %4721 = vmatpush2.msra.mxu0 0.0
    %4722 = vmatprep.subr.mxu0 0.0
    %4723 = vmatpush2.msra.mxu0 0.0
    %4724 = vmatprep.subr.mxu0 0.0
    %4725 = vmatpush2.msra.mxu0 0.0
    %4726 = vmatprep.subr.mxu0 0.0
    %4727 = vmatpush2.msra.mxu0 0.0
    %4728 = vmatprep.mubr.f32.mxu0 0.0
    %v4729 = vand.u32 %v4563, 4294901760
    %4730 = vmatmul.mubr.f32.gmra.mxu0 %v4729
    %v4731 = vpop.f32.mrf.mxu0
    %v4732 = vadd.f32 %v4641, %v4731
    %v4733 = vpop.f32.mrf.mxu0
    %4734 = vdwg.mxu0
    %4735 = vmatprep.subr.mxu0 0.0
    %4736 = vmatpush1.msra.mxu0 0.0
    %4737 = vmatprep.subr.mxu0 0.0
    %4738 = vmatpush1.msra.mxu0 0.0
    %4739 = vmatprep.subr.mxu0 0.0
    %4740 = vmatpush1.msra.mxu0 0.0
    %4741 = vmatprep.subr.mxu0 0.0
    %4742 = vmatpush1.msra.mxu0 0.0
    %4743 = vmatprep.subr.mxu0 0.0
    %4744 = vmatpush1.msra.mxu0 0.0
    %4745 = vmatprep.subr.mxu0 0.0
    %4746 = vmatpush1.msra.mxu0 0.0
    %4747 = vmatprep.subr.mxu0 0.0
    %4748 = vmatpush1.msra.mxu0 0.0
    %4749 = vmatprep.subr.mxu0 0.0
    %4750 = vmatpush1.msra.mxu0 0.0
    %4751 = vmatprep.subr.mxu0 0.0
    %4752 = vmatpush1.msra.mxu0 0.0
    %4753 = vmatprep.subr.mxu0 0.0
    %4754 = vmatpush1.msra.mxu0 0.0
    %4755 = vmatprep.subr.mxu0 0.0
    %4756 = vmatpush1.msra.mxu0 0.0
    %4757 = vmatprep.subr.mxu0 0.0
    %4758 = vmatpush1.msra.mxu0 0.0
    %4759 = vmatprep.subr.mxu0 0.0
    %v4760 = vand.u32 %v950, 4294901760
    %v4761 = vsub.f32 %v950, %v4760
    %4762 = vmatpush1.msra.mxu0 %v4761
    %4763 = vmatprep.subr.mxu0 0.0
    %v4764 = vand.u32 %v949, 4294901760
    %v4765 = vsub.f32 %v949, %v4764
    %4766 = vmatpush1.msra.mxu0 %v4765
    %4767 = vmatprep.subr.mxu0 0.0
    %v4768 = vand.u32 %v948, 4294901760
    %v4769 = vsub.f32 %v948, %v4768
    %4770 = vmatpush1.msra.mxu0 %v4769
    %4771 = vmatprep.subr.mxu0 0.0
    %v4772 = vand.u32 %v947, 4294901760
    %v4773 = vsub.f32 %v947, %v4772
    %4774 = vmatpush1.msra.mxu0 %v4773
    %4775 = vmatprep.subr.mxu0 0.0
    %4776 = vmatpush2.msra.mxu0 0.0
    %4777 = vmatprep.subr.mxu0 0.0
    %4778 = vmatpush2.msra.mxu0 0.0
    %4779 = vmatprep.subr.mxu0 0.0
    %4780 = vmatpush2.msra.mxu0 0.0
    %4781 = vmatprep.subr.mxu0 0.0
    %4782 = vmatpush2.msra.mxu0 0.0
    %4783 = vmatprep.subr.mxu0 0.0
    %4784 = vmatpush2.msra.mxu0 0.0
    %4785 = vmatprep.subr.mxu0 0.0
    %4786 = vmatpush2.msra.mxu0 0.0
    %4787 = vmatprep.subr.mxu0 0.0
    %4788 = vmatpush2.msra.mxu0 0.0
    %4789 = vmatprep.subr.mxu0 0.0
    %4790 = vmatpush2.msra.mxu0 0.0
    %4791 = vmatprep.subr.mxu0 0.0
    %4792 = vmatpush2.msra.mxu0 0.0
    %4793 = vmatprep.subr.mxu0 0.0
    %4794 = vmatpush2.msra.mxu0 0.0
    %4795 = vmatprep.subr.mxu0 0.0
    %4796 = vmatpush2.msra.mxu0 0.0
    %4797 = vmatprep.subr.mxu0 0.0
    %4798 = vmatpush2.msra.mxu0 0.0
    %4799 = vmatprep.subr.mxu0 0.0
    %4800 = vmatpush2.msra.mxu0 0.0
    %4801 = vmatprep.subr.mxu0 0.0
    %4802 = vmatpush2.msra.mxu0 0.0
    %4803 = vmatprep.subr.mxu0 0.0
    %4804 = vmatpush2.msra.mxu0 0.0
    %4805 = vmatprep.subr.mxu0 0.0
    %4806 = vmatpush2.msra.mxu0 0.0
    %4807 = vmatprep.mubr.f32.mxu0 0.0
    %v4808 = vand.u32 %v4563, 4294901760
    %v4809 = vsub.f32 %v4563, %v4808
    %4810 = vmatmul.mubr.f32.gmra.mxu0 %v4809
    %v4811 = vpop.f32.mrf.mxu0
    %v4812 = vadd.f32 %v4732, %v4811
    %v4813 = vpop.f32.mrf.mxu0
    %4814 = vdwg.mxu0
    %4815 = vmatprep.subr.mxu0 0.0
    %4816 = vmatpush1.msra.mxu0 0.0
    %4817 = vmatprep.subr.mxu0 0.0
    %4818 = vmatpush1.msra.mxu0 0.0
    %4819 = vmatprep.subr.mxu0 0.0
    %4820 = vmatpush1.msra.mxu0 0.0
    %4821 = vmatprep.subr.mxu0 0.0
    %4822 = vmatpush1.msra.mxu0 0.0
    %4823 = vmatprep.subr.mxu0 0.0
    %4824 = vmatpush1.msra.mxu0 0.0
    %4825 = vmatprep.subr.mxu0 0.0
    %4826 = vmatpush1.msra.mxu0 0.0
    %4827 = vmatprep.subr.mxu0 0.0
    %4828 = vmatpush1.msra.mxu0 0.0
    %4829 = vmatprep.subr.mxu0 0.0
    %4830 = vmatpush1.msra.mxu0 0.0
    %4831 = vmatprep.subr.mxu0 0.0
    %4832 = vmatpush1.msra.mxu0 0.0
    %4833 = vmatprep.subr.mxu0 0.0
    %4834 = vmatpush1.msra.mxu0 0.0
    %4835 = vmatprep.subr.mxu0 0.0
    %4836 = vmatpush1.msra.mxu0 0.0
    %4837 = vmatprep.subr.mxu0 0.0
    %4838 = vmatpush1.msra.mxu0 0.0
    %4839 = vmatprep.subr.mxu0 0.0
    %v4840 = vand.u32 %v950, 4294901760
    %4841 = vmatpush1.msra.mxu0 %v4840
    %4842 = vmatprep.subr.mxu0 0.0
    %v4843 = vand.u32 %v949, 4294901760
    %4844 = vmatpush1.msra.mxu0 %v4843
    %4845 = vmatprep.subr.mxu0 0.0
    %v4846 = vand.u32 %v948, 4294901760
    %4847 = vmatpush1.msra.mxu0 %v4846
    %4848 = vmatprep.subr.mxu0 0.0
    %v4849 = vand.u32 %v947, 4294901760
    %4850 = vmatpush1.msra.mxu0 %v4849
    %4851 = vmatprep.subr.mxu0 0.0
    %4852 = vmatpush2.msra.mxu0 0.0
    %4853 = vmatprep.subr.mxu0 0.0
    %4854 = vmatpush2.msra.mxu0 0.0
    %4855 = vmatprep.subr.mxu0 0.0
    %4856 = vmatpush2.msra.mxu0 0.0
    %4857 = vmatprep.subr.mxu0 0.0
    %4858 = vmatpush2.msra.mxu0 0.0
    %4859 = vmatprep.subr.mxu0 0.0
    %4860 = vmatpush2.msra.mxu0 0.0
    %4861 = vmatprep.subr.mxu0 0.0
    %4862 = vmatpush2.msra.mxu0 0.0
    %4863 = vmatprep.subr.mxu0 0.0
    %4864 = vmatpush2.msra.mxu0 0.0
    %4865 = vmatprep.subr.mxu0 0.0
    %4866 = vmatpush2.msra.mxu0 0.0
    %4867 = vmatprep.subr.mxu0 0.0
    %4868 = vmatpush2.msra.mxu0 0.0
    %4869 = vmatprep.subr.mxu0 0.0
    %4870 = vmatpush2.msra.mxu0 0.0
    %4871 = vmatprep.subr.mxu0 0.0
    %4872 = vmatpush2.msra.mxu0 0.0
    %4873 = vmatprep.subr.mxu0 0.0
    %4874 = vmatpush2.msra.mxu0 0.0
    %4875 = vmatprep.subr.mxu0 0.0
    %4876 = vmatpush2.msra.mxu0 0.0
    %4877 = vmatprep.subr.mxu0 0.0
    %4878 = vmatpush2.msra.mxu0 0.0
    %4879 = vmatprep.subr.mxu0 0.0
    %4880 = vmatpush2.msra.mxu0 0.0
    %4881 = vmatprep.subr.mxu0 0.0
    %4882 = vmatpush2.msra.mxu0 0.0
    %4883 = vmatprep.mubr.f32.mxu0 0.0
    %v4884 = vand.u32 %v4563, 4294901760
    %v4885 = vsub.f32 %v4563, %v4884
    %v4886 = vand.u32 %v4885, 4294901760
    %4887 = vmatmul.mubr.f32.gmra.mxu0 %v4886
    %v4888 = vpop.f32.mrf.mxu0
    %v4889 = vadd.f32 %v4812, %v4888
    %v4890 = vpop.f32.mrf.mxu0
    %4891 = vdwg.mxu0
    %4892 = vmatprep.subr.mxu0 0.0
    %4893 = vmatpush1.msra.mxu0 0.0
    %4894 = vmatprep.subr.mxu0 0.0
    %4895 = vmatpush1.msra.mxu0 0.0
    %4896 = vmatprep.subr.mxu0 0.0
    %4897 = vmatpush1.msra.mxu0 0.0
    %4898 = vmatprep.subr.mxu0 0.0
    %4899 = vmatpush1.msra.mxu0 0.0
    %4900 = vmatprep.subr.mxu0 0.0
    %4901 = vmatpush1.msra.mxu0 0.0
    %4902 = vmatprep.subr.mxu0 0.0
    %4903 = vmatpush1.msra.mxu0 0.0
    %4904 = vmatprep.subr.mxu0 0.0
    %4905 = vmatpush1.msra.mxu0 0.0
    %4906 = vmatprep.subr.mxu0 0.0
    %4907 = vmatpush1.msra.mxu0 0.0
    %4908 = vmatprep.subr.mxu0 0.0
    %4909 = vmatpush1.msra.mxu0 0.0
    %4910 = vmatprep.subr.mxu0 0.0
    %4911 = vmatpush1.msra.mxu0 0.0
    %4912 = vmatprep.subr.mxu0 0.0
    %4913 = vmatpush1.msra.mxu0 0.0
    %4914 = vmatprep.subr.mxu0 0.0
    %4915 = vmatpush1.msra.mxu0 0.0
    %4916 = vmatprep.subr.mxu0 0.0
    %v4917 = vand.u32 %v950, 4294901760
    %v4918 = vsub.f32 %v950, %v4917
    %v4919 = vand.u32 %v4918, 4294901760
    %4920 = vmatpush1.msra.mxu0 %v4919
    %4921 = vmatprep.subr.mxu0 0.0
    %v4922 = vand.u32 %v949, 4294901760
    %v4923 = vsub.f32 %v949, %v4922
    %v4924 = vand.u32 %v4923, 4294901760
    %4925 = vmatpush1.msra.mxu0 %v4924
    %4926 = vmatprep.subr.mxu0 0.0
    %v4927 = vand.u32 %v948, 4294901760
    %v4928 = vsub.f32 %v948, %v4927
    %v4929 = vand.u32 %v4928, 4294901760
    %4930 = vmatpush1.msra.mxu0 %v4929
    %4931 = vmatprep.subr.mxu0 0.0
    %v4932 = vand.u32 %v947, 4294901760
    %v4933 = vsub.f32 %v947, %v4932
    %v4934 = vand.u32 %v4933, 4294901760
    %4935 = vmatpush1.msra.mxu0 %v4934
    %4936 = vmatprep.subr.mxu0 0.0
    %4937 = vmatpush2.msra.mxu0 0.0
    %4938 = vmatprep.subr.mxu0 0.0
    %4939 = vmatpush2.msra.mxu0 0.0
    %4940 = vmatprep.subr.mxu0 0.0
    %4941 = vmatpush2.msra.mxu0 0.0
    %4942 = vmatprep.subr.mxu0 0.0
    %4943 = vmatpush2.msra.mxu0 0.0
    %4944 = vmatprep.subr.mxu0 0.0
    %4945 = vmatpush2.msra.mxu0 0.0
    %4946 = vmatprep.subr.mxu0 0.0
    %4947 = vmatpush2.msra.mxu0 0.0
    %4948 = vmatprep.subr.mxu0 0.0
    %4949 = vmatpush2.msra.mxu0 0.0
    %4950 = vmatprep.subr.mxu0 0.0
    %4951 = vmatpush2.msra.mxu0 0.0
    %4952 = vmatprep.subr.mxu0 0.0
    %4953 = vmatpush2.msra.mxu0 0.0
    %4954 = vmatprep.subr.mxu0 0.0
    %4955 = vmatpush2.msra.mxu0 0.0
    %4956 = vmatprep.subr.mxu0 0.0
    %4957 = vmatpush2.msra.mxu0 0.0
    %4958 = vmatprep.subr.mxu0 0.0
    %4959 = vmatpush2.msra.mxu0 0.0
    %4960 = vmatprep.subr.mxu0 0.0
    %4961 = vmatpush2.msra.mxu0 0.0
    %4962 = vmatprep.subr.mxu0 0.0
    %4963 = vmatpush2.msra.mxu0 0.0
    %4964 = vmatprep.subr.mxu0 0.0
    %4965 = vmatpush2.msra.mxu0 0.0
    %4966 = vmatprep.subr.mxu0 0.0
    %4967 = vmatpush2.msra.mxu0 0.0
    %4968 = vmatprep.mubr.f32.mxu0 0.0
    %v4969 = vand.u32 %v4563, 4294901760
    %4970 = vmatmul.mubr.f32.gmra.mxu0 %v4969
    %v4971 = vpop.f32.mrf.mxu0
    %v4972 = vadd.f32 %v4889, %v4971
    %v4973 = vpop.f32.mrf.mxu0
    %4974 = vdwg.mxu0
    %4975 = vmatprep.subr.mxu0 0.0
    %4976 = vmatpush1.msra.mxu0 0.0
    %4977 = vmatprep.subr.mxu0 0.0
    %4978 = vmatpush1.msra.mxu0 0.0
    %4979 = vmatprep.subr.mxu0 0.0
    %4980 = vmatpush1.msra.mxu0 0.0
    %4981 = vmatprep.subr.mxu0 0.0
    %4982 = vmatpush1.msra.mxu0 0.0
    %4983 = vmatprep.subr.mxu0 0.0
    %4984 = vmatpush1.msra.mxu0 0.0
    %4985 = vmatprep.subr.mxu0 0.0
    %4986 = vmatpush1.msra.mxu0 0.0
    %4987 = vmatprep.subr.mxu0 0.0
    %4988 = vmatpush1.msra.mxu0 0.0
    %4989 = vmatprep.subr.mxu0 0.0
    %4990 = vmatpush1.msra.mxu0 0.0
    %4991 = vmatprep.subr.mxu0 0.0
    %4992 = vmatpush1.msra.mxu0 0.0
    %4993 = vmatprep.subr.mxu0 0.0
    %4994 = vmatpush1.msra.mxu0 0.0
    %4995 = vmatprep.subr.mxu0 0.0
    %4996 = vmatpush1.msra.mxu0 0.0
    %4997 = vmatprep.subr.mxu0 0.0
    %4998 = vmatpush1.msra.mxu0 0.0
    %4999 = vmatprep.subr.mxu0 0.0
    %v5000 = vand.u32 %v950, 4294901760
    %5001 = vmatpush1.msra.mxu0 %v5000
    %5002 = vmatprep.subr.mxu0 0.0
    %v5003 = vand.u32 %v949, 4294901760
    %5004 = vmatpush1.msra.mxu0 %v5003
    %5005 = vmatprep.subr.mxu0 0.0
    %v5006 = vand.u32 %v948, 4294901760
    %5007 = vmatpush1.msra.mxu0 %v5006
    %5008 = vmatprep.subr.mxu0 0.0
    %v5009 = vand.u32 %v947, 4294901760
    %5010 = vmatpush1.msra.mxu0 %v5009
    %5011 = vmatprep.subr.mxu0 0.0
    %5012 = vmatpush2.msra.mxu0 0.0
    %5013 = vmatprep.subr.mxu0 0.0
    %5014 = vmatpush2.msra.mxu0 0.0
    %5015 = vmatprep.subr.mxu0 0.0
    %5016 = vmatpush2.msra.mxu0 0.0
    %5017 = vmatprep.subr.mxu0 0.0
    %5018 = vmatpush2.msra.mxu0 0.0
    %5019 = vmatprep.subr.mxu0 0.0
    %5020 = vmatpush2.msra.mxu0 0.0
    %5021 = vmatprep.subr.mxu0 0.0
    %5022 = vmatpush2.msra.mxu0 0.0
    %5023 = vmatprep.subr.mxu0 0.0
    %5024 = vmatpush2.msra.mxu0 0.0
    %5025 = vmatprep.subr.mxu0 0.0
    %5026 = vmatpush2.msra.mxu0 0.0
    %5027 = vmatprep.subr.mxu0 0.0
    %5028 = vmatpush2.msra.mxu0 0.0
    %5029 = vmatprep.subr.mxu0 0.0
    %5030 = vmatpush2.msra.mxu0 0.0
    %5031 = vmatprep.subr.mxu0 0.0
    %5032 = vmatpush2.msra.mxu0 0.0
    %5033 = vmatprep.subr.mxu0 0.0
    %5034 = vmatpush2.msra.mxu0 0.0
    %5035 = vmatprep.subr.mxu0 0.0
    %5036 = vmatpush2.msra.mxu0 0.0
    %5037 = vmatprep.subr.mxu0 0.0
    %5038 = vmatpush2.msra.mxu0 0.0
    %5039 = vmatprep.subr.mxu0 0.0
    %5040 = vmatpush2.msra.mxu0 0.0
    %5041 = vmatprep.subr.mxu0 0.0
    %5042 = vmatpush2.msra.mxu0 0.0
    %5043 = vmatprep.mubr.f32.mxu0 0.0
    %v5044 = vand.u32 %v4563, 4294901760
    %5045 = vmatmul.mubr.f32.gmra.mxu0 %v5044
    %v5046 = vpop.f32.mrf.mxu0
    %v5047 = vadd.f32 %v4972, %v5046
    %v5048 = vpop.f32.mrf.mxu0
    %5049 = vdwg.mxu0
    %v5050 = vadd.f32 %v944, %v5047
    %v5051 = vxor.u32 %v5050, 2147483648
    %v5052 = vmul.f32 %v5051, 1.442695
    %v5053 = vpow.pop %v5052
    %v5054 = vadd.f32 %v5053, 1.0
    %v5055 = vrcp.pop %v5054
    %v5056 = vmul.f32 1.0, %v5055
    %v5057 = vtanh.pop %v5050
    %v5058 = vmul.f32 %v5056, %v4553
    %5060 = vrot.lane.b32.xlu0 %v5057, 64
    %v5061 = vpop.permute.xlu0 %5060
    %v5063 = vmul.f32 %v5056, %v5061
    %5065 = vrot.lane.b32.xlu0 %v5063, 32
    %v5066 = vpop.permute.xlu0 %5065
    %v5068 = vadd.f32 %v5058, %v5066
    %v5069 = vtanh.pop %v5068
    %5071 = vrot.lane.b32.xlu0 %v5069, 64
    %v5072 = vpop.permute.xlu0 %5071
    %v5074 = vmul.f32 %v5056, %v5072
    %5076 = vrot.lane.b32.xlu0 %v5074, 32
    %v5077 = vpop.permute.xlu0 %5076
    %5079 = vst.msk [vmem:[#allocation2] sm:$0xff] %vm136, %v5077
    %5081 = vrot.lane.b32.xlu0 %v5068, 96
    %v5082 = vpop.permute.xlu0 %5081
    %5084 = vst.msk [vmem:[#allocation3] sm:$0xff] %vm136, %v5082
    // Predicated region
    $region34: #{tpu_custom_call.1} parent=1 // pred_check
      %p5085 = pneg %p60
    $region35: #{tpu_custom_call.1} parent=1 // pred_check_branch
      %5087 = sbr.rel (%p5085) target = $region37
    $region36: #{tpu_custom_call.1} parent=1 // pred_region
      %v5088 = vld [vmem:[#allocation4] sm:$0xff]
      %v5089 = vld [vmem:[#allocation4 + $0x8] sm:$0xff]
      %v5090 = vld [vmem:[#allocation4 + $0x10] sm:$0xff]
      %v5091 = vld [vmem:[#allocation4 + $0x18] sm:$0xff]
      %v5092 = vld [vmem:[%s5] sm:$0x1]
      %v5094 = vlaneseq
      %v5095 = vshrl.u32 %v5094, 7
      %v5096 = vsub.s32 0, %v5095
      %v5097 = vrot.slane %v5092, %v5096
      %v5099 = vsel %vm136, %v5077, 0
      %5101 = vmatprep.subr.mxu0 0.0
      %5102 = vmatpush1.msra.mxu0 0.0
      %5103 = vmatprep.subr.mxu0 0.0
      %5104 = vmatpush1.msra.mxu0 0.0
      %5105 = vmatprep.subr.mxu0 0.0
      %5106 = vmatpush1.msra.mxu0 0.0
      %5107 = vmatprep.subr.mxu0 0.0
      %5108 = vmatpush1.msra.mxu0 0.0
      %5109 = vmatprep.subr.mxu0 0.0
      %5110 = vmatpush1.msra.mxu0 0.0
      %5111 = vmatprep.subr.mxu0 0.0
      %5112 = vmatpush1.msra.mxu0 0.0
      %5113 = vmatprep.subr.mxu0 0.0
      %5114 = vmatpush1.msra.mxu0 0.0
      %5115 = vmatprep.subr.mxu0 0.0
      %5116 = vmatpush1.msra.mxu0 0.0
      %5117 = vmatprep.subr.mxu0 0.0
      %5118 = vmatpush1.msra.mxu0 0.0
      %5119 = vmatprep.subr.mxu0 0.0
      %5120 = vmatpush1.msra.mxu0 0.0
      %5121 = vmatprep.subr.mxu0 0.0
      %5122 = vmatpush1.msra.mxu0 0.0
      %5123 = vmatprep.subr.mxu0 0.0
      %5124 = vmatpush1.msra.mxu0 0.0
      %5125 = vmatprep.subr.mxu0 0.0
      %v5126 = vand.u32 %v5091, 4294901760
      %5127 = vmatpush1.msra.mxu0 %v5126
      %5128 = vmatprep.subr.mxu0 0.0
      %v5129 = vand.u32 %v5090, 4294901760
      %5130 = vmatpush1.msra.mxu0 %v5129
      %5131 = vmatprep.subr.mxu0 0.0
      %v5132 = vand.u32 %v5089, 4294901760
      %5133 = vmatpush1.msra.mxu0 %v5132
      %5134 = vmatprep.subr.mxu0 0.0
      %v5135 = vand.u32 %v5088, 4294901760
      %5136 = vmatpush1.msra.mxu0 %v5135
      %5137 = vmatprep.subr.mxu0 0.0
      %5138 = vmatpush2.msra.mxu0 0.0
      %5139 = vmatprep.subr.mxu0 0.0
      %5140 = vmatpush2.msra.mxu0 0.0
      %5141 = vmatprep.subr.mxu0 0.0
      %5142 = vmatpush2.msra.mxu0 0.0
      %5143 = vmatprep.subr.mxu0 0.0
      %5144 = vmatpush2.msra.mxu0 0.0
      %5145 = vmatprep.subr.mxu0 0.0
      %5146 = vmatpush2.msra.mxu0 0.0
      %5147 = vmatprep.subr.mxu0 0.0
      %5148 = vmatpush2.msra.mxu0 0.0
      %5149 = vmatprep.subr.mxu0 0.0
      %5150 = vmatpush2.msra.mxu0 0.0
      %5151 = vmatprep.subr.mxu0 0.0
      %5152 = vmatpush2.msra.mxu0 0.0
      %5153 = vmatprep.subr.mxu0 0.0
      %5154 = vmatpush2.msra.mxu0 0.0
      %5155 = vmatprep.subr.mxu0 0.0
      %5156 = vmatpush2.msra.mxu0 0.0
      %5157 = vmatprep.subr.mxu0 0.0
      %5158 = vmatpush2.msra.mxu0 0.0
      %5159 = vmatprep.subr.mxu0 0.0
      %5160 = vmatpush2.msra.mxu0 0.0
      %5161 = vmatprep.subr.mxu0 0.0
      %5162 = vmatpush2.msra.mxu0 0.0
      %5163 = vmatprep.subr.mxu0 0.0
      %5164 = vmatpush2.msra.mxu0 0.0
      %5165 = vmatprep.subr.mxu0 0.0
      %5166 = vmatpush2.msra.mxu0 0.0
      %5167 = vmatprep.subr.mxu0 0.0
      %5168 = vmatpush2.msra.mxu0 0.0
      %5169 = vmatprep.mubr.f32.mxu0 0.0
      %v5170 = vand.u32 %v5099, 4294901760
      %v5171 = vsub.f32 %v5099, %v5170
      %v5172 = vand.u32 %v5171, 4294901760
      %v5173 = vsub.f32 %v5171, %v5172
      %v5174 = vand.u32 %v5173, 4294901760
      %5175 = vmatmul.mubr.f32.gmra.mxu0 %v5174
      %v5176 = vpop.f32.mrf.mxu0
      %v5177 = vadd.f32 %v5097, %v5176
      %v5178 = vpop.f32.mrf.mxu0
      %5179 = vdwg.mxu0
      %5180 = vmatprep.subr.mxu0 0.0
      %5181 = vmatpush1.msra.mxu0 0.0
      %5182 = vmatprep.subr.mxu0 0.0
      %5183 = vmatpush1.msra.mxu0 0.0
      %5184 = vmatprep.subr.mxu0 0.0
      %5185 = vmatpush1.msra.mxu0 0.0
      %5186 = vmatprep.subr.mxu0 0.0
      %5187 = vmatpush1.msra.mxu0 0.0
      %5188 = vmatprep.subr.mxu0 0.0
      %5189 = vmatpush1.msra.mxu0 0.0
      %5190 = vmatprep.subr.mxu0 0.0
      %5191 = vmatpush1.msra.mxu0 0.0
      %5192 = vmatprep.subr.mxu0 0.0
      %5193 = vmatpush1.msra.mxu0 0.0
      %5194 = vmatprep.subr.mxu0 0.0
      %5195 = vmatpush1.msra.mxu0 0.0
      %5196 = vmatprep.subr.mxu0 0.0
      %5197 = vmatpush1.msra.mxu0 0.0
      %5198 = vmatprep.subr.mxu0 0.0
      %5199 = vmatpush1.msra.mxu0 0.0
      %5200 = vmatprep.subr.mxu0 0.0
      %5201 = vmatpush1.msra.mxu0 0.0
      %5202 = vmatprep.subr.mxu0 0.0
      %5203 = vmatpush1.msra.mxu0 0.0
      %5204 = vmatprep.subr.mxu0 0.0
      %v5205 = vand.u32 %v5091, 4294901760
      %v5206 = vsub.f32 %v5091, %v5205
      %v5207 = vand.u32 %v5206, 4294901760
      %v5208 = vsub.f32 %v5206, %v5207
      %v5209 = vand.u32 %v5208, 4294901760
      %5210 = vmatpush1.msra.mxu0 %v5209
      %5211 = vmatprep.subr.mxu0 0.0
      %v5212 = vand.u32 %v5090, 4294901760
      %v5213 = vsub.f32 %v5090, %v5212
      %v5214 = vand.u32 %v5213, 4294901760
      %v5215 = vsub.f32 %v5213, %v5214
      %v5216 = vand.u32 %v5215, 4294901760
      %5217 = vmatpush1.msra.mxu0 %v5216
      %5218 = vmatprep.subr.mxu0 0.0
      %v5219 = vand.u32 %v5089, 4294901760
      %v5220 = vsub.f32 %v5089, %v5219
      %v5221 = vand.u32 %v5220, 4294901760
      %v5222 = vsub.f32 %v5220, %v5221
      %v5223 = vand.u32 %v5222, 4294901760
      %5224 = vmatpush1.msra.mxu0 %v5223
      %5225 = vmatprep.subr.mxu0 0.0
      %v5226 = vand.u32 %v5088, 4294901760
      %v5227 = vsub.f32 %v5088, %v5226
      %v5228 = vand.u32 %v5227, 4294901760
      %v5229 = vsub.f32 %v5227, %v5228
      %v5230 = vand.u32 %v5229, 4294901760
      %5231 = vmatpush1.msra.mxu0 %v5230
      %5232 = vmatprep.subr.mxu0 0.0
      %5233 = vmatpush2.msra.mxu0 0.0
      %5234 = vmatprep.subr.mxu0 0.0
      %5235 = vmatpush2.msra.mxu0 0.0
      %5236 = vmatprep.subr.mxu0 0.0
      %5237 = vmatpush2.msra.mxu0 0.0
      %5238 = vmatprep.subr.mxu0 0.0
      %5239 = vmatpush2.msra.mxu0 0.0
      %5240 = vmatprep.subr.mxu0 0.0
      %5241 = vmatpush2.msra.mxu0 0.0
      %5242 = vmatprep.subr.mxu0 0.0
      %5243 = vmatpush2.msra.mxu0 0.0
      %5244 = vmatprep.subr.mxu0 0.0
      %5245 = vmatpush2.msra.mxu0 0.0
      %5246 = vmatprep.subr.mxu0 0.0
      %5247 = vmatpush2.msra.mxu0 0.0
      %5248 = vmatprep.subr.mxu0 0.0
      %5249 = vmatpush2.msra.mxu0 0.0
      %5250 = vmatprep.subr.mxu0 0.0
      %5251 = vmatpush2.msra.mxu0 0.0
      %5252 = vmatprep.subr.mxu0 0.0
      %5253 = vmatpush2.msra.mxu0 0.0
      %5254 = vmatprep.subr.mxu0 0.0
      %5255 = vmatpush2.msra.mxu0 0.0
      %5256 = vmatprep.subr.mxu0 0.0
      %5257 = vmatpush2.msra.mxu0 0.0
      %5258 = vmatprep.subr.mxu0 0.0
      %5259 = vmatpush2.msra.mxu0 0.0
      %5260 = vmatprep.subr.mxu0 0.0
      %5261 = vmatpush2.msra.mxu0 0.0
      %5262 = vmatprep.subr.mxu0 0.0
      %5263 = vmatpush2.msra.mxu0 0.0
      %5264 = vmatprep.mubr.f32.mxu0 0.0
      %v5265 = vand.u32 %v5099, 4294901760
      %5266 = vmatmul.mubr.f32.gmra.mxu0 %v5265
      %v5267 = vpop.f32.mrf.mxu0
      %v5268 = vadd.f32 %v5177, %v5267
      %v5269 = vpop.f32.mrf.mxu0
      %5270 = vdwg.mxu0
      %5271 = vmatprep.subr.mxu0 0.0
      %5272 = vmatpush1.msra.mxu0 0.0
      %5273 = vmatprep.subr.mxu0 0.0
      %5274 = vmatpush1.msra.mxu0 0.0
      %5275 = vmatprep.subr.mxu0 0.0
      %5276 = vmatpush1.msra.mxu0 0.0
      %5277 = vmatprep.subr.mxu0 0.0
      %5278 = vmatpush1.msra.mxu0 0.0
      %5279 = vmatprep.subr.mxu0 0.0
      %5280 = vmatpush1.msra.mxu0 0.0
      %5281 = vmatprep.subr.mxu0 0.0
      %5282 = vmatpush1.msra.mxu0 0.0
      %5283 = vmatprep.subr.mxu0 0.0
      %5284 = vmatpush1.msra.mxu0 0.0
      %5285 = vmatprep.subr.mxu0 0.0
      %5286 = vmatpush1.msra.mxu0 0.0
      %5287 = vmatprep.subr.mxu0 0.0
      %5288 = vmatpush1.msra.mxu0 0.0
      %5289 = vmatprep.subr.mxu0 0.0
      %5290 = vmatpush1.msra.mxu0 0.0
      %5291 = vmatprep.subr.mxu0 0.0
      %5292 = vmatpush1.msra.mxu0 0.0
      %5293 = vmatprep.subr.mxu0 0.0
      %5294 = vmatpush1.msra.mxu0 0.0
      %5295 = vmatprep.subr.mxu0 0.0
      %v5296 = vand.u32 %v5091, 4294901760
      %v5297 = vsub.f32 %v5091, %v5296
      %5298 = vmatpush1.msra.mxu0 %v5297
      %5299 = vmatprep.subr.mxu0 0.0
      %v5300 = vand.u32 %v5090, 4294901760
      %v5301 = vsub.f32 %v5090, %v5300
      %5302 = vmatpush1.msra.mxu0 %v5301
      %5303 = vmatprep.subr.mxu0 0.0
      %v5304 = vand.u32 %v5089, 4294901760
      %v5305 = vsub.f32 %v5089, %v5304
      %5306 = vmatpush1.msra.mxu0 %v5305
      %5307 = vmatprep.subr.mxu0 0.0
      %v5308 = vand.u32 %v5088, 4294901760
      %v5309 = vsub.f32 %v5088, %v5308
      %5310 = vmatpush1.msra.mxu0 %v5309
      %5311 = vmatprep.subr.mxu0 0.0
      %5312 = vmatpush2.msra.mxu0 0.0
      %5313 = vmatprep.subr.mxu0 0.0
      %5314 = vmatpush2.msra.mxu0 0.0
      %5315 = vmatprep.subr.mxu0 0.0
      %5316 = vmatpush2.msra.mxu0 0.0
      %5317 = vmatprep.subr.mxu0 0.0
      %5318 = vmatpush2.msra.mxu0 0.0
      %5319 = vmatprep.subr.mxu0 0.0
      %5320 = vmatpush2.msra.mxu0 0.0
      %5321 = vmatprep.subr.mxu0 0.0
      %5322 = vmatpush2.msra.mxu0 0.0
      %5323 = vmatprep.subr.mxu0 0.0
      %5324 = vmatpush2.msra.mxu0 0.0
      %5325 = vmatprep.subr.mxu0 0.0
      %5326 = vmatpush2.msra.mxu0 0.0
      %5327 = vmatprep.subr.mxu0 0.0
      %5328 = vmatpush2.msra.mxu0 0.0
      %5329 = vmatprep.subr.mxu0 0.0
      %5330 = vmatpush2.msra.mxu0 0.0
      %5331 = vmatprep.subr.mxu0 0.0
      %5332 = vmatpush2.msra.mxu0 0.0
      %5333 = vmatprep.subr.mxu0 0.0
      %5334 = vmatpush2.msra.mxu0 0.0
      %5335 = vmatprep.subr.mxu0 0.0
      %5336 = vmatpush2.msra.mxu0 0.0
      %5337 = vmatprep.subr.mxu0 0.0
      %5338 = vmatpush2.msra.mxu0 0.0
      %5339 = vmatprep.subr.mxu0 0.0
      %5340 = vmatpush2.msra.mxu0 0.0
      %5341 = vmatprep.subr.mxu0 0.0
      %5342 = vmatpush2.msra.mxu0 0.0
      %5343 = vmatprep.mubr.f32.mxu0 0.0
      %v5344 = vand.u32 %v5099, 4294901760
      %v5345 = vsub.f32 %v5099, %v5344
      %5346 = vmatmul.mubr.f32.gmra.mxu0 %v5345
      %v5347 = vpop.f32.mrf.mxu0
      %v5348 = vadd.f32 %v5268, %v5347
      %v5349 = vpop.f32.mrf.mxu0
      %5350 = vdwg.mxu0
      %5351 = vmatprep.subr.mxu0 0.0
      %5352 = vmatpush1.msra.mxu0 0.0
      %5353 = vmatprep.subr.mxu0 0.0
      %5354 = vmatpush1.msra.mxu0 0.0
      %5355 = vmatprep.subr.mxu0 0.0
      %5356 = vmatpush1.msra.mxu0 0.0
      %5357 = vmatprep.subr.mxu0 0.0
      %5358 = vmatpush1.msra.mxu0 0.0
      %5359 = vmatprep.subr.mxu0 0.0
      %5360 = vmatpush1.msra.mxu0 0.0
      %5361 = vmatprep.subr.mxu0 0.0
      %5362 = vmatpush1.msra.mxu0 0.0
      %5363 = vmatprep.subr.mxu0 0.0
      %5364 = vmatpush1.msra.mxu0 0.0
      %5365 = vmatprep.subr.mxu0 0.0
      %5366 = vmatpush1.msra.mxu0 0.0
      %5367 = vmatprep.subr.mxu0 0.0
      %5368 = vmatpush1.msra.mxu0 0.0
      %5369 = vmatprep.subr.mxu0 0.0
      %5370 = vmatpush1.msra.mxu0 0.0
      %5371 = vmatprep.subr.mxu0 0.0
      %5372 = vmatpush1.msra.mxu0 0.0
      %5373 = vmatprep.subr.mxu0 0.0
      %5374 = vmatpush1.msra.mxu0 0.0
      %5375 = vmatprep.subr.mxu0 0.0
      %v5376 = vand.u32 %v5091, 4294901760
      %5377 = vmatpush1.msra.mxu0 %v5376
      %5378 = vmatprep.subr.mxu0 0.0
      %v5379 = vand.u32 %v5090, 4294901760
      %5380 = vmatpush1.msra.mxu0 %v5379
      %5381 = vmatprep.subr.mxu0 0.0
      %v5382 = vand.u32 %v5089, 4294901760
      %5383 = vmatpush1.msra.mxu0 %v5382
      %5384 = vmatprep.subr.mxu0 0.0
      %v5385 = vand.u32 %v5088, 4294901760
      %5386 = vmatpush1.msra.mxu0 %v5385
      %5387 = vmatprep.subr.mxu0 0.0
      %5388 = vmatpush2.msra.mxu0 0.0
      %5389 = vmatprep.subr.mxu0 0.0
      %5390 = vmatpush2.msra.mxu0 0.0
      %5391 = vmatprep.subr.mxu0 0.0
      %5392 = vmatpush2.msra.mxu0 0.0
      %5393 = vmatprep.subr.mxu0 0.0
      %5394 = vmatpush2.msra.mxu0 0.0
      %5395 = vmatprep.subr.mxu0 0.0
      %5396 = vmatpush2.msra.mxu0 0.0
      %5397 = vmatprep.subr.mxu0 0.0
      %5398 = vmatpush2.msra.mxu0 0.0
      %5399 = vmatprep.subr.mxu0 0.0
      %5400 = vmatpush2.msra.mxu0 0.0
      %5401 = vmatprep.subr.mxu0 0.0
      %5402 = vmatpush2.msra.mxu0 0.0
      %5403 = vmatprep.subr.mxu0 0.0
      %5404 = vmatpush2.msra.mxu0 0.0
      %5405 = vmatprep.subr.mxu0 0.0
      %5406 = vmatpush2.msra.mxu0 0.0
      %5407 = vmatprep.subr.mxu0 0.0
      %5408 = vmatpush2.msra.mxu0 0.0
      %5409 = vmatprep.subr.mxu0 0.0
      %5410 = vmatpush2.msra.mxu0 0.0
      %5411 = vmatprep.subr.mxu0 0.0
      %5412 = vmatpush2.msra.mxu0 0.0
      %5413 = vmatprep.subr.mxu0 0.0
      %5414 = vmatpush2.msra.mxu0 0.0
      %5415 = vmatprep.subr.mxu0 0.0
      %5416 = vmatpush2.msra.mxu0 0.0
      %5417 = vmatprep.subr.mxu0 0.0
      %5418 = vmatpush2.msra.mxu0 0.0
      %5419 = vmatprep.mubr.f32.mxu0 0.0
      %v5420 = vand.u32 %v5099, 4294901760
      %v5421 = vsub.f32 %v5099, %v5420
      %v5422 = vand.u32 %v5421, 4294901760
      %5423 = vmatmul.mubr.f32.gmra.mxu0 %v5422
      %v5424 = vpop.f32.mrf.mxu0
      %v5425 = vadd.f32 %v5348, %v5424
      %v5426 = vpop.f32.mrf.mxu0
      %5427 = vdwg.mxu0
      %5428 = vmatprep.subr.mxu0 0.0
      %5429 = vmatpush1.msra.mxu0 0.0
      %5430 = vmatprep.subr.mxu0 0.0
      %5431 = vmatpush1.msra.mxu0 0.0
      %5432 = vmatprep.subr.mxu0 0.0
      %5433 = vmatpush1.msra.mxu0 0.0
      %5434 = vmatprep.subr.mxu0 0.0
      %5435 = vmatpush1.msra.mxu0 0.0
      %5436 = vmatprep.subr.mxu0 0.0
      %5437 = vmatpush1.msra.mxu0 0.0
      %5438 = vmatprep.subr.mxu0 0.0
      %5439 = vmatpush1.msra.mxu0 0.0
      %5440 = vmatprep.subr.mxu0 0.0
      %5441 = vmatpush1.msra.mxu0 0.0
      %5442 = vmatprep.subr.mxu0 0.0
      %5443 = vmatpush1.msra.mxu0 0.0
      %5444 = vmatprep.subr.mxu0 0.0
      %5445 = vmatpush1.msra.mxu0 0.0
      %5446 = vmatprep.subr.mxu0 0.0
      %5447 = vmatpush1.msra.mxu0 0.0
      %5448 = vmatprep.subr.mxu0 0.0
      %5449 = vmatpush1.msra.mxu0 0.0
      %5450 = vmatprep.subr.mxu0 0.0
      %5451 = vmatpush1.msra.mxu0 0.0
      %5452 = vmatprep.subr.mxu0 0.0
      %v5453 = vand.u32 %v5091, 4294901760
      %v5454 = vsub.f32 %v5091, %v5453
      %v5455 = vand.u32 %v5454, 4294901760
      %5456 = vmatpush1.msra.mxu0 %v5455
      %5457 = vmatprep.subr.mxu0 0.0
      %v5458 = vand.u32 %v5090, 4294901760
      %v5459 = vsub.f32 %v5090, %v5458
      %v5460 = vand.u32 %v5459, 4294901760
      %5461 = vmatpush1.msra.mxu0 %v5460
      %5462 = vmatprep.subr.mxu0 0.0
      %v5463 = vand.u32 %v5089, 4294901760
      %v5464 = vsub.f32 %v5089, %v5463
      %v5465 = vand.u32 %v5464, 4294901760
      %5466 = vmatpush1.msra.mxu0 %v5465
      %5467 = vmatprep.subr.mxu0 0.0
      %v5468 = vand.u32 %v5088, 4294901760
      %v5469 = vsub.f32 %v5088, %v5468
      %v5470 = vand.u32 %v5469, 4294901760
      %5471 = vmatpush1.msra.mxu0 %v5470
      %5472 = vmatprep.subr.mxu0 0.0
      %5473 = vmatpush2.msra.mxu0 0.0
      %5474 = vmatprep.subr.mxu0 0.0
      %5475 = vmatpush2.msra.mxu0 0.0
      %5476 = vmatprep.subr.mxu0 0.0
      %5477 = vmatpush2.msra.mxu0 0.0
      %5478 = vmatprep.subr.mxu0 0.0
      %5479 = vmatpush2.msra.mxu0 0.0
      %5480 = vmatprep.subr.mxu0 0.0
      %5481 = vmatpush2.msra.mxu0 0.0
      %5482 = vmatprep.subr.mxu0 0.0
      %5483 = vmatpush2.msra.mxu0 0.0
      %5484 = vmatprep.subr.mxu0 0.0
      %5485 = vmatpush2.msra.mxu0 0.0
      %5486 = vmatprep.subr.mxu0 0.0
      %5487 = vmatpush2.msra.mxu0 0.0
      %5488 = vmatprep.subr.mxu0 0.0
      %5489 = vmatpush2.msra.mxu0 0.0
      %5490 = vmatprep.subr.mxu0 0.0
      %5491 = vmatpush2.msra.mxu0 0.0
      %5492 = vmatprep.subr.mxu0 0.0
      %5493 = vmatpush2.msra.mxu0 0.0
      %5494 = vmatprep.subr.mxu0 0.0
      %5495 = vmatpush2.msra.mxu0 0.0
      %5496 = vmatprep.subr.mxu0 0.0
      %5497 = vmatpush2.msra.mxu0 0.0
      %5498 = vmatprep.subr.mxu0 0.0
      %5499 = vmatpush2.msra.mxu0 0.0
      %5500 = vmatprep.subr.mxu0 0.0
      %5501 = vmatpush2.msra.mxu0 0.0
      %5502 = vmatprep.subr.mxu0 0.0
      %5503 = vmatpush2.msra.mxu0 0.0
      %5504 = vmatprep.mubr.f32.mxu0 0.0
      %v5505 = vand.u32 %v5099, 4294901760
      %5506 = vmatmul.mubr.f32.gmra.mxu0 %v5505
      %v5507 = vpop.f32.mrf.mxu0
      %v5508 = vadd.f32 %v5425, %v5507
      %v5509 = vpop.f32.mrf.mxu0
      %5510 = vdwg.mxu0
      %5511 = vmatprep.subr.mxu0 0.0
      %5512 = vmatpush1.msra.mxu0 0.0
      %5513 = vmatprep.subr.mxu0 0.0
      %5514 = vmatpush1.msra.mxu0 0.0
      %5515 = vmatprep.subr.mxu0 0.0
      %5516 = vmatpush1.msra.mxu0 0.0
      %5517 = vmatprep.subr.mxu0 0.0
      %5518 = vmatpush1.msra.mxu0 0.0
      %5519 = vmatprep.subr.mxu0 0.0
      %5520 = vmatpush1.msra.mxu0 0.0
      %5521 = vmatprep.subr.mxu0 0.0
      %5522 = vmatpush1.msra.mxu0 0.0
      %5523 = vmatprep.subr.mxu0 0.0
      %5524 = vmatpush1.msra.mxu0 0.0
      %5525 = vmatprep.subr.mxu0 0.0
      %5526 = vmatpush1.msra.mxu0 0.0
      %5527 = vmatprep.subr.mxu0 0.0
      %5528 = vmatpush1.msra.mxu0 0.0
      %5529 = vmatprep.subr.mxu0 0.0
      %5530 = vmatpush1.msra.mxu0 0.0
      %5531 = vmatprep.subr.mxu0 0.0
      %5532 = vmatpush1.msra.mxu0 0.0
      %5533 = vmatprep.subr.mxu0 0.0
      %5534 = vmatpush1.msra.mxu0 0.0
      %5535 = vmatprep.subr.mxu0 0.0
      %v5536 = vand.u32 %v5091, 4294901760
      %5537 = vmatpush1.msra.mxu0 %v5536
      %5538 = vmatprep.subr.mxu0 0.0
      %v5539 = vand.u32 %v5090, 4294901760
      %5540 = vmatpush1.msra.mxu0 %v5539
      %5541 = vmatprep.subr.mxu0 0.0
      %v5542 = vand.u32 %v5089, 4294901760
      %5543 = vmatpush1.msra.mxu0 %v5542
      %5544 = vmatprep.subr.mxu0 0.0
      %v5545 = vand.u32 %v5088, 4294901760
      %5546 = vmatpush1.msra.mxu0 %v5545
      %5547 = vmatprep.subr.mxu0 0.0
      %5548 = vmatpush2.msra.mxu0 0.0
      %5549 = vmatprep.subr.mxu0 0.0
      %5550 = vmatpush2.msra.mxu0 0.0
      %5551 = vmatprep.subr.mxu0 0.0
      %5552 = vmatpush2.msra.mxu0 0.0
      %5553 = vmatprep.subr.mxu0 0.0
      %5554 = vmatpush2.msra.mxu0 0.0
      %5555 = vmatprep.subr.mxu0 0.0
      %5556 = vmatpush2.msra.mxu0 0.0
      %5557 = vmatprep.subr.mxu0 0.0
      %5558 = vmatpush2.msra.mxu0 0.0
      %5559 = vmatprep.subr.mxu0 0.0
      %5560 = vmatpush2.msra.mxu0 0.0
      %5561 = vmatprep.subr.mxu0 0.0
      %5562 = vmatpush2.msra.mxu0 0.0
      %5563 = vmatprep.subr.mxu0 0.0
      %5564 = vmatpush2.msra.mxu0 0.0
      %5565 = vmatprep.subr.mxu0 0.0
      %5566 = vmatpush2.msra.mxu0 0.0
      %5567 = vmatprep.subr.mxu0 0.0
      %5568 = vmatpush2.msra.mxu0 0.0
      %5569 = vmatprep.subr.mxu0 0.0
      %5570 = vmatpush2.msra.mxu0 0.0
      %5571 = vmatprep.subr.mxu0 0.0
      %5572 = vmatpush2.msra.mxu0 0.0
      %5573 = vmatprep.subr.mxu0 0.0
      %5574 = vmatpush2.msra.mxu0 0.0
      %5575 = vmatprep.subr.mxu0 0.0
      %5576 = vmatpush2.msra.mxu0 0.0
      %5577 = vmatprep.subr.mxu0 0.0
      %5578 = vmatpush2.msra.mxu0 0.0
      %5579 = vmatprep.mubr.f32.mxu0 0.0
      %v5580 = vand.u32 %v5099, 4294901760
      %5581 = vmatmul.mubr.f32.gmra.mxu0 %v5580
      %v5582 = vpop.f32.mrf.mxu0
      %v5583 = vadd.f32 %v5508, %v5582
      %v5584 = vpop.f32.mrf.mxu0
      %5585 = vdwg.mxu0
      %5586 = vst.msk [vmem:[#allocation7] sm:$0xff] %vm136, %v5583
    $region37: #{tpu_custom_call.1} parent=1 // pred_fallthru
      _
    // Predicated region
    $region38: #{tpu_custom_call.1} parent=1 // pred_check
      _
    $region39: #{tpu_custom_call.1} parent=1 // pred_check_branch
      %5588 = sbr.rel (0) target = $region41
    $region40: #{tpu_custom_call.1} parent=1 // pred_region
      %s5590 = ssub.s32 128, 128
      %5591 = vsyncadd [#allocation6], %s5590
      %s5593 = sshll.u32 [#allocation7], 4
      %s5594 = int_to_ptr.vmem [resolvable:$true] %s5593
      %5596 = dma.vmem_to_hbm [thread:$0]  %s5594, 128, %s6, [#allocation6]
    $region41: #{tpu_custom_call.1} parent=1 // pred_fallthru
      _
    // Predicated region
    $region42: #{tpu_custom_call.1} parent=1 // pred_check
      _
    $region43: #{tpu_custom_call.1} parent=1 // pred_check_branch
      %5598 = sbr.rel (0) target = $region45
    $region44: #{tpu_custom_call.1} parent=1 // pred_region
      %5599 = dma.done [#allocation6], 128
    $region45: #{tpu_custom_call.1} parent=1 // pred_fallthru
      _
    %5600 = vsyncpa [#allocation5], 1
    %5601 = vsyncpa [#allocation6], 1

</llo_original>
